<compile_context>
chip_gen: v5e
topology: v5e:2x2
jax: 0.10.0
libtpu: 0.0.40
codegen_flags: <defaults>
</compile_context>

<pallas_src>
import math

import jax
import jax.numpy as jnp
import numpy as np
from jax.experimental import pallas as pl
from jax.experimental.pallas import tpu as pltpu


# ----------------------------------------------------------------------------
# Pallas kernel: fused LSTM-aggregation + degree normalization + fused linears
# ----------------------------------------------------------------------------
def _sage_lstm_kernel(m_ref,      # (T, TN, F)    time-major mailbox tile
                      feat_ref,   # (TN, F)       dst-node features
                      inv_ref,    # (TN, 1)       1 / in-degree (precomputed)
                      wih_ref,    # (F, 4F)       LSTM W_ih^T, gate order (i,f,o,g)
                      whh_ref,    # (F, 4F)       LSTM W_hh^T, gate order (i,f,o,g)
                      b_ref,      # (1, 4F)       b_ih + b_hh, gate order (i,f,o,g)
                      wcat_ref,   # (2F, O_pad)   [W1^T ; W2^T], lane-padded
                      bcat_ref,   # (1, O_pad)    b1 + b2, lane-padded
                      out_ref):   # (TN, O_pad)
    T, TN, F = m_ref.shape

    whh = whh_ref[...]

    # Hoisted input projection: one large MXU matmul over all T timesteps at once,
    # bias broadcast added exactly once (not re-broadcast per step).
    m_all = m_ref[...].reshape(T * TN, F)
    gx = (jnp.dot(m_all, wih_ref[...], preferred_element_type=jnp.float32)
          + b_ref[...]).reshape(T, TN, 4 * F)

    h = jnp.zeros((TN, F), jnp.float32)
    c = jnp.zeros((TN, F), jnp.float32)

    # T is small and static -> fully unrolled recurrence; only h @ W_hh is serial.
    for t in range(T):
        gates = gx[t] + jnp.dot(h, whh, preferred_element_type=jnp.float32)
        sig = jax.nn.sigmoid(gates[:, : 3 * F])   # (i, f, o) gates, contiguous lanes
        g_g = jnp.tanh(gates[:, 3 * F:])          # cell candidate
        i_g = sig[:, :F]
        f_g = sig[:, F:2 * F]
        o_g = sig[:, 2 * F:]
        c = f_g * c + i_g * g_g
        h = o_g * jnp.tanh(c)

    # degree normalization as a multiply (reciprocal precomputed on host)
    ah = h * inv_ref[...]                          # (TN, F)

    # fused linear1(feat) + linear2(ah): one K=2F matmul into a 128-lane output
    x_cat = jnp.concatenate([feat_ref[...], ah], axis=-1)          # (TN, 2F)
    out = (jnp.dot(x_cat, wcat_ref[...], preferred_element_type=jnp.float32)
           + bcat_ref[...])
    out_ref[...] = out.astype(out_ref.dtype)


# ----------------------------------------------------------------------------
# Parameter prep: gate reorder (i,f,g,o) -> (i,f,o,g), fuse/pad output linears
# ----------------------------------------------------------------------------
def prep_kernel_params(params, in_feats, out_feats, out_pad):
    F = in_feats

    def reorder(w):  # columns [i|f|g|o] -> [i|f|o|g]
        return jnp.concatenate(
            [w[..., 0:F], w[..., F:2 * F], w[..., 3 * F:4 * F], w[..., 2 * F:3 * F]],
            axis=-1)

    w_cat = jnp.concatenate([params["w1_t"], params["w2_t"]], axis=0)  # (2F, O)
    b_cat = params["b1"] + params["b2"]                                # (1, O)
    if out_pad > out_feats:
        pad = out_pad - out_feats
        w_cat = jnp.pad(w_cat, ((0, 0), (0, pad)))
        b_cat = jnp.pad(b_cat, ((0, 0), (0, pad)))

    return {
        "wih_t": reorder(params["wih_t"]),
        "whh_t": reorder(params["whh_t"]),
        "b_lstm": reorder(params["b_lstm"]),
        "w_cat": w_cat,
        "b_cat": b_cat,
    }


# ----------------------------------------------------------------------------
# Wrapper
# ----------------------------------------------------------------------------
def graphsage_lstm_forward(mailbox_tnf, feat, in_norm, params, *, tile_n=128):
    """mailbox_tnf: (T, N, F) time-major neighbor features
       feat:        (N, F)    destination-node features
       in_norm:     (N,)      in-degrees (float)
    """
    T, N, F = mailbox_tnf.shape
    O = params["w1_t"].shape[1]
    O_pad = max(128, ((O + 127) // 128) * 128)     # lane-dense output stores

    tile_n = min(tile_n, N)
    assert N % tile_n == 0 and tile_n % 8 == 0

    kp = prep_kernel_params(params, F, O, O_pad)
    inv_deg = (1.0 / in_norm.astype(jnp.float32)).reshape(N, 1)

    grid = (N // tile_n,)
    full = lambda shape: pl.BlockSpec(shape, lambda i: tuple(0 for _ in shape))

    out_padded = pl.pallas_call(
        _sage_lstm_kernel,
        out_shape=jax.ShapeDtypeStruct((N, O_pad), jnp.float32),
        grid=grid,
        in_specs=[
            pl.BlockSpec((T, tile_n, F), lambda i: (0, i, 0)),   # mailbox
            pl.BlockSpec((tile_n, F), lambda i: (i, 0)),         # feat
            pl.BlockSpec((tile_n, 1), lambda i: (i, 0)),         # 1/deg
            full((F, 4 * F)),                                    # W_ih^T
            full((F, 4 * F)),                                    # W_hh^T
            full((1, 4 * F)),                                    # b_ih + b_hh
            full((2 * F, O_pad)),                                # [W1^T ; W2^T]
            full((1, O_pad)),                                    # b1 + b2
        ],
        out_specs=pl.BlockSpec((tile_n, O_pad), lambda i: (i, 0)),
        compiler_params=pltpu.CompilerParams(
            dimension_semantics=("parallel",)),
    )(mailbox_tnf, feat, inv_deg,
      kp["wih_t"], kp["whh_t"], kp["b_lstm"], kp["w_cat"], kp["b_cat"])

    return out_padded[:, :O]


# ----------------------------------------------------------------------------
# Pure-JAX reference (mirrors torch.nn.LSTM + the two nn.Linear layers)
# ----------------------------------------------------------------------------
def reference_forward(mailbox_tnf, feat, in_norm, params):
    T, N, F = mailbox_tnf.shape
    h = jnp.zeros((N, F), jnp.float32)
    c = jnp.zeros((N, F), jnp.float32)
    for t in range(T):
        gates = (mailbox_tnf[t] @ params["wih_t"]
                 + h @ params["whh_t"] + params["b_lstm"])
        i_g = jax.nn.sigmoid(gates[:, 0:F])
        f_g = jax.nn.sigmoid(gates[:, F:2 * F])
        g_g = jnp.tanh(gates[:, 2 * F:3 * F])
        o_g = jax.nn.sigmoid(gates[:, 3 * F:4 * F])
        c = f_g * c + i_g * g_g
        h = o_g * jnp.tanh(c)
    ah = h / in_norm.reshape(N, 1)
    return (feat @ params["w1_t"] + params["b1"]
            + ah @ params["w2_t"] + params["b2"])


# ----------------------------------------------------------------------------
# Deterministic parameter init (matches shapes / init ranges of the PyTorch module)
# ----------------------------------------------------------------------------
def init_params(key, in_feats, out_feats):
    ks = jax.random.split(key, 8)
    stdv_lin = 1.0 / math.sqrt(in_feats)          # reset_parameters()
    stdv_lstm = 1.0 / math.sqrt(in_feats)         # PyTorch LSTM default init
    u = lambda k, shape, s: jax.random.uniform(k, shape, jnp.float32, -s, s)
    # nn.Linear stores weight as (out, in); we keep the transposed (in, out) form.
    w1 = u(ks[0], (out_feats, in_feats), stdv_lin)
    w2 = u(ks[1], (out_feats, in_feats), stdv_lin)
    b1 = u(ks[2], (1, out_feats), stdv_lin)
    b2 = u(ks[3], (1, out_feats), stdv_lin)
    # nn.LSTM: weight_ih_l0 (4H, In), weight_hh_l0 (4H, H), biases (4H,); gates i,f,g,o.
    wih = u(ks[4], (4 * in_feats, in_feats), stdv_lstm)
    whh = u(ks[5], (4 * in_feats, in_feats), stdv_lstm)
    b_ih = u(ks[6], (4 * in_feats,), stdv_lstm)
    b_hh = u(ks[7], (4 * in_feats,), stdv_lstm)
    return {
        "w1_t": w1.T, "b1": b1,
        "w2_t": w2.T, "b2": b2,
        "wih_t": wih.T, "whh_t": whh.T,
        "b_lstm": (b_ih + b_hh).reshape(1, 4 * in_feats),
    }


if __name__ == "__main__":
    key = jax.random.PRNGKey(0)
    N = 256         # number of nodes (all are dst nodes); 2 grid steps of 128
    T = 8           # fixed in-degree / neighbor-sequence length
    IN_FEATS = 32
    OUT_FEATS = 32

    k_feat, k_nbr, k_param = jax.random.split(key, 3)
    feat = jax.random.normal(k_feat, (N, IN_FEATS), jnp.float32)
    # Dense graph representation: each node has T sampled neighbors.
    nbr_idx = jax.random.randint(k_nbr, (N, T), 0, N)
    mailbox = feat[nbr_idx]                          # (N, T, F)  == DGL mailbox 'm'
    mailbox_tnf = jnp.transpose(mailbox, (1, 0, 2))  # time-major (T, N, F)
    in_norm = jnp.full((N,), float(T), jnp.float32)  # in-degrees

    params = init_params(k_param, IN_FEATS, OUT_FEATS)

    out = graphsage_lstm_forward(mailbox_tnf, feat, in_norm, params, tile_n=128)
    out = jax.block_until_ready(out)

    ref = reference_forward(mailbox_tnf, feat, in_norm, params)
    np.testing.assert_allclose(np.asarray(out), np.asarray(ref),
                               rtol=1e-4, atol=1e-4)
    print("KERNEL_OK")
</pallas_src>

<mosaic_0001>
module attributes {stable_mosaic.version = 11 : i64} {
  func.func @_sage_lstm_kernel(%arg0: i32, %arg1: memref<8x128x32xf32, #tpu.memory_space<vmem>>, %arg2: memref<128x32xf32, #tpu.memory_space<vmem>>, %arg3: memref<128x1xf32, #tpu.memory_space<vmem>>, %arg4: memref<32x128xf32, #tpu.memory_space<vmem>>, %arg5: memref<32x128xf32, #tpu.memory_space<vmem>>, %arg6: memref<1x128xf32, #tpu.memory_space<vmem>>, %arg7: memref<64x128xf32, #tpu.memory_space<vmem>>, %arg8: memref<1x128xf32, #tpu.memory_space<vmem>>, %arg9: memref<128x128xf32, #tpu.memory_space<vmem>>) attributes {dimension_semantics = [#tpu.dimension_semantics<parallel>], iteration_bounds = array<i64: 2>, scalar_prefetch = 0 : i64, scratch_operands = 0 : i64, tpu.core_type = #tpu.core_type<tc>, window_params = [{transform_indices = @transform_0, window_bounds = array<i64: 8, 128, 32>}, {transform_indices = @transform_1, window_bounds = array<i64: 128, 32>}, {transform_indices = @transform_2, window_bounds = array<i64: 128, 1>}, {pipeline_mode = #tpu.pipeline_mode<synchronous>, transform_indices = @transform_3, window_bounds = array<i64: 32, 128>}, {pipeline_mode = #tpu.pipeline_mode<synchronous>, transform_indices = @transform_4, window_bounds = array<i64: 32, 128>}, {pipeline_mode = #tpu.pipeline_mode<synchronous>, transform_indices = @transform_5, window_bounds = array<i64: 1, 128>}, {pipeline_mode = #tpu.pipeline_mode<synchronous>, transform_indices = @transform_6, window_bounds = array<i64: 64, 128>}, {pipeline_mode = #tpu.pipeline_mode<synchronous>, transform_indices = @transform_7, window_bounds = array<i64: 1, 128>}, {transform_indices = @transform_8, window_bounds = array<i64: 128, 128>}]} {
    %c0 = arith.constant 0 : index
    %c0_0 = arith.constant 0 : index
    %0 = vector.load %arg5[%c0, %c0_0] : memref<32x128xf32, #tpu.memory_space<vmem>>, vector<32x128xf32>
    %c0_1 = arith.constant 0 : index
    %c0_2 = arith.constant 0 : index
    %c0_3 = arith.constant 0 : index
    %1 = vector.load %arg1[%c0_1, %c0_2, %c0_3] : memref<8x128x32xf32, #tpu.memory_space<vmem>>, vector<8x128x32xf32>
    %2 = vector.shape_cast %1 : vector<8x128x32xf32> to vector<1024x32xf32>
    %c0_4 = arith.constant 0 : index
    %c0_5 = arith.constant 0 : index
    %3 = vector.load %arg4[%c0_4, %c0_5] : memref<32x128xf32, #tpu.memory_space<vmem>>, vector<32x128xf32>
    %cst = arith.constant dense<0.000000e+00> : vector<1024x128xf32>
    %4 = tpu.matmul %2, %3, %cst {dimension_numbers = #tpu.dot_dimension_numbers<[1], [0], [0], [1], [0, 0, 1, 1], [], []>} : vector<1024x32xf32>, vector<32x128xf32>, vector<1024x128xf32> -> vector<1024x128xf32>
    %c0_6 = arith.constant 0 : index
    %c0_7 = arith.constant 0 : index
    %5 = vector.load %arg6[%c0_6, %c0_7] : memref<1x128xf32, #tpu.memory_space<vmem>>, vector<1x128xf32>
    %6 = vector.broadcast %5 : vector<1x128xf32> to vector<1024x128xf32>
    %7 = arith.addf %4, %6 : vector<1024x128xf32>
    %8 = vector.shape_cast %7 : vector<1024x128xf32> to vector<8x128x128xf32>
    %cst_8 = arith.constant 0.000000e+00 : f32
    %9 = vector.broadcast %cst_8 : f32 to vector<128x32xf32>
    %cst_9 = arith.constant 0.000000e+00 : f32
    %10 = vector.broadcast %cst_9 : f32 to vector<128x32xf32>
    %11 = vector.extract_strided_slice %8 {offsets = [0, 0, 0], sizes = [1, 128, 128], strides = [1, 1, 1]} : vector<8x128x128xf32> to vector<1x128x128xf32>
    %12 = vector.shape_cast %11 : vector<1x128x128xf32> to vector<128x128xf32>
    %cst_10 = arith.constant dense<0.000000e+00> : vector<128x128xf32>
    %13 = tpu.matmul %9, %0, %cst_10 {dimension_numbers = #tpu.dot_dimension_numbers<[1], [0], [0], [1], [0, 0, 1, 1], [], []>} : vector<128x32xf32>, vector<32x128xf32>, vector<128x128xf32> -> vector<128x128xf32>
    %14 = arith.addf %12, %13 : vector<128x128xf32>
    %15 = vector.extract_strided_slice %14 {offsets = [0, 0], sizes = [128, 96], strides = [1, 1]} : vector<128x128xf32> to vector<128x96xf32>
    %16 = arith.negf %15 : vector<128x96xf32>
    %17 = math.exp %16 : vector<128x96xf32>
    %cst_11 = arith.constant 1.000000e+00 : f32
    %18 = vector.broadcast %cst_11 : f32 to vector<128x96xf32>
    %19 = arith.addf %18, %17 : vector<128x96xf32>
    %20 = arith.divf %18, %19 : vector<128x96xf32>
    %21 = vector.extract_strided_slice %14 {offsets = [0, 96], sizes = [128, 32], strides = [1, 1]} : vector<128x128xf32> to vector<128x32xf32>
    %22 = math.tanh %21 : vector<128x32xf32>
    %23 = vector.extract_strided_slice %20 {offsets = [0, 0], sizes = [128, 32], strides = [1, 1]} : vector<128x96xf32> to vector<128x32xf32>
    %24 = vector.extract_strided_slice %20 {offsets = [0, 32], sizes = [128, 32], strides = [1, 1]} : vector<128x96xf32> to vector<128x32xf32>
    %25 = vector.extract_strided_slice %20 {offsets = [0, 64], sizes = [128, 32], strides = [1, 1]} : vector<128x96xf32> to vector<128x32xf32>
    %26 = arith.mulf %24, %10 : vector<128x32xf32>
    %27 = arith.mulf %23, %22 : vector<128x32xf32>
    %28 = arith.addf %26, %27 : vector<128x32xf32>
    %29 = math.tanh %28 : vector<128x32xf32>
    %30 = arith.mulf %25, %29 : vector<128x32xf32>
    %31 = vector.extract_strided_slice %8 {offsets = [1, 0, 0], sizes = [1, 128, 128], strides = [1, 1, 1]} : vector<8x128x128xf32> to vector<1x128x128xf32>
    %32 = vector.shape_cast %31 : vector<1x128x128xf32> to vector<128x128xf32>
    %cst_12 = arith.constant dense<0.000000e+00> : vector<128x128xf32>
    %33 = tpu.matmul %30, %0, %cst_12 {dimension_numbers = #tpu.dot_dimension_numbers<[1], [0], [0], [1], [0, 0, 1, 1], [], []>} : vector<128x32xf32>, vector<32x128xf32>, vector<128x128xf32> -> vector<128x128xf32>
    %34 = arith.addf %32, %33 : vector<128x128xf32>
    %35 = vector.extract_strided_slice %34 {offsets = [0, 0], sizes = [128, 96], strides = [1, 1]} : vector<128x128xf32> to vector<128x96xf32>
    %36 = arith.negf %35 : vector<128x96xf32>
    %37 = math.exp %36 : vector<128x96xf32>
    %cst_13 = arith.constant 1.000000e+00 : f32
    %38 = vector.broadcast %cst_13 : f32 to vector<128x96xf32>
    %39 = arith.addf %38, %37 : vector<128x96xf32>
    %40 = arith.divf %38, %39 : vector<128x96xf32>
    %41 = vector.extract_strided_slice %34 {offsets = [0, 96], sizes = [128, 32], strides = [1, 1]} : vector<128x128xf32> to vector<128x32xf32>
    %42 = math.tanh %41 : vector<128x32xf32>
    %43 = vector.extract_strided_slice %40 {offsets = [0, 0], sizes = [128, 32], strides = [1, 1]} : vector<128x96xf32> to vector<128x32xf32>
    %44 = vector.extract_strided_slice %40 {offsets = [0, 32], sizes = [128, 32], strides = [1, 1]} : vector<128x96xf32> to vector<128x32xf32>
    %45 = vector.extract_strided_slice %40 {offsets = [0, 64], sizes = [128, 32], strides = [1, 1]} : vector<128x96xf32> to vector<128x32xf32>
    %46 = arith.mulf %44, %28 : vector<128x32xf32>
    %47 = arith.mulf %43, %42 : vector<128x32xf32>
    %48 = arith.addf %46, %47 : vector<128x32xf32>
    %49 = math.tanh %48 : vector<128x32xf32>
    %50 = arith.mulf %45, %49 : vector<128x32xf32>
    %51 = vector.extract_strided_slice %8 {offsets = [2, 0, 0], sizes = [1, 128, 128], strides = [1, 1, 1]} : vector<8x128x128xf32> to vector<1x128x128xf32>
    %52 = vector.shape_cast %51 : vector<1x128x128xf32> to vector<128x128xf32>
    %cst_14 = arith.constant dense<0.000000e+00> : vector<128x128xf32>
    %53 = tpu.matmul %50, %0, %cst_14 {dimension_numbers = #tpu.dot_dimension_numbers<[1], [0], [0], [1], [0, 0, 1, 1], [], []>} : vector<128x32xf32>, vector<32x128xf32>, vector<128x128xf32> -> vector<128x128xf32>
    %54 = arith.addf %52, %53 : vector<128x128xf32>
    %55 = vector.extract_strided_slice %54 {offsets = [0, 0], sizes = [128, 96], strides = [1, 1]} : vector<128x128xf32> to vector<128x96xf32>
    %56 = arith.negf %55 : vector<128x96xf32>
    %57 = math.exp %56 : vector<128x96xf32>
    %cst_15 = arith.constant 1.000000e+00 : f32
    %58 = vector.broadcast %cst_15 : f32 to vector<128x96xf32>
    %59 = arith.addf %58, %57 : vector<128x96xf32>
    %60 = arith.divf %58, %59 : vector<128x96xf32>
    %61 = vector.extract_strided_slice %54 {offsets = [0, 96], sizes = [128, 32], strides = [1, 1]} : vector<128x128xf32> to vector<128x32xf32>
    %62 = math.tanh %61 : vector<128x32xf32>
    %63 = vector.extract_strided_slice %60 {offsets = [0, 0], sizes = [128, 32], strides = [1, 1]} : vector<128x96xf32> to vector<128x32xf32>
    %64 = vector.extract_strided_slice %60 {offsets = [0, 32], sizes = [128, 32], strides = [1, 1]} : vector<128x96xf32> to vector<128x32xf32>
    %65 = vector.extract_strided_slice %60 {offsets = [0, 64], sizes = [128, 32], strides = [1, 1]} : vector<128x96xf32> to vector<128x32xf32>
    %66 = arith.mulf %64, %48 : vector<128x32xf32>
    %67 = arith.mulf %63, %62 : vector<128x32xf32>
    %68 = arith.addf %66, %67 : vector<128x32xf32>
    %69 = math.tanh %68 : vector<128x32xf32>
    %70 = arith.mulf %65, %69 : vector<128x32xf32>
    %71 = vector.extract_strided_slice %8 {offsets = [3, 0, 0], sizes = [1, 128, 128], strides = [1, 1, 1]} : vector<8x128x128xf32> to vector<1x128x128xf32>
    %72 = vector.shape_cast %71 : vector<1x128x128xf32> to vector<128x128xf32>
    %cst_16 = arith.constant dense<0.000000e+00> : vector<128x128xf32>
    %73 = tpu.matmul %70, %0, %cst_16 {dimension_numbers = #tpu.dot_dimension_numbers<[1], [0], [0], [1], [0, 0, 1, 1], [], []>} : vector<128x32xf32>, vector<32x128xf32>, vector<128x128xf32> -> vector<128x128xf32>
    %74 = arith.addf %72, %73 : vector<128x128xf32>
    %75 = vector.extract_strided_slice %74 {offsets = [0, 0], sizes = [128, 96], strides = [1, 1]} : vector<128x128xf32> to vector<128x96xf32>
    %76 = arith.negf %75 : vector<128x96xf32>
    %77 = math.exp %76 : vector<128x96xf32>
    %cst_17 = arith.constant 1.000000e+00 : f32
    %78 = vector.broadcast %cst_17 : f32 to vector<128x96xf32>
    %79 = arith.addf %78, %77 : vector<128x96xf32>
    %80 = arith.divf %78, %79 : vector<128x96xf32>
    %81 = vector.extract_strided_slice %74 {offsets = [0, 96], sizes = [128, 32], strides = [1, 1]} : vector<128x128xf32> to vector<128x32xf32>
    %82 = math.tanh %81 : vector<128x32xf32>
    %83 = vector.extract_strided_slice %80 {offsets = [0, 0], sizes = [128, 32], strides = [1, 1]} : vector<128x96xf32> to vector<128x32xf32>
    %84 = vector.extract_strided_slice %80 {offsets = [0, 32], sizes = [128, 32], strides = [1, 1]} : vector<128x96xf32> to vector<128x32xf32>
    %85 = vector.extract_strided_slice %80 {offsets = [0, 64], sizes = [128, 32], strides = [1, 1]} : vector<128x96xf32> to vector<128x32xf32>
    %86 = arith.mulf %84, %68 : vector<128x32xf32>
    %87 = arith.mulf %83, %82 : vector<128x32xf32>
    %88 = arith.addf %86, %87 : vector<128x32xf32>
    %89 = math.tanh %88 : vector<128x32xf32>
    %90 = arith.mulf %85, %89 : vector<128x32xf32>
    %91 = vector.extract_strided_slice %8 {offsets = [4, 0, 0], sizes = [1, 128, 128], strides = [1, 1, 1]} : vector<8x128x128xf32> to vector<1x128x128xf32>
    %92 = vector.shape_cast %91 : vector<1x128x128xf32> to vector<128x128xf32>
    %cst_18 = arith.constant dense<0.000000e+00> : vector<128x128xf32>
    %93 = tpu.matmul %90, %0, %cst_18 {dimension_numbers = #tpu.dot_dimension_numbers<[1], [0], [0], [1], [0, 0, 1, 1], [], []>} : vector<128x32xf32>, vector<32x128xf32>, vector<128x128xf32> -> vector<128x128xf32>
    %94 = arith.addf %92, %93 : vector<128x128xf32>
    %95 = vector.extract_strided_slice %94 {offsets = [0, 0], sizes = [128, 96], strides = [1, 1]} : vector<128x128xf32> to vector<128x96xf32>
    %96 = arith.negf %95 : vector<128x96xf32>
    %97 = math.exp %96 : vector<128x96xf32>
    %cst_19 = arith.constant 1.000000e+00 : f32
    %98 = vector.broadcast %cst_19 : f32 to vector<128x96xf32>
    %99 = arith.addf %98, %97 : vector<128x96xf32>
    %100 = arith.divf %98, %99 : vector<128x96xf32>
    %101 = vector.extract_strided_slice %94 {offsets = [0, 96], sizes = [128, 32], strides = [1, 1]} : vector<128x128xf32> to vector<128x32xf32>
    %102 = math.tanh %101 : vector<128x32xf32>
    %103 = vector.extract_strided_slice %100 {offsets = [0, 0], sizes = [128, 32], strides = [1, 1]} : vector<128x96xf32> to vector<128x32xf32>
    %104 = vector.extract_strided_slice %100 {offsets = [0, 32], sizes = [128, 32], strides = [1, 1]} : vector<128x96xf32> to vector<128x32xf32>
    %105 = vector.extract_strided_slice %100 {offsets = [0, 64], sizes = [128, 32], strides = [1, 1]} : vector<128x96xf32> to vector<128x32xf32>
    %106 = arith.mulf %104, %88 : vector<128x32xf32>
    %107 = arith.mulf %103, %102 : vector<128x32xf32>
    %108 = arith.addf %106, %107 : vector<128x32xf32>
    %109 = math.tanh %108 : vector<128x32xf32>
    %110 = arith.mulf %105, %109 : vector<128x32xf32>
    %111 = vector.extract_strided_slice %8 {offsets = [5, 0, 0], sizes = [1, 128, 128], strides = [1, 1, 1]} : vector<8x128x128xf32> to vector<1x128x128xf32>
    %112 = vector.shape_cast %111 : vector<1x128x128xf32> to vector<128x128xf32>
    %cst_20 = arith.constant dense<0.000000e+00> : vector<128x128xf32>
    %113 = tpu.matmul %110, %0, %cst_20 {dimension_numbers = #tpu.dot_dimension_numbers<[1], [0], [0], [1], [0, 0, 1, 1], [], []>} : vector<128x32xf32>, vector<32x128xf32>, vector<128x128xf32> -> vector<128x128xf32>
    %114 = arith.addf %112, %113 : vector<128x128xf32>
    %115 = vector.extract_strided_slice %114 {offsets = [0, 0], sizes = [128, 96], strides = [1, 1]} : vector<128x128xf32> to vector<128x96xf32>
    %116 = arith.negf %115 : vector<128x96xf32>
    %117 = math.exp %116 : vector<128x96xf32>
    %cst_21 = arith.constant 1.000000e+00 : f32
    %118 = vector.broadcast %cst_21 : f32 to vector<128x96xf32>
    %119 = arith.addf %118, %117 : vector<128x96xf32>
    %120 = arith.divf %118, %119 : vector<128x96xf32>
    %121 = vector.extract_strided_slice %114 {offsets = [0, 96], sizes = [128, 32], strides = [1, 1]} : vector<128x128xf32> to vector<128x32xf32>
    %122 = math.tanh %121 : vector<128x32xf32>
    %123 = vector.extract_strided_slice %120 {offsets = [0, 0], sizes = [128, 32], strides = [1, 1]} : vector<128x96xf32> to vector<128x32xf32>
    %124 = vector.extract_strided_slice %120 {offsets = [0, 32], sizes = [128, 32], strides = [1, 1]} : vector<128x96xf32> to vector<128x32xf32>
    %125 = vector.extract_strided_slice %120 {offsets = [0, 64], sizes = [128, 32], strides = [1, 1]} : vector<128x96xf32> to vector<128x32xf32>
    %126 = arith.mulf %124, %108 : vector<128x32xf32>
    %127 = arith.mulf %123, %122 : vector<128x32xf32>
    %128 = arith.addf %126, %127 : vector<128x32xf32>
    %129 = math.tanh %128 : vector<128x32xf32>
    %130 = arith.mulf %125, %129 : vector<128x32xf32>
    %131 = vector.extract_strided_slice %8 {offsets = [6, 0, 0], sizes = [1, 128, 128], strides = [1, 1, 1]} : vector<8x128x128xf32> to vector<1x128x128xf32>
    %132 = vector.shape_cast %131 : vector<1x128x128xf32> to vector<128x128xf32>
    %cst_22 = arith.constant dense<0.000000e+00> : vector<128x128xf32>
    %133 = tpu.matmul %130, %0, %cst_22 {dimension_numbers = #tpu.dot_dimension_numbers<[1], [0], [0], [1], [0, 0, 1, 1], [], []>} : vector<128x32xf32>, vector<32x128xf32>, vector<128x128xf32> -> vector<128x128xf32>
    %134 = arith.addf %132, %133 : vector<128x128xf32>
    %135 = vector.extract_strided_slice %134 {offsets = [0, 0], sizes = [128, 96], strides = [1, 1]} : vector<128x128xf32> to vector<128x96xf32>
    %136 = arith.negf %135 : vector<128x96xf32>
    %137 = math.exp %136 : vector<128x96xf32>
    %cst_23 = arith.constant 1.000000e+00 : f32
    %138 = vector.broadcast %cst_23 : f32 to vector<128x96xf32>
    %139 = arith.addf %138, %137 : vector<128x96xf32>
    %140 = arith.divf %138, %139 : vector<128x96xf32>
    %141 = vector.extract_strided_slice %134 {offsets = [0, 96], sizes = [128, 32], strides = [1, 1]} : vector<128x128xf32> to vector<128x32xf32>
    %142 = math.tanh %141 : vector<128x32xf32>
    %143 = vector.extract_strided_slice %140 {offsets = [0, 0], sizes = [128, 32], strides = [1, 1]} : vector<128x96xf32> to vector<128x32xf32>
    %144 = vector.extract_strided_slice %140 {offsets = [0, 32], sizes = [128, 32], strides = [1, 1]} : vector<128x96xf32> to vector<128x32xf32>
    %145 = vector.extract_strided_slice %140 {offsets = [0, 64], sizes = [128, 32], strides = [1, 1]} : vector<128x96xf32> to vector<128x32xf32>
    %146 = arith.mulf %144, %128 : vector<128x32xf32>
    %147 = arith.mulf %143, %142 : vector<128x32xf32>
    %148 = arith.addf %146, %147 : vector<128x32xf32>
    %149 = math.tanh %148 : vector<128x32xf32>
    %150 = arith.mulf %145, %149 : vector<128x32xf32>
    %151 = vector.extract_strided_slice %8 {offsets = [7, 0, 0], sizes = [1, 128, 128], strides = [1, 1, 1]} : vector<8x128x128xf32> to vector<1x128x128xf32>
    %152 = vector.shape_cast %151 : vector<1x128x128xf32> to vector<128x128xf32>
    %cst_24 = arith.constant dense<0.000000e+00> : vector<128x128xf32>
    %153 = tpu.matmul %150, %0, %cst_24 {dimension_numbers = #tpu.dot_dimension_numbers<[1], [0], [0], [1], [0, 0, 1, 1], [], []>} : vector<128x32xf32>, vector<32x128xf32>, vector<128x128xf32> -> vector<128x128xf32>
    %154 = arith.addf %152, %153 : vector<128x128xf32>
    %155 = vector.extract_strided_slice %154 {offsets = [0, 0], sizes = [128, 96], strides = [1, 1]} : vector<128x128xf32> to vector<128x96xf32>
    %156 = arith.negf %155 : vector<128x96xf32>
    %157 = math.exp %156 : vector<128x96xf32>
    %cst_25 = arith.constant 1.000000e+00 : f32
    %158 = vector.broadcast %cst_25 : f32 to vector<128x96xf32>
    %159 = arith.addf %158, %157 : vector<128x96xf32>
    %160 = arith.divf %158, %159 : vector<128x96xf32>
    %161 = vector.extract_strided_slice %154 {offsets = [0, 96], sizes = [128, 32], strides = [1, 1]} : vector<128x128xf32> to vector<128x32xf32>
    %162 = math.tanh %161 : vector<128x32xf32>
    %163 = vector.extract_strided_slice %160 {offsets = [0, 0], sizes = [128, 32], strides = [1, 1]} : vector<128x96xf32> to vector<128x32xf32>
    %164 = vector.extract_strided_slice %160 {offsets = [0, 32], sizes = [128, 32], strides = [1, 1]} : vector<128x96xf32> to vector<128x32xf32>
    %165 = vector.extract_strided_slice %160 {offsets = [0, 64], sizes = [128, 32], strides = [1, 1]} : vector<128x96xf32> to vector<128x32xf32>
    %166 = arith.mulf %164, %148 : vector<128x32xf32>
    %167 = arith.mulf %163, %162 : vector<128x32xf32>
    %168 = arith.addf %166, %167 : vector<128x32xf32>
    %169 = math.tanh %168 : vector<128x32xf32>
    %170 = arith.mulf %165, %169 : vector<128x32xf32>
    %c0_26 = arith.constant 0 : index
    %c0_27 = arith.constant 0 : index
    %171 = vector.load %arg3[%c0_26, %c0_27] : memref<128x1xf32, #tpu.memory_space<vmem>>, vector<128x1xf32>
    %172 = vector.broadcast %171 : vector<128x1xf32> to vector<128x32xf32>
    %173 = arith.mulf %170, %172 : vector<128x32xf32>
    %c0_28 = arith.constant 0 : index
    %c0_29 = arith.constant 0 : index
    %174 = vector.load %arg2[%c0_28, %c0_29] : memref<128x32xf32, #tpu.memory_space<vmem>>, vector<128x32xf32>
    %175 = tpu.concatenate %174, %173 in 1 : vector<128x32xf32>, vector<128x32xf32> -> vector<128x64xf32>
    %c0_30 = arith.constant 0 : index
    %c0_31 = arith.constant 0 : index
    %176 = vector.load %arg7[%c0_30, %c0_31] : memref<64x128xf32, #tpu.memory_space<vmem>>, vector<64x128xf32>
    %cst_32 = arith.constant dense<0.000000e+00> : vector<128x128xf32>
    %177 = tpu.matmul %175, %176, %cst_32 {dimension_numbers = #tpu.dot_dimension_numbers<[1], [0], [0], [1], [0, 0, 1, 1], [], []>} : vector<128x64xf32>, vector<64x128xf32>, vector<128x128xf32> -> vector<128x128xf32>
    %c0_33 = arith.constant 0 : index
    %c0_34 = arith.constant 0 : index
    %178 = vector.load %arg8[%c0_33, %c0_34] : memref<1x128xf32, #tpu.memory_space<vmem>>, vector<1x128xf32>
    %179 = vector.broadcast %178 : vector<1x128xf32> to vector<128x128xf32>
    %180 = arith.addf %177, %179 : vector<128x128xf32>
    %c0_35 = arith.constant 0 : index
    %c0_36 = arith.constant 0 : index
    %181 = vector.load %arg9[%c0_35, %c0_36] : memref<128x128xf32, #tpu.memory_space<vmem>>, vector<128x128xf32>
    tpu.vector_store %arg9[%c0_35, %c0_36], %180 {strides = array<i32>} : memref<128x128xf32, #tpu.memory_space<vmem>>, vector<128x128xf32>,
    return
  }
  func.func @transform_0(%arg0: i32) -> (i32, i32, i32) {
    %c0_i32 = arith.constant 0 : i32
    %c0_i32_0 = arith.constant 0 : i32
    %c0_i32_1 = arith.constant 0 : i32
    return %c0_i32, %arg0, %c0_i32_0 : i32, i32, i32
  }
  func.func @transform_1(%arg0: i32) -> (i32, i32) {
    %c0_i32 = arith.constant 0 : i32
    %c0_i32_0 = arith.constant 0 : i32
    return %arg0, %c0_i32 : i32, i32
  }
  func.func @transform_2(%arg0: i32) -> (i32, i32) {
    %c0_i32 = arith.constant 0 : i32
    %c0_i32_0 = arith.constant 0 : i32
    return %arg0, %c0_i32 : i32, i32
  }
  func.func @transform_3(%arg0: i32) -> (i32, i32) {
    %c0_i32 = arith.constant 0 : i32
    %c0_i32_0 = arith.constant 0 : i32
    %c0_i32_1 = arith.constant 0 : i32
    return %c0_i32, %c0_i32_0 : i32, i32
  }
  func.func @transform_4(%arg0: i32) -> (i32, i32) {
    %c0_i32 = arith.constant 0 : i32
    %c0_i32_0 = arith.constant 0 : i32
    %c0_i32_1 = arith.constant 0 : i32
    return %c0_i32, %c0_i32_0 : i32, i32
  }
  func.func @transform_5(%arg0: i32) -> (i32, i32) {
    %c0_i32 = arith.constant 0 : i32
    %c0_i32_0 = arith.constant 0 : i32
    %c0_i32_1 = arith.constant 0 : i32
    return %c0_i32, %c0_i32_0 : i32, i32
  }
  func.func @transform_6(%arg0: i32) -> (i32, i32) {
    %c0_i32 = arith.constant 0 : i32
    %c0_i32_0 = arith.constant 0 : i32
    %c0_i32_1 = arith.constant 0 : i32
    return %c0_i32, %c0_i32_0 : i32, i32
  }
  func.func @transform_7(%arg0: i32) -> (i32, i32) {
    %c0_i32 = arith.constant 0 : i32
    %c0_i32_0 = arith.constant 0 : i32
    %c0_i32_1 = arith.constant 0 : i32
    return %c0_i32, %c0_i32_0 : i32, i32
  }
  func.func @transform_8(%arg0: i32) -> (i32, i32) {
    %c0_i32 = arith.constant 0 : i32
    %c0_i32_0 = arith.constant 0 : i32
    return %arg0, %c0_i32 : i32, i32
  }
}

</mosaic_0001>

<llo_original>
// kernel: tpu_custom_call.1
$region0: #{tpu_custom_call.1}
  #allocation0 [shape = 'u32[]', space=smem, size = 0x4, offset = 0x4, fixed_abs, tag = 'smem constant byte address 0x4 - core index']
  #allocation1 [shape = 'u32[72,128]{1,0:T(1,128)}', space=vmem, size = 0x9000, scoped, tag = 'internal scratch']
  %s0 = inlined_call_operand.vmem [shape: f32[8,256,32], index: 0, kind: input, shape index: {}]
  %s1 = inlined_call_operand.vmem [shape: f32[256,32], index: 1, kind: input, shape index: {}]
  %s2 = inlined_call_operand.vmem [shape: f32[256,1], index: 2, kind: input, shape index: {}]
  %s3 = inlined_call_operand.vmem [shape: f32[32,128], index: 3, kind: input, shape index: {}]
  %s4 = inlined_call_operand.vmem [shape: f32[32,128], index: 4, kind: input, shape index: {}]
  %s5 = inlined_call_operand.vmem [shape: f32[1,128], index: 5, kind: input, shape index: {}]
  %s6 = inlined_call_operand.vmem [shape: f32[64,128], index: 6, kind: input, shape index: {}]
  %s7 = inlined_call_operand.vmem [shape: f32[1,128], index: 7, kind: input, shape index: {}]
  %s8 = inlined_call_operand.hbm [shape: f32[256,128], index: 8, kind: output, shape index: {}]
  %s9 = sld [smem:[#allocation0]]
  $region103: #{tpu_custom_call.1} parent=0
    _
  %s11 = ssub.s32 1, %s9
  %s12 = scalar_select 0, %s11, %s9
  $region1: #{tpu_custom_call.1} parent=0
    #allocation2 [shape = 'u8[1048576]{0}', space=vmem, size = 0x100000, scoped, tag = 'input window, operand 0']
    #allocation3 [shape = 'u8[131072]{0}', space=vmem, size = 0x20000, scoped, tag = 'output window, operand 0']
    #allocation4 [shape = 's32[2]{0}', space=sflag, size = 0x8, scoped, tag = 'scoped memory for tpu_custom_call.1']
    %13 = vsyncpa [#allocation4], 0
    %s14 = scalar_lea.sflag [#allocation4], 1
    %15 = vsyncpa %s14, 0
    loop: start=0, step=1, limit=4
    $region2: #{tpu_custom_call.1} parent=1 // loop_pre_header
      _
    $region3: #{tpu_custom_call.1} parent=1 // loop_header
      %s17 = sphi 0, %s21
      %p18 = scmp.ge.s32.totalorder %s17, 4
      %s27 = sphi 0, %s29
      %s30 = sphi 0, %s27
      %s31 = sphi 0, %s30
      %s47 = sphi 0, %s31
      %s53 = sphi 0, %s55
      %s56 = sphi 0, %s53
      %s57 = sphi 0, %s56
      %s73 = sphi 0, %s57
      %s79 = sphi 0, %s81
      %s82 = sphi 0, %s79
      %s83 = sphi 0, %s82
      %s99 = sphi 0, %s83
      %s103 = sphi 0, %s103
      %s105 = sphi 0, %s103
      %s106 = sphi 0, %s105
      %s120 = sphi 0, %s106
      %s124 = sphi 0, %s124
      %s126 = sphi 0, %s124
      %s127 = sphi 0, %s126
      %s141 = sphi 0, %s127
      %s145 = sphi 0, %s145
      %s147 = sphi 0, %s145
      %s148 = sphi 0, %s147
      %s162 = sphi 0, %s148
      %s166 = sphi 0, %s166
      %s168 = sphi 0, %s166
      %s169 = sphi 0, %s168
      %s183 = sphi 0, %s169
      %s187 = sphi 0, %s187
      %s189 = sphi 0, %s187
      %s190 = sphi 0, %s189
      %s204 = sphi 0, %s190
      %s210 = sphi 0, %s212
      %s213 = sphi 0, %s210
      %s214 = sphi 0, %s213
      %s230 = sphi 0, %s214
    $region4: #{tpu_custom_call.1} parent=1 // loop_header_branch
      %20 = sbr.rel (%p18) target = $region8
    $region5: #{tpu_custom_call.1} parent=1 // loop_body
      %s22 = ssub.s32 %s17, 1
      %s23 = ssub.s32 %s17, 2
      %s24 = sadd.s32 %s17, 1
      %s25 = ssub.s32 %s17, %s24
      %p26 = scmp.eq.s32.totalorder %s25, 0
      %s28 = sadd.s32 %s27, 1
      %s29 = scalar_select %p26, %s27, %s28
      %p32 = pneg %p26
      %p33 = scmp.eq.s32.totalorder %s17, 1
      %p34 = por %p32, %p33
      %p35 = scmp.ne.s32.totalorder %s27, %s30
      %p36 = scmp.eq.s32.totalorder %s17, 0
      %p37 = por %p35, %p36
      %p38 = scmp.ne.s32.totalorder %s27, %s30
      %p39 = scmp.eq.s32.totalorder %s22, 1
      %p40 = por %p38, %p39
      %p41 = scmp.ne.s32.totalorder %s30, %s31
      %p42 = scmp.eq.s32.totalorder %s22, 0
      %p43 = por %p41, %p42
      %p44 = scmp.ne.s32.totalorder %s30, %s31
      %p45 = scmp.eq.s32.totalorder %s23, 1
      %p46 = por %p44, %p45
      %p48 = scmp.ne.s32.totalorder %s31, %s47
      %p49 = scmp.eq.s32.totalorder %s23, 0
      %p50 = por %p48, %p49
      %s51 = ssub.s32 %s17, %s24
      %p52 = scmp.eq.s32.totalorder %s51, 0
      %s54 = sadd.s32 %s53, 1
      %s55 = scalar_select %p52, %s53, %s54
      %p58 = pneg %p52
      %p59 = scmp.eq.s32.totalorder %s17, 1
      %p60 = por %p58, %p59
      %p61 = scmp.ne.s32.totalorder %s53, %s56
      %p62 = scmp.eq.s32.totalorder %s17, 0
      %p63 = por %p61, %p62
      %p64 = scmp.ne.s32.totalorder %s53, %s56
      %p65 = scmp.eq.s32.totalorder %s22, 1
      %p66 = por %p64, %p65
      %p67 = scmp.ne.s32.totalorder %s56, %s57
      %p68 = scmp.eq.s32.totalorder %s22, 0
      %p69 = por %p67, %p68
      %p70 = scmp.ne.s32.totalorder %s56, %s57
      %p71 = scmp.eq.s32.totalorder %s23, 1
      %p72 = por %p70, %p71
      %p74 = scmp.ne.s32.totalorder %s57, %s73
      %p75 = scmp.eq.s32.totalorder %s23, 0
      %p76 = por %p74, %p75
      %s77 = ssub.s32 %s17, %s24
      %p78 = scmp.eq.s32.totalorder %s77, 0
      %s80 = sadd.s32 %s79, 1
      %s81 = scalar_select %p78, %s79, %s80
      %p84 = pneg %p78
      %p85 = scmp.eq.s32.totalorder %s17, 1
      %p86 = por %p84, %p85
      %p87 = scmp.ne.s32.totalorder %s79, %s82
      %p88 = scmp.eq.s32.totalorder %s17, 0
      %p89 = por %p87, %p88
      %p90 = scmp.ne.s32.totalorder %s79, %s82
      %p91 = scmp.eq.s32.totalorder %s22, 1
      %p92 = por %p90, %p91
      %p93 = scmp.ne.s32.totalorder %s82, %s83
      %p94 = scmp.eq.s32.totalorder %s22, 0
      %p95 = por %p93, %p94
      %p96 = scmp.ne.s32.totalorder %s82, %s83
      %p97 = scmp.eq.s32.totalorder %s23, 1
      %p98 = por %p96, %p97
      %p100 = scmp.ne.s32.totalorder %s83, %s99
      %p101 = scmp.eq.s32.totalorder %s23, 0
      %p102 = por %p100, %p101
      %s104 = sadd.s32 %s103, 1
      %p107 = scmp.eq.s32.totalorder %s17, 1
      %p108 = scmp.ne.s32.totalorder %s103, %s105
      %p109 = scmp.eq.s32.totalorder %s17, 0
      %p110 = por %p108, %p109
      %p111 = scmp.ne.s32.totalorder %s103, %s105
      %p112 = scmp.eq.s32.totalorder %s22, 1
      %p113 = por %p111, %p112
      %p114 = scmp.ne.s32.totalorder %s105, %s106
      %p115 = scmp.eq.s32.totalorder %s22, 0
      %p116 = por %p114, %p115
      %p117 = scmp.ne.s32.totalorder %s105, %s106
      %p118 = scmp.eq.s32.totalorder %s23, 1
      %p119 = por %p117, %p118
      %p121 = scmp.ne.s32.totalorder %s106, %s120
      %p122 = scmp.eq.s32.totalorder %s23, 0
      %p123 = por %p121, %p122
      %s125 = sadd.s32 %s124, 1
      %p128 = scmp.eq.s32.totalorder %s17, 1
      %p129 = scmp.ne.s32.totalorder %s124, %s126
      %p130 = scmp.eq.s32.totalorder %s17, 0
      %p131 = por %p129, %p130
      %p132 = scmp.ne.s32.totalorder %s124, %s126
      %p133 = scmp.eq.s32.totalorder %s22, 1
      %p134 = por %p132, %p133
      %p135 = scmp.ne.s32.totalorder %s126, %s127
      %p136 = scmp.eq.s32.totalorder %s22, 0
      %p137 = por %p135, %p136
      %p138 = scmp.ne.s32.totalorder %s126, %s127
      %p139 = scmp.eq.s32.totalorder %s23, 1
      %p140 = por %p138, %p139
      %p142 = scmp.ne.s32.totalorder %s127, %s141
      %p143 = scmp.eq.s32.totalorder %s23, 0
      %p144 = por %p142, %p143
      %s146 = sadd.s32 %s145, 1
      %p149 = scmp.eq.s32.totalorder %s17, 1
      %p150 = scmp.ne.s32.totalorder %s145, %s147
      %p151 = scmp.eq.s32.totalorder %s17, 0
      %p152 = por %p150, %p151
      %p153 = scmp.ne.s32.totalorder %s145, %s147
      %p154 = scmp.eq.s32.totalorder %s22, 1
      %p155 = por %p153, %p154
      %p156 = scmp.ne.s32.totalorder %s147, %s148
      %p157 = scmp.eq.s32.totalorder %s22, 0
      %p158 = por %p156, %p157
      %p159 = scmp.ne.s32.totalorder %s147, %s148
      %p160 = scmp.eq.s32.totalorder %s23, 1
      %p161 = por %p159, %p160
      %p163 = scmp.ne.s32.totalorder %s148, %s162
      %p164 = scmp.eq.s32.totalorder %s23, 0
      %p165 = por %p163, %p164
      %s167 = sadd.s32 %s166, 1
      %p170 = scmp.eq.s32.totalorder %s17, 1
      %p171 = scmp.ne.s32.totalorder %s166, %s168
      %p172 = scmp.eq.s32.totalorder %s17, 0
      %p173 = por %p171, %p172
      %p174 = scmp.ne.s32.totalorder %s166, %s168
      %p175 = scmp.eq.s32.totalorder %s22, 1
      %p176 = por %p174, %p175
      %p177 = scmp.ne.s32.totalorder %s168, %s169
      %p178 = scmp.eq.s32.totalorder %s22, 0
      %p179 = por %p177, %p178
      %p180 = scmp.ne.s32.totalorder %s168, %s169
      %p181 = scmp.eq.s32.totalorder %s23, 1
      %p182 = por %p180, %p181
      %p184 = scmp.ne.s32.totalorder %s169, %s183
      %p185 = scmp.eq.s32.totalorder %s23, 0
      %p186 = por %p184, %p185
      %s188 = sadd.s32 %s187, 1
      %p191 = scmp.eq.s32.totalorder %s17, 1
      %p192 = scmp.ne.s32.totalorder %s187, %s189
      %p193 = scmp.eq.s32.totalorder %s17, 0
      %p194 = por %p192, %p193
      %p195 = scmp.ne.s32.totalorder %s187, %s189
      %p196 = scmp.eq.s32.totalorder %s22, 1
      %p197 = por %p195, %p196
      %p198 = scmp.ne.s32.totalorder %s189, %s190
      %p199 = scmp.eq.s32.totalorder %s22, 0
      %p200 = por %p198, %p199
      %p201 = scmp.ne.s32.totalorder %s189, %s190
      %p202 = scmp.eq.s32.totalorder %s23, 1
      %p203 = por %p201, %p202
      %p205 = scmp.ne.s32.totalorder %s190, %s204
      %p206 = scmp.eq.s32.totalorder %s23, 0
      %p207 = por %p205, %p206
      %s208 = ssub.s32 %s17, %s24
      %p209 = scmp.eq.s32.totalorder %s208, 0
      %s211 = sadd.s32 %s210, 1
      %s212 = scalar_select %p209, %s210, %s211
      %p215 = pneg %p209
      %p216 = scmp.eq.s32.totalorder %s17, 1
      %p217 = por %p215, %p216
      %p218 = scmp.ne.s32.totalorder %s210, %s213
      %p219 = scmp.eq.s32.totalorder %s17, 0
      %p220 = por %p218, %p219
      %p221 = scmp.ne.s32.totalorder %s210, %s213
      %p222 = scmp.eq.s32.totalorder %s22, 1
      %p223 = por %p221, %p222
      %p224 = scmp.ne.s32.totalorder %s213, %s214
      %p225 = scmp.eq.s32.totalorder %s22, 0
      %p226 = por %p224, %p225
      %p227 = scmp.ne.s32.totalorder %s213, %s214
      %p228 = scmp.eq.s32.totalorder %s23, 1
      %p229 = por %p227, %p228
      %p231 = scmp.ne.s32.totalorder %s214, %s230
      %p232 = scmp.eq.s32.totalorder %s23, 0
      %p233 = por %p231, %p232
      %p234 = scmp.le.s32.totalorder 1, %s17
      %p235 = scmp.lt.s32.totalorder %s17, 3
      %p236 = pnand %p234, %p235
      %p237 = pneg %p236
      // Predicated region
      $region9: #{tpu_custom_call.1} parent=5 // pred_check
        _
      $region10: #{tpu_custom_call.1} parent=5 // pred_check_branch
        %239 = sbr.rel (%p236) target = $region12
      $region11: #{tpu_custom_call.1} parent=5 // pred_region
        %s240 = ssub.s32 %s17, 1
        // Predicated region
        $region13: #{tpu_custom_call.1} parent=11 // pred_check
          %p241 = pneg %p116
        $region14: #{tpu_custom_call.1} parent=11 // pred_check_branch
          %243 = sbr.rel (%p241) target = $region16
        $region15: #{tpu_custom_call.1} parent=11 // pred_region
          _
        $region16: #{tpu_custom_call.1} parent=11 // pred_fallthru
          _
        // Predicated region
        $region17: #{tpu_custom_call.1} parent=11 // pred_check
          %p244 = pneg %p137
        $region18: #{tpu_custom_call.1} parent=11 // pred_check_branch
          %246 = sbr.rel (%p244) target = $region20
        $region19: #{tpu_custom_call.1} parent=11 // pred_region
          _
        $region20: #{tpu_custom_call.1} parent=11 // pred_fallthru
          _
        // Predicated region
        $region21: #{tpu_custom_call.1} parent=11 // pred_check
          %p247 = pneg %p158
        $region22: #{tpu_custom_call.1} parent=11 // pred_check_branch
          %249 = sbr.rel (%p247) target = $region24
        $region23: #{tpu_custom_call.1} parent=11 // pred_region
          _
        $region24: #{tpu_custom_call.1} parent=11 // pred_fallthru
          _
        // Predicated region
        $region25: #{tpu_custom_call.1} parent=11 // pred_check
          %p250 = pneg %p179
        $region26: #{tpu_custom_call.1} parent=11 // pred_check_branch
          %252 = sbr.rel (%p250) target = $region28
        $region27: #{tpu_custom_call.1} parent=11 // pred_region
          _
        $region28: #{tpu_custom_call.1} parent=11 // pred_fallthru
          _
        // Predicated region
        $region29: #{tpu_custom_call.1} parent=11 // pred_check
          %p253 = pneg %p200
        $region30: #{tpu_custom_call.1} parent=11 // pred_check_branch
          %255 = sbr.rel (%p253) target = $region32
        $region31: #{tpu_custom_call.1} parent=11 // pred_region
          _
        $region32: #{tpu_custom_call.1} parent=11 // pred_fallthru
          _
      $region12: #{tpu_custom_call.1} parent=5 // pred_fallthru
        _
      %p256 = scmp.lt.s32.totalorder %s17, 2
      // Predicated region
      $region33: #{tpu_custom_call.1} parent=5 // pred_check
        %p257 = pneg %p256
      $region34: #{tpu_custom_call.1} parent=5 // pred_check_branch
        %259 = sbr.rel (%p257) target = $region36
      $region35: #{tpu_custom_call.1} parent=5 // pred_region
        // Predicated region
        $region37: #{tpu_custom_call.1} parent=35 // pred_check
          %p260 = pneg %p37
        $region38: #{tpu_custom_call.1} parent=35 // pred_check_branch
          %262 = sbr.rel (%p260) target = $region40
        $region39: #{tpu_custom_call.1} parent=35 // pred_region
          %s263 = sand.u32 %s27, 1
          %s264 = sand.u32 %s27, 1
          %s265 = smul.addr %s264, 1024
          %s266 = scalar_lea.vmem [#allocation2], %s265
          %s267 = smul.u32 16, %s17
          %s268 = smul.addr %s267, 8
          %s269 = scalar_lea.vmem %s0, %s268
          // Predicated region
          $region41: #{tpu_custom_call.1} parent=39 // pred_check
            _
          $region42: #{tpu_custom_call.1} parent=39 // pred_check_branch
            %271 = sbr.rel (0) target = $region44
          $region43: #{tpu_custom_call.1} parent=39 // pred_region
            // Predicated region
            $region45: #{tpu_custom_call.1} parent=43 // pred_check
              _
            $region46: #{tpu_custom_call.1} parent=43 // pred_check_branch
              %273 = sbr.rel (0) target = $region48
            $region47: #{tpu_custom_call.1} parent=43 // pred_region
              // Predicated region
              $region60: #{tpu_custom_call.1} parent=47 // pred_check
                _
              $region61: #{tpu_custom_call.1} parent=47 // pred_check_branch
                %543 = sbr.rel (0) target = $region63
              $region62: #{tpu_custom_call.1} parent=47 // pred_region
                loop: start=0, step=1, limit=1
                $region64: #{tpu_custom_call.1} parent=62 // loop_pre_header
                  _
                $region65: #{tpu_custom_call.1} parent=62 // loop_header
                  %s545 = sphi 0, %s549
                  %p546 = scmp.ge.s32.totalorder %s545, 1
                  %s550 = sphi %s269, %s269
                  %s551 = sphi %s266, %s266
                $region66: #{tpu_custom_call.1} parent=62 // loop_header_branch
                  %548 = sbr.rel (%p546) target = $region70
                $region67: #{tpu_custom_call.1} parent=62 // loop_body
                  %v552 = vld [vmem:[%s550] sm:$0xff]
                  %553 = vst [vmem:[%s551] sm:$0xff] %v552
                  %v554 = vld [vmem:[%s550 + $0x8] sm:$0xff]
                  %555 = vst [vmem:[%s551 + $0x8] sm:$0xff] %v554
                  %v556 = vld [vmem:[%s550 + $0x10] sm:$0xff]
                  %557 = vst [vmem:[%s551 + $0x10] sm:$0xff] %v556
                  %v558 = vld [vmem:[%s550 + $0x18] sm:$0xff]
                  %559 = vst [vmem:[%s551 + $0x18] sm:$0xff] %v558
                  %v560 = vld [vmem:[%s550 + $0x20] sm:$0xff]
                  %561 = vst [vmem:[%s551 + $0x20] sm:$0xff] %v560
                  %v562 = vld [vmem:[%s550 + $0x28] sm:$0xff]
                  %563 = vst [vmem:[%s551 + $0x28] sm:$0xff] %v562
                  %v564 = vld [vmem:[%s550 + $0x30] sm:$0xff]
                  %565 = vst [vmem:[%s551 + $0x30] sm:$0xff] %v564
                  %v566 = vld [vmem:[%s550 + $0x38] sm:$0xff]
                  %567 = vst [vmem:[%s551 + $0x38] sm:$0xff] %v566
                  %v568 = vld [vmem:[%s550 + $0x40] sm:$0xff]
                  %569 = vst [vmem:[%s551 + $0x40] sm:$0xff] %v568
                  %v570 = vld [vmem:[%s550 + $0x48] sm:$0xff]
                  %571 = vst [vmem:[%s551 + $0x48] sm:$0xff] %v570
                  %v572 = vld [vmem:[%s550 + $0x50] sm:$0xff]
                  %573 = vst [vmem:[%s551 + $0x50] sm:$0xff] %v572
                  %v574 = vld [vmem:[%s550 + $0x58] sm:$0xff]
                  %575 = vst [vmem:[%s551 + $0x58] sm:$0xff] %v574
                  %v576 = vld [vmem:[%s550 + $0x60] sm:$0xff]
                  %577 = vst [vmem:[%s551 + $0x60] sm:$0xff] %v576
                  %v578 = vld [vmem:[%s550 + $0x68] sm:$0xff]
                  %579 = vst [vmem:[%s551 + $0x68] sm:$0xff] %v578
                  %v580 = vld [vmem:[%s550 + $0x70] sm:$0xff]
                  %581 = vst [vmem:[%s551 + $0x70] sm:$0xff] %v580
                  %v582 = vld [vmem:[%s550 + $0x78] sm:$0xff]
                  %583 = vst [vmem:[%s551 + $0x78] sm:$0xff] %v582
                  %v584 = vld [vmem:[%s550 + $0x100] sm:$0xff]
                  %585 = vst [vmem:[%s551 + $0x80] sm:$0xff] %v584
                  %v586 = vld [vmem:[%s550 + $0x108] sm:$0xff]
                  %587 = vst [vmem:[%s551 + $0x88] sm:$0xff] %v586
                  %v588 = vld [vmem:[%s550 + $0x110] sm:$0xff]
                  %589 = vst [vmem:[%s551 + $0x90] sm:$0xff] %v588
                  %v590 = vld [vmem:[%s550 + $0x118] sm:$0xff]
                  %591 = vst [vmem:[%s551 + $0x98] sm:$0xff] %v590
                  %v592 = vld [vmem:[%s550 + $0x120] sm:$0xff]
                  %593 = vst [vmem:[%s551 + $0xa0] sm:$0xff] %v592
                  %v594 = vld [vmem:[%s550 + $0x128] sm:$0xff]
                  %595 = vst [vmem:[%s551 + $0xa8] sm:$0xff] %v594
                  %v596 = vld [vmem:[%s550 + $0x130] sm:$0xff]
                  %597 = vst [vmem:[%s551 + $0xb0] sm:$0xff] %v596
                  %v598 = vld [vmem:[%s550 + $0x138] sm:$0xff]
                  %599 = vst [vmem:[%s551 + $0xb8] sm:$0xff] %v598
                  %v600 = vld [vmem:[%s550 + $0x140] sm:$0xff]
                  %601 = vst [vmem:[%s551 + $0xc0] sm:$0xff] %v600
                  %v602 = vld [vmem:[%s550 + $0x148] sm:$0xff]
                  %603 = vst [vmem:[%s551 + $0xc8] sm:$0xff] %v602
                  %v604 = vld [vmem:[%s550 + $0x150] sm:$0xff]
                  %605 = vst [vmem:[%s551 + $0xd0] sm:$0xff] %v604
                  %v606 = vld [vmem:[%s550 + $0x158] sm:$0xff]
                  %607 = vst [vmem:[%s551 + $0xd8] sm:$0xff] %v606
                  %v608 = vld [vmem:[%s550 + $0x160] sm:$0xff]
                  %609 = vst [vmem:[%s551 + $0xe0] sm:$0xff] %v608
                  %v610 = vld [vmem:[%s550 + $0x168] sm:$0xff]
                  %611 = vst [vmem:[%s551 + $0xe8] sm:$0xff] %v610
                  %v612 = vld [vmem:[%s550 + $0x170] sm:$0xff]
                  %613 = vst [vmem:[%s551 + $0xf0] sm:$0xff] %v612
                  %v614 = vld [vmem:[%s550 + $0x178] sm:$0xff]
                  %615 = vst [vmem:[%s551 + $0xf8] sm:$0xff] %v614
                  %v616 = vld [vmem:[%s550 + $0x200] sm:$0xff]
                  %617 = vst [vmem:[%s551 + $0x100] sm:$0xff] %v616
                  %v618 = vld [vmem:[%s550 + $0x208] sm:$0xff]
                  %619 = vst [vmem:[%s551 + $0x108] sm:$0xff] %v618
                  %v620 = vld [vmem:[%s550 + $0x210] sm:$0xff]
                  %621 = vst [vmem:[%s551 + $0x110] sm:$0xff] %v620
                  %v622 = vld [vmem:[%s550 + $0x218] sm:$0xff]
                  %623 = vst [vmem:[%s551 + $0x118] sm:$0xff] %v622
                  %v624 = vld [vmem:[%s550 + $0x220] sm:$0xff]
                  %625 = vst [vmem:[%s551 + $0x120] sm:$0xff] %v624
                  %v626 = vld [vmem:[%s550 + $0x228] sm:$0xff]
                  %627 = vst [vmem:[%s551 + $0x128] sm:$0xff] %v626
                  %v628 = vld [vmem:[%s550 + $0x230] sm:$0xff]
                  %629 = vst [vmem:[%s551 + $0x130] sm:$0xff] %v628
                  %v630 = vld [vmem:[%s550 + $0x238] sm:$0xff]
                  %631 = vst [vmem:[%s551 + $0x138] sm:$0xff] %v630
                  %v632 = vld [vmem:[%s550 + $0x240] sm:$0xff]
                  %633 = vst [vmem:[%s551 + $0x140] sm:$0xff] %v632
                  %v634 = vld [vmem:[%s550 + $0x248] sm:$0xff]
                  %635 = vst [vmem:[%s551 + $0x148] sm:$0xff] %v634
                  %v636 = vld [vmem:[%s550 + $0x250] sm:$0xff]
                  %637 = vst [vmem:[%s551 + $0x150] sm:$0xff] %v636
                  %v638 = vld [vmem:[%s550 + $0x258] sm:$0xff]
                  %639 = vst [vmem:[%s551 + $0x158] sm:$0xff] %v638
                  %v640 = vld [vmem:[%s550 + $0x260] sm:$0xff]
                  %641 = vst [vmem:[%s551 + $0x160] sm:$0xff] %v640
                  %v642 = vld [vmem:[%s550 + $0x268] sm:$0xff]
                  %643 = vst [vmem:[%s551 + $0x168] sm:$0xff] %v642
                  %v644 = vld [vmem:[%s550 + $0x270] sm:$0xff]
                  %645 = vst [vmem:[%s551 + $0x170] sm:$0xff] %v644
                  %v646 = vld [vmem:[%s550 + $0x278] sm:$0xff]
                  %647 = vst [vmem:[%s551 + $0x178] sm:$0xff] %v646
                  %v648 = vld [vmem:[%s550 + $0x300] sm:$0xff]
                  %649 = vst [vmem:[%s551 + $0x180] sm:$0xff] %v648
                  %v650 = vld [vmem:[%s550 + $0x308] sm:$0xff]
                  %651 = vst [vmem:[%s551 + $0x188] sm:$0xff] %v650
                  %v652 = vld [vmem:[%s550 + $0x310] sm:$0xff]
                  %653 = vst [vmem:[%s551 + $0x190] sm:$0xff] %v652
                  %v654 = vld [vmem:[%s550 + $0x318] sm:$0xff]
                  %655 = vst [vmem:[%s551 + $0x198] sm:$0xff] %v654
                  %v656 = vld [vmem:[%s550 + $0x320] sm:$0xff]
                  %657 = vst [vmem:[%s551 + $0x1a0] sm:$0xff] %v656
                  %v658 = vld [vmem:[%s550 + $0x328] sm:$0xff]
                  %659 = vst [vmem:[%s551 + $0x1a8] sm:$0xff] %v658
                  %v660 = vld [vmem:[%s550 + $0x330] sm:$0xff]
                  %661 = vst [vmem:[%s551 + $0x1b0] sm:$0xff] %v660
                  %v662 = vld [vmem:[%s550 + $0x338] sm:$0xff]
                  %663 = vst [vmem:[%s551 + $0x1b8] sm:$0xff] %v662
                  %v664 = vld [vmem:[%s550 + $0x340] sm:$0xff]
                  %665 = vst [vmem:[%s551 + $0x1c0] sm:$0xff] %v664
                  %v666 = vld [vmem:[%s550 + $0x348] sm:$0xff]
                  %667 = vst [vmem:[%s551 + $0x1c8] sm:$0xff] %v666
                  %v668 = vld [vmem:[%s550 + $0x350] sm:$0xff]
                  %669 = vst [vmem:[%s551 + $0x1d0] sm:$0xff] %v668
                  %v670 = vld [vmem:[%s550 + $0x358] sm:$0xff]
                  %671 = vst [vmem:[%s551 + $0x1d8] sm:$0xff] %v670
                  %v672 = vld [vmem:[%s550 + $0x360] sm:$0xff]
                  %673 = vst [vmem:[%s551 + $0x1e0] sm:$0xff] %v672
                  %v674 = vld [vmem:[%s550 + $0x368] sm:$0xff]
                  %675 = vst [vmem:[%s551 + $0x1e8] sm:$0xff] %v674
                  %v676 = vld [vmem:[%s550 + $0x370] sm:$0xff]
                  %677 = vst [vmem:[%s551 + $0x1f0] sm:$0xff] %v676
                  %v678 = vld [vmem:[%s550 + $0x378] sm:$0xff]
                  %679 = vst [vmem:[%s551 + $0x1f8] sm:$0xff] %v678
                  %v680 = vld [vmem:[%s550 + $0x400] sm:$0xff]
                  %681 = vst [vmem:[%s551 + $0x200] sm:$0xff] %v680
                  %v682 = vld [vmem:[%s550 + $0x408] sm:$0xff]
                  %683 = vst [vmem:[%s551 + $0x208] sm:$0xff] %v682
                  %v684 = vld [vmem:[%s550 + $0x410] sm:$0xff]
                  %685 = vst [vmem:[%s551 + $0x210] sm:$0xff] %v684
                  %v686 = vld [vmem:[%s550 + $0x418] sm:$0xff]
                  %687 = vst [vmem:[%s551 + $0x218] sm:$0xff] %v686
                  %v688 = vld [vmem:[%s550 + $0x420] sm:$0xff]
                  %689 = vst [vmem:[%s551 + $0x220] sm:$0xff] %v688
                  %v690 = vld [vmem:[%s550 + $0x428] sm:$0xff]
                  %691 = vst [vmem:[%s551 + $0x228] sm:$0xff] %v690
                  %v692 = vld [vmem:[%s550 + $0x430] sm:$0xff]
                  %693 = vst [vmem:[%s551 + $0x230] sm:$0xff] %v692
                  %v694 = vld [vmem:[%s550 + $0x438] sm:$0xff]
                  %695 = vst [vmem:[%s551 + $0x238] sm:$0xff] %v694
                  %v696 = vld [vmem:[%s550 + $0x440] sm:$0xff]
                  %697 = vst [vmem:[%s551 + $0x240] sm:$0xff] %v696
                  %v698 = vld [vmem:[%s550 + $0x448] sm:$0xff]
                  %699 = vst [vmem:[%s551 + $0x248] sm:$0xff] %v698
                  %v700 = vld [vmem:[%s550 + $0x450] sm:$0xff]
                  %701 = vst [vmem:[%s551 + $0x250] sm:$0xff] %v700
                  %v702 = vld [vmem:[%s550 + $0x458] sm:$0xff]
                  %703 = vst [vmem:[%s551 + $0x258] sm:$0xff] %v702
                  %v704 = vld [vmem:[%s550 + $0x460] sm:$0xff]
                  %705 = vst [vmem:[%s551 + $0x260] sm:$0xff] %v704
                  %v706 = vld [vmem:[%s550 + $0x468] sm:$0xff]
                  %707 = vst [vmem:[%s551 + $0x268] sm:$0xff] %v706
                  %v708 = vld [vmem:[%s550 + $0x470] sm:$0xff]
                  %709 = vst [vmem:[%s551 + $0x270] sm:$0xff] %v708
                  %v710 = vld [vmem:[%s550 + $0x478] sm:$0xff]
                  %711 = vst [vmem:[%s551 + $0x278] sm:$0xff] %v710
                  %v712 = vld [vmem:[%s550 + $0x500] sm:$0xff]
                  %713 = vst [vmem:[%s551 + $0x280] sm:$0xff] %v712
                  %v714 = vld [vmem:[%s550 + $0x508] sm:$0xff]
                  %715 = vst [vmem:[%s551 + $0x288] sm:$0xff] %v714
                  %v716 = vld [vmem:[%s550 + $0x510] sm:$0xff]
                  %717 = vst [vmem:[%s551 + $0x290] sm:$0xff] %v716
                  %v718 = vld [vmem:[%s550 + $0x518] sm:$0xff]
                  %719 = vst [vmem:[%s551 + $0x298] sm:$0xff] %v718
                  %v720 = vld [vmem:[%s550 + $0x520] sm:$0xff]
                  %721 = vst [vmem:[%s551 + $0x2a0] sm:$0xff] %v720
                  %v722 = vld [vmem:[%s550 + $0x528] sm:$0xff]
                  %723 = vst [vmem:[%s551 + $0x2a8] sm:$0xff] %v722
                  %v724 = vld [vmem:[%s550 + $0x530] sm:$0xff]
                  %725 = vst [vmem:[%s551 + $0x2b0] sm:$0xff] %v724
                  %v726 = vld [vmem:[%s550 + $0x538] sm:$0xff]
                  %727 = vst [vmem:[%s551 + $0x2b8] sm:$0xff] %v726
                  %v728 = vld [vmem:[%s550 + $0x540] sm:$0xff]
                  %729 = vst [vmem:[%s551 + $0x2c0] sm:$0xff] %v728
                  %v730 = vld [vmem:[%s550 + $0x548] sm:$0xff]
                  %731 = vst [vmem:[%s551 + $0x2c8] sm:$0xff] %v730
                  %v732 = vld [vmem:[%s550 + $0x550] sm:$0xff]
                  %733 = vst [vmem:[%s551 + $0x2d0] sm:$0xff] %v732
                  %v734 = vld [vmem:[%s550 + $0x558] sm:$0xff]
                  %735 = vst [vmem:[%s551 + $0x2d8] sm:$0xff] %v734
                  %v736 = vld [vmem:[%s550 + $0x560] sm:$0xff]
                  %737 = vst [vmem:[%s551 + $0x2e0] sm:$0xff] %v736
                  %v738 = vld [vmem:[%s550 + $0x568] sm:$0xff]
                  %739 = vst [vmem:[%s551 + $0x2e8] sm:$0xff] %v738
                  %v740 = vld [vmem:[%s550 + $0x570] sm:$0xff]
                  %741 = vst [vmem:[%s551 + $0x2f0] sm:$0xff] %v740
                  %v742 = vld [vmem:[%s550 + $0x578] sm:$0xff]
                  %743 = vst [vmem:[%s551 + $0x2f8] sm:$0xff] %v742
                  %v744 = vld [vmem:[%s550 + $0x600] sm:$0xff]
                  %745 = vst [vmem:[%s551 + $0x300] sm:$0xff] %v744
                  %v746 = vld [vmem:[%s550 + $0x608] sm:$0xff]
                  %747 = vst [vmem:[%s551 + $0x308] sm:$0xff] %v746
                  %v748 = vld [vmem:[%s550 + $0x610] sm:$0xff]
                  %749 = vst [vmem:[%s551 + $0x310] sm:$0xff] %v748
                  %v750 = vld [vmem:[%s550 + $0x618] sm:$0xff]
                  %751 = vst [vmem:[%s551 + $0x318] sm:$0xff] %v750
                  %v752 = vld [vmem:[%s550 + $0x620] sm:$0xff]
                  %753 = vst [vmem:[%s551 + $0x320] sm:$0xff] %v752
                  %v754 = vld [vmem:[%s550 + $0x628] sm:$0xff]
                  %755 = vst [vmem:[%s551 + $0x328] sm:$0xff] %v754
                  %v756 = vld [vmem:[%s550 + $0x630] sm:$0xff]
                  %757 = vst [vmem:[%s551 + $0x330] sm:$0xff] %v756
                  %v758 = vld [vmem:[%s550 + $0x638] sm:$0xff]
                  %759 = vst [vmem:[%s551 + $0x338] sm:$0xff] %v758
                  %v760 = vld [vmem:[%s550 + $0x640] sm:$0xff]
                  %761 = vst [vmem:[%s551 + $0x340] sm:$0xff] %v760
                  %v762 = vld [vmem:[%s550 + $0x648] sm:$0xff]
                  %763 = vst [vmem:[%s551 + $0x348] sm:$0xff] %v762
                  %v764 = vld [vmem:[%s550 + $0x650] sm:$0xff]
                  %765 = vst [vmem:[%s551 + $0x350] sm:$0xff] %v764
                  %v766 = vld [vmem:[%s550 + $0x658] sm:$0xff]
                  %767 = vst [vmem:[%s551 + $0x358] sm:$0xff] %v766
                  %v768 = vld [vmem:[%s550 + $0x660] sm:$0xff]
                  %769 = vst [vmem:[%s551 + $0x360] sm:$0xff] %v768
                  %v770 = vld [vmem:[%s550 + $0x668] sm:$0xff]
                  %771 = vst [vmem:[%s551 + $0x368] sm:$0xff] %v770
                  %v772 = vld [vmem:[%s550 + $0x670] sm:$0xff]
                  %773 = vst [vmem:[%s551 + $0x370] sm:$0xff] %v772
                  %v774 = vld [vmem:[%s550 + $0x678] sm:$0xff]
                  %775 = vst [vmem:[%s551 + $0x378] sm:$0xff] %v774
                  %v776 = vld [vmem:[%s550 + $0x700] sm:$0xff]
                  %777 = vst [vmem:[%s551 + $0x380] sm:$0xff] %v776
                  %v778 = vld [vmem:[%s550 + $0x708] sm:$0xff]
                  %779 = vst [vmem:[%s551 + $0x388] sm:$0xff] %v778
                  %v780 = vld [vmem:[%s550 + $0x710] sm:$0xff]
                  %781 = vst [vmem:[%s551 + $0x390] sm:$0xff] %v780
                  %v782 = vld [vmem:[%s550 + $0x718] sm:$0xff]
                  %783 = vst [vmem:[%s551 + $0x398] sm:$0xff] %v782
                  %v784 = vld [vmem:[%s550 + $0x720] sm:$0xff]
                  %785 = vst [vmem:[%s551 + $0x3a0] sm:$0xff] %v784
                  %v786 = vld [vmem:[%s550 + $0x728] sm:$0xff]
                  %787 = vst [vmem:[%s551 + $0x3a8] sm:$0xff] %v786
                  %v788 = vld [vmem:[%s550 + $0x730] sm:$0xff]
                  %789 = vst [vmem:[%s551 + $0x3b0] sm:$0xff] %v788
                  %v790 = vld [vmem:[%s550 + $0x738] sm:$0xff]
                  %791 = vst [vmem:[%s551 + $0x3b8] sm:$0xff] %v790
                  %v792 = vld [vmem:[%s550 + $0x740] sm:$0xff]
                  %793 = vst [vmem:[%s551 + $0x3c0] sm:$0xff] %v792
                  %v794 = vld [vmem:[%s550 + $0x748] sm:$0xff]
                  %795 = vst [vmem:[%s551 + $0x3c8] sm:$0xff] %v794
                  %v796 = vld [vmem:[%s550 + $0x750] sm:$0xff]
                  %797 = vst [vmem:[%s551 + $0x3d0] sm:$0xff] %v796
                  %v798 = vld [vmem:[%s550 + $0x758] sm:$0xff]
                  %799 = vst [vmem:[%s551 + $0x3d8] sm:$0xff] %v798
                  %v800 = vld [vmem:[%s550 + $0x760] sm:$0xff]
                  %801 = vst [vmem:[%s551 + $0x3e0] sm:$0xff] %v800
                  %v802 = vld [vmem:[%s550 + $0x768] sm:$0xff]
                  %803 = vst [vmem:[%s551 + $0x3e8] sm:$0xff] %v802
                  %v804 = vld [vmem:[%s550 + $0x770] sm:$0xff]
                  %805 = vst [vmem:[%s551 + $0x3f0] sm:$0xff] %v804
                  %v806 = vld [vmem:[%s550 + $0x778] sm:$0xff]
                  %807 = vst [vmem:[%s551 + $0x3f8] sm:$0xff] %v806
                $region68: #{tpu_custom_call.1} parent=62 // loop_footer
                  %s549 = sadd.s32 1, %s545
                $region69: #{tpu_custom_call.1} parent=62 // loop_footer_branch
                  %544 = sbr.rel target = $region65
                $region70: #{tpu_custom_call.1} parent=62 // loop_exit
                  _
              $region63: #{tpu_custom_call.1} parent=47 // pred_fallthru
                _
              // Predicated region
              $region71: #{tpu_custom_call.1} parent=47 // pred_check
                _
              $region72: #{tpu_custom_call.1} parent=47 // pred_check_branch
                %809 = sbr.rel target = $region74
              $region73: #{tpu_custom_call.1} parent=47 // pred_region
                _
              $region74: #{tpu_custom_call.1} parent=47 // pred_fallthru
                _
            $region48: #{tpu_custom_call.1} parent=43 // pred_fallthru
              _
            // Predicated region
            $region49: #{tpu_custom_call.1} parent=43 // pred_check
              _
            $region50: #{tpu_custom_call.1} parent=43 // pred_check_branch
              %275 = sbr.rel target = $region52
            $region51: #{tpu_custom_call.1} parent=43 // pred_region
              %s277 = ssub.s32 256, 1
              loop: start=0, step=1, limit=1
              $region53: #{tpu_custom_call.1} parent=51 // loop_pre_header
                _
              $region54: #{tpu_custom_call.1} parent=51 // loop_header
                %s279 = sphi 0, %s283
                %p280 = scmp.ge.s32.totalorder %s279, 1
                %s284 = sphi %s269, %s269
                %s285 = sphi %s266, %s266
              $region55: #{tpu_custom_call.1} parent=51 // loop_header_branch
                %282 = sbr.rel (%p280) target = $region59
              $region56: #{tpu_custom_call.1} parent=51 // loop_body
                %v286 = vld [vmem:[%s284] sm:%s277]
                %287 = vst [vmem:[%s285] sm:%s277] %v286
                %v288 = vld [vmem:[%s284 + $0x8] sm:%s277]
                %289 = vst [vmem:[%s285 + $0x8] sm:%s277] %v288
                %v290 = vld [vmem:[%s284 + $0x10] sm:%s277]
                %291 = vst [vmem:[%s285 + $0x10] sm:%s277] %v290
                %v292 = vld [vmem:[%s284 + $0x18] sm:%s277]
                %293 = vst [vmem:[%s285 + $0x18] sm:%s277] %v292
                %v294 = vld [vmem:[%s284 + $0x20] sm:%s277]
                %295 = vst [vmem:[%s285 + $0x20] sm:%s277] %v294
                %v296 = vld [vmem:[%s284 + $0x28] sm:%s277]
                %297 = vst [vmem:[%s285 + $0x28] sm:%s277] %v296
                %v298 = vld [vmem:[%s284 + $0x30] sm:%s277]
                %299 = vst [vmem:[%s285 + $0x30] sm:%s277] %v298
                %v300 = vld [vmem:[%s284 + $0x38] sm:%s277]
                %301 = vst [vmem:[%s285 + $0x38] sm:%s277] %v300
                %v302 = vld [vmem:[%s284 + $0x40] sm:%s277]
                %303 = vst [vmem:[%s285 + $0x40] sm:%s277] %v302
                %v304 = vld [vmem:[%s284 + $0x48] sm:%s277]
                %305 = vst [vmem:[%s285 + $0x48] sm:%s277] %v304
                %v306 = vld [vmem:[%s284 + $0x50] sm:%s277]
                %307 = vst [vmem:[%s285 + $0x50] sm:%s277] %v306
                %v308 = vld [vmem:[%s284 + $0x58] sm:%s277]
                %309 = vst [vmem:[%s285 + $0x58] sm:%s277] %v308
                %v310 = vld [vmem:[%s284 + $0x60] sm:%s277]
                %311 = vst [vmem:[%s285 + $0x60] sm:%s277] %v310
                %v312 = vld [vmem:[%s284 + $0x68] sm:%s277]
                %313 = vst [vmem:[%s285 + $0x68] sm:%s277] %v312
                %v314 = vld [vmem:[%s284 + $0x70] sm:%s277]
                %315 = vst [vmem:[%s285 + $0x70] sm:%s277] %v314
                %v316 = vld [vmem:[%s284 + $0x78] sm:%s277]
                %317 = vst [vmem:[%s285 + $0x78] sm:%s277] %v316
                %v318 = vld [vmem:[%s284 + $0x100] sm:%s277]
                %319 = vst [vmem:[%s285 + $0x80] sm:%s277] %v318
                %v320 = vld [vmem:[%s284 + $0x108] sm:%s277]
                %321 = vst [vmem:[%s285 + $0x88] sm:%s277] %v320
                %v322 = vld [vmem:[%s284 + $0x110] sm:%s277]
                %323 = vst [vmem:[%s285 + $0x90] sm:%s277] %v322
                %v324 = vld [vmem:[%s284 + $0x118] sm:%s277]
                %325 = vst [vmem:[%s285 + $0x98] sm:%s277] %v324
                %v326 = vld [vmem:[%s284 + $0x120] sm:%s277]
                %327 = vst [vmem:[%s285 + $0xa0] sm:%s277] %v326
                %v328 = vld [vmem:[%s284 + $0x128] sm:%s277]
                %329 = vst [vmem:[%s285 + $0xa8] sm:%s277] %v328
                %v330 = vld [vmem:[%s284 + $0x130] sm:%s277]
                %331 = vst [vmem:[%s285 + $0xb0] sm:%s277] %v330
                %v332 = vld [vmem:[%s284 + $0x138] sm:%s277]
                %333 = vst [vmem:[%s285 + $0xb8] sm:%s277] %v332
                %v334 = vld [vmem:[%s284 + $0x140] sm:%s277]
                %335 = vst [vmem:[%s285 + $0xc0] sm:%s277] %v334
                %v336 = vld [vmem:[%s284 + $0x148] sm:%s277]
                %337 = vst [vmem:[%s285 + $0xc8] sm:%s277] %v336
                %v338 = vld [vmem:[%s284 + $0x150] sm:%s277]
                %339 = vst [vmem:[%s285 + $0xd0] sm:%s277] %v338
                %v340 = vld [vmem:[%s284 + $0x158] sm:%s277]
                %341 = vst [vmem:[%s285 + $0xd8] sm:%s277] %v340
                %v342 = vld [vmem:[%s284 + $0x160] sm:%s277]
                %343 = vst [vmem:[%s285 + $0xe0] sm:%s277] %v342
                %v344 = vld [vmem:[%s284 + $0x168] sm:%s277]
                %345 = vst [vmem:[%s285 + $0xe8] sm:%s277] %v344
                %v346 = vld [vmem:[%s284 + $0x170] sm:%s277]
                %347 = vst [vmem:[%s285 + $0xf0] sm:%s277] %v346
                %v348 = vld [vmem:[%s284 + $0x178] sm:%s277]
                %349 = vst [vmem:[%s285 + $0xf8] sm:%s277] %v348
                %v350 = vld [vmem:[%s284 + $0x200] sm:%s277]
                %351 = vst [vmem:[%s285 + $0x100] sm:%s277] %v350
                %v352 = vld [vmem:[%s284 + $0x208] sm:%s277]
                %353 = vst [vmem:[%s285 + $0x108] sm:%s277] %v352
                %v354 = vld [vmem:[%s284 + $0x210] sm:%s277]
                %355 = vst [vmem:[%s285 + $0x110] sm:%s277] %v354
                %v356 = vld [vmem:[%s284 + $0x218] sm:%s277]
                %357 = vst [vmem:[%s285 + $0x118] sm:%s277] %v356
                %v358 = vld [vmem:[%s284 + $0x220] sm:%s277]
                %359 = vst [vmem:[%s285 + $0x120] sm:%s277] %v358
                %v360 = vld [vmem:[%s284 + $0x228] sm:%s277]
                %361 = vst [vmem:[%s285 + $0x128] sm:%s277] %v360
                %v362 = vld [vmem:[%s284 + $0x230] sm:%s277]
                %363 = vst [vmem:[%s285 + $0x130] sm:%s277] %v362
                %v364 = vld [vmem:[%s284 + $0x238] sm:%s277]
                %365 = vst [vmem:[%s285 + $0x138] sm:%s277] %v364
                %v366 = vld [vmem:[%s284 + $0x240] sm:%s277]
                %367 = vst [vmem:[%s285 + $0x140] sm:%s277] %v366
                %v368 = vld [vmem:[%s284 + $0x248] sm:%s277]
                %369 = vst [vmem:[%s285 + $0x148] sm:%s277] %v368
                %v370 = vld [vmem:[%s284 + $0x250] sm:%s277]
                %371 = vst [vmem:[%s285 + $0x150] sm:%s277] %v370
                %v372 = vld [vmem:[%s284 + $0x258] sm:%s277]
                %373 = vst [vmem:[%s285 + $0x158] sm:%s277] %v372
                %v374 = vld [vmem:[%s284 + $0x260] sm:%s277]
                %375 = vst [vmem:[%s285 + $0x160] sm:%s277] %v374
                %v376 = vld [vmem:[%s284 + $0x268] sm:%s277]
                %377 = vst [vmem:[%s285 + $0x168] sm:%s277] %v376
                %v378 = vld [vmem:[%s284 + $0x270] sm:%s277]
                %379 = vst [vmem:[%s285 + $0x170] sm:%s277] %v378
                %v380 = vld [vmem:[%s284 + $0x278] sm:%s277]
                %381 = vst [vmem:[%s285 + $0x178] sm:%s277] %v380
                %v382 = vld [vmem:[%s284 + $0x300] sm:%s277]
                %383 = vst [vmem:[%s285 + $0x180] sm:%s277] %v382
                %v384 = vld [vmem:[%s284 + $0x308] sm:%s277]
                %385 = vst [vmem:[%s285 + $0x188] sm:%s277] %v384
                %v386 = vld [vmem:[%s284 + $0x310] sm:%s277]
                %387 = vst [vmem:[%s285 + $0x190] sm:%s277] %v386
                %v388 = vld [vmem:[%s284 + $0x318] sm:%s277]
                %389 = vst [vmem:[%s285 + $0x198] sm:%s277] %v388
                %v390 = vld [vmem:[%s284 + $0x320] sm:%s277]
                %391 = vst [vmem:[%s285 + $0x1a0] sm:%s277] %v390
                %v392 = vld [vmem:[%s284 + $0x328] sm:%s277]
                %393 = vst [vmem:[%s285 + $0x1a8] sm:%s277] %v392
                %v394 = vld [vmem:[%s284 + $0x330] sm:%s277]
                %395 = vst [vmem:[%s285 + $0x1b0] sm:%s277] %v394
                %v396 = vld [vmem:[%s284 + $0x338] sm:%s277]
                %397 = vst [vmem:[%s285 + $0x1b8] sm:%s277] %v396
                %v398 = vld [vmem:[%s284 + $0x340] sm:%s277]
                %399 = vst [vmem:[%s285 + $0x1c0] sm:%s277] %v398
                %v400 = vld [vmem:[%s284 + $0x348] sm:%s277]
                %401 = vst [vmem:[%s285 + $0x1c8] sm:%s277] %v400
                %v402 = vld [vmem:[%s284 + $0x350] sm:%s277]
                %403 = vst [vmem:[%s285 + $0x1d0] sm:%s277] %v402
                %v404 = vld [vmem:[%s284 + $0x358] sm:%s277]
                %405 = vst [vmem:[%s285 + $0x1d8] sm:%s277] %v404
                %v406 = vld [vmem:[%s284 + $0x360] sm:%s277]
                %407 = vst [vmem:[%s285 + $0x1e0] sm:%s277] %v406
                %v408 = vld [vmem:[%s284 + $0x368] sm:%s277]
                %409 = vst [vmem:[%s285 + $0x1e8] sm:%s277] %v408
                %v410 = vld [vmem:[%s284 + $0x370] sm:%s277]
                %411 = vst [vmem:[%s285 + $0x1f0] sm:%s277] %v410
                %v412 = vld [vmem:[%s284 + $0x378] sm:%s277]
                %413 = vst [vmem:[%s285 + $0x1f8] sm:%s277] %v412
                %v414 = vld [vmem:[%s284 + $0x400] sm:%s277]
                %415 = vst [vmem:[%s285 + $0x200] sm:%s277] %v414
                %v416 = vld [vmem:[%s284 + $0x408] sm:%s277]
                %417 = vst [vmem:[%s285 + $0x208] sm:%s277] %v416
                %v418 = vld [vmem:[%s284 + $0x410] sm:%s277]
                %419 = vst [vmem:[%s285 + $0x210] sm:%s277] %v418
                %v420 = vld [vmem:[%s284 + $0x418] sm:%s277]
                %421 = vst [vmem:[%s285 + $0x218] sm:%s277] %v420
                %v422 = vld [vmem:[%s284 + $0x420] sm:%s277]
                %423 = vst [vmem:[%s285 + $0x220] sm:%s277] %v422
                %v424 = vld [vmem:[%s284 + $0x428] sm:%s277]
                %425 = vst [vmem:[%s285 + $0x228] sm:%s277] %v424
                %v426 = vld [vmem:[%s284 + $0x430] sm:%s277]
                %427 = vst [vmem:[%s285 + $0x230] sm:%s277] %v426
                %v428 = vld [vmem:[%s284 + $0x438] sm:%s277]
                %429 = vst [vmem:[%s285 + $0x238] sm:%s277] %v428
                %v430 = vld [vmem:[%s284 + $0x440] sm:%s277]
                %431 = vst [vmem:[%s285 + $0x240] sm:%s277] %v430
                %v432 = vld [vmem:[%s284 + $0x448] sm:%s277]
                %433 = vst [vmem:[%s285 + $0x248] sm:%s277] %v432
                %v434 = vld [vmem:[%s284 + $0x450] sm:%s277]
                %435 = vst [vmem:[%s285 + $0x250] sm:%s277] %v434
                %v436 = vld [vmem:[%s284 + $0x458] sm:%s277]
                %437 = vst [vmem:[%s285 + $0x258] sm:%s277] %v436
                %v438 = vld [vmem:[%s284 + $0x460] sm:%s277]
                %439 = vst [vmem:[%s285 + $0x260] sm:%s277] %v438
                %v440 = vld [vmem:[%s284 + $0x468] sm:%s277]
                %441 = vst [vmem:[%s285 + $0x268] sm:%s277] %v440
                %v442 = vld [vmem:[%s284 + $0x470] sm:%s277]
                %443 = vst [vmem:[%s285 + $0x270] sm:%s277] %v442
                %v444 = vld [vmem:[%s284 + $0x478] sm:%s277]
                %445 = vst [vmem:[%s285 + $0x278] sm:%s277] %v444
                %v446 = vld [vmem:[%s284 + $0x500] sm:%s277]
                %447 = vst [vmem:[%s285 + $0x280] sm:%s277] %v446
                %v448 = vld [vmem:[%s284 + $0x508] sm:%s277]
                %449 = vst [vmem:[%s285 + $0x288] sm:%s277] %v448
                %v450 = vld [vmem:[%s284 + $0x510] sm:%s277]
                %451 = vst [vmem:[%s285 + $0x290] sm:%s277] %v450
                %v452 = vld [vmem:[%s284 + $0x518] sm:%s277]
                %453 = vst [vmem:[%s285 + $0x298] sm:%s277] %v452
                %v454 = vld [vmem:[%s284 + $0x520] sm:%s277]
                %455 = vst [vmem:[%s285 + $0x2a0] sm:%s277] %v454
                %v456 = vld [vmem:[%s284 + $0x528] sm:%s277]
                %457 = vst [vmem:[%s285 + $0x2a8] sm:%s277] %v456
                %v458 = vld [vmem:[%s284 + $0x530] sm:%s277]
                %459 = vst [vmem:[%s285 + $0x2b0] sm:%s277] %v458
                %v460 = vld [vmem:[%s284 + $0x538] sm:%s277]
                %461 = vst [vmem:[%s285 + $0x2b8] sm:%s277] %v460
                %v462 = vld [vmem:[%s284 + $0x540] sm:%s277]
                %463 = vst [vmem:[%s285 + $0x2c0] sm:%s277] %v462
                %v464 = vld [vmem:[%s284 + $0x548] sm:%s277]
                %465 = vst [vmem:[%s285 + $0x2c8] sm:%s277] %v464
                %v466 = vld [vmem:[%s284 + $0x550] sm:%s277]
                %467 = vst [vmem:[%s285 + $0x2d0] sm:%s277] %v466
                %v468 = vld [vmem:[%s284 + $0x558] sm:%s277]
                %469 = vst [vmem:[%s285 + $0x2d8] sm:%s277] %v468
                %v470 = vld [vmem:[%s284 + $0x560] sm:%s277]
                %471 = vst [vmem:[%s285 + $0x2e0] sm:%s277] %v470
                %v472 = vld [vmem:[%s284 + $0x568] sm:%s277]
                %473 = vst [vmem:[%s285 + $0x2e8] sm:%s277] %v472
                %v474 = vld [vmem:[%s284 + $0x570] sm:%s277]
                %475 = vst [vmem:[%s285 + $0x2f0] sm:%s277] %v474
                %v476 = vld [vmem:[%s284 + $0x578] sm:%s277]
                %477 = vst [vmem:[%s285 + $0x2f8] sm:%s277] %v476
                %v478 = vld [vmem:[%s284 + $0x600] sm:%s277]
                %479 = vst [vmem:[%s285 + $0x300] sm:%s277] %v478
                %v480 = vld [vmem:[%s284 + $0x608] sm:%s277]
                %481 = vst [vmem:[%s285 + $0x308] sm:%s277] %v480
                %v482 = vld [vmem:[%s284 + $0x610] sm:%s277]
                %483 = vst [vmem:[%s285 + $0x310] sm:%s277] %v482
                %v484 = vld [vmem:[%s284 + $0x618] sm:%s277]
                %485 = vst [vmem:[%s285 + $0x318] sm:%s277] %v484
                %v486 = vld [vmem:[%s284 + $0x620] sm:%s277]
                %487 = vst [vmem:[%s285 + $0x320] sm:%s277] %v486
                %v488 = vld [vmem:[%s284 + $0x628] sm:%s277]
                %489 = vst [vmem:[%s285 + $0x328] sm:%s277] %v488
                %v490 = vld [vmem:[%s284 + $0x630] sm:%s277]
                %491 = vst [vmem:[%s285 + $0x330] sm:%s277] %v490
                %v492 = vld [vmem:[%s284 + $0x638] sm:%s277]
                %493 = vst [vmem:[%s285 + $0x338] sm:%s277] %v492
                %v494 = vld [vmem:[%s284 + $0x640] sm:%s277]
                %495 = vst [vmem:[%s285 + $0x340] sm:%s277] %v494
                %v496 = vld [vmem:[%s284 + $0x648] sm:%s277]
                %497 = vst [vmem:[%s285 + $0x348] sm:%s277] %v496
                %v498 = vld [vmem:[%s284 + $0x650] sm:%s277]
                %499 = vst [vmem:[%s285 + $0x350] sm:%s277] %v498
                %v500 = vld [vmem:[%s284 + $0x658] sm:%s277]
                %501 = vst [vmem:[%s285 + $0x358] sm:%s277] %v500
                %v502 = vld [vmem:[%s284 + $0x660] sm:%s277]
                %503 = vst [vmem:[%s285 + $0x360] sm:%s277] %v502
                %v504 = vld [vmem:[%s284 + $0x668] sm:%s277]
                %505 = vst [vmem:[%s285 + $0x368] sm:%s277] %v504
                %v506 = vld [vmem:[%s284 + $0x670] sm:%s277]
                %507 = vst [vmem:[%s285 + $0x370] sm:%s277] %v506
                %v508 = vld [vmem:[%s284 + $0x678] sm:%s277]
                %509 = vst [vmem:[%s285 + $0x378] sm:%s277] %v508
                %v510 = vld [vmem:[%s284 + $0x700] sm:%s277]
                %511 = vst [vmem:[%s285 + $0x380] sm:%s277] %v510
                %v512 = vld [vmem:[%s284 + $0x708] sm:%s277]
                %513 = vst [vmem:[%s285 + $0x388] sm:%s277] %v512
                %v514 = vld [vmem:[%s284 + $0x710] sm:%s277]
                %515 = vst [vmem:[%s285 + $0x390] sm:%s277] %v514
                %v516 = vld [vmem:[%s284 + $0x718] sm:%s277]
                %517 = vst [vmem:[%s285 + $0x398] sm:%s277] %v516
                %v518 = vld [vmem:[%s284 + $0x720] sm:%s277]
                %519 = vst [vmem:[%s285 + $0x3a0] sm:%s277] %v518
                %v520 = vld [vmem:[%s284 + $0x728] sm:%s277]
                %521 = vst [vmem:[%s285 + $0x3a8] sm:%s277] %v520
                %v522 = vld [vmem:[%s284 + $0x730] sm:%s277]
                %523 = vst [vmem:[%s285 + $0x3b0] sm:%s277] %v522
                %v524 = vld [vmem:[%s284 + $0x738] sm:%s277]
                %525 = vst [vmem:[%s285 + $0x3b8] sm:%s277] %v524
                %v526 = vld [vmem:[%s284 + $0x740] sm:%s277]
                %527 = vst [vmem:[%s285 + $0x3c0] sm:%s277] %v526
                %v528 = vld [vmem:[%s284 + $0x748] sm:%s277]
                %529 = vst [vmem:[%s285 + $0x3c8] sm:%s277] %v528
                %v530 = vld [vmem:[%s284 + $0x750] sm:%s277]
                %531 = vst [vmem:[%s285 + $0x3d0] sm:%s277] %v530
                %v532 = vld [vmem:[%s284 + $0x758] sm:%s277]
                %533 = vst [vmem:[%s285 + $0x3d8] sm:%s277] %v532
                %v534 = vld [vmem:[%s284 + $0x760] sm:%s277]
                %535 = vst [vmem:[%s285 + $0x3e0] sm:%s277] %v534
                %v536 = vld [vmem:[%s284 + $0x768] sm:%s277]
                %537 = vst [vmem:[%s285 + $0x3e8] sm:%s277] %v536
                %v538 = vld [vmem:[%s284 + $0x770] sm:%s277]
                %539 = vst [vmem:[%s285 + $0x3f0] sm:%s277] %v538
                %v540 = vld [vmem:[%s284 + $0x778] sm:%s277]
                %541 = vst [vmem:[%s285 + $0x3f8] sm:%s277] %v540
              $region57: #{tpu_custom_call.1} parent=51 // loop_footer
                %s283 = sadd.s32 1, %s279
              $region58: #{tpu_custom_call.1} parent=51 // loop_footer_branch
                %278 = sbr.rel target = $region54
              $region59: #{tpu_custom_call.1} parent=51 // loop_exit
                _
            $region52: #{tpu_custom_call.1} parent=43 // pred_fallthru
              _
          $region44: #{tpu_custom_call.1} parent=39 // pred_fallthru
            _
          %810 = vnop
        $region40: #{tpu_custom_call.1} parent=35 // pred_fallthru
          _
        // Predicated region
        $region75: #{tpu_custom_call.1} parent=35 // pred_check
          %p811 = pneg %p63
        $region76: #{tpu_custom_call.1} parent=35 // pred_check_branch
          %813 = sbr.rel (%p811) target = $region78
        $region77: #{tpu_custom_call.1} parent=35 // pred_region
          %s814 = smul.u32 16, %s17
          %p815 = scmp.lt.s32.totalorder %s814, 31
          %s816 = scalar_select %p815, %s814, 31
          %s817 = smul.addr %s816, 8
          %s818 = scalar_lea.vmem %s1, %s817
          %s819 = smul.u32 16, %s17
        $region78: #{tpu_custom_call.1} parent=35 // pred_fallthru
          _
        // Predicated region
        $region79: #{tpu_custom_call.1} parent=35 // pred_check
          %p820 = pneg %p89
        $region80: #{tpu_custom_call.1} parent=35 // pred_check_branch
          %822 = sbr.rel (%p820) target = $region82
        $region81: #{tpu_custom_call.1} parent=35 // pred_region
          %s823 = smul.u32 16, %s17
          %p824 = scmp.lt.s32.totalorder %s823, 31
          %s825 = scalar_select %p824, %s823, 31
          %s826 = smul.addr %s825, 8
          %s827 = scalar_lea.vmem %s2, %s826
          %s828 = smul.u32 16, %s17
        $region82: #{tpu_custom_call.1} parent=35 // pred_fallthru
          _
      $region36: #{tpu_custom_call.1} parent=5 // pred_fallthru
        _
      %p829 = scmp.le.s32.totalorder 1, %s17
      %p830 = scmp.lt.s32.totalorder %s17, 3
      %p831 = pnand %p829, %p830
      %p832 = pneg %p831
      // Predicated region
      $region83: #{tpu_custom_call.1} parent=5 // pred_check
        _
      $region84: #{tpu_custom_call.1} parent=5 // pred_check_branch
        %834 = sbr.rel (%p831) target = $region86
      $region85: #{tpu_custom_call.1} parent=5 // pred_region
        %s835 = ssub.s32 %s17, 1
        %s836 = sand.u32 %s30, 1
        %s837 = sand.u32 %s30, 1
        %s838 = smul.addr %s837, 1024
        %s839 = scalar_lea.vmem [#allocation2], %s838
        // Predicated region
        $region87: #{tpu_custom_call.1} parent=85 // pred_check
          %p840 = pneg %p43
        $region88: #{tpu_custom_call.1} parent=85 // pred_check_branch
          %842 = sbr.rel (%p840) target = $region90
        $region89: #{tpu_custom_call.1} parent=85 // pred_region
          _
        $region90: #{tpu_custom_call.1} parent=85 // pred_fallthru
          _
        %s843 = sand.u32 %s30, 1
        %s844 = sand.u32 %s30, 1
        %s845 = smul.addr %s844, 1024
        %s846 = scalar_lea.vmem [#allocation2], %s845
        %p847 = pneg %p43
        %p848 = pneg %p40
        %s849 = smul.u32 16, %s22
        %p850 = scmp.lt.s32.totalorder %s849, 31
        %s851 = scalar_select %p850, %s849, 31
        %s852 = smul.addr %s851, 8
        %s853 = scalar_lea.vmem %s1, %s852
        %p854 = pneg %p69
        %p855 = pneg %p66
        %s856 = smul.u32 16, %s22
        %p857 = scmp.lt.s32.totalorder %s856, 31
        %s858 = scalar_select %p857, %s856, 31
        %s859 = smul.addr %s858, 8
        %s860 = scalar_lea.vmem %s2, %s859
        %p861 = pneg %p95
        %p862 = pneg %p92
        %p863 = pneg %p116
        %p864 = pneg %p113
        %p865 = pneg %p137
        %p866 = pneg %p134
        %p867 = pneg %p158
        %p868 = pneg %p155
        %p869 = pneg %p179
        %p870 = pneg %p176
        %p871 = pneg %p200
        %p872 = pneg %p197
        %p873 = pneg %p226
        %p874 = pneg %p223
        %s875 = sand.u32 %s213, 1
        %s876 = scalar_lea.sflag [#allocation4], %s875
        %s877 = sand.u32 %s213, 1
        %s878 = smul.addr %s877, 128
        %s879 = scalar_lea.vmem [#allocation3], %s878
        %s880 = smul.u32 16, %s22
        %s881 = smul.u32 16, %s22
        %p882 = scmp.lt.s32.totalorder %s881, 31
        %s883 = scalar_select %p882, %s881, 31
        %s884 = smul.addr %s883, 8
        %s885 = scalar_lea.vmem %s1, %s884
        %s886 = smul.u32 16, %s22
        %s887 = smul.u32 16, %s22
        %p888 = scmp.lt.s32.totalorder %s887, 31
        %s889 = scalar_select %p888, %s887, 31
        %s890 = smul.addr %s889, 8
        %s891 = scalar_lea.vmem %s2, %s890
        %s892 = smul.u32 16, %s22
        %s893 = smul.u32 16, %s22
        %v894 = vld [vmem:[%s4] sm:$0xff]
        %v895 = vld [vmem:[%s4 + $0x8] sm:$0xff]
        %v896 = vld [vmem:[%s4 + $0x10] sm:$0xff]
        %v897 = vld [vmem:[%s4 + $0x18] sm:$0xff]
        %v898 = vld [vmem:[%s839] sm:$0xff]
        %v899 = vld [vmem:[%s839 + $0x8] sm:$0xff]
        %v900 = vld [vmem:[%s839 + $0x10] sm:$0xff]
        %v901 = vld [vmem:[%s839 + $0x18] sm:$0xff]
        %v902 = vld [vmem:[%s839 + $0x20] sm:$0xff]
        %v903 = vld [vmem:[%s839 + $0x28] sm:$0xff]
        %v904 = vld [vmem:[%s839 + $0x30] sm:$0xff]
        %v905 = vld [vmem:[%s839 + $0x38] sm:$0xff]
        %v906 = vld [vmem:[%s839 + $0x40] sm:$0xff]
        %v907 = vld [vmem:[%s839 + $0x48] sm:$0xff]
        %v908 = vld [vmem:[%s839 + $0x50] sm:$0xff]
        %v909 = vld [vmem:[%s839 + $0x58] sm:$0xff]
        %v910 = vld [vmem:[%s839 + $0x60] sm:$0xff]
        %v911 = vld [vmem:[%s839 + $0x68] sm:$0xff]
        %v912 = vld [vmem:[%s839 + $0x70] sm:$0xff]
        %v913 = vld [vmem:[%s839 + $0x78] sm:$0xff]
        %v914 = vld [vmem:[%s839 + $0x80] sm:$0xff]
        %v915 = vld [vmem:[%s839 + $0x88] sm:$0xff]
        %v916 = vld [vmem:[%s839 + $0x90] sm:$0xff]
        %v917 = vld [vmem:[%s839 + $0x98] sm:$0xff]
        %v918 = vld [vmem:[%s839 + $0xa0] sm:$0xff]
        %v919 = vld [vmem:[%s839 + $0xa8] sm:$0xff]
        %v920 = vld [vmem:[%s839 + $0xb0] sm:$0xff]
        %v921 = vld [vmem:[%s839 + $0xb8] sm:$0xff]
        %v922 = vld [vmem:[%s839 + $0xc0] sm:$0xff]
        %v923 = vld [vmem:[%s839 + $0xc8] sm:$0xff]
        %v924 = vld [vmem:[%s839 + $0xd0] sm:$0xff]
        %v925 = vld [vmem:[%s839 + $0xd8] sm:$0xff]
        %v926 = vld [vmem:[%s839 + $0xe0] sm:$0xff]
        %v927 = vld [vmem:[%s839 + $0xe8] sm:$0xff]
        %v928 = vld [vmem:[%s839 + $0xf0] sm:$0xff]
        %v929 = vld [vmem:[%s839 + $0xf8] sm:$0xff]
        %v930 = vld [vmem:[%s839 + $0x100] sm:$0xff]
        %v931 = vld [vmem:[%s839 + $0x108] sm:$0xff]
        %v932 = vld [vmem:[%s839 + $0x110] sm:$0xff]
        %v933 = vld [vmem:[%s839 + $0x118] sm:$0xff]
        %v934 = vld [vmem:[%s839 + $0x120] sm:$0xff]
        %v935 = vld [vmem:[%s839 + $0x128] sm:$0xff]
        %v936 = vld [vmem:[%s839 + $0x130] sm:$0xff]
        %v937 = vld [vmem:[%s839 + $0x138] sm:$0xff]
        %v938 = vld [vmem:[%s839 + $0x140] sm:$0xff]
        %v939 = vld [vmem:[%s839 + $0x148] sm:$0xff]
        %v940 = vld [vmem:[%s839 + $0x150] sm:$0xff]
        %v941 = vld [vmem:[%s839 + $0x158] sm:$0xff]
        %v942 = vld [vmem:[%s839 + $0x160] sm:$0xff]
        %v943 = vld [vmem:[%s839 + $0x168] sm:$0xff]
        %v944 = vld [vmem:[%s839 + $0x170] sm:$0xff]
        %v945 = vld [vmem:[%s839 + $0x178] sm:$0xff]
        %v946 = vld [vmem:[%s839 + $0x180] sm:$0xff]
        %v947 = vld [vmem:[%s839 + $0x188] sm:$0xff]
        %v948 = vld [vmem:[%s839 + $0x190] sm:$0xff]
        %v949 = vld [vmem:[%s839 + $0x198] sm:$0xff]
        %v950 = vld [vmem:[%s839 + $0x1a0] sm:$0xff]
        %v951 = vld [vmem:[%s839 + $0x1a8] sm:$0xff]
        %v952 = vld [vmem:[%s839 + $0x1b0] sm:$0xff]
        %v953 = vld [vmem:[%s839 + $0x1b8] sm:$0xff]
        %v954 = vld [vmem:[%s839 + $0x1c0] sm:$0xff]
        %v955 = vld [vmem:[%s839 + $0x1c8] sm:$0xff]
        %v956 = vld [vmem:[%s839 + $0x1d0] sm:$0xff]
        %v957 = vld [vmem:[%s839 + $0x1d8] sm:$0xff]
        %v958 = vld [vmem:[%s839 + $0x1e0] sm:$0xff]
        %v959 = vld [vmem:[%s839 + $0x1e8] sm:$0xff]
        %v960 = vld [vmem:[%s839 + $0x1f0] sm:$0xff]
        %v961 = vld [vmem:[%s839 + $0x1f8] sm:$0xff]
        %v962 = vld [vmem:[%s839 + $0x200] sm:$0xff]
        %v963 = vld [vmem:[%s839 + $0x208] sm:$0xff]
        %v964 = vld [vmem:[%s839 + $0x210] sm:$0xff]
        %v965 = vld [vmem:[%s839 + $0x218] sm:$0xff]
        %v966 = vld [vmem:[%s839 + $0x220] sm:$0xff]
        %v967 = vld [vmem:[%s839 + $0x228] sm:$0xff]
        %v968 = vld [vmem:[%s839 + $0x230] sm:$0xff]
        %v969 = vld [vmem:[%s839 + $0x238] sm:$0xff]
        %v970 = vld [vmem:[%s839 + $0x240] sm:$0xff]
        %v971 = vld [vmem:[%s839 + $0x248] sm:$0xff]
        %v972 = vld [vmem:[%s839 + $0x250] sm:$0xff]
        %v973 = vld [vmem:[%s839 + $0x258] sm:$0xff]
        %v974 = vld [vmem:[%s839 + $0x260] sm:$0xff]
        %v975 = vld [vmem:[%s839 + $0x268] sm:$0xff]
        %v976 = vld [vmem:[%s839 + $0x270] sm:$0xff]
        %v977 = vld [vmem:[%s839 + $0x278] sm:$0xff]
        %v978 = vld [vmem:[%s839 + $0x280] sm:$0xff]
        %v979 = vld [vmem:[%s839 + $0x288] sm:$0xff]
        %v980 = vld [vmem:[%s839 + $0x290] sm:$0xff]
        %v981 = vld [vmem:[%s839 + $0x298] sm:$0xff]
        %v982 = vld [vmem:[%s839 + $0x2a0] sm:$0xff]
        %v983 = vld [vmem:[%s839 + $0x2a8] sm:$0xff]
        %v984 = vld [vmem:[%s839 + $0x2b0] sm:$0xff]
        %v985 = vld [vmem:[%s839 + $0x2b8] sm:$0xff]
        %v986 = vld [vmem:[%s839 + $0x2c0] sm:$0xff]
        %v987 = vld [vmem:[%s839 + $0x2c8] sm:$0xff]
        %v988 = vld [vmem:[%s839 + $0x2d0] sm:$0xff]
        %v989 = vld [vmem:[%s839 + $0x2d8] sm:$0xff]
        %v990 = vld [vmem:[%s839 + $0x2e0] sm:$0xff]
        %v991 = vld [vmem:[%s839 + $0x2e8] sm:$0xff]
        %v992 = vld [vmem:[%s839 + $0x2f0] sm:$0xff]
        %v993 = vld [vmem:[%s839 + $0x2f8] sm:$0xff]
        %v994 = vld [vmem:[%s839 + $0x300] sm:$0xff]
        %v995 = vld [vmem:[%s839 + $0x308] sm:$0xff]
        %v996 = vld [vmem:[%s839 + $0x310] sm:$0xff]
        %v997 = vld [vmem:[%s839 + $0x318] sm:$0xff]
        %v998 = vld [vmem:[%s839 + $0x320] sm:$0xff]
        %v999 = vld [vmem:[%s839 + $0x328] sm:$0xff]
        %v1000 = vld [vmem:[%s839 + $0x330] sm:$0xff]
        %v1001 = vld [vmem:[%s839 + $0x338] sm:$0xff]
        %v1002 = vld [vmem:[%s839 + $0x340] sm:$0xff]
        %v1003 = vld [vmem:[%s839 + $0x348] sm:$0xff]
        %v1004 = vld [vmem:[%s839 + $0x350] sm:$0xff]
        %v1005 = vld [vmem:[%s839 + $0x358] sm:$0xff]
        %v1006 = vld [vmem:[%s839 + $0x360] sm:$0xff]
        %v1007 = vld [vmem:[%s839 + $0x368] sm:$0xff]
        %v1008 = vld [vmem:[%s839 + $0x370] sm:$0xff]
        %v1009 = vld [vmem:[%s839 + $0x378] sm:$0xff]
        %v1010 = vld [vmem:[%s839 + $0x380] sm:$0xff]
        %v1011 = vld [vmem:[%s839 + $0x388] sm:$0xff]
        %v1012 = vld [vmem:[%s839 + $0x390] sm:$0xff]
        %v1013 = vld [vmem:[%s839 + $0x398] sm:$0xff]
        %v1014 = vld [vmem:[%s839 + $0x3a0] sm:$0xff]
        %v1015 = vld [vmem:[%s839 + $0x3a8] sm:$0xff]
        %v1016 = vld [vmem:[%s839 + $0x3b0] sm:$0xff]
        %v1017 = vld [vmem:[%s839 + $0x3b8] sm:$0xff]
        %v1018 = vld [vmem:[%s839 + $0x3c0] sm:$0xff]
        %v1019 = vld [vmem:[%s839 + $0x3c8] sm:$0xff]
        %v1020 = vld [vmem:[%s839 + $0x3d0] sm:$0xff]
        %v1021 = vld [vmem:[%s839 + $0x3d8] sm:$0xff]
        %v1022 = vld [vmem:[%s839 + $0x3e0] sm:$0xff]
        %v1023 = vld [vmem:[%s839 + $0x3e8] sm:$0xff]
        %v1024 = vld [vmem:[%s839 + $0x3f0] sm:$0xff]
        %v1025 = vld [vmem:[%s839 + $0x3f8] sm:$0xff]
        %v1026 = vld [vmem:[%s3] sm:$0xff]
        %v1027 = vld [vmem:[%s3 + $0x8] sm:$0xff]
        %v1028 = vld [vmem:[%s3 + $0x10] sm:$0xff]
        %v1029 = vld [vmem:[%s3 + $0x18] sm:$0xff]
        %v1030 = vld [vmem:[%s5] sm:$0x1]
        %v1032 = vperm.slane %v1030, 0
        %vm1034 = vcmask 261120
        %v1036 = vsel %vm1034, %v898, 0
        %v1039 = vsel %vm1034, %v899, 0
        %v1042 = vsel %vm1034, %v900, 0
        %v1045 = vsel %vm1034, %v901, 0
        %v1048 = vsel %vm1034, %v902, 0
        %v1051 = vsel %vm1034, %v903, 0
        %v1054 = vsel %vm1034, %v904, 0
        %v1057 = vsel %vm1034, %v905, 0
        %v1060 = vsel %vm1034, %v906, 0
        %v1063 = vsel %vm1034, %v907, 0
        %v1066 = vsel %vm1034, %v908, 0
        %v1069 = vsel %vm1034, %v909, 0
        %v1072 = vsel %vm1034, %v910, 0
        %v1075 = vsel %vm1034, %v911, 0
        %v1078 = vsel %vm1034, %v912, 0
        %v1081 = vsel %vm1034, %v913, 0
        %v1084 = vsel %vm1034, %v914, 0
        %v1087 = vsel %vm1034, %v915, 0
        %v1090 = vsel %vm1034, %v916, 0
        %v1093 = vsel %vm1034, %v917, 0
        %v1096 = vsel %vm1034, %v918, 0
        %v1099 = vsel %vm1034, %v919, 0
        %v1102 = vsel %vm1034, %v920, 0
        %v1105 = vsel %vm1034, %v921, 0
        %v1108 = vsel %vm1034, %v922, 0
        %v1111 = vsel %vm1034, %v923, 0
        %v1114 = vsel %vm1034, %v924, 0
        %v1117 = vsel %vm1034, %v925, 0
        %v1120 = vsel %vm1034, %v926, 0
        %v1123 = vsel %vm1034, %v927, 0
        %v1126 = vsel %vm1034, %v928, 0
        %v1129 = vsel %vm1034, %v929, 0
        %v1132 = vsel %vm1034, %v930, 0
        %v1135 = vsel %vm1034, %v931, 0
        %v1138 = vsel %vm1034, %v932, 0
        %v1141 = vsel %vm1034, %v933, 0
        %v1144 = vsel %vm1034, %v934, 0
        %v1147 = vsel %vm1034, %v935, 0
        %v1150 = vsel %vm1034, %v936, 0
        %v1153 = vsel %vm1034, %v937, 0
        %v1156 = vsel %vm1034, %v938, 0
        %v1159 = vsel %vm1034, %v939, 0
        %v1162 = vsel %vm1034, %v940, 0
        %v1165 = vsel %vm1034, %v941, 0
        %v1168 = vsel %vm1034, %v942, 0
        %v1171 = vsel %vm1034, %v943, 0
        %v1174 = vsel %vm1034, %v944, 0
        %v1177 = vsel %vm1034, %v945, 0
        %v1180 = vsel %vm1034, %v946, 0
        %v1183 = vsel %vm1034, %v947, 0
        %v1186 = vsel %vm1034, %v948, 0
        %v1189 = vsel %vm1034, %v949, 0
        %v1192 = vsel %vm1034, %v950, 0
        %v1195 = vsel %vm1034, %v951, 0
        %v1198 = vsel %vm1034, %v952, 0
        %v1201 = vsel %vm1034, %v953, 0
        %v1204 = vsel %vm1034, %v954, 0
        %v1207 = vsel %vm1034, %v955, 0
        %v1210 = vsel %vm1034, %v956, 0
        %v1213 = vsel %vm1034, %v957, 0
        %v1216 = vsel %vm1034, %v958, 0
        %v1219 = vsel %vm1034, %v959, 0
        %v1222 = vsel %vm1034, %v960, 0
        %v1225 = vsel %vm1034, %v961, 0
        %v1228 = vsel %vm1034, %v962, 0
        %v1231 = vsel %vm1034, %v963, 0
        %v1234 = vsel %vm1034, %v964, 0
        %v1237 = vsel %vm1034, %v965, 0
        %v1240 = vsel %vm1034, %v966, 0
        %v1243 = vsel %vm1034, %v967, 0
        %v1246 = vsel %vm1034, %v968, 0
        %v1249 = vsel %vm1034, %v969, 0
        %v1252 = vsel %vm1034, %v970, 0
        %v1255 = vsel %vm1034, %v971, 0
        %v1258 = vsel %vm1034, %v972, 0
        %v1261 = vsel %vm1034, %v973, 0
        %v1264 = vsel %vm1034, %v974, 0
        %v1267 = vsel %vm1034, %v975, 0
        %v1270 = vsel %vm1034, %v976, 0
        %v1273 = vsel %vm1034, %v977, 0
        %v1276 = vsel %vm1034, %v978, 0
        %v1279 = vsel %vm1034, %v979, 0
        %v1282 = vsel %vm1034, %v980, 0
        %v1285 = vsel %vm1034, %v981, 0
        %v1288 = vsel %vm1034, %v982, 0
        %v1291 = vsel %vm1034, %v983, 0
        %v1294 = vsel %vm1034, %v984, 0
        %v1297 = vsel %vm1034, %v985, 0
        %v1300 = vsel %vm1034, %v986, 0
        %v1303 = vsel %vm1034, %v987, 0
        %v1306 = vsel %vm1034, %v988, 0
        %v1309 = vsel %vm1034, %v989, 0
        %v1312 = vsel %vm1034, %v990, 0
        %v1315 = vsel %vm1034, %v991, 0
        %v1318 = vsel %vm1034, %v992, 0
        %v1321 = vsel %vm1034, %v993, 0
        %v1324 = vsel %vm1034, %v994, 0
        %v1327 = vsel %vm1034, %v995, 0
        %v1330 = vsel %vm1034, %v996, 0
        %v1333 = vsel %vm1034, %v997, 0
        %v1336 = vsel %vm1034, %v998, 0
        %v1339 = vsel %vm1034, %v999, 0
        %v1342 = vsel %vm1034, %v1000, 0
        %v1345 = vsel %vm1034, %v1001, 0
        %v1348 = vsel %vm1034, %v1002, 0
        %v1351 = vsel %vm1034, %v1003, 0
        %v1354 = vsel %vm1034, %v1004, 0
        %v1357 = vsel %vm1034, %v1005, 0
        %v1360 = vsel %vm1034, %v1006, 0
        %v1363 = vsel %vm1034, %v1007, 0
        %v1366 = vsel %vm1034, %v1008, 0
        %v1369 = vsel %vm1034, %v1009, 0
        %v1372 = vsel %vm1034, %v1010, 0
        %v1375 = vsel %vm1034, %v1011, 0
        %v1378 = vsel %vm1034, %v1012, 0
        %v1381 = vsel %vm1034, %v1013, 0
        %v1384 = vsel %vm1034, %v1014, 0
        %v1387 = vsel %vm1034, %v1015, 0
        %v1390 = vsel %vm1034, %v1016, 0
        %v1393 = vsel %vm1034, %v1017, 0
        %v1396 = vsel %vm1034, %v1018, 0
        %v1399 = vsel %vm1034, %v1019, 0
        %v1402 = vsel %vm1034, %v1020, 0
        %v1405 = vsel %vm1034, %v1021, 0
        %v1408 = vsel %vm1034, %v1022, 0
        %v1411 = vsel %vm1034, %v1023, 0
        %v1414 = vsel %vm1034, %v1024, 0
        %v1417 = vsel %vm1034, %v1025, 0
        %1419 = vmatpush.msra.mxu0 0.0
        %1420 = vmatpush.msra.mxu0 0.0
        %1421 = vmatpush.msra.mxu0 0.0
        %1422 = vmatpush.msra.mxu0 0.0
        %1423 = vmatpush.msra.mxu0 0.0
        %1424 = vmatpush.msra.mxu0 0.0
        %1425 = vmatpush.msra.mxu0 0.0
        %1426 = vmatpush.msra.mxu0 0.0
        %1427 = vmatpush.msra.mxu0 0.0
        %1428 = vmatpush.msra.mxu0 0.0
        %1429 = vmatpush.msra.mxu0 0.0
        %1430 = vmatpush.msra.mxu0 0.0
        %1431 = vmatpush.msra.mxu0 %v1029
        %1432 = vmatpush.msra.mxu0 %v1028
        %1433 = vmatpush.msra.mxu0 %v1027
        %1434 = vmatpush.msra.mxu0 %v1026
        %1435 = vmatmul.f32.gmra.mxu0 %v1036
        %v1436 = vpop.f32.mrf.mxu0
        %v1437 = vadd.f32 %v1032, %v1436
        %1438 = vmatmul.f32.gmra.mxu0 %v1039
        %v1439 = vpop.f32.mrf.mxu0
        %v1440 = vadd.f32 %v1032, %v1439
        %1441 = vmatmul.f32.gmra.mxu0 %v1042
        %v1442 = vpop.f32.mrf.mxu0
        %v1443 = vadd.f32 %v1032, %v1442
        %1444 = vmatmul.f32.gmra.mxu0 %v1045
        %v1445 = vpop.f32.mrf.mxu0
        %v1446 = vadd.f32 %v1032, %v1445
        %1447 = vmatmul.f32.gmra.mxu0 %v1048
        %v1448 = vpop.f32.mrf.mxu0
        %v1449 = vadd.f32 %v1032, %v1448
        %1450 = vmatmul.f32.gmra.mxu0 %v1051
        %v1451 = vpop.f32.mrf.mxu0
        %v1452 = vadd.f32 %v1032, %v1451
        %1453 = vmatmul.f32.gmra.mxu0 %v1054
        %v1454 = vpop.f32.mrf.mxu0
        %v1455 = vadd.f32 %v1032, %v1454
        %1456 = vmatmul.f32.gmra.mxu0 %v1057
        %v1457 = vpop.f32.mrf.mxu0
        %v1458 = vadd.f32 %v1032, %v1457
        %1459 = vmatmul.f32.gmra.mxu0 %v1060
        %v1460 = vpop.f32.mrf.mxu0
        %v1461 = vadd.f32 %v1032, %v1460
        %1462 = vmatmul.f32.gmra.mxu0 %v1063
        %v1463 = vpop.f32.mrf.mxu0
        %v1464 = vadd.f32 %v1032, %v1463
        %1465 = vmatmul.f32.gmra.mxu0 %v1066
        %v1466 = vpop.f32.mrf.mxu0
        %v1467 = vadd.f32 %v1032, %v1466
        %1468 = vmatmul.f32.gmra.mxu0 %v1069
        %v1469 = vpop.f32.mrf.mxu0
        %v1470 = vadd.f32 %v1032, %v1469
        %1471 = vmatmul.f32.gmra.mxu0 %v1072
        %v1472 = vpop.f32.mrf.mxu0
        %v1473 = vadd.f32 %v1032, %v1472
        %1474 = vmatmul.f32.gmra.mxu0 %v1075
        %v1475 = vpop.f32.mrf.mxu0
        %v1476 = vadd.f32 %v1032, %v1475
        %1477 = vmatmul.f32.gmra.mxu0 %v1078
        %v1478 = vpop.f32.mrf.mxu0
        %v1479 = vadd.f32 %v1032, %v1478
        %1480 = vmatmul.f32.gmra.mxu0 %v1081
        %v1481 = vpop.f32.mrf.mxu0
        %v1482 = vadd.f32 %v1032, %v1481
        %1483 = vmatmul.f32.gmra.mxu0 %v1084
        %v1484 = vpop.f32.mrf.mxu0
        %v1485 = vadd.f32 %v1032, %v1484
        %1486 = vmatmul.f32.gmra.mxu0 %v1087
        %v1487 = vpop.f32.mrf.mxu0
        %v1488 = vadd.f32 %v1032, %v1487
        %1489 = vmatmul.f32.gmra.mxu0 %v1090
        %v1490 = vpop.f32.mrf.mxu0
        %v1491 = vadd.f32 %v1032, %v1490
        %1492 = vmatmul.f32.gmra.mxu0 %v1093
        %v1493 = vpop.f32.mrf.mxu0
        %v1494 = vadd.f32 %v1032, %v1493
        %1495 = vmatmul.f32.gmra.mxu0 %v1096
        %v1496 = vpop.f32.mrf.mxu0
        %v1497 = vadd.f32 %v1032, %v1496
        %1498 = vmatmul.f32.gmra.mxu0 %v1099
        %v1499 = vpop.f32.mrf.mxu0
        %v1500 = vadd.f32 %v1032, %v1499
        %1501 = vmatmul.f32.gmra.mxu0 %v1102
        %v1502 = vpop.f32.mrf.mxu0
        %v1503 = vadd.f32 %v1032, %v1502
        %1504 = vmatmul.f32.gmra.mxu0 %v1105
        %v1505 = vpop.f32.mrf.mxu0
        %v1506 = vadd.f32 %v1032, %v1505
        %1507 = vmatmul.f32.gmra.mxu0 %v1108
        %v1508 = vpop.f32.mrf.mxu0
        %v1509 = vadd.f32 %v1032, %v1508
        %1510 = vmatmul.f32.gmra.mxu0 %v1111
        %v1511 = vpop.f32.mrf.mxu0
        %v1512 = vadd.f32 %v1032, %v1511
        %1513 = vmatmul.f32.gmra.mxu0 %v1114
        %v1514 = vpop.f32.mrf.mxu0
        %v1515 = vadd.f32 %v1032, %v1514
        %1516 = vmatmul.f32.gmra.mxu0 %v1117
        %v1517 = vpop.f32.mrf.mxu0
        %v1518 = vadd.f32 %v1032, %v1517
        %1519 = vmatmul.f32.gmra.mxu0 %v1120
        %v1520 = vpop.f32.mrf.mxu0
        %v1521 = vadd.f32 %v1032, %v1520
        %1522 = vmatmul.f32.gmra.mxu0 %v1123
        %v1523 = vpop.f32.mrf.mxu0
        %v1524 = vadd.f32 %v1032, %v1523
        %1525 = vmatmul.f32.gmra.mxu0 %v1126
        %v1526 = vpop.f32.mrf.mxu0
        %v1527 = vadd.f32 %v1032, %v1526
        %1528 = vmatmul.f32.gmra.mxu0 %v1129
        %v1529 = vpop.f32.mrf.mxu0
        %v1530 = vadd.f32 %v1032, %v1529
        %1531 = vmatmul.f32.gmra.mxu0 %v1132
        %v1532 = vpop.f32.mrf.mxu0
        %v1533 = vadd.f32 %v1032, %v1532
        %1534 = vmatmul.f32.gmra.mxu0 %v1135
        %v1535 = vpop.f32.mrf.mxu0
        %v1536 = vadd.f32 %v1032, %v1535
        %1537 = vmatmul.f32.gmra.mxu0 %v1138
        %v1538 = vpop.f32.mrf.mxu0
        %v1539 = vadd.f32 %v1032, %v1538
        %1540 = vmatmul.f32.gmra.mxu0 %v1141
        %v1541 = vpop.f32.mrf.mxu0
        %v1542 = vadd.f32 %v1032, %v1541
        %1543 = vmatmul.f32.gmra.mxu0 %v1144
        %v1544 = vpop.f32.mrf.mxu0
        %v1545 = vadd.f32 %v1032, %v1544
        %1546 = vmatmul.f32.gmra.mxu0 %v1147
        %v1547 = vpop.f32.mrf.mxu0
        %v1548 = vadd.f32 %v1032, %v1547
        %1549 = vmatmul.f32.gmra.mxu0 %v1150
        %v1550 = vpop.f32.mrf.mxu0
        %v1551 = vadd.f32 %v1032, %v1550
        %1552 = vmatmul.f32.gmra.mxu0 %v1153
        %v1553 = vpop.f32.mrf.mxu0
        %v1554 = vadd.f32 %v1032, %v1553
        %1555 = vmatmul.f32.gmra.mxu0 %v1156
        %v1556 = vpop.f32.mrf.mxu0
        %v1557 = vadd.f32 %v1032, %v1556
        %1558 = vmatmul.f32.gmra.mxu0 %v1159
        %v1559 = vpop.f32.mrf.mxu0
        %v1560 = vadd.f32 %v1032, %v1559
        %1561 = vmatmul.f32.gmra.mxu0 %v1162
        %v1562 = vpop.f32.mrf.mxu0
        %v1563 = vadd.f32 %v1032, %v1562
        %1564 = vmatmul.f32.gmra.mxu0 %v1165
        %v1565 = vpop.f32.mrf.mxu0
        %v1566 = vadd.f32 %v1032, %v1565
        %1567 = vmatmul.f32.gmra.mxu0 %v1168
        %v1568 = vpop.f32.mrf.mxu0
        %v1569 = vadd.f32 %v1032, %v1568
        %1570 = vmatmul.f32.gmra.mxu0 %v1171
        %v1571 = vpop.f32.mrf.mxu0
        %v1572 = vadd.f32 %v1032, %v1571
        %1573 = vmatmul.f32.gmra.mxu0 %v1174
        %v1574 = vpop.f32.mrf.mxu0
        %v1575 = vadd.f32 %v1032, %v1574
        %1576 = vmatmul.f32.gmra.mxu0 %v1177
        %v1577 = vpop.f32.mrf.mxu0
        %v1578 = vadd.f32 %v1032, %v1577
        %1579 = vmatmul.f32.gmra.mxu0 %v1180
        %v1580 = vpop.f32.mrf.mxu0
        %v1581 = vadd.f32 %v1032, %v1580
        %1582 = vmatmul.f32.gmra.mxu0 %v1183
        %v1583 = vpop.f32.mrf.mxu0
        %v1584 = vadd.f32 %v1032, %v1583
        %1585 = vmatmul.f32.gmra.mxu0 %v1186
        %v1586 = vpop.f32.mrf.mxu0
        %v1587 = vadd.f32 %v1032, %v1586
        %1588 = vmatmul.f32.gmra.mxu0 %v1189
        %v1589 = vpop.f32.mrf.mxu0
        %v1590 = vadd.f32 %v1032, %v1589
        %1591 = vmatmul.f32.gmra.mxu0 %v1192
        %v1592 = vpop.f32.mrf.mxu0
        %v1593 = vadd.f32 %v1032, %v1592
        %1594 = vmatmul.f32.gmra.mxu0 %v1195
        %v1595 = vpop.f32.mrf.mxu0
        %v1596 = vadd.f32 %v1032, %v1595
        %1597 = vmatmul.f32.gmra.mxu0 %v1198
        %v1598 = vpop.f32.mrf.mxu0
        %v1599 = vadd.f32 %v1032, %v1598
        %1600 = vmatmul.f32.gmra.mxu0 %v1201
        %v1601 = vpop.f32.mrf.mxu0
        %v1602 = vadd.f32 %v1032, %v1601
        %1603 = vmatmul.f32.gmra.mxu0 %v1204
        %v1604 = vpop.f32.mrf.mxu0
        %v1605 = vadd.f32 %v1032, %v1604
        %1606 = vmatmul.f32.gmra.mxu0 %v1207
        %v1607 = vpop.f32.mrf.mxu0
        %v1608 = vadd.f32 %v1032, %v1607
        %1609 = vmatmul.f32.gmra.mxu0 %v1210
        %v1610 = vpop.f32.mrf.mxu0
        %v1611 = vadd.f32 %v1032, %v1610
        %1612 = vmatmul.f32.gmra.mxu0 %v1213
        %v1613 = vpop.f32.mrf.mxu0
        %v1614 = vadd.f32 %v1032, %v1613
        %1615 = vmatmul.f32.gmra.mxu0 %v1216
        %v1616 = vpop.f32.mrf.mxu0
        %v1617 = vadd.f32 %v1032, %v1616
        %1618 = vmatmul.f32.gmra.mxu0 %v1219
        %v1619 = vpop.f32.mrf.mxu0
        %v1620 = vadd.f32 %v1032, %v1619
        %1621 = vmatmul.f32.gmra.mxu0 %v1222
        %v1622 = vpop.f32.mrf.mxu0
        %v1623 = vadd.f32 %v1032, %v1622
        %1624 = vmatmul.f32.gmra.mxu0 %v1225
        %v1625 = vpop.f32.mrf.mxu0
        %v1626 = vadd.f32 %v1032, %v1625
        %1627 = vmatmul.f32.gmra.mxu0 %v1228
        %v1628 = vpop.f32.mrf.mxu0
        %v1629 = vadd.f32 %v1032, %v1628
        %1630 = vmatmul.f32.gmra.mxu0 %v1231
        %v1631 = vpop.f32.mrf.mxu0
        %v1632 = vadd.f32 %v1032, %v1631
        %1633 = vmatmul.f32.gmra.mxu0 %v1234
        %v1634 = vpop.f32.mrf.mxu0
        %v1635 = vadd.f32 %v1032, %v1634
        %1636 = vmatmul.f32.gmra.mxu0 %v1237
        %v1637 = vpop.f32.mrf.mxu0
        %v1638 = vadd.f32 %v1032, %v1637
        %1639 = vmatmul.f32.gmra.mxu0 %v1240
        %v1640 = vpop.f32.mrf.mxu0
        %v1641 = vadd.f32 %v1032, %v1640
        %1642 = vmatmul.f32.gmra.mxu0 %v1243
        %v1643 = vpop.f32.mrf.mxu0
        %v1644 = vadd.f32 %v1032, %v1643
        %1645 = vmatmul.f32.gmra.mxu0 %v1246
        %v1646 = vpop.f32.mrf.mxu0
        %v1647 = vadd.f32 %v1032, %v1646
        %1648 = vmatmul.f32.gmra.mxu0 %v1249
        %v1649 = vpop.f32.mrf.mxu0
        %v1650 = vadd.f32 %v1032, %v1649
        %1651 = vmatmul.f32.gmra.mxu0 %v1252
        %v1652 = vpop.f32.mrf.mxu0
        %v1653 = vadd.f32 %v1032, %v1652
        %1654 = vmatmul.f32.gmra.mxu0 %v1255
        %v1655 = vpop.f32.mrf.mxu0
        %v1656 = vadd.f32 %v1032, %v1655
        %1657 = vmatmul.f32.gmra.mxu0 %v1258
        %v1658 = vpop.f32.mrf.mxu0
        %v1659 = vadd.f32 %v1032, %v1658
        %1660 = vmatmul.f32.gmra.mxu0 %v1261
        %v1661 = vpop.f32.mrf.mxu0
        %v1662 = vadd.f32 %v1032, %v1661
        %1663 = vmatmul.f32.gmra.mxu0 %v1264
        %v1664 = vpop.f32.mrf.mxu0
        %v1665 = vadd.f32 %v1032, %v1664
        %1666 = vmatmul.f32.gmra.mxu0 %v1267
        %v1667 = vpop.f32.mrf.mxu0
        %v1668 = vadd.f32 %v1032, %v1667
        %1669 = vmatmul.f32.gmra.mxu0 %v1270
        %v1670 = vpop.f32.mrf.mxu0
        %v1671 = vadd.f32 %v1032, %v1670
        %1672 = vmatmul.f32.gmra.mxu0 %v1273
        %v1673 = vpop.f32.mrf.mxu0
        %v1674 = vadd.f32 %v1032, %v1673
        %1675 = vmatmul.f32.gmra.mxu0 %v1276
        %v1676 = vpop.f32.mrf.mxu0
        %v1677 = vadd.f32 %v1032, %v1676
        %1678 = vmatmul.f32.gmra.mxu0 %v1279
        %v1679 = vpop.f32.mrf.mxu0
        %v1680 = vadd.f32 %v1032, %v1679
        %1681 = vmatmul.f32.gmra.mxu0 %v1282
        %v1682 = vpop.f32.mrf.mxu0
        %v1683 = vadd.f32 %v1032, %v1682
        %1684 = vmatmul.f32.gmra.mxu0 %v1285
        %v1685 = vpop.f32.mrf.mxu0
        %v1686 = vadd.f32 %v1032, %v1685
        %1687 = vmatmul.f32.gmra.mxu0 %v1288
        %v1688 = vpop.f32.mrf.mxu0
        %v1689 = vadd.f32 %v1032, %v1688
        %1690 = vmatmul.f32.gmra.mxu0 %v1291
        %v1691 = vpop.f32.mrf.mxu0
        %v1692 = vadd.f32 %v1032, %v1691
        %1693 = vmatmul.f32.gmra.mxu0 %v1294
        %v1694 = vpop.f32.mrf.mxu0
        %v1695 = vadd.f32 %v1032, %v1694
        %1696 = vmatmul.f32.gmra.mxu0 %v1297
        %v1697 = vpop.f32.mrf.mxu0
        %v1698 = vadd.f32 %v1032, %v1697
        %1699 = vmatmul.f32.gmra.mxu0 %v1300
        %v1700 = vpop.f32.mrf.mxu0
        %v1701 = vadd.f32 %v1032, %v1700
        %1702 = vmatmul.f32.gmra.mxu0 %v1303
        %v1703 = vpop.f32.mrf.mxu0
        %v1704 = vadd.f32 %v1032, %v1703
        %1705 = vmatmul.f32.gmra.mxu0 %v1306
        %v1706 = vpop.f32.mrf.mxu0
        %v1707 = vadd.f32 %v1032, %v1706
        %1708 = vmatmul.f32.gmra.mxu0 %v1309
        %v1709 = vpop.f32.mrf.mxu0
        %v1710 = vadd.f32 %v1032, %v1709
        %1711 = vmatmul.f32.gmra.mxu0 %v1312
        %v1712 = vpop.f32.mrf.mxu0
        %v1713 = vadd.f32 %v1032, %v1712
        %1714 = vmatmul.f32.gmra.mxu0 %v1315
        %v1715 = vpop.f32.mrf.mxu0
        %v1716 = vadd.f32 %v1032, %v1715
        %1717 = vmatmul.f32.gmra.mxu0 %v1318
        %v1718 = vpop.f32.mrf.mxu0
        %v1719 = vadd.f32 %v1032, %v1718
        %1720 = vmatmul.f32.gmra.mxu0 %v1321
        %v1721 = vpop.f32.mrf.mxu0
        %v1722 = vadd.f32 %v1032, %v1721
        %1723 = vmatmul.f32.gmra.mxu0 %v1324
        %v1724 = vpop.f32.mrf.mxu0
        %v1725 = vadd.f32 %v1032, %v1724
        %1726 = vmatmul.f32.gmra.mxu0 %v1327
        %v1727 = vpop.f32.mrf.mxu0
        %v1728 = vadd.f32 %v1032, %v1727
        %1729 = vmatmul.f32.gmra.mxu0 %v1330
        %v1730 = vpop.f32.mrf.mxu0
        %v1731 = vadd.f32 %v1032, %v1730
        %1732 = vmatmul.f32.gmra.mxu0 %v1333
        %v1733 = vpop.f32.mrf.mxu0
        %v1734 = vadd.f32 %v1032, %v1733
        %1735 = vmatmul.f32.gmra.mxu0 %v1336
        %v1736 = vpop.f32.mrf.mxu0
        %v1737 = vadd.f32 %v1032, %v1736
        %1738 = vmatmul.f32.gmra.mxu0 %v1339
        %v1739 = vpop.f32.mrf.mxu0
        %v1740 = vadd.f32 %v1032, %v1739
        %1741 = vmatmul.f32.gmra.mxu0 %v1342
        %v1742 = vpop.f32.mrf.mxu0
        %v1743 = vadd.f32 %v1032, %v1742
        %1744 = vmatmul.f32.gmra.mxu0 %v1345
        %v1745 = vpop.f32.mrf.mxu0
        %v1746 = vadd.f32 %v1032, %v1745
        %1747 = vmatmul.f32.gmra.mxu0 %v1348
        %v1748 = vpop.f32.mrf.mxu0
        %v1749 = vadd.f32 %v1032, %v1748
        %1750 = vmatmul.f32.gmra.mxu0 %v1351
        %v1751 = vpop.f32.mrf.mxu0
        %v1752 = vadd.f32 %v1032, %v1751
        %1753 = vmatmul.f32.gmra.mxu0 %v1354
        %v1754 = vpop.f32.mrf.mxu0
        %v1755 = vadd.f32 %v1032, %v1754
        %1756 = vmatmul.f32.gmra.mxu0 %v1357
        %v1757 = vpop.f32.mrf.mxu0
        %v1758 = vadd.f32 %v1032, %v1757
        %1759 = vmatmul.f32.gmra.mxu0 %v1360
        %v1760 = vpop.f32.mrf.mxu0
        %v1761 = vadd.f32 %v1032, %v1760
        %1762 = vmatmul.f32.gmra.mxu0 %v1363
        %v1763 = vpop.f32.mrf.mxu0
        %v1764 = vadd.f32 %v1032, %v1763
        %1765 = vmatmul.f32.gmra.mxu0 %v1366
        %v1766 = vpop.f32.mrf.mxu0
        %v1767 = vadd.f32 %v1032, %v1766
        %1768 = vmatmul.f32.gmra.mxu0 %v1369
        %v1769 = vpop.f32.mrf.mxu0
        %v1770 = vadd.f32 %v1032, %v1769
        %1771 = vmatmul.f32.gmra.mxu0 %v1372
        %v1772 = vpop.f32.mrf.mxu0
        %v1773 = vadd.f32 %v1032, %v1772
        %1774 = vmatmul.f32.gmra.mxu0 %v1375
        %v1775 = vpop.f32.mrf.mxu0
        %v1776 = vadd.f32 %v1032, %v1775
        %1777 = vmatmul.f32.gmra.mxu0 %v1378
        %v1778 = vpop.f32.mrf.mxu0
        %v1779 = vadd.f32 %v1032, %v1778
        %1780 = vmatmul.f32.gmra.mxu0 %v1381
        %v1781 = vpop.f32.mrf.mxu0
        %v1782 = vadd.f32 %v1032, %v1781
        %1783 = vmatmul.f32.gmra.mxu0 %v1384
        %v1784 = vpop.f32.mrf.mxu0
        %v1785 = vadd.f32 %v1032, %v1784
        %1786 = vmatmul.f32.gmra.mxu0 %v1387
        %v1787 = vpop.f32.mrf.mxu0
        %v1788 = vadd.f32 %v1032, %v1787
        %1789 = vmatmul.f32.gmra.mxu0 %v1390
        %v1790 = vpop.f32.mrf.mxu0
        %v1791 = vadd.f32 %v1032, %v1790
        %1792 = vmatmul.f32.gmra.mxu0 %v1393
        %v1793 = vpop.f32.mrf.mxu0
        %v1794 = vadd.f32 %v1032, %v1793
        %1795 = vmatmul.f32.gmra.mxu0 %v1396
        %v1796 = vpop.f32.mrf.mxu0
        %v1797 = vadd.f32 %v1032, %v1796
        %1798 = vmatmul.f32.gmra.mxu0 %v1399
        %v1799 = vpop.f32.mrf.mxu0
        %v1800 = vadd.f32 %v1032, %v1799
        %1801 = vmatmul.f32.gmra.mxu0 %v1402
        %v1802 = vpop.f32.mrf.mxu0
        %v1803 = vadd.f32 %v1032, %v1802
        %1804 = vmatmul.f32.gmra.mxu0 %v1405
        %v1805 = vpop.f32.mrf.mxu0
        %v1806 = vadd.f32 %v1032, %v1805
        %1807 = vmatmul.f32.gmra.mxu0 %v1408
        %v1808 = vpop.f32.mrf.mxu0
        %v1809 = vadd.f32 %v1032, %v1808
        %1810 = vmatmul.f32.gmra.mxu0 %v1411
        %v1811 = vpop.f32.mrf.mxu0
        %v1812 = vadd.f32 %v1032, %v1811
        %1813 = vmatmul.f32.gmra.mxu0 %v1414
        %v1814 = vpop.f32.mrf.mxu0
        %v1815 = vadd.f32 %v1032, %v1814
        %1816 = vmatmul.f32.gmra.mxu0 %v1417
        %v1817 = vpop.f32.mrf.mxu0
        %v1818 = vadd.f32 %v1032, %v1817
        %1819 = vdwg.mxu0
        %v1821 = vsel %vm1034, 0.0, 0
        %1823 = vmatpush.msra.mxu0 0.0
        %1824 = vmatpush.msra.mxu0 0.0
        %1825 = vmatpush.msra.mxu0 0.0
        %1826 = vmatpush.msra.mxu0 0.0
        %1827 = vmatpush.msra.mxu0 0.0
        %1828 = vmatpush.msra.mxu0 0.0
        %1829 = vmatpush.msra.mxu0 0.0
        %1830 = vmatpush.msra.mxu0 0.0
        %1831 = vmatpush.msra.mxu0 0.0
        %1832 = vmatpush.msra.mxu0 0.0
        %1833 = vmatpush.msra.mxu0 0.0
        %1834 = vmatpush.msra.mxu0 0.0
        %1835 = vmatpush.msra.mxu0 %v897
        %1836 = vmatpush.msra.mxu0 %v896
        %1837 = vmatpush.msra.mxu0 %v895
        %1838 = vmatpush.msra.mxu0 %v894
        %1839 = vmatmul.f32.gmra.mxu0 %v1821
        %v1840 = vpop.f32.mrf.mxu0
        %v1841 = vadd.f32 0.0, %v1840
        %1842 = vmatmul.f32.gmra.mxu0 %v1821
        %v1843 = vpop.f32.mrf.mxu0
        %v1844 = vadd.f32 0.0, %v1843
        %1845 = vmatmul.f32.gmra.mxu0 %v1821
        %v1846 = vpop.f32.mrf.mxu0
        %v1847 = vadd.f32 0.0, %v1846
        %1848 = vmatmul.f32.gmra.mxu0 %v1821
        %v1849 = vpop.f32.mrf.mxu0
        %v1850 = vadd.f32 0.0, %v1849
        %1851 = vmatmul.f32.gmra.mxu0 %v1821
        %v1852 = vpop.f32.mrf.mxu0
        %v1853 = vadd.f32 0.0, %v1852
        %1854 = vmatmul.f32.gmra.mxu0 %v1821
        %v1855 = vpop.f32.mrf.mxu0
        %v1856 = vadd.f32 0.0, %v1855
        %1857 = vmatmul.f32.gmra.mxu0 %v1821
        %v1858 = vpop.f32.mrf.mxu0
        %v1859 = vadd.f32 0.0, %v1858
        %1860 = vmatmul.f32.gmra.mxu0 %v1821
        %v1861 = vpop.f32.mrf.mxu0
        %v1862 = vadd.f32 0.0, %v1861
        %1863 = vmatmul.f32.gmra.mxu0 %v1821
        %v1864 = vpop.f32.mrf.mxu0
        %v1865 = vadd.f32 0.0, %v1864
        %1866 = vmatmul.f32.gmra.mxu0 %v1821
        %v1867 = vpop.f32.mrf.mxu0
        %v1868 = vadd.f32 0.0, %v1867
        %1869 = vmatmul.f32.gmra.mxu0 %v1821
        %v1870 = vpop.f32.mrf.mxu0
        %v1871 = vadd.f32 0.0, %v1870
        %1872 = vmatmul.f32.gmra.mxu0 %v1821
        %v1873 = vpop.f32.mrf.mxu0
        %v1874 = vadd.f32 0.0, %v1873
        %1875 = vmatmul.f32.gmra.mxu0 %v1821
        %v1876 = vpop.f32.mrf.mxu0
        %v1877 = vadd.f32 0.0, %v1876
        %1878 = vmatmul.f32.gmra.mxu0 %v1821
        %v1879 = vpop.f32.mrf.mxu0
        %v1880 = vadd.f32 0.0, %v1879
        %1881 = vmatmul.f32.gmra.mxu0 %v1821
        %v1882 = vpop.f32.mrf.mxu0
        %v1883 = vadd.f32 0.0, %v1882
        %1884 = vmatmul.f32.gmra.mxu0 %v1821
        %v1885 = vpop.f32.mrf.mxu0
        %v1886 = vadd.f32 0.0, %v1885
        %1887 = vdwg.mxu0
        %v1888 = vadd.f32 %v1437, %v1841
        %v1889 = vadd.f32 %v1440, %v1844
        %v1890 = vadd.f32 %v1443, %v1847
        %v1891 = vadd.f32 %v1446, %v1850
        %v1892 = vadd.f32 %v1449, %v1853
        %v1893 = vadd.f32 %v1452, %v1856
        %v1894 = vadd.f32 %v1455, %v1859
        %v1895 = vadd.f32 %v1458, %v1862
        %v1896 = vadd.f32 %v1461, %v1865
        %v1897 = vadd.f32 %v1464, %v1868
        %v1898 = vadd.f32 %v1467, %v1871
        %v1899 = vadd.f32 %v1470, %v1874
        %v1900 = vadd.f32 %v1473, %v1877
        %v1901 = vadd.f32 %v1476, %v1880
        %v1902 = vadd.f32 %v1479, %v1883
        %v1903 = vadd.f32 %v1482, %v1886
        %v1904 = vxor.u32 %v1888, 2147483648
        %v1905 = vxor.u32 %v1889, 2147483648
        %v1906 = vxor.u32 %v1890, 2147483648
        %v1907 = vxor.u32 %v1891, 2147483648
        %v1908 = vxor.u32 %v1892, 2147483648
        %v1909 = vxor.u32 %v1893, 2147483648
        %v1910 = vxor.u32 %v1894, 2147483648
        %v1911 = vxor.u32 %v1895, 2147483648
        %v1912 = vxor.u32 %v1896, 2147483648
        %v1913 = vxor.u32 %v1897, 2147483648
        %v1914 = vxor.u32 %v1898, 2147483648
        %v1915 = vxor.u32 %v1899, 2147483648
        %v1916 = vxor.u32 %v1900, 2147483648
        %v1917 = vxor.u32 %v1901, 2147483648
        %v1918 = vxor.u32 %v1902, 2147483648
        %v1919 = vxor.u32 %v1903, 2147483648
        %v1920 = vmul.f32 %v1904, 1.442695
        %v1921 = vpow.pop %v1920
        %v1922 = vmul.f32 %v1905, 1.442695
        %v1923 = vpow.pop %v1922
        %v1924 = vmul.f32 %v1906, 1.442695
        %v1925 = vpow.pop %v1924
        %v1926 = vmul.f32 %v1907, 1.442695
        %v1927 = vpow.pop %v1926
        %v1928 = vmul.f32 %v1908, 1.442695
        %v1929 = vpow.pop %v1928
        %v1930 = vmul.f32 %v1909, 1.442695
        %v1931 = vpow.pop %v1930
        %v1932 = vmul.f32 %v1910, 1.442695
        %v1933 = vpow.pop %v1932
        %v1934 = vmul.f32 %v1911, 1.442695
        %v1935 = vpow.pop %v1934
        %v1936 = vmul.f32 %v1912, 1.442695
        %v1937 = vpow.pop %v1936
        %v1938 = vmul.f32 %v1913, 1.442695
        %v1939 = vpow.pop %v1938
        %v1940 = vmul.f32 %v1914, 1.442695
        %v1941 = vpow.pop %v1940
        %v1942 = vmul.f32 %v1915, 1.442695
        %v1943 = vpow.pop %v1942
        %v1944 = vmul.f32 %v1916, 1.442695
        %v1945 = vpow.pop %v1944
        %v1946 = vmul.f32 %v1917, 1.442695
        %v1947 = vpow.pop %v1946
        %v1948 = vmul.f32 %v1918, 1.442695
        %v1949 = vpow.pop %v1948
        %v1950 = vmul.f32 %v1919, 1.442695
        %v1951 = vpow.pop %v1950
        %v1952 = vadd.f32 %v1921, 1.0
        %v1953 = vadd.f32 %v1923, 1.0
        %v1954 = vadd.f32 %v1925, 1.0
        %v1955 = vadd.f32 %v1927, 1.0
        %v1956 = vadd.f32 %v1929, 1.0
        %v1957 = vadd.f32 %v1931, 1.0
        %v1958 = vadd.f32 %v1933, 1.0
        %v1959 = vadd.f32 %v1935, 1.0
        %v1960 = vadd.f32 %v1937, 1.0
        %v1961 = vadd.f32 %v1939, 1.0
        %v1962 = vadd.f32 %v1941, 1.0
        %v1963 = vadd.f32 %v1943, 1.0
        %v1964 = vadd.f32 %v1945, 1.0
        %v1965 = vadd.f32 %v1947, 1.0
        %v1966 = vadd.f32 %v1949, 1.0
        %v1967 = vadd.f32 %v1951, 1.0
        %v1968 = vrcp.pop %v1952
        %v1969 = vmul.f32 %v1952, %v1968
        %v1970 = vsub.f32 1.0, %v1969
        %v1971 = vmul.f32 %v1968, %v1970
        %v1972 = vadd.f32 %v1968, %v1971
        %vm1973 = vweird.f32 %v1952
        %vm1974 = vweird.f32 %v1968
        %vm1975 = vmor %vm1973, %vm1974
        %v1976 = vsel %vm1975, %v1968, %v1972
        %v1977 = vand.u32 2147483647, %v1952
        %vm1978 = vcmp.eq.f32.partialorder %v1977, 8.507059e+37
        %v1979 = vand.u32 %v1952, 2147483648
        %v1980 = vor.u32 1.1754944e-38, %v1979
        %v1981 = vsel %vm1978, %v1980, %v1976
        %v1982 = vmul.f32 1.0, %v1981
        %v1983 = vrcp.pop %v1953
        %v1984 = vmul.f32 %v1953, %v1983
        %v1985 = vsub.f32 1.0, %v1984
        %v1986 = vmul.f32 %v1983, %v1985
        %v1987 = vadd.f32 %v1983, %v1986
        %vm1988 = vweird.f32 %v1953
        %vm1989 = vweird.f32 %v1983
        %vm1990 = vmor %vm1988, %vm1989
        %v1991 = vsel %vm1990, %v1983, %v1987
        %v1992 = vand.u32 2147483647, %v1953
        %vm1993 = vcmp.eq.f32.partialorder %v1992, 8.507059e+37
        %v1994 = vand.u32 %v1953, 2147483648
        %v1995 = vor.u32 1.1754944e-38, %v1994
        %v1996 = vsel %vm1993, %v1995, %v1991
        %v1997 = vmul.f32 1.0, %v1996
        %v1998 = vrcp.pop %v1954
        %v1999 = vmul.f32 %v1954, %v1998
        %v2000 = vsub.f32 1.0, %v1999
        %v2001 = vmul.f32 %v1998, %v2000
        %v2002 = vadd.f32 %v1998, %v2001
        %vm2003 = vweird.f32 %v1954
        %vm2004 = vweird.f32 %v1998
        %vm2005 = vmor %vm2003, %vm2004
        %v2006 = vsel %vm2005, %v1998, %v2002
        %v2007 = vand.u32 2147483647, %v1954
        %vm2008 = vcmp.eq.f32.partialorder %v2007, 8.507059e+37
        %v2009 = vand.u32 %v1954, 2147483648
        %v2010 = vor.u32 1.1754944e-38, %v2009
        %v2011 = vsel %vm2008, %v2010, %v2006
        %v2012 = vmul.f32 1.0, %v2011
        %v2013 = vrcp.pop %v1955
        %v2014 = vmul.f32 %v1955, %v2013
        %v2015 = vsub.f32 1.0, %v2014
        %v2016 = vmul.f32 %v2013, %v2015
        %v2017 = vadd.f32 %v2013, %v2016
        %vm2018 = vweird.f32 %v1955
        %vm2019 = vweird.f32 %v2013
        %vm2020 = vmor %vm2018, %vm2019
        %v2021 = vsel %vm2020, %v2013, %v2017
        %v2022 = vand.u32 2147483647, %v1955
        %vm2023 = vcmp.eq.f32.partialorder %v2022, 8.507059e+37
        %v2024 = vand.u32 %v1955, 2147483648
        %v2025 = vor.u32 1.1754944e-38, %v2024
        %v2026 = vsel %vm2023, %v2025, %v2021
        %v2027 = vmul.f32 1.0, %v2026
        %v2028 = vrcp.pop %v1956
        %v2029 = vmul.f32 %v1956, %v2028
        %v2030 = vsub.f32 1.0, %v2029
        %v2031 = vmul.f32 %v2028, %v2030
        %v2032 = vadd.f32 %v2028, %v2031
        %vm2033 = vweird.f32 %v1956
        %vm2034 = vweird.f32 %v2028
        %vm2035 = vmor %vm2033, %vm2034
        %v2036 = vsel %vm2035, %v2028, %v2032
        %v2037 = vand.u32 2147483647, %v1956
        %vm2038 = vcmp.eq.f32.partialorder %v2037, 8.507059e+37
        %v2039 = vand.u32 %v1956, 2147483648
        %v2040 = vor.u32 1.1754944e-38, %v2039
        %v2041 = vsel %vm2038, %v2040, %v2036
        %v2042 = vmul.f32 1.0, %v2041
        %v2043 = vrcp.pop %v1957
        %v2044 = vmul.f32 %v1957, %v2043
        %v2045 = vsub.f32 1.0, %v2044
        %v2046 = vmul.f32 %v2043, %v2045
        %v2047 = vadd.f32 %v2043, %v2046
        %vm2048 = vweird.f32 %v1957
        %vm2049 = vweird.f32 %v2043
        %vm2050 = vmor %vm2048, %vm2049
        %v2051 = vsel %vm2050, %v2043, %v2047
        %v2052 = vand.u32 2147483647, %v1957
        %vm2053 = vcmp.eq.f32.partialorder %v2052, 8.507059e+37
        %v2054 = vand.u32 %v1957, 2147483648
        %v2055 = vor.u32 1.1754944e-38, %v2054
        %v2056 = vsel %vm2053, %v2055, %v2051
        %v2057 = vmul.f32 1.0, %v2056
        %v2058 = vrcp.pop %v1958
        %v2059 = vmul.f32 %v1958, %v2058
        %v2060 = vsub.f32 1.0, %v2059
        %v2061 = vmul.f32 %v2058, %v2060
        %v2062 = vadd.f32 %v2058, %v2061
        %vm2063 = vweird.f32 %v1958
        %vm2064 = vweird.f32 %v2058
        %vm2065 = vmor %vm2063, %vm2064
        %v2066 = vsel %vm2065, %v2058, %v2062
        %v2067 = vand.u32 2147483647, %v1958
        %vm2068 = vcmp.eq.f32.partialorder %v2067, 8.507059e+37
        %v2069 = vand.u32 %v1958, 2147483648
        %v2070 = vor.u32 1.1754944e-38, %v2069
        %v2071 = vsel %vm2068, %v2070, %v2066
        %v2072 = vmul.f32 1.0, %v2071
        %v2073 = vrcp.pop %v1959
        %v2074 = vmul.f32 %v1959, %v2073
        %v2075 = vsub.f32 1.0, %v2074
        %v2076 = vmul.f32 %v2073, %v2075
        %v2077 = vadd.f32 %v2073, %v2076
        %vm2078 = vweird.f32 %v1959
        %vm2079 = vweird.f32 %v2073
        %vm2080 = vmor %vm2078, %vm2079
        %v2081 = vsel %vm2080, %v2073, %v2077
        %v2082 = vand.u32 2147483647, %v1959
        %vm2083 = vcmp.eq.f32.partialorder %v2082, 8.507059e+37
        %v2084 = vand.u32 %v1959, 2147483648
        %v2085 = vor.u32 1.1754944e-38, %v2084
        %v2086 = vsel %vm2083, %v2085, %v2081
        %v2087 = vmul.f32 1.0, %v2086
        %v2088 = vrcp.pop %v1960
        %v2089 = vmul.f32 %v1960, %v2088
        %v2090 = vsub.f32 1.0, %v2089
        %v2091 = vmul.f32 %v2088, %v2090
        %v2092 = vadd.f32 %v2088, %v2091
        %vm2093 = vweird.f32 %v1960
        %vm2094 = vweird.f32 %v2088
        %vm2095 = vmor %vm2093, %vm2094
        %v2096 = vsel %vm2095, %v2088, %v2092
        %v2097 = vand.u32 2147483647, %v1960
        %vm2098 = vcmp.eq.f32.partialorder %v2097, 8.507059e+37
        %v2099 = vand.u32 %v1960, 2147483648
        %v2100 = vor.u32 1.1754944e-38, %v2099
        %v2101 = vsel %vm2098, %v2100, %v2096
        %v2102 = vmul.f32 1.0, %v2101
        %v2103 = vrcp.pop %v1961
        %v2104 = vmul.f32 %v1961, %v2103
        %v2105 = vsub.f32 1.0, %v2104
        %v2106 = vmul.f32 %v2103, %v2105
        %v2107 = vadd.f32 %v2103, %v2106
        %vm2108 = vweird.f32 %v1961
        %vm2109 = vweird.f32 %v2103
        %vm2110 = vmor %vm2108, %vm2109
        %v2111 = vsel %vm2110, %v2103, %v2107
        %v2112 = vand.u32 2147483647, %v1961
        %vm2113 = vcmp.eq.f32.partialorder %v2112, 8.507059e+37
        %v2114 = vand.u32 %v1961, 2147483648
        %v2115 = vor.u32 1.1754944e-38, %v2114
        %v2116 = vsel %vm2113, %v2115, %v2111
        %v2117 = vmul.f32 1.0, %v2116
        %v2118 = vrcp.pop %v1962
        %v2119 = vmul.f32 %v1962, %v2118
        %v2120 = vsub.f32 1.0, %v2119
        %v2121 = vmul.f32 %v2118, %v2120
        %v2122 = vadd.f32 %v2118, %v2121
        %vm2123 = vweird.f32 %v1962
        %vm2124 = vweird.f32 %v2118
        %vm2125 = vmor %vm2123, %vm2124
        %v2126 = vsel %vm2125, %v2118, %v2122
        %v2127 = vand.u32 2147483647, %v1962
        %vm2128 = vcmp.eq.f32.partialorder %v2127, 8.507059e+37
        %v2129 = vand.u32 %v1962, 2147483648
        %v2130 = vor.u32 1.1754944e-38, %v2129
        %v2131 = vsel %vm2128, %v2130, %v2126
        %v2132 = vmul.f32 1.0, %v2131
        %v2133 = vrcp.pop %v1963
        %v2134 = vmul.f32 %v1963, %v2133
        %v2135 = vsub.f32 1.0, %v2134
        %v2136 = vmul.f32 %v2133, %v2135
        %v2137 = vadd.f32 %v2133, %v2136
        %vm2138 = vweird.f32 %v1963
        %vm2139 = vweird.f32 %v2133
        %vm2140 = vmor %vm2138, %vm2139
        %v2141 = vsel %vm2140, %v2133, %v2137
        %v2142 = vand.u32 2147483647, %v1963
        %vm2143 = vcmp.eq.f32.partialorder %v2142, 8.507059e+37
        %v2144 = vand.u32 %v1963, 2147483648
        %v2145 = vor.u32 1.1754944e-38, %v2144
        %v2146 = vsel %vm2143, %v2145, %v2141
        %v2147 = vmul.f32 1.0, %v2146
        %v2148 = vrcp.pop %v1964
        %v2149 = vmul.f32 %v1964, %v2148
        %v2150 = vsub.f32 1.0, %v2149
        %v2151 = vmul.f32 %v2148, %v2150
        %v2152 = vadd.f32 %v2148, %v2151
        %vm2153 = vweird.f32 %v1964
        %vm2154 = vweird.f32 %v2148
        %vm2155 = vmor %vm2153, %vm2154
        %v2156 = vsel %vm2155, %v2148, %v2152
        %v2157 = vand.u32 2147483647, %v1964
        %vm2158 = vcmp.eq.f32.partialorder %v2157, 8.507059e+37
        %v2159 = vand.u32 %v1964, 2147483648
        %v2160 = vor.u32 1.1754944e-38, %v2159
        %v2161 = vsel %vm2158, %v2160, %v2156
        %v2162 = vmul.f32 1.0, %v2161
        %v2163 = vrcp.pop %v1965
        %v2164 = vmul.f32 %v1965, %v2163
        %v2165 = vsub.f32 1.0, %v2164
        %v2166 = vmul.f32 %v2163, %v2165
        %v2167 = vadd.f32 %v2163, %v2166
        %vm2168 = vweird.f32 %v1965
        %vm2169 = vweird.f32 %v2163
        %vm2170 = vmor %vm2168, %vm2169
        %v2171 = vsel %vm2170, %v2163, %v2167
        %v2172 = vand.u32 2147483647, %v1965
        %vm2173 = vcmp.eq.f32.partialorder %v2172, 8.507059e+37
        %v2174 = vand.u32 %v1965, 2147483648
        %v2175 = vor.u32 1.1754944e-38, %v2174
        %v2176 = vsel %vm2173, %v2175, %v2171
        %v2177 = vmul.f32 1.0, %v2176
        %v2178 = vrcp.pop %v1966
        %v2179 = vmul.f32 %v1966, %v2178
        %v2180 = vsub.f32 1.0, %v2179
        %v2181 = vmul.f32 %v2178, %v2180
        %v2182 = vadd.f32 %v2178, %v2181
        %vm2183 = vweird.f32 %v1966
        %vm2184 = vweird.f32 %v2178
        %vm2185 = vmor %vm2183, %vm2184
        %v2186 = vsel %vm2185, %v2178, %v2182
        %v2187 = vand.u32 2147483647, %v1966
        %vm2188 = vcmp.eq.f32.partialorder %v2187, 8.507059e+37
        %v2189 = vand.u32 %v1966, 2147483648
        %v2190 = vor.u32 1.1754944e-38, %v2189
        %v2191 = vsel %vm2188, %v2190, %v2186
        %v2192 = vmul.f32 1.0, %v2191
        %v2193 = vrcp.pop %v1967
        %v2194 = vmul.f32 %v1967, %v2193
        %v2195 = vsub.f32 1.0, %v2194
        %v2196 = vmul.f32 %v2193, %v2195
        %v2197 = vadd.f32 %v2193, %v2196
        %vm2198 = vweird.f32 %v1967
        %vm2199 = vweird.f32 %v2193
        %vm2200 = vmor %vm2198, %vm2199
        %v2201 = vsel %vm2200, %v2193, %v2197
        %v2202 = vand.u32 2147483647, %v1967
        %vm2203 = vcmp.eq.f32.partialorder %v2202, 8.507059e+37
        %v2204 = vand.u32 %v1967, 2147483648
        %v2205 = vor.u32 1.1754944e-38, %v2204
        %v2206 = vsel %vm2203, %v2205, %v2201
        %v2207 = vmul.f32 1.0, %v2206
        %v2208 = vtanh.pop %v1888
        %v2209 = vtanh.pop %v1889
        %v2210 = vtanh.pop %v1890
        %v2211 = vtanh.pop %v1891
        %v2212 = vtanh.pop %v1892
        %v2213 = vtanh.pop %v1893
        %v2214 = vtanh.pop %v1894
        %v2215 = vtanh.pop %v1895
        %v2216 = vtanh.pop %v1896
        %v2217 = vtanh.pop %v1897
        %v2218 = vtanh.pop %v1898
        %v2219 = vtanh.pop %v1899
        %v2220 = vtanh.pop %v1900
        %v2221 = vtanh.pop %v1901
        %v2222 = vtanh.pop %v1902
        %v2223 = vtanh.pop %v1903
        %v2224 = vmul.f32 %v1982, 0.0
        %v2225 = vmul.f32 %v1997, 0.0
        %v2226 = vmul.f32 %v2012, 0.0
        %v2227 = vmul.f32 %v2027, 0.0
        %v2228 = vmul.f32 %v2042, 0.0
        %v2229 = vmul.f32 %v2057, 0.0
        %v2230 = vmul.f32 %v2072, 0.0
        %v2231 = vmul.f32 %v2087, 0.0
        %v2232 = vmul.f32 %v2102, 0.0
        %v2233 = vmul.f32 %v2117, 0.0
        %v2234 = vmul.f32 %v2132, 0.0
        %v2235 = vmul.f32 %v2147, 0.0
        %v2236 = vmul.f32 %v2162, 0.0
        %v2237 = vmul.f32 %v2177, 0.0
        %v2238 = vmul.f32 %v2192, 0.0
        %v2239 = vmul.f32 %v2207, 0.0
        %2256 = vrot.lane.b32.xlu0 %v2208, 32
        %v2257 = vpop.permute.xlu0 %2256
        %2258 = vrot.lane.b32.xlu0 %v2209, 32
        %v2259 = vpop.permute.xlu0 %2258
        %2260 = vrot.lane.b32.xlu0 %v2210, 32
        %v2261 = vpop.permute.xlu0 %2260
        %2262 = vrot.lane.b32.xlu0 %v2211, 32
        %v2263 = vpop.permute.xlu0 %2262
        %2264 = vrot.lane.b32.xlu0 %v2212, 32
        %v2265 = vpop.permute.xlu0 %2264
        %2266 = vrot.lane.b32.xlu0 %v2213, 32
        %v2267 = vpop.permute.xlu0 %2266
        %2268 = vrot.lane.b32.xlu0 %v2214, 32
        %v2269 = vpop.permute.xlu0 %2268
        %2270 = vrot.lane.b32.xlu0 %v2215, 32
        %v2271 = vpop.permute.xlu0 %2270
        %2272 = vrot.lane.b32.xlu0 %v2216, 32
        %v2273 = vpop.permute.xlu0 %2272
        %2274 = vrot.lane.b32.xlu0 %v2217, 32
        %v2275 = vpop.permute.xlu0 %2274
        %2276 = vrot.lane.b32.xlu0 %v2218, 32
        %v2277 = vpop.permute.xlu0 %2276
        %2278 = vrot.lane.b32.xlu0 %v2219, 32
        %v2279 = vpop.permute.xlu0 %2278
        %2280 = vrot.lane.b32.xlu0 %v2220, 32
        %v2281 = vpop.permute.xlu0 %2280
        %2282 = vrot.lane.b32.xlu0 %v2221, 32
        %v2283 = vpop.permute.xlu0 %2282
        %2284 = vrot.lane.b32.xlu0 %v2222, 32
        %v2285 = vpop.permute.xlu0 %2284
        %2286 = vrot.lane.b32.xlu0 %v2223, 32
        %v2287 = vpop.permute.xlu0 %2286
        %v2304 = vmul.f32 %v1982, %v2257
        %v2305 = vmul.f32 %v1997, %v2259
        %v2306 = vmul.f32 %v2012, %v2261
        %v2307 = vmul.f32 %v2027, %v2263
        %v2308 = vmul.f32 %v2042, %v2265
        %v2309 = vmul.f32 %v2057, %v2267
        %v2310 = vmul.f32 %v2072, %v2269
        %v2311 = vmul.f32 %v2087, %v2271
        %v2312 = vmul.f32 %v2102, %v2273
        %v2313 = vmul.f32 %v2117, %v2275
        %v2314 = vmul.f32 %v2132, %v2277
        %v2315 = vmul.f32 %v2147, %v2279
        %v2316 = vmul.f32 %v2162, %v2281
        %v2317 = vmul.f32 %v2177, %v2283
        %v2318 = vmul.f32 %v2192, %v2285
        %v2319 = vmul.f32 %v2207, %v2287
        %2336 = vrot.lane.b32.xlu0 %v2304, 32
        %v2337 = vpop.permute.xlu0 %2336
        %2338 = vrot.lane.b32.xlu0 %v2305, 32
        %v2339 = vpop.permute.xlu0 %2338
        %2340 = vrot.lane.b32.xlu0 %v2306, 32
        %v2341 = vpop.permute.xlu0 %2340
        %2342 = vrot.lane.b32.xlu0 %v2307, 32
        %v2343 = vpop.permute.xlu0 %2342
        %2344 = vrot.lane.b32.xlu0 %v2308, 32
        %v2345 = vpop.permute.xlu0 %2344
        %2346 = vrot.lane.b32.xlu0 %v2309, 32
        %v2347 = vpop.permute.xlu0 %2346
        %2348 = vrot.lane.b32.xlu0 %v2310, 32
        %v2349 = vpop.permute.xlu0 %2348
        %2350 = vrot.lane.b32.xlu0 %v2311, 32
        %v2351 = vpop.permute.xlu0 %2350
        %2352 = vrot.lane.b32.xlu0 %v2312, 32
        %v2353 = vpop.permute.xlu0 %2352
        %2354 = vrot.lane.b32.xlu0 %v2313, 32
        %v2355 = vpop.permute.xlu0 %2354
        %2356 = vrot.lane.b32.xlu0 %v2314, 32
        %v2357 = vpop.permute.xlu0 %2356
        %2358 = vrot.lane.b32.xlu0 %v2315, 32
        %v2359 = vpop.permute.xlu0 %2358
        %2360 = vrot.lane.b32.xlu0 %v2316, 32
        %v2361 = vpop.permute.xlu0 %2360
        %2362 = vrot.lane.b32.xlu0 %v2317, 32
        %v2363 = vpop.permute.xlu0 %2362
        %2364 = vrot.lane.b32.xlu0 %v2318, 32
        %v2365 = vpop.permute.xlu0 %2364
        %2366 = vrot.lane.b32.xlu0 %v2319, 32
        %v2367 = vpop.permute.xlu0 %2366
        %v2384 = vadd.f32 %v2224, %v2337
        %v2385 = vadd.f32 %v2225, %v2339
        %v2386 = vadd.f32 %v2226, %v2341
        %v2387 = vadd.f32 %v2227, %v2343
        %v2388 = vadd.f32 %v2228, %v2345
        %v2389 = vadd.f32 %v2229, %v2347
        %v2390 = vadd.f32 %v2230, %v2349
        %v2391 = vadd.f32 %v2231, %v2351
        %v2392 = vadd.f32 %v2232, %v2353
        %v2393 = vadd.f32 %v2233, %v2355
        %v2394 = vadd.f32 %v2234, %v2357
        %v2395 = vadd.f32 %v2235, %v2359
        %v2396 = vadd.f32 %v2236, %v2361
        %v2397 = vadd.f32 %v2237, %v2363
        %v2398 = vadd.f32 %v2238, %v2365
        %v2399 = vadd.f32 %v2239, %v2367
        %v2400 = vtanh.pop %v2384
        %v2401 = vtanh.pop %v2385
        %v2402 = vtanh.pop %v2386
        %v2403 = vtanh.pop %v2387
        %v2404 = vtanh.pop %v2388
        %v2405 = vtanh.pop %v2389
        %v2406 = vtanh.pop %v2390
        %v2407 = vtanh.pop %v2391
        %v2408 = vtanh.pop %v2392
        %v2409 = vtanh.pop %v2393
        %v2410 = vtanh.pop %v2394
        %v2411 = vtanh.pop %v2395
        %v2412 = vtanh.pop %v2396
        %v2413 = vtanh.pop %v2397
        %v2414 = vtanh.pop %v2398
        %v2415 = vtanh.pop %v2399
        %2432 = vrot.lane.b32.xlu0 %v2400, 32
        %v2433 = vpop.permute.xlu0 %2432
        %2434 = vrot.lane.b32.xlu0 %v2401, 32
        %v2435 = vpop.permute.xlu0 %2434
        %2436 = vrot.lane.b32.xlu0 %v2402, 32
        %v2437 = vpop.permute.xlu0 %2436
        %2438 = vrot.lane.b32.xlu0 %v2403, 32
        %v2439 = vpop.permute.xlu0 %2438
        %2440 = vrot.lane.b32.xlu0 %v2404, 32
        %v2441 = vpop.permute.xlu0 %2440
        %2442 = vrot.lane.b32.xlu0 %v2405, 32
        %v2443 = vpop.permute.xlu0 %2442
        %2444 = vrot.lane.b32.xlu0 %v2406, 32
        %v2445 = vpop.permute.xlu0 %2444
        %2446 = vrot.lane.b32.xlu0 %v2407, 32
        %v2447 = vpop.permute.xlu0 %2446
        %2448 = vrot.lane.b32.xlu0 %v2408, 32
        %v2449 = vpop.permute.xlu0 %2448
        %2450 = vrot.lane.b32.xlu0 %v2409, 32
        %v2451 = vpop.permute.xlu0 %2450
        %2452 = vrot.lane.b32.xlu0 %v2410, 32
        %v2453 = vpop.permute.xlu0 %2452
        %2454 = vrot.lane.b32.xlu0 %v2411, 32
        %v2455 = vpop.permute.xlu0 %2454
        %2456 = vrot.lane.b32.xlu0 %v2412, 32
        %v2457 = vpop.permute.xlu0 %2456
        %2458 = vrot.lane.b32.xlu0 %v2413, 32
        %v2459 = vpop.permute.xlu0 %2458
        %2460 = vrot.lane.b32.xlu0 %v2414, 32
        %v2461 = vpop.permute.xlu0 %2460
        %2462 = vrot.lane.b32.xlu0 %v2415, 32
        %v2463 = vpop.permute.xlu0 %2462
        %v2480 = vmul.f32 %v1982, %v2433
        %v2481 = vmul.f32 %v1997, %v2435
        %v2482 = vmul.f32 %v2012, %v2437
        %v2483 = vmul.f32 %v2027, %v2439
        %v2484 = vmul.f32 %v2042, %v2441
        %v2485 = vmul.f32 %v2057, %v2443
        %v2486 = vmul.f32 %v2072, %v2445
        %v2487 = vmul.f32 %v2087, %v2447
        %v2488 = vmul.f32 %v2102, %v2449
        %v2489 = vmul.f32 %v2117, %v2451
        %v2490 = vmul.f32 %v2132, %v2453
        %v2491 = vmul.f32 %v2147, %v2455
        %v2492 = vmul.f32 %v2162, %v2457
        %v2493 = vmul.f32 %v2177, %v2459
        %v2494 = vmul.f32 %v2192, %v2461
        %v2495 = vmul.f32 %v2207, %v2463
        %2512 = vrot.lane.b32.xlu0 %v2480, 64
        %v2513 = vpop.permute.xlu0 %2512
        %2514 = vrot.lane.b32.xlu0 %v2481, 64
        %v2515 = vpop.permute.xlu0 %2514
        %2516 = vrot.lane.b32.xlu0 %v2482, 64
        %v2517 = vpop.permute.xlu0 %2516
        %2518 = vrot.lane.b32.xlu0 %v2483, 64
        %v2519 = vpop.permute.xlu0 %2518
        %2520 = vrot.lane.b32.xlu0 %v2484, 64
        %v2521 = vpop.permute.xlu0 %2520
        %2522 = vrot.lane.b32.xlu0 %v2485, 64
        %v2523 = vpop.permute.xlu0 %2522
        %2524 = vrot.lane.b32.xlu0 %v2486, 64
        %v2525 = vpop.permute.xlu0 %2524
        %2526 = vrot.lane.b32.xlu0 %v2487, 64
        %v2527 = vpop.permute.xlu0 %2526
        %2528 = vrot.lane.b32.xlu0 %v2488, 64
        %v2529 = vpop.permute.xlu0 %2528
        %2530 = vrot.lane.b32.xlu0 %v2489, 64
        %v2531 = vpop.permute.xlu0 %2530
        %2532 = vrot.lane.b32.xlu0 %v2490, 64
        %v2533 = vpop.permute.xlu0 %2532
        %2534 = vrot.lane.b32.xlu0 %v2491, 64
        %v2535 = vpop.permute.xlu0 %2534
        %2536 = vrot.lane.b32.xlu0 %v2492, 64
        %v2537 = vpop.permute.xlu0 %2536
        %2538 = vrot.lane.b32.xlu0 %v2493, 64
        %v2539 = vpop.permute.xlu0 %2538
        %2540 = vrot.lane.b32.xlu0 %v2494, 64
        %v2541 = vpop.permute.xlu0 %2540
        %2542 = vrot.lane.b32.xlu0 %v2495, 64
        %v2543 = vpop.permute.xlu0 %2542
        %v2544 = vsel %vm1034, %v2513, 0
        %v2546 = vsel %vm1034, %v2515, 0
        %v2548 = vsel %vm1034, %v2517, 0
        %v2550 = vsel %vm1034, %v2519, 0
        %v2552 = vsel %vm1034, %v2521, 0
        %v2554 = vsel %vm1034, %v2523, 0
        %v2556 = vsel %vm1034, %v2525, 0
        %v2558 = vsel %vm1034, %v2527, 0
        %v2560 = vsel %vm1034, %v2529, 0
        %v2562 = vsel %vm1034, %v2531, 0
        %v2564 = vsel %vm1034, %v2533, 0
        %v2566 = vsel %vm1034, %v2535, 0
        %v2568 = vsel %vm1034, %v2537, 0
        %v2570 = vsel %vm1034, %v2539, 0
        %v2572 = vsel %vm1034, %v2541, 0
        %v2574 = vsel %vm1034, %v2543, 0
        %2576 = vmatpush.msra.mxu0 0.0
        %2577 = vmatpush.msra.mxu0 0.0
        %2578 = vmatpush.msra.mxu0 0.0
        %2579 = vmatpush.msra.mxu0 0.0
        %2580 = vmatpush.msra.mxu0 0.0
        %2581 = vmatpush.msra.mxu0 0.0
        %2582 = vmatpush.msra.mxu0 0.0
        %2583 = vmatpush.msra.mxu0 0.0
        %2584 = vmatpush.msra.mxu0 0.0
        %2585 = vmatpush.msra.mxu0 0.0
        %2586 = vmatpush.msra.mxu0 0.0
        %2587 = vmatpush.msra.mxu0 0.0
        %2588 = vmatpush.msra.mxu0 %v897
        %2589 = vmatpush.msra.mxu0 %v896
        %2590 = vmatpush.msra.mxu0 %v895
        %2591 = vmatpush.msra.mxu0 %v894
        %2592 = vmatmul.f32.gmra.mxu0 %v2544
        %v2593 = vpop.f32.mrf.mxu0
        %v2594 = vadd.f32 0.0, %v2593
        %2595 = vmatmul.f32.gmra.mxu0 %v2546
        %v2596 = vpop.f32.mrf.mxu0
        %v2597 = vadd.f32 0.0, %v2596
        %2598 = vmatmul.f32.gmra.mxu0 %v2548
        %v2599 = vpop.f32.mrf.mxu0
        %v2600 = vadd.f32 0.0, %v2599
        %2601 = vmatmul.f32.gmra.mxu0 %v2550
        %v2602 = vpop.f32.mrf.mxu0
        %v2603 = vadd.f32 0.0, %v2602
        %2604 = vmatmul.f32.gmra.mxu0 %v2552
        %v2605 = vpop.f32.mrf.mxu0
        %v2606 = vadd.f32 0.0, %v2605
        %2607 = vmatmul.f32.gmra.mxu0 %v2554
        %v2608 = vpop.f32.mrf.mxu0
        %v2609 = vadd.f32 0.0, %v2608
        %2610 = vmatmul.f32.gmra.mxu0 %v2556
        %v2611 = vpop.f32.mrf.mxu0
        %v2612 = vadd.f32 0.0, %v2611
        %2613 = vmatmul.f32.gmra.mxu0 %v2558
        %v2614 = vpop.f32.mrf.mxu0
        %v2615 = vadd.f32 0.0, %v2614
        %2616 = vmatmul.f32.gmra.mxu0 %v2560
        %v2617 = vpop.f32.mrf.mxu0
        %v2618 = vadd.f32 0.0, %v2617
        %2619 = vmatmul.f32.gmra.mxu0 %v2562
        %v2620 = vpop.f32.mrf.mxu0
        %v2621 = vadd.f32 0.0, %v2620
        %2622 = vmatmul.f32.gmra.mxu0 %v2564
        %v2623 = vpop.f32.mrf.mxu0
        %v2624 = vadd.f32 0.0, %v2623
        %2625 = vmatmul.f32.gmra.mxu0 %v2566
        %v2626 = vpop.f32.mrf.mxu0
        %v2627 = vadd.f32 0.0, %v2626
        %2628 = vmatmul.f32.gmra.mxu0 %v2568
        %v2629 = vpop.f32.mrf.mxu0
        %v2630 = vadd.f32 0.0, %v2629
        %2631 = vmatmul.f32.gmra.mxu0 %v2570
        %v2632 = vpop.f32.mrf.mxu0
        %v2633 = vadd.f32 0.0, %v2632
        %2634 = vmatmul.f32.gmra.mxu0 %v2572
        %v2635 = vpop.f32.mrf.mxu0
        %v2636 = vadd.f32 0.0, %v2635
        %2637 = vmatmul.f32.gmra.mxu0 %v2574
        %v2638 = vpop.f32.mrf.mxu0
        %v2639 = vadd.f32 0.0, %v2638
        %2640 = vdwg.mxu0
        %v2641 = vadd.f32 %v1485, %v2594
        %v2642 = vadd.f32 %v1488, %v2597
        %v2643 = vadd.f32 %v1491, %v2600
        %v2644 = vadd.f32 %v1494, %v2603
        %v2645 = vadd.f32 %v1497, %v2606
        %v2646 = vadd.f32 %v1500, %v2609
        %v2647 = vadd.f32 %v1503, %v2612
        %v2648 = vadd.f32 %v1506, %v2615
        %v2649 = vadd.f32 %v1509, %v2618
        %v2650 = vadd.f32 %v1512, %v2621
        %v2651 = vadd.f32 %v1515, %v2624
        %v2652 = vadd.f32 %v1518, %v2627
        %v2653 = vadd.f32 %v1521, %v2630
        %v2654 = vadd.f32 %v1524, %v2633
        %v2655 = vadd.f32 %v1527, %v2636
        %v2656 = vadd.f32 %v1530, %v2639
        %v2657 = vxor.u32 %v2641, 2147483648
        %v2658 = vxor.u32 %v2642, 2147483648
        %v2659 = vxor.u32 %v2643, 2147483648
        %v2660 = vxor.u32 %v2644, 2147483648
        %v2661 = vxor.u32 %v2645, 2147483648
        %v2662 = vxor.u32 %v2646, 2147483648
        %v2663 = vxor.u32 %v2647, 2147483648
        %v2664 = vxor.u32 %v2648, 2147483648
        %v2665 = vxor.u32 %v2649, 2147483648
        %v2666 = vxor.u32 %v2650, 2147483648
        %v2667 = vxor.u32 %v2651, 2147483648
        %v2668 = vxor.u32 %v2652, 2147483648
        %v2669 = vxor.u32 %v2653, 2147483648
        %v2670 = vxor.u32 %v2654, 2147483648
        %v2671 = vxor.u32 %v2655, 2147483648
        %v2672 = vxor.u32 %v2656, 2147483648
        %v2673 = vmul.f32 %v2657, 1.442695
        %v2674 = vpow.pop %v2673
        %v2675 = vmul.f32 %v2658, 1.442695
        %v2676 = vpow.pop %v2675
        %v2677 = vmul.f32 %v2659, 1.442695
        %v2678 = vpow.pop %v2677
        %v2679 = vmul.f32 %v2660, 1.442695
        %v2680 = vpow.pop %v2679
        %v2681 = vmul.f32 %v2661, 1.442695
        %v2682 = vpow.pop %v2681
        %v2683 = vmul.f32 %v2662, 1.442695
        %v2684 = vpow.pop %v2683
        %v2685 = vmul.f32 %v2663, 1.442695
        %v2686 = vpow.pop %v2685
        %v2687 = vmul.f32 %v2664, 1.442695
        %v2688 = vpow.pop %v2687
        %v2689 = vmul.f32 %v2665, 1.442695
        %v2690 = vpow.pop %v2689
        %v2691 = vmul.f32 %v2666, 1.442695
        %v2692 = vpow.pop %v2691
        %v2693 = vmul.f32 %v2667, 1.442695
        %v2694 = vpow.pop %v2693
        %v2695 = vmul.f32 %v2668, 1.442695
        %v2696 = vpow.pop %v2695
        %v2697 = vmul.f32 %v2669, 1.442695
        %v2698 = vpow.pop %v2697
        %v2699 = vmul.f32 %v2670, 1.442695
        %v2700 = vpow.pop %v2699
        %v2701 = vmul.f32 %v2671, 1.442695
        %v2702 = vpow.pop %v2701
        %v2703 = vmul.f32 %v2672, 1.442695
        %v2704 = vpow.pop %v2703
        %v2705 = vadd.f32 %v2674, 1.0
        %v2706 = vadd.f32 %v2676, 1.0
        %v2707 = vadd.f32 %v2678, 1.0
        %v2708 = vadd.f32 %v2680, 1.0
        %v2709 = vadd.f32 %v2682, 1.0
        %v2710 = vadd.f32 %v2684, 1.0
        %v2711 = vadd.f32 %v2686, 1.0
        %v2712 = vadd.f32 %v2688, 1.0
        %v2713 = vadd.f32 %v2690, 1.0
        %v2714 = vadd.f32 %v2692, 1.0
        %v2715 = vadd.f32 %v2694, 1.0
        %v2716 = vadd.f32 %v2696, 1.0
        %v2717 = vadd.f32 %v2698, 1.0
        %v2718 = vadd.f32 %v2700, 1.0
        %v2719 = vadd.f32 %v2702, 1.0
        %v2720 = vadd.f32 %v2704, 1.0
        %v2721 = vrcp.pop %v2705
        %v2722 = vmul.f32 %v2705, %v2721
        %v2723 = vsub.f32 1.0, %v2722
        %v2724 = vmul.f32 %v2721, %v2723
        %v2725 = vadd.f32 %v2721, %v2724
        %vm2726 = vweird.f32 %v2705
        %vm2727 = vweird.f32 %v2721
        %vm2728 = vmor %vm2726, %vm2727
        %v2729 = vsel %vm2728, %v2721, %v2725
        %v2730 = vand.u32 2147483647, %v2705
        %vm2731 = vcmp.eq.f32.partialorder %v2730, 8.507059e+37
        %v2732 = vand.u32 %v2705, 2147483648
        %v2733 = vor.u32 1.1754944e-38, %v2732
        %v2734 = vsel %vm2731, %v2733, %v2729
        %v2735 = vmul.f32 1.0, %v2734
        %v2736 = vrcp.pop %v2706
        %v2737 = vmul.f32 %v2706, %v2736
        %v2738 = vsub.f32 1.0, %v2737
        %v2739 = vmul.f32 %v2736, %v2738
        %v2740 = vadd.f32 %v2736, %v2739
        %vm2741 = vweird.f32 %v2706
        %vm2742 = vweird.f32 %v2736
        %vm2743 = vmor %vm2741, %vm2742
        %v2744 = vsel %vm2743, %v2736, %v2740
        %v2745 = vand.u32 2147483647, %v2706
        %vm2746 = vcmp.eq.f32.partialorder %v2745, 8.507059e+37
        %v2747 = vand.u32 %v2706, 2147483648
        %v2748 = vor.u32 1.1754944e-38, %v2747
        %v2749 = vsel %vm2746, %v2748, %v2744
        %v2750 = vmul.f32 1.0, %v2749
        %v2751 = vrcp.pop %v2707
        %v2752 = vmul.f32 %v2707, %v2751
        %v2753 = vsub.f32 1.0, %v2752
        %v2754 = vmul.f32 %v2751, %v2753
        %v2755 = vadd.f32 %v2751, %v2754
        %vm2756 = vweird.f32 %v2707
        %vm2757 = vweird.f32 %v2751
        %vm2758 = vmor %vm2756, %vm2757
        %v2759 = vsel %vm2758, %v2751, %v2755
        %v2760 = vand.u32 2147483647, %v2707
        %vm2761 = vcmp.eq.f32.partialorder %v2760, 8.507059e+37
        %v2762 = vand.u32 %v2707, 2147483648
        %v2763 = vor.u32 1.1754944e-38, %v2762
        %v2764 = vsel %vm2761, %v2763, %v2759
        %v2765 = vmul.f32 1.0, %v2764
        %v2766 = vrcp.pop %v2708
        %v2767 = vmul.f32 %v2708, %v2766
        %v2768 = vsub.f32 1.0, %v2767
        %v2769 = vmul.f32 %v2766, %v2768
        %v2770 = vadd.f32 %v2766, %v2769
        %vm2771 = vweird.f32 %v2708
        %vm2772 = vweird.f32 %v2766
        %vm2773 = vmor %vm2771, %vm2772
        %v2774 = vsel %vm2773, %v2766, %v2770
        %v2775 = vand.u32 2147483647, %v2708
        %vm2776 = vcmp.eq.f32.partialorder %v2775, 8.507059e+37
        %v2777 = vand.u32 %v2708, 2147483648
        %v2778 = vor.u32 1.1754944e-38, %v2777
        %v2779 = vsel %vm2776, %v2778, %v2774
        %v2780 = vmul.f32 1.0, %v2779
        %v2781 = vrcp.pop %v2709
        %v2782 = vmul.f32 %v2709, %v2781
        %v2783 = vsub.f32 1.0, %v2782
        %v2784 = vmul.f32 %v2781, %v2783
        %v2785 = vadd.f32 %v2781, %v2784
        %vm2786 = vweird.f32 %v2709
        %vm2787 = vweird.f32 %v2781
        %vm2788 = vmor %vm2786, %vm2787
        %v2789 = vsel %vm2788, %v2781, %v2785
        %v2790 = vand.u32 2147483647, %v2709
        %vm2791 = vcmp.eq.f32.partialorder %v2790, 8.507059e+37
        %v2792 = vand.u32 %v2709, 2147483648
        %v2793 = vor.u32 1.1754944e-38, %v2792
        %v2794 = vsel %vm2791, %v2793, %v2789
        %v2795 = vmul.f32 1.0, %v2794
        %v2796 = vrcp.pop %v2710
        %v2797 = vmul.f32 %v2710, %v2796
        %v2798 = vsub.f32 1.0, %v2797
        %v2799 = vmul.f32 %v2796, %v2798
        %v2800 = vadd.f32 %v2796, %v2799
        %vm2801 = vweird.f32 %v2710
        %vm2802 = vweird.f32 %v2796
        %vm2803 = vmor %vm2801, %vm2802
        %v2804 = vsel %vm2803, %v2796, %v2800
        %v2805 = vand.u32 2147483647, %v2710
        %vm2806 = vcmp.eq.f32.partialorder %v2805, 8.507059e+37
        %v2807 = vand.u32 %v2710, 2147483648
        %v2808 = vor.u32 1.1754944e-38, %v2807
        %v2809 = vsel %vm2806, %v2808, %v2804
        %v2810 = vmul.f32 1.0, %v2809
        %v2811 = vrcp.pop %v2711
        %v2812 = vmul.f32 %v2711, %v2811
        %v2813 = vsub.f32 1.0, %v2812
        %v2814 = vmul.f32 %v2811, %v2813
        %v2815 = vadd.f32 %v2811, %v2814
        %vm2816 = vweird.f32 %v2711
        %vm2817 = vweird.f32 %v2811
        %vm2818 = vmor %vm2816, %vm2817
        %v2819 = vsel %vm2818, %v2811, %v2815
        %v2820 = vand.u32 2147483647, %v2711
        %vm2821 = vcmp.eq.f32.partialorder %v2820, 8.507059e+37
        %v2822 = vand.u32 %v2711, 2147483648
        %v2823 = vor.u32 1.1754944e-38, %v2822
        %v2824 = vsel %vm2821, %v2823, %v2819
        %v2825 = vmul.f32 1.0, %v2824
        %v2826 = vrcp.pop %v2712
        %v2827 = vmul.f32 %v2712, %v2826
        %v2828 = vsub.f32 1.0, %v2827
        %v2829 = vmul.f32 %v2826, %v2828
        %v2830 = vadd.f32 %v2826, %v2829
        %vm2831 = vweird.f32 %v2712
        %vm2832 = vweird.f32 %v2826
        %vm2833 = vmor %vm2831, %vm2832
        %v2834 = vsel %vm2833, %v2826, %v2830
        %v2835 = vand.u32 2147483647, %v2712
        %vm2836 = vcmp.eq.f32.partialorder %v2835, 8.507059e+37
        %v2837 = vand.u32 %v2712, 2147483648
        %v2838 = vor.u32 1.1754944e-38, %v2837
        %v2839 = vsel %vm2836, %v2838, %v2834
        %v2840 = vmul.f32 1.0, %v2839
        %v2841 = vrcp.pop %v2713
        %v2842 = vmul.f32 %v2713, %v2841
        %v2843 = vsub.f32 1.0, %v2842
        %v2844 = vmul.f32 %v2841, %v2843
        %v2845 = vadd.f32 %v2841, %v2844
        %vm2846 = vweird.f32 %v2713
        %vm2847 = vweird.f32 %v2841
        %vm2848 = vmor %vm2846, %vm2847
        %v2849 = vsel %vm2848, %v2841, %v2845
        %v2850 = vand.u32 2147483647, %v2713
        %vm2851 = vcmp.eq.f32.partialorder %v2850, 8.507059e+37
        %v2852 = vand.u32 %v2713, 2147483648
        %v2853 = vor.u32 1.1754944e-38, %v2852
        %v2854 = vsel %vm2851, %v2853, %v2849
        %v2855 = vmul.f32 1.0, %v2854
        %v2856 = vrcp.pop %v2714
        %v2857 = vmul.f32 %v2714, %v2856
        %v2858 = vsub.f32 1.0, %v2857
        %v2859 = vmul.f32 %v2856, %v2858
        %v2860 = vadd.f32 %v2856, %v2859
        %vm2861 = vweird.f32 %v2714
        %vm2862 = vweird.f32 %v2856
        %vm2863 = vmor %vm2861, %vm2862
        %v2864 = vsel %vm2863, %v2856, %v2860
        %v2865 = vand.u32 2147483647, %v2714
        %vm2866 = vcmp.eq.f32.partialorder %v2865, 8.507059e+37
        %v2867 = vand.u32 %v2714, 2147483648
        %v2868 = vor.u32 1.1754944e-38, %v2867
        %v2869 = vsel %vm2866, %v2868, %v2864
        %v2870 = vmul.f32 1.0, %v2869
        %v2871 = vrcp.pop %v2715
        %v2872 = vmul.f32 %v2715, %v2871
        %v2873 = vsub.f32 1.0, %v2872
        %v2874 = vmul.f32 %v2871, %v2873
        %v2875 = vadd.f32 %v2871, %v2874
        %vm2876 = vweird.f32 %v2715
        %vm2877 = vweird.f32 %v2871
        %vm2878 = vmor %vm2876, %vm2877
        %v2879 = vsel %vm2878, %v2871, %v2875
        %v2880 = vand.u32 2147483647, %v2715
        %vm2881 = vcmp.eq.f32.partialorder %v2880, 8.507059e+37
        %v2882 = vand.u32 %v2715, 2147483648
        %v2883 = vor.u32 1.1754944e-38, %v2882
        %v2884 = vsel %vm2881, %v2883, %v2879
        %v2885 = vmul.f32 1.0, %v2884
        %v2886 = vrcp.pop %v2716
        %v2887 = vmul.f32 %v2716, %v2886
        %v2888 = vsub.f32 1.0, %v2887
        %v2889 = vmul.f32 %v2886, %v2888
        %v2890 = vadd.f32 %v2886, %v2889
        %vm2891 = vweird.f32 %v2716
        %vm2892 = vweird.f32 %v2886
        %vm2893 = vmor %vm2891, %vm2892
        %v2894 = vsel %vm2893, %v2886, %v2890
        %v2895 = vand.u32 2147483647, %v2716
        %vm2896 = vcmp.eq.f32.partialorder %v2895, 8.507059e+37
        %v2897 = vand.u32 %v2716, 2147483648
        %v2898 = vor.u32 1.1754944e-38, %v2897
        %v2899 = vsel %vm2896, %v2898, %v2894
        %v2900 = vmul.f32 1.0, %v2899
        %v2901 = vrcp.pop %v2717
        %v2902 = vmul.f32 %v2717, %v2901
        %v2903 = vsub.f32 1.0, %v2902
        %v2904 = vmul.f32 %v2901, %v2903
        %v2905 = vadd.f32 %v2901, %v2904
        %vm2906 = vweird.f32 %v2717
        %vm2907 = vweird.f32 %v2901
        %vm2908 = vmor %vm2906, %vm2907
        %v2909 = vsel %vm2908, %v2901, %v2905
        %v2910 = vand.u32 2147483647, %v2717
        %vm2911 = vcmp.eq.f32.partialorder %v2910, 8.507059e+37
        %v2912 = vand.u32 %v2717, 2147483648
        %v2913 = vor.u32 1.1754944e-38, %v2912
        %v2914 = vsel %vm2911, %v2913, %v2909
        %v2915 = vmul.f32 1.0, %v2914
        %v2916 = vrcp.pop %v2718
        %v2917 = vmul.f32 %v2718, %v2916
        %v2918 = vsub.f32 1.0, %v2917
        %v2919 = vmul.f32 %v2916, %v2918
        %v2920 = vadd.f32 %v2916, %v2919
        %vm2921 = vweird.f32 %v2718
        %vm2922 = vweird.f32 %v2916
        %vm2923 = vmor %vm2921, %vm2922
        %v2924 = vsel %vm2923, %v2916, %v2920
        %v2925 = vand.u32 2147483647, %v2718
        %vm2926 = vcmp.eq.f32.partialorder %v2925, 8.507059e+37
        %v2927 = vand.u32 %v2718, 2147483648
        %v2928 = vor.u32 1.1754944e-38, %v2927
        %v2929 = vsel %vm2926, %v2928, %v2924
        %v2930 = vmul.f32 1.0, %v2929
        %v2931 = vrcp.pop %v2719
        %v2932 = vmul.f32 %v2719, %v2931
        %v2933 = vsub.f32 1.0, %v2932
        %v2934 = vmul.f32 %v2931, %v2933
        %v2935 = vadd.f32 %v2931, %v2934
        %vm2936 = vweird.f32 %v2719
        %vm2937 = vweird.f32 %v2931
        %vm2938 = vmor %vm2936, %vm2937
        %v2939 = vsel %vm2938, %v2931, %v2935
        %v2940 = vand.u32 2147483647, %v2719
        %vm2941 = vcmp.eq.f32.partialorder %v2940, 8.507059e+37
        %v2942 = vand.u32 %v2719, 2147483648
        %v2943 = vor.u32 1.1754944e-38, %v2942
        %v2944 = vsel %vm2941, %v2943, %v2939
        %v2945 = vmul.f32 1.0, %v2944
        %v2946 = vrcp.pop %v2720
        %v2947 = vmul.f32 %v2720, %v2946
        %v2948 = vsub.f32 1.0, %v2947
        %v2949 = vmul.f32 %v2946, %v2948
        %v2950 = vadd.f32 %v2946, %v2949
        %vm2951 = vweird.f32 %v2720
        %vm2952 = vweird.f32 %v2946
        %vm2953 = vmor %vm2951, %vm2952
        %v2954 = vsel %vm2953, %v2946, %v2950
        %v2955 = vand.u32 2147483647, %v2720
        %vm2956 = vcmp.eq.f32.partialorder %v2955, 8.507059e+37
        %v2957 = vand.u32 %v2720, 2147483648
        %v2958 = vor.u32 1.1754944e-38, %v2957
        %v2959 = vsel %vm2956, %v2958, %v2954
        %v2960 = vmul.f32 1.0, %v2959
        %v2961 = vtanh.pop %v2641
        %v2962 = vtanh.pop %v2642
        %v2963 = vtanh.pop %v2643
        %v2964 = vtanh.pop %v2644
        %v2965 = vtanh.pop %v2645
        %v2966 = vtanh.pop %v2646
        %v2967 = vtanh.pop %v2647
        %v2968 = vtanh.pop %v2648
        %v2969 = vtanh.pop %v2649
        %v2970 = vtanh.pop %v2650
        %v2971 = vtanh.pop %v2651
        %v2972 = vtanh.pop %v2652
        %v2973 = vtanh.pop %v2653
        %v2974 = vtanh.pop %v2654
        %v2975 = vtanh.pop %v2655
        %v2976 = vtanh.pop %v2656
        %v2977 = vmul.f32 %v2735, %v2384
        %v2978 = vmul.f32 %v2750, %v2385
        %v2979 = vmul.f32 %v2765, %v2386
        %v2980 = vmul.f32 %v2780, %v2387
        %v2981 = vmul.f32 %v2795, %v2388
        %v2982 = vmul.f32 %v2810, %v2389
        %v2983 = vmul.f32 %v2825, %v2390
        %v2984 = vmul.f32 %v2840, %v2391
        %v2985 = vmul.f32 %v2855, %v2392
        %v2986 = vmul.f32 %v2870, %v2393
        %v2987 = vmul.f32 %v2885, %v2394
        %v2988 = vmul.f32 %v2900, %v2395
        %v2989 = vmul.f32 %v2915, %v2396
        %v2990 = vmul.f32 %v2930, %v2397
        %v2991 = vmul.f32 %v2945, %v2398
        %v2992 = vmul.f32 %v2960, %v2399
        %3009 = vrot.lane.b32.xlu0 %v2961, 32
        %v3010 = vpop.permute.xlu0 %3009
        %3011 = vrot.lane.b32.xlu0 %v2962, 32
        %v3012 = vpop.permute.xlu0 %3011
        %3013 = vrot.lane.b32.xlu0 %v2963, 32
        %v3014 = vpop.permute.xlu0 %3013
        %3015 = vrot.lane.b32.xlu0 %v2964, 32
        %v3016 = vpop.permute.xlu0 %3015
        %3017 = vrot.lane.b32.xlu0 %v2965, 32
        %v3018 = vpop.permute.xlu0 %3017
        %3019 = vrot.lane.b32.xlu0 %v2966, 32
        %v3020 = vpop.permute.xlu0 %3019
        %3021 = vrot.lane.b32.xlu0 %v2967, 32
        %v3022 = vpop.permute.xlu0 %3021
        %3023 = vrot.lane.b32.xlu0 %v2968, 32
        %v3024 = vpop.permute.xlu0 %3023
        %3025 = vrot.lane.b32.xlu0 %v2969, 32
        %v3026 = vpop.permute.xlu0 %3025
        %3027 = vrot.lane.b32.xlu0 %v2970, 32
        %v3028 = vpop.permute.xlu0 %3027
        %3029 = vrot.lane.b32.xlu0 %v2971, 32
        %v3030 = vpop.permute.xlu0 %3029
        %3031 = vrot.lane.b32.xlu0 %v2972, 32
        %v3032 = vpop.permute.xlu0 %3031
        %3033 = vrot.lane.b32.xlu0 %v2973, 32
        %v3034 = vpop.permute.xlu0 %3033
        %3035 = vrot.lane.b32.xlu0 %v2974, 32
        %v3036 = vpop.permute.xlu0 %3035
        %3037 = vrot.lane.b32.xlu0 %v2975, 32
        %v3038 = vpop.permute.xlu0 %3037
        %3039 = vrot.lane.b32.xlu0 %v2976, 32
        %v3040 = vpop.permute.xlu0 %3039
        %v3057 = vmul.f32 %v2735, %v3010
        %v3058 = vmul.f32 %v2750, %v3012
        %v3059 = vmul.f32 %v2765, %v3014
        %v3060 = vmul.f32 %v2780, %v3016
        %v3061 = vmul.f32 %v2795, %v3018
        %v3062 = vmul.f32 %v2810, %v3020
        %v3063 = vmul.f32 %v2825, %v3022
        %v3064 = vmul.f32 %v2840, %v3024
        %v3065 = vmul.f32 %v2855, %v3026
        %v3066 = vmul.f32 %v2870, %v3028
        %v3067 = vmul.f32 %v2885, %v3030
        %v3068 = vmul.f32 %v2900, %v3032
        %v3069 = vmul.f32 %v2915, %v3034
        %v3070 = vmul.f32 %v2930, %v3036
        %v3071 = vmul.f32 %v2945, %v3038
        %v3072 = vmul.f32 %v2960, %v3040
        %3089 = vrot.lane.b32.xlu0 %v3057, 32
        %v3090 = vpop.permute.xlu0 %3089
        %3091 = vrot.lane.b32.xlu0 %v3058, 32
        %v3092 = vpop.permute.xlu0 %3091
        %3093 = vrot.lane.b32.xlu0 %v3059, 32
        %v3094 = vpop.permute.xlu0 %3093
        %3095 = vrot.lane.b32.xlu0 %v3060, 32
        %v3096 = vpop.permute.xlu0 %3095
        %3097 = vrot.lane.b32.xlu0 %v3061, 32
        %v3098 = vpop.permute.xlu0 %3097
        %3099 = vrot.lane.b32.xlu0 %v3062, 32
        %v3100 = vpop.permute.xlu0 %3099
        %3101 = vrot.lane.b32.xlu0 %v3063, 32
        %v3102 = vpop.permute.xlu0 %3101
        %3103 = vrot.lane.b32.xlu0 %v3064, 32
        %v3104 = vpop.permute.xlu0 %3103
        %3105 = vrot.lane.b32.xlu0 %v3065, 32
        %v3106 = vpop.permute.xlu0 %3105
        %3107 = vrot.lane.b32.xlu0 %v3066, 32
        %v3108 = vpop.permute.xlu0 %3107
        %3109 = vrot.lane.b32.xlu0 %v3067, 32
        %v3110 = vpop.permute.xlu0 %3109
        %3111 = vrot.lane.b32.xlu0 %v3068, 32
        %v3112 = vpop.permute.xlu0 %3111
        %3113 = vrot.lane.b32.xlu0 %v3069, 32
        %v3114 = vpop.permute.xlu0 %3113
        %3115 = vrot.lane.b32.xlu0 %v3070, 32
        %v3116 = vpop.permute.xlu0 %3115
        %3117 = vrot.lane.b32.xlu0 %v3071, 32
        %v3118 = vpop.permute.xlu0 %3117
        %3119 = vrot.lane.b32.xlu0 %v3072, 32
        %v3120 = vpop.permute.xlu0 %3119
        %v3137 = vadd.f32 %v2977, %v3090
        %v3138 = vadd.f32 %v2978, %v3092
        %v3139 = vadd.f32 %v2979, %v3094
        %v3140 = vadd.f32 %v2980, %v3096
        %v3141 = vadd.f32 %v2981, %v3098
        %v3142 = vadd.f32 %v2982, %v3100
        %v3143 = vadd.f32 %v2983, %v3102
        %v3144 = vadd.f32 %v2984, %v3104
        %v3145 = vadd.f32 %v2985, %v3106
        %v3146 = vadd.f32 %v2986, %v3108
        %v3147 = vadd.f32 %v2987, %v3110
        %v3148 = vadd.f32 %v2988, %v3112
        %v3149 = vadd.f32 %v2989, %v3114
        %v3150 = vadd.f32 %v2990, %v3116
        %v3151 = vadd.f32 %v2991, %v3118
        %v3152 = vadd.f32 %v2992, %v3120
        %v3153 = vtanh.pop %v3137
        %v3154 = vtanh.pop %v3138
        %v3155 = vtanh.pop %v3139
        %v3156 = vtanh.pop %v3140
        %v3157 = vtanh.pop %v3141
        %v3158 = vtanh.pop %v3142
        %v3159 = vtanh.pop %v3143
        %v3160 = vtanh.pop %v3144
        %v3161 = vtanh.pop %v3145
        %v3162 = vtanh.pop %v3146
        %v3163 = vtanh.pop %v3147
        %v3164 = vtanh.pop %v3148
        %v3165 = vtanh.pop %v3149
        %v3166 = vtanh.pop %v3150
        %v3167 = vtanh.pop %v3151
        %v3168 = vtanh.pop %v3152
        %3185 = vrot.lane.b32.xlu0 %v3153, 32
        %v3186 = vpop.permute.xlu0 %3185
        %3187 = vrot.lane.b32.xlu0 %v3154, 32
        %v3188 = vpop.permute.xlu0 %3187
        %3189 = vrot.lane.b32.xlu0 %v3155, 32
        %v3190 = vpop.permute.xlu0 %3189
        %3191 = vrot.lane.b32.xlu0 %v3156, 32
        %v3192 = vpop.permute.xlu0 %3191
        %3193 = vrot.lane.b32.xlu0 %v3157, 32
        %v3194 = vpop.permute.xlu0 %3193
        %3195 = vrot.lane.b32.xlu0 %v3158, 32
        %v3196 = vpop.permute.xlu0 %3195
        %3197 = vrot.lane.b32.xlu0 %v3159, 32
        %v3198 = vpop.permute.xlu0 %3197
        %3199 = vrot.lane.b32.xlu0 %v3160, 32
        %v3200 = vpop.permute.xlu0 %3199
        %3201 = vrot.lane.b32.xlu0 %v3161, 32
        %v3202 = vpop.permute.xlu0 %3201
        %3203 = vrot.lane.b32.xlu0 %v3162, 32
        %v3204 = vpop.permute.xlu0 %3203
        %3205 = vrot.lane.b32.xlu0 %v3163, 32
        %v3206 = vpop.permute.xlu0 %3205
        %3207 = vrot.lane.b32.xlu0 %v3164, 32
        %v3208 = vpop.permute.xlu0 %3207
        %3209 = vrot.lane.b32.xlu0 %v3165, 32
        %v3210 = vpop.permute.xlu0 %3209
        %3211 = vrot.lane.b32.xlu0 %v3166, 32
        %v3212 = vpop.permute.xlu0 %3211
        %3213 = vrot.lane.b32.xlu0 %v3167, 32
        %v3214 = vpop.permute.xlu0 %3213
        %3215 = vrot.lane.b32.xlu0 %v3168, 32
        %v3216 = vpop.permute.xlu0 %3215
        %v3233 = vmul.f32 %v2735, %v3186
        %v3234 = vmul.f32 %v2750, %v3188
        %v3235 = vmul.f32 %v2765, %v3190
        %v3236 = vmul.f32 %v2780, %v3192
        %v3237 = vmul.f32 %v2795, %v3194
        %v3238 = vmul.f32 %v2810, %v3196
        %v3239 = vmul.f32 %v2825, %v3198
        %v3240 = vmul.f32 %v2840, %v3200
        %v3241 = vmul.f32 %v2855, %v3202
        %v3242 = vmul.f32 %v2870, %v3204
        %v3243 = vmul.f32 %v2885, %v3206
        %v3244 = vmul.f32 %v2900, %v3208
        %v3245 = vmul.f32 %v2915, %v3210
        %v3246 = vmul.f32 %v2930, %v3212
        %v3247 = vmul.f32 %v2945, %v3214
        %v3248 = vmul.f32 %v2960, %v3216
        %3265 = vrot.lane.b32.xlu0 %v3233, 64
        %v3266 = vpop.permute.xlu0 %3265
        %3267 = vrot.lane.b32.xlu0 %v3234, 64
        %v3268 = vpop.permute.xlu0 %3267
        %3269 = vrot.lane.b32.xlu0 %v3235, 64
        %v3270 = vpop.permute.xlu0 %3269
        %3271 = vrot.lane.b32.xlu0 %v3236, 64
        %v3272 = vpop.permute.xlu0 %3271
        %3273 = vrot.lane.b32.xlu0 %v3237, 64
        %v3274 = vpop.permute.xlu0 %3273
        %3275 = vrot.lane.b32.xlu0 %v3238, 64
        %v3276 = vpop.permute.xlu0 %3275
        %3277 = vrot.lane.b32.xlu0 %v3239, 64
        %v3278 = vpop.permute.xlu0 %3277
        %3279 = vrot.lane.b32.xlu0 %v3240, 64
        %v3280 = vpop.permute.xlu0 %3279
        %3281 = vrot.lane.b32.xlu0 %v3241, 64
        %v3282 = vpop.permute.xlu0 %3281
        %3283 = vrot.lane.b32.xlu0 %v3242, 64
        %v3284 = vpop.permute.xlu0 %3283
        %3285 = vrot.lane.b32.xlu0 %v3243, 64
        %v3286 = vpop.permute.xlu0 %3285
        %3287 = vrot.lane.b32.xlu0 %v3244, 64
        %v3288 = vpop.permute.xlu0 %3287
        %3289 = vrot.lane.b32.xlu0 %v3245, 64
        %v3290 = vpop.permute.xlu0 %3289
        %3291 = vrot.lane.b32.xlu0 %v3246, 64
        %v3292 = vpop.permute.xlu0 %3291
        %3293 = vrot.lane.b32.xlu0 %v3247, 64
        %v3294 = vpop.permute.xlu0 %3293
        %3295 = vrot.lane.b32.xlu0 %v3248, 64
        %v3296 = vpop.permute.xlu0 %3295
        %v3297 = vsel %vm1034, %v3266, 0
        %v3299 = vsel %vm1034, %v3268, 0
        %v3301 = vsel %vm1034, %v3270, 0
        %v3303 = vsel %vm1034, %v3272, 0
        %v3305 = vsel %vm1034, %v3274, 0
        %v3307 = vsel %vm1034, %v3276, 0
        %v3309 = vsel %vm1034, %v3278, 0
        %v3311 = vsel %vm1034, %v3280, 0
        %v3313 = vsel %vm1034, %v3282, 0
        %v3315 = vsel %vm1034, %v3284, 0
        %v3317 = vsel %vm1034, %v3286, 0
        %v3319 = vsel %vm1034, %v3288, 0
        %v3321 = vsel %vm1034, %v3290, 0
        %v3323 = vsel %vm1034, %v3292, 0
        %v3325 = vsel %vm1034, %v3294, 0
        %v3327 = vsel %vm1034, %v3296, 0
        %3329 = vmatpush.msra.mxu0 0.0
        %3330 = vmatpush.msra.mxu0 0.0
        %3331 = vmatpush.msra.mxu0 0.0
        %3332 = vmatpush.msra.mxu0 0.0
        %3333 = vmatpush.msra.mxu0 0.0
        %3334 = vmatpush.msra.mxu0 0.0
        %3335 = vmatpush.msra.mxu0 0.0
        %3336 = vmatpush.msra.mxu0 0.0
        %3337 = vmatpush.msra.mxu0 0.0
        %3338 = vmatpush.msra.mxu0 0.0
        %3339 = vmatpush.msra.mxu0 0.0
        %3340 = vmatpush.msra.mxu0 0.0
        %3341 = vmatpush.msra.mxu0 %v897
        %3342 = vmatpush.msra.mxu0 %v896
        %3343 = vmatpush.msra.mxu0 %v895
        %3344 = vmatpush.msra.mxu0 %v894
        %3345 = vmatmul.f32.gmra.mxu0 %v3297
        %v3346 = vpop.f32.mrf.mxu0
        %v3347 = vadd.f32 0.0, %v3346
        %3348 = vmatmul.f32.gmra.mxu0 %v3299
        %v3349 = vpop.f32.mrf.mxu0
        %v3350 = vadd.f32 0.0, %v3349
        %3351 = vmatmul.f32.gmra.mxu0 %v3301
        %v3352 = vpop.f32.mrf.mxu0
        %v3353 = vadd.f32 0.0, %v3352
        %3354 = vmatmul.f32.gmra.mxu0 %v3303
        %v3355 = vpop.f32.mrf.mxu0
        %v3356 = vadd.f32 0.0, %v3355
        %3357 = vmatmul.f32.gmra.mxu0 %v3305
        %v3358 = vpop.f32.mrf.mxu0
        %v3359 = vadd.f32 0.0, %v3358
        %3360 = vmatmul.f32.gmra.mxu0 %v3307
        %v3361 = vpop.f32.mrf.mxu0
        %v3362 = vadd.f32 0.0, %v3361
        %3363 = vmatmul.f32.gmra.mxu0 %v3309
        %v3364 = vpop.f32.mrf.mxu0
        %v3365 = vadd.f32 0.0, %v3364
        %3366 = vmatmul.f32.gmra.mxu0 %v3311
        %v3367 = vpop.f32.mrf.mxu0
        %v3368 = vadd.f32 0.0, %v3367
        %3369 = vmatmul.f32.gmra.mxu0 %v3313
        %v3370 = vpop.f32.mrf.mxu0
        %v3371 = vadd.f32 0.0, %v3370
        %3372 = vmatmul.f32.gmra.mxu0 %v3315
        %v3373 = vpop.f32.mrf.mxu0
        %v3374 = vadd.f32 0.0, %v3373
        %3375 = vmatmul.f32.gmra.mxu0 %v3317
        %v3376 = vpop.f32.mrf.mxu0
        %v3377 = vadd.f32 0.0, %v3376
        %3378 = vmatmul.f32.gmra.mxu0 %v3319
        %v3379 = vpop.f32.mrf.mxu0
        %v3380 = vadd.f32 0.0, %v3379
        %3381 = vmatmul.f32.gmra.mxu0 %v3321
        %v3382 = vpop.f32.mrf.mxu0
        %v3383 = vadd.f32 0.0, %v3382
        %3384 = vmatmul.f32.gmra.mxu0 %v3323
        %v3385 = vpop.f32.mrf.mxu0
        %v3386 = vadd.f32 0.0, %v3385
        %3387 = vmatmul.f32.gmra.mxu0 %v3325
        %v3388 = vpop.f32.mrf.mxu0
        %v3389 = vadd.f32 0.0, %v3388
        %3390 = vmatmul.f32.gmra.mxu0 %v3327
        %v3391 = vpop.f32.mrf.mxu0
        %v3392 = vadd.f32 0.0, %v3391
        %3393 = vdwg.mxu0
        %v3394 = vadd.f32 %v1533, %v3347
        %v3395 = vadd.f32 %v1536, %v3350
        %v3396 = vadd.f32 %v1539, %v3353
        %v3397 = vadd.f32 %v1542, %v3356
        %v3398 = vadd.f32 %v1545, %v3359
        %v3399 = vadd.f32 %v1548, %v3362
        %v3400 = vadd.f32 %v1551, %v3365
        %v3401 = vadd.f32 %v1554, %v3368
        %v3402 = vadd.f32 %v1557, %v3371
        %v3403 = vadd.f32 %v1560, %v3374
        %v3404 = vadd.f32 %v1563, %v3377
        %v3405 = vadd.f32 %v1566, %v3380
        %v3406 = vadd.f32 %v1569, %v3383
        %v3407 = vadd.f32 %v1572, %v3386
        %v3408 = vadd.f32 %v1575, %v3389
        %v3409 = vadd.f32 %v1578, %v3392
        %v3410 = vxor.u32 %v3394, 2147483648
        %v3411 = vxor.u32 %v3395, 2147483648
        %v3412 = vxor.u32 %v3396, 2147483648
        %v3413 = vxor.u32 %v3397, 2147483648
        %v3414 = vxor.u32 %v3398, 2147483648
        %v3415 = vxor.u32 %v3399, 2147483648
        %v3416 = vxor.u32 %v3400, 2147483648
        %v3417 = vxor.u32 %v3401, 2147483648
        %v3418 = vxor.u32 %v3402, 2147483648
        %v3419 = vxor.u32 %v3403, 2147483648
        %v3420 = vxor.u32 %v3404, 2147483648
        %v3421 = vxor.u32 %v3405, 2147483648
        %v3422 = vxor.u32 %v3406, 2147483648
        %v3423 = vxor.u32 %v3407, 2147483648
        %v3424 = vxor.u32 %v3408, 2147483648
        %v3425 = vxor.u32 %v3409, 2147483648
        %v3426 = vmul.f32 %v3410, 1.442695
        %v3427 = vpow.pop %v3426
        %v3428 = vmul.f32 %v3411, 1.442695
        %v3429 = vpow.pop %v3428
        %v3430 = vmul.f32 %v3412, 1.442695
        %v3431 = vpow.pop %v3430
        %v3432 = vmul.f32 %v3413, 1.442695
        %v3433 = vpow.pop %v3432
        %v3434 = vmul.f32 %v3414, 1.442695
        %v3435 = vpow.pop %v3434
        %v3436 = vmul.f32 %v3415, 1.442695
        %v3437 = vpow.pop %v3436
        %v3438 = vmul.f32 %v3416, 1.442695
        %v3439 = vpow.pop %v3438
        %v3440 = vmul.f32 %v3417, 1.442695
        %v3441 = vpow.pop %v3440
        %v3442 = vmul.f32 %v3418, 1.442695
        %v3443 = vpow.pop %v3442
        %v3444 = vmul.f32 %v3419, 1.442695
        %v3445 = vpow.pop %v3444
        %v3446 = vmul.f32 %v3420, 1.442695
        %v3447 = vpow.pop %v3446
        %v3448 = vmul.f32 %v3421, 1.442695
        %v3449 = vpow.pop %v3448
        %v3450 = vmul.f32 %v3422, 1.442695
        %v3451 = vpow.pop %v3450
        %v3452 = vmul.f32 %v3423, 1.442695
        %v3453 = vpow.pop %v3452
        %v3454 = vmul.f32 %v3424, 1.442695
        %v3455 = vpow.pop %v3454
        %v3456 = vmul.f32 %v3425, 1.442695
        %v3457 = vpow.pop %v3456
        %v3458 = vadd.f32 %v3427, 1.0
        %v3459 = vadd.f32 %v3429, 1.0
        %v3460 = vadd.f32 %v3431, 1.0
        %v3461 = vadd.f32 %v3433, 1.0
        %v3462 = vadd.f32 %v3435, 1.0
        %v3463 = vadd.f32 %v3437, 1.0
        %v3464 = vadd.f32 %v3439, 1.0
        %v3465 = vadd.f32 %v3441, 1.0
        %v3466 = vadd.f32 %v3443, 1.0
        %v3467 = vadd.f32 %v3445, 1.0
        %v3468 = vadd.f32 %v3447, 1.0
        %v3469 = vadd.f32 %v3449, 1.0
        %v3470 = vadd.f32 %v3451, 1.0
        %v3471 = vadd.f32 %v3453, 1.0
        %v3472 = vadd.f32 %v3455, 1.0
        %v3473 = vadd.f32 %v3457, 1.0
        %v3474 = vrcp.pop %v3458
        %v3475 = vmul.f32 %v3458, %v3474
        %v3476 = vsub.f32 1.0, %v3475
        %v3477 = vmul.f32 %v3474, %v3476
        %v3478 = vadd.f32 %v3474, %v3477
        %vm3479 = vweird.f32 %v3458
        %vm3480 = vweird.f32 %v3474
        %vm3481 = vmor %vm3479, %vm3480
        %v3482 = vsel %vm3481, %v3474, %v3478
        %v3483 = vand.u32 2147483647, %v3458
        %vm3484 = vcmp.eq.f32.partialorder %v3483, 8.507059e+37
        %v3485 = vand.u32 %v3458, 2147483648
        %v3486 = vor.u32 1.1754944e-38, %v3485
        %v3487 = vsel %vm3484, %v3486, %v3482
        %v3488 = vmul.f32 1.0, %v3487
        %v3489 = vrcp.pop %v3459
        %v3490 = vmul.f32 %v3459, %v3489
        %v3491 = vsub.f32 1.0, %v3490
        %v3492 = vmul.f32 %v3489, %v3491
        %v3493 = vadd.f32 %v3489, %v3492
        %vm3494 = vweird.f32 %v3459
        %vm3495 = vweird.f32 %v3489
        %vm3496 = vmor %vm3494, %vm3495
        %v3497 = vsel %vm3496, %v3489, %v3493
        %v3498 = vand.u32 2147483647, %v3459
        %vm3499 = vcmp.eq.f32.partialorder %v3498, 8.507059e+37
        %v3500 = vand.u32 %v3459, 2147483648
        %v3501 = vor.u32 1.1754944e-38, %v3500
        %v3502 = vsel %vm3499, %v3501, %v3497
        %v3503 = vmul.f32 1.0, %v3502
        %v3504 = vrcp.pop %v3460
        %v3505 = vmul.f32 %v3460, %v3504
        %v3506 = vsub.f32 1.0, %v3505
        %v3507 = vmul.f32 %v3504, %v3506
        %v3508 = vadd.f32 %v3504, %v3507
        %vm3509 = vweird.f32 %v3460
        %vm3510 = vweird.f32 %v3504
        %vm3511 = vmor %vm3509, %vm3510
        %v3512 = vsel %vm3511, %v3504, %v3508
        %v3513 = vand.u32 2147483647, %v3460
        %vm3514 = vcmp.eq.f32.partialorder %v3513, 8.507059e+37
        %v3515 = vand.u32 %v3460, 2147483648
        %v3516 = vor.u32 1.1754944e-38, %v3515
        %v3517 = vsel %vm3514, %v3516, %v3512
        %v3518 = vmul.f32 1.0, %v3517
        %v3519 = vrcp.pop %v3461
        %v3520 = vmul.f32 %v3461, %v3519
        %v3521 = vsub.f32 1.0, %v3520
        %v3522 = vmul.f32 %v3519, %v3521
        %v3523 = vadd.f32 %v3519, %v3522
        %vm3524 = vweird.f32 %v3461
        %vm3525 = vweird.f32 %v3519
        %vm3526 = vmor %vm3524, %vm3525
        %v3527 = vsel %vm3526, %v3519, %v3523
        %v3528 = vand.u32 2147483647, %v3461
        %vm3529 = vcmp.eq.f32.partialorder %v3528, 8.507059e+37
        %v3530 = vand.u32 %v3461, 2147483648
        %v3531 = vor.u32 1.1754944e-38, %v3530
        %v3532 = vsel %vm3529, %v3531, %v3527
        %v3533 = vmul.f32 1.0, %v3532
        %v3534 = vrcp.pop %v3462
        %v3535 = vmul.f32 %v3462, %v3534
        %v3536 = vsub.f32 1.0, %v3535
        %v3537 = vmul.f32 %v3534, %v3536
        %v3538 = vadd.f32 %v3534, %v3537
        %vm3539 = vweird.f32 %v3462
        %vm3540 = vweird.f32 %v3534
        %vm3541 = vmor %vm3539, %vm3540
        %v3542 = vsel %vm3541, %v3534, %v3538
        %v3543 = vand.u32 2147483647, %v3462
        %vm3544 = vcmp.eq.f32.partialorder %v3543, 8.507059e+37
        %v3545 = vand.u32 %v3462, 2147483648
        %v3546 = vor.u32 1.1754944e-38, %v3545
        %v3547 = vsel %vm3544, %v3546, %v3542
        %v3548 = vmul.f32 1.0, %v3547
        %v3549 = vrcp.pop %v3463
        %v3550 = vmul.f32 %v3463, %v3549
        %v3551 = vsub.f32 1.0, %v3550
        %v3552 = vmul.f32 %v3549, %v3551
        %v3553 = vadd.f32 %v3549, %v3552
        %vm3554 = vweird.f32 %v3463
        %vm3555 = vweird.f32 %v3549
        %vm3556 = vmor %vm3554, %vm3555
        %v3557 = vsel %vm3556, %v3549, %v3553
        %v3558 = vand.u32 2147483647, %v3463
        %vm3559 = vcmp.eq.f32.partialorder %v3558, 8.507059e+37
        %v3560 = vand.u32 %v3463, 2147483648
        %v3561 = vor.u32 1.1754944e-38, %v3560
        %v3562 = vsel %vm3559, %v3561, %v3557
        %v3563 = vmul.f32 1.0, %v3562
        %v3564 = vrcp.pop %v3464
        %v3565 = vmul.f32 %v3464, %v3564
        %v3566 = vsub.f32 1.0, %v3565
        %v3567 = vmul.f32 %v3564, %v3566
        %v3568 = vadd.f32 %v3564, %v3567
        %vm3569 = vweird.f32 %v3464
        %vm3570 = vweird.f32 %v3564
        %vm3571 = vmor %vm3569, %vm3570
        %v3572 = vsel %vm3571, %v3564, %v3568
        %v3573 = vand.u32 2147483647, %v3464
        %vm3574 = vcmp.eq.f32.partialorder %v3573, 8.507059e+37
        %v3575 = vand.u32 %v3464, 2147483648
        %v3576 = vor.u32 1.1754944e-38, %v3575
        %v3577 = vsel %vm3574, %v3576, %v3572
        %v3578 = vmul.f32 1.0, %v3577
        %v3579 = vrcp.pop %v3465
        %v3580 = vmul.f32 %v3465, %v3579
        %v3581 = vsub.f32 1.0, %v3580
        %v3582 = vmul.f32 %v3579, %v3581
        %v3583 = vadd.f32 %v3579, %v3582
        %vm3584 = vweird.f32 %v3465
        %vm3585 = vweird.f32 %v3579
        %vm3586 = vmor %vm3584, %vm3585
        %v3587 = vsel %vm3586, %v3579, %v3583
        %v3588 = vand.u32 2147483647, %v3465
        %vm3589 = vcmp.eq.f32.partialorder %v3588, 8.507059e+37
        %v3590 = vand.u32 %v3465, 2147483648
        %v3591 = vor.u32 1.1754944e-38, %v3590
        %v3592 = vsel %vm3589, %v3591, %v3587
        %v3593 = vmul.f32 1.0, %v3592
        %v3594 = vrcp.pop %v3466
        %v3595 = vmul.f32 %v3466, %v3594
        %v3596 = vsub.f32 1.0, %v3595
        %v3597 = vmul.f32 %v3594, %v3596
        %v3598 = vadd.f32 %v3594, %v3597
        %vm3599 = vweird.f32 %v3466
        %vm3600 = vweird.f32 %v3594
        %vm3601 = vmor %vm3599, %vm3600
        %v3602 = vsel %vm3601, %v3594, %v3598
        %v3603 = vand.u32 2147483647, %v3466
        %vm3604 = vcmp.eq.f32.partialorder %v3603, 8.507059e+37
        %v3605 = vand.u32 %v3466, 2147483648
        %v3606 = vor.u32 1.1754944e-38, %v3605
        %v3607 = vsel %vm3604, %v3606, %v3602
        %v3608 = vmul.f32 1.0, %v3607
        %v3609 = vrcp.pop %v3467
        %v3610 = vmul.f32 %v3467, %v3609
        %v3611 = vsub.f32 1.0, %v3610
        %v3612 = vmul.f32 %v3609, %v3611
        %v3613 = vadd.f32 %v3609, %v3612
        %vm3614 = vweird.f32 %v3467
        %vm3615 = vweird.f32 %v3609
        %vm3616 = vmor %vm3614, %vm3615
        %v3617 = vsel %vm3616, %v3609, %v3613
        %v3618 = vand.u32 2147483647, %v3467
        %vm3619 = vcmp.eq.f32.partialorder %v3618, 8.507059e+37
        %v3620 = vand.u32 %v3467, 2147483648
        %v3621 = vor.u32 1.1754944e-38, %v3620
        %v3622 = vsel %vm3619, %v3621, %v3617
        %v3623 = vmul.f32 1.0, %v3622
        %v3624 = vrcp.pop %v3468
        %v3625 = vmul.f32 %v3468, %v3624
        %v3626 = vsub.f32 1.0, %v3625
        %v3627 = vmul.f32 %v3624, %v3626
        %v3628 = vadd.f32 %v3624, %v3627
        %vm3629 = vweird.f32 %v3468
        %vm3630 = vweird.f32 %v3624
        %vm3631 = vmor %vm3629, %vm3630
        %v3632 = vsel %vm3631, %v3624, %v3628
        %v3633 = vand.u32 2147483647, %v3468
        %vm3634 = vcmp.eq.f32.partialorder %v3633, 8.507059e+37
        %v3635 = vand.u32 %v3468, 2147483648
        %v3636 = vor.u32 1.1754944e-38, %v3635
        %v3637 = vsel %vm3634, %v3636, %v3632
        %v3638 = vmul.f32 1.0, %v3637
        %v3639 = vrcp.pop %v3469
        %v3640 = vmul.f32 %v3469, %v3639
        %v3641 = vsub.f32 1.0, %v3640
        %v3642 = vmul.f32 %v3639, %v3641
        %v3643 = vadd.f32 %v3639, %v3642
        %vm3644 = vweird.f32 %v3469
        %vm3645 = vweird.f32 %v3639
        %vm3646 = vmor %vm3644, %vm3645
        %v3647 = vsel %vm3646, %v3639, %v3643
        %v3648 = vand.u32 2147483647, %v3469
        %vm3649 = vcmp.eq.f32.partialorder %v3648, 8.507059e+37
        %v3650 = vand.u32 %v3469, 2147483648
        %v3651 = vor.u32 1.1754944e-38, %v3650
        %v3652 = vsel %vm3649, %v3651, %v3647
        %v3653 = vmul.f32 1.0, %v3652
        %v3654 = vrcp.pop %v3470
        %v3655 = vmul.f32 %v3470, %v3654
        %v3656 = vsub.f32 1.0, %v3655
        %v3657 = vmul.f32 %v3654, %v3656
        %v3658 = vadd.f32 %v3654, %v3657
        %vm3659 = vweird.f32 %v3470
        %vm3660 = vweird.f32 %v3654
        %vm3661 = vmor %vm3659, %vm3660
        %v3662 = vsel %vm3661, %v3654, %v3658
        %v3663 = vand.u32 2147483647, %v3470
        %vm3664 = vcmp.eq.f32.partialorder %v3663, 8.507059e+37
        %v3665 = vand.u32 %v3470, 2147483648
        %v3666 = vor.u32 1.1754944e-38, %v3665
        %v3667 = vsel %vm3664, %v3666, %v3662
        %v3668 = vmul.f32 1.0, %v3667
        %v3669 = vrcp.pop %v3471
        %v3670 = vmul.f32 %v3471, %v3669
        %v3671 = vsub.f32 1.0, %v3670
        %v3672 = vmul.f32 %v3669, %v3671
        %v3673 = vadd.f32 %v3669, %v3672
        %vm3674 = vweird.f32 %v3471
        %vm3675 = vweird.f32 %v3669
        %vm3676 = vmor %vm3674, %vm3675
        %v3677 = vsel %vm3676, %v3669, %v3673
        %v3678 = vand.u32 2147483647, %v3471
        %vm3679 = vcmp.eq.f32.partialorder %v3678, 8.507059e+37
        %v3680 = vand.u32 %v3471, 2147483648
        %v3681 = vor.u32 1.1754944e-38, %v3680
        %v3682 = vsel %vm3679, %v3681, %v3677
        %v3683 = vmul.f32 1.0, %v3682
        %v3684 = vrcp.pop %v3472
        %v3685 = vmul.f32 %v3472, %v3684
        %v3686 = vsub.f32 1.0, %v3685
        %v3687 = vmul.f32 %v3684, %v3686
        %v3688 = vadd.f32 %v3684, %v3687
        %vm3689 = vweird.f32 %v3472
        %vm3690 = vweird.f32 %v3684
        %vm3691 = vmor %vm3689, %vm3690
        %v3692 = vsel %vm3691, %v3684, %v3688
        %v3693 = vand.u32 2147483647, %v3472
        %vm3694 = vcmp.eq.f32.partialorder %v3693, 8.507059e+37
        %v3695 = vand.u32 %v3472, 2147483648
        %v3696 = vor.u32 1.1754944e-38, %v3695
        %v3697 = vsel %vm3694, %v3696, %v3692
        %v3698 = vmul.f32 1.0, %v3697
        %v3699 = vrcp.pop %v3473
        %v3700 = vmul.f32 %v3473, %v3699
        %v3701 = vsub.f32 1.0, %v3700
        %v3702 = vmul.f32 %v3699, %v3701
        %v3703 = vadd.f32 %v3699, %v3702
        %vm3704 = vweird.f32 %v3473
        %vm3705 = vweird.f32 %v3699
        %vm3706 = vmor %vm3704, %vm3705
        %v3707 = vsel %vm3706, %v3699, %v3703
        %v3708 = vand.u32 2147483647, %v3473
        %vm3709 = vcmp.eq.f32.partialorder %v3708, 8.507059e+37
        %v3710 = vand.u32 %v3473, 2147483648
        %v3711 = vor.u32 1.1754944e-38, %v3710
        %v3712 = vsel %vm3709, %v3711, %v3707
        %v3713 = vmul.f32 1.0, %v3712
        %v3714 = vtanh.pop %v3394
        %v3715 = vtanh.pop %v3395
        %v3716 = vtanh.pop %v3396
        %v3717 = vtanh.pop %v3397
        %v3718 = vtanh.pop %v3398
        %v3719 = vtanh.pop %v3399
        %v3720 = vtanh.pop %v3400
        %v3721 = vtanh.pop %v3401
        %v3722 = vtanh.pop %v3402
        %v3723 = vtanh.pop %v3403
        %v3724 = vtanh.pop %v3404
        %v3725 = vtanh.pop %v3405
        %v3726 = vtanh.pop %v3406
        %v3727 = vtanh.pop %v3407
        %v3728 = vtanh.pop %v3408
        %v3729 = vtanh.pop %v3409
        %v3730 = vmul.f32 %v3488, %v3137
        %v3731 = vmul.f32 %v3503, %v3138
        %v3732 = vmul.f32 %v3518, %v3139
        %v3733 = vmul.f32 %v3533, %v3140
        %v3734 = vmul.f32 %v3548, %v3141
        %v3735 = vmul.f32 %v3563, %v3142
        %v3736 = vmul.f32 %v3578, %v3143
        %v3737 = vmul.f32 %v3593, %v3144
        %v3738 = vmul.f32 %v3608, %v3145
        %v3739 = vmul.f32 %v3623, %v3146
        %v3740 = vmul.f32 %v3638, %v3147
        %v3741 = vmul.f32 %v3653, %v3148
        %v3742 = vmul.f32 %v3668, %v3149
        %v3743 = vmul.f32 %v3683, %v3150
        %v3744 = vmul.f32 %v3698, %v3151
        %v3745 = vmul.f32 %v3713, %v3152
        %3762 = vrot.lane.b32.xlu0 %v3714, 32
        %v3763 = vpop.permute.xlu0 %3762
        %3764 = vrot.lane.b32.xlu0 %v3715, 32
        %v3765 = vpop.permute.xlu0 %3764
        %3766 = vrot.lane.b32.xlu0 %v3716, 32
        %v3767 = vpop.permute.xlu0 %3766
        %3768 = vrot.lane.b32.xlu0 %v3717, 32
        %v3769 = vpop.permute.xlu0 %3768
        %3770 = vrot.lane.b32.xlu0 %v3718, 32
        %v3771 = vpop.permute.xlu0 %3770
        %3772 = vrot.lane.b32.xlu0 %v3719, 32
        %v3773 = vpop.permute.xlu0 %3772
        %3774 = vrot.lane.b32.xlu0 %v3720, 32
        %v3775 = vpop.permute.xlu0 %3774
        %3776 = vrot.lane.b32.xlu0 %v3721, 32
        %v3777 = vpop.permute.xlu0 %3776
        %3778 = vrot.lane.b32.xlu0 %v3722, 32
        %v3779 = vpop.permute.xlu0 %3778
        %3780 = vrot.lane.b32.xlu0 %v3723, 32
        %v3781 = vpop.permute.xlu0 %3780
        %3782 = vrot.lane.b32.xlu0 %v3724, 32
        %v3783 = vpop.permute.xlu0 %3782
        %3784 = vrot.lane.b32.xlu0 %v3725, 32
        %v3785 = vpop.permute.xlu0 %3784
        %3786 = vrot.lane.b32.xlu0 %v3726, 32
        %v3787 = vpop.permute.xlu0 %3786
        %3788 = vrot.lane.b32.xlu0 %v3727, 32
        %v3789 = vpop.permute.xlu0 %3788
        %3790 = vrot.lane.b32.xlu0 %v3728, 32
        %v3791 = vpop.permute.xlu0 %3790
        %3792 = vrot.lane.b32.xlu0 %v3729, 32
        %v3793 = vpop.permute.xlu0 %3792
        %v3810 = vmul.f32 %v3488, %v3763
        %v3811 = vmul.f32 %v3503, %v3765
        %v3812 = vmul.f32 %v3518, %v3767
        %v3813 = vmul.f32 %v3533, %v3769
        %v3814 = vmul.f32 %v3548, %v3771
        %v3815 = vmul.f32 %v3563, %v3773
        %v3816 = vmul.f32 %v3578, %v3775
        %v3817 = vmul.f32 %v3593, %v3777
        %v3818 = vmul.f32 %v3608, %v3779
        %v3819 = vmul.f32 %v3623, %v3781
        %v3820 = vmul.f32 %v3638, %v3783
        %v3821 = vmul.f32 %v3653, %v3785
        %v3822 = vmul.f32 %v3668, %v3787
        %v3823 = vmul.f32 %v3683, %v3789
        %v3824 = vmul.f32 %v3698, %v3791
        %v3825 = vmul.f32 %v3713, %v3793
        %3842 = vrot.lane.b32.xlu0 %v3810, 32
        %v3843 = vpop.permute.xlu0 %3842
        %3844 = vrot.lane.b32.xlu0 %v3811, 32
        %v3845 = vpop.permute.xlu0 %3844
        %3846 = vrot.lane.b32.xlu0 %v3812, 32
        %v3847 = vpop.permute.xlu0 %3846
        %3848 = vrot.lane.b32.xlu0 %v3813, 32
        %v3849 = vpop.permute.xlu0 %3848
        %3850 = vrot.lane.b32.xlu0 %v3814, 32
        %v3851 = vpop.permute.xlu0 %3850
        %3852 = vrot.lane.b32.xlu0 %v3815, 32
        %v3853 = vpop.permute.xlu0 %3852
        %3854 = vrot.lane.b32.xlu0 %v3816, 32
        %v3855 = vpop.permute.xlu0 %3854
        %3856 = vrot.lane.b32.xlu0 %v3817, 32
        %v3857 = vpop.permute.xlu0 %3856
        %3858 = vrot.lane.b32.xlu0 %v3818, 32
        %v3859 = vpop.permute.xlu0 %3858
        %3860 = vrot.lane.b32.xlu0 %v3819, 32
        %v3861 = vpop.permute.xlu0 %3860
        %3862 = vrot.lane.b32.xlu0 %v3820, 32
        %v3863 = vpop.permute.xlu0 %3862
        %3864 = vrot.lane.b32.xlu0 %v3821, 32
        %v3865 = vpop.permute.xlu0 %3864
        %3866 = vrot.lane.b32.xlu0 %v3822, 32
        %v3867 = vpop.permute.xlu0 %3866
        %3868 = vrot.lane.b32.xlu0 %v3823, 32
        %v3869 = vpop.permute.xlu0 %3868
        %3870 = vrot.lane.b32.xlu0 %v3824, 32
        %v3871 = vpop.permute.xlu0 %3870
        %3872 = vrot.lane.b32.xlu0 %v3825, 32
        %v3873 = vpop.permute.xlu0 %3872
        %v3890 = vadd.f32 %v3730, %v3843
        %v3891 = vadd.f32 %v3731, %v3845
        %v3892 = vadd.f32 %v3732, %v3847
        %v3893 = vadd.f32 %v3733, %v3849
        %v3894 = vadd.f32 %v3734, %v3851
        %v3895 = vadd.f32 %v3735, %v3853
        %v3896 = vadd.f32 %v3736, %v3855
        %v3897 = vadd.f32 %v3737, %v3857
        %v3898 = vadd.f32 %v3738, %v3859
        %v3899 = vadd.f32 %v3739, %v3861
        %v3900 = vadd.f32 %v3740, %v3863
        %v3901 = vadd.f32 %v3741, %v3865
        %v3902 = vadd.f32 %v3742, %v3867
        %v3903 = vadd.f32 %v3743, %v3869
        %v3904 = vadd.f32 %v3744, %v3871
        %v3905 = vadd.f32 %v3745, %v3873
        %v3906 = vtanh.pop %v3890
        %v3907 = vtanh.pop %v3891
        %v3908 = vtanh.pop %v3892
        %v3909 = vtanh.pop %v3893
        %v3910 = vtanh.pop %v3894
        %v3911 = vtanh.pop %v3895
        %v3912 = vtanh.pop %v3896
        %v3913 = vtanh.pop %v3897
        %v3914 = vtanh.pop %v3898
        %v3915 = vtanh.pop %v3899
        %v3916 = vtanh.pop %v3900
        %v3917 = vtanh.pop %v3901
        %v3918 = vtanh.pop %v3902
        %v3919 = vtanh.pop %v3903
        %v3920 = vtanh.pop %v3904
        %v3921 = vtanh.pop %v3905
        %3938 = vrot.lane.b32.xlu0 %v3906, 32
        %v3939 = vpop.permute.xlu0 %3938
        %3940 = vrot.lane.b32.xlu0 %v3907, 32
        %v3941 = vpop.permute.xlu0 %3940
        %3942 = vrot.lane.b32.xlu0 %v3908, 32
        %v3943 = vpop.permute.xlu0 %3942
        %3944 = vrot.lane.b32.xlu0 %v3909, 32
        %v3945 = vpop.permute.xlu0 %3944
        %3946 = vrot.lane.b32.xlu0 %v3910, 32
        %v3947 = vpop.permute.xlu0 %3946
        %3948 = vrot.lane.b32.xlu0 %v3911, 32
        %v3949 = vpop.permute.xlu0 %3948
        %3950 = vrot.lane.b32.xlu0 %v3912, 32
        %v3951 = vpop.permute.xlu0 %3950
        %3952 = vrot.lane.b32.xlu0 %v3913, 32
        %v3953 = vpop.permute.xlu0 %3952
        %3954 = vrot.lane.b32.xlu0 %v3914, 32
        %v3955 = vpop.permute.xlu0 %3954
        %3956 = vrot.lane.b32.xlu0 %v3915, 32
        %v3957 = vpop.permute.xlu0 %3956
        %3958 = vrot.lane.b32.xlu0 %v3916, 32
        %v3959 = vpop.permute.xlu0 %3958
        %3960 = vrot.lane.b32.xlu0 %v3917, 32
        %v3961 = vpop.permute.xlu0 %3960
        %3962 = vrot.lane.b32.xlu0 %v3918, 32
        %v3963 = vpop.permute.xlu0 %3962
        %3964 = vrot.lane.b32.xlu0 %v3919, 32
        %v3965 = vpop.permute.xlu0 %3964
        %3966 = vrot.lane.b32.xlu0 %v3920, 32
        %v3967 = vpop.permute.xlu0 %3966
        %3968 = vrot.lane.b32.xlu0 %v3921, 32
        %v3969 = vpop.permute.xlu0 %3968
        %v3986 = vmul.f32 %v3488, %v3939
        %v3987 = vmul.f32 %v3503, %v3941
        %v3988 = vmul.f32 %v3518, %v3943
        %v3989 = vmul.f32 %v3533, %v3945
        %v3990 = vmul.f32 %v3548, %v3947
        %v3991 = vmul.f32 %v3563, %v3949
        %v3992 = vmul.f32 %v3578, %v3951
        %v3993 = vmul.f32 %v3593, %v3953
        %v3994 = vmul.f32 %v3608, %v3955
        %v3995 = vmul.f32 %v3623, %v3957
        %v3996 = vmul.f32 %v3638, %v3959
        %v3997 = vmul.f32 %v3653, %v3961
        %v3998 = vmul.f32 %v3668, %v3963
        %v3999 = vmul.f32 %v3683, %v3965
        %v4000 = vmul.f32 %v3698, %v3967
        %v4001 = vmul.f32 %v3713, %v3969
        %4018 = vrot.lane.b32.xlu0 %v3986, 64
        %v4019 = vpop.permute.xlu0 %4018
        %4020 = vrot.lane.b32.xlu0 %v3987, 64
        %v4021 = vpop.permute.xlu0 %4020
        %4022 = vrot.lane.b32.xlu0 %v3988, 64
        %v4023 = vpop.permute.xlu0 %4022
        %4024 = vrot.lane.b32.xlu0 %v3989, 64
        %v4025 = vpop.permute.xlu0 %4024
        %4026 = vrot.lane.b32.xlu0 %v3990, 64
        %v4027 = vpop.permute.xlu0 %4026
        %4028 = vrot.lane.b32.xlu0 %v3991, 64
        %v4029 = vpop.permute.xlu0 %4028
        %4030 = vrot.lane.b32.xlu0 %v3992, 64
        %v4031 = vpop.permute.xlu0 %4030
        %4032 = vrot.lane.b32.xlu0 %v3993, 64
        %v4033 = vpop.permute.xlu0 %4032
        %4034 = vrot.lane.b32.xlu0 %v3994, 64
        %v4035 = vpop.permute.xlu0 %4034
        %4036 = vrot.lane.b32.xlu0 %v3995, 64
        %v4037 = vpop.permute.xlu0 %4036
        %4038 = vrot.lane.b32.xlu0 %v3996, 64
        %v4039 = vpop.permute.xlu0 %4038
        %4040 = vrot.lane.b32.xlu0 %v3997, 64
        %v4041 = vpop.permute.xlu0 %4040
        %4042 = vrot.lane.b32.xlu0 %v3998, 64
        %v4043 = vpop.permute.xlu0 %4042
        %4044 = vrot.lane.b32.xlu0 %v3999, 64
        %v4045 = vpop.permute.xlu0 %4044
        %4046 = vrot.lane.b32.xlu0 %v4000, 64
        %v4047 = vpop.permute.xlu0 %4046
        %4048 = vrot.lane.b32.xlu0 %v4001, 64
        %v4049 = vpop.permute.xlu0 %4048
        %v4050 = vsel %vm1034, %v4019, 0
        %v4052 = vsel %vm1034, %v4021, 0
        %v4054 = vsel %vm1034, %v4023, 0
        %v4056 = vsel %vm1034, %v4025, 0
        %v4058 = vsel %vm1034, %v4027, 0
        %v4060 = vsel %vm1034, %v4029, 0
        %v4062 = vsel %vm1034, %v4031, 0
        %v4064 = vsel %vm1034, %v4033, 0
        %v4066 = vsel %vm1034, %v4035, 0
        %v4068 = vsel %vm1034, %v4037, 0
        %v4070 = vsel %vm1034, %v4039, 0
        %v4072 = vsel %vm1034, %v4041, 0
        %v4074 = vsel %vm1034, %v4043, 0
        %v4076 = vsel %vm1034, %v4045, 0
        %v4078 = vsel %vm1034, %v4047, 0
        %v4080 = vsel %vm1034, %v4049, 0
        %4082 = vmatpush.msra.mxu0 0.0
        %4083 = vmatpush.msra.mxu0 0.0
        %4084 = vmatpush.msra.mxu0 0.0
        %4085 = vmatpush.msra.mxu0 0.0
        %4086 = vmatpush.msra.mxu0 0.0
        %4087 = vmatpush.msra.mxu0 0.0
        %4088 = vmatpush.msra.mxu0 0.0
        %4089 = vmatpush.msra.mxu0 0.0
        %4090 = vmatpush.msra.mxu0 0.0
        %4091 = vmatpush.msra.mxu0 0.0
        %4092 = vmatpush.msra.mxu0 0.0
        %4093 = vmatpush.msra.mxu0 0.0
        %4094 = vmatpush.msra.mxu0 %v897
        %4095 = vmatpush.msra.mxu0 %v896
        %4096 = vmatpush.msra.mxu0 %v895
        %4097 = vmatpush.msra.mxu0 %v894
        %4098 = vmatmul.f32.gmra.mxu0 %v4050
        %v4099 = vpop.f32.mrf.mxu0
        %v4100 = vadd.f32 0.0, %v4099
        %4101 = vmatmul.f32.gmra.mxu0 %v4052
        %v4102 = vpop.f32.mrf.mxu0
        %v4103 = vadd.f32 0.0, %v4102
        %4104 = vmatmul.f32.gmra.mxu0 %v4054
        %v4105 = vpop.f32.mrf.mxu0
        %v4106 = vadd.f32 0.0, %v4105
        %4107 = vmatmul.f32.gmra.mxu0 %v4056
        %v4108 = vpop.f32.mrf.mxu0
        %v4109 = vadd.f32 0.0, %v4108
        %4110 = vmatmul.f32.gmra.mxu0 %v4058
        %v4111 = vpop.f32.mrf.mxu0
        %v4112 = vadd.f32 0.0, %v4111
        %4113 = vmatmul.f32.gmra.mxu0 %v4060
        %v4114 = vpop.f32.mrf.mxu0
        %v4115 = vadd.f32 0.0, %v4114
        %4116 = vmatmul.f32.gmra.mxu0 %v4062
        %v4117 = vpop.f32.mrf.mxu0
        %v4118 = vadd.f32 0.0, %v4117
        %4119 = vmatmul.f32.gmra.mxu0 %v4064
        %v4120 = vpop.f32.mrf.mxu0
        %v4121 = vadd.f32 0.0, %v4120
        %4122 = vmatmul.f32.gmra.mxu0 %v4066
        %v4123 = vpop.f32.mrf.mxu0
        %v4124 = vadd.f32 0.0, %v4123
        %4125 = vmatmul.f32.gmra.mxu0 %v4068
        %v4126 = vpop.f32.mrf.mxu0
        %v4127 = vadd.f32 0.0, %v4126
        %4128 = vmatmul.f32.gmra.mxu0 %v4070
        %v4129 = vpop.f32.mrf.mxu0
        %v4130 = vadd.f32 0.0, %v4129
        %4131 = vmatmul.f32.gmra.mxu0 %v4072
        %v4132 = vpop.f32.mrf.mxu0
        %v4133 = vadd.f32 0.0, %v4132
        %4134 = vmatmul.f32.gmra.mxu0 %v4074
        %v4135 = vpop.f32.mrf.mxu0
        %v4136 = vadd.f32 0.0, %v4135
        %4137 = vmatmul.f32.gmra.mxu0 %v4076
        %v4138 = vpop.f32.mrf.mxu0
        %v4139 = vadd.f32 0.0, %v4138
        %4140 = vmatmul.f32.gmra.mxu0 %v4078
        %v4141 = vpop.f32.mrf.mxu0
        %v4142 = vadd.f32 0.0, %v4141
        %4143 = vmatmul.f32.gmra.mxu0 %v4080
        %v4144 = vpop.f32.mrf.mxu0
        %v4145 = vadd.f32 0.0, %v4144
        %4146 = vdwg.mxu0
        %v4147 = vadd.f32 %v1581, %v4100
        %v4148 = vadd.f32 %v1584, %v4103
        %v4149 = vadd.f32 %v1587, %v4106
        %v4150 = vadd.f32 %v1590, %v4109
        %v4151 = vadd.f32 %v1593, %v4112
        %v4152 = vadd.f32 %v1596, %v4115
        %v4153 = vadd.f32 %v1599, %v4118
        %v4154 = vadd.f32 %v1602, %v4121
        %v4155 = vadd.f32 %v1605, %v4124
        %v4156 = vadd.f32 %v1608, %v4127
        %v4157 = vadd.f32 %v1611, %v4130
        %v4158 = vadd.f32 %v1614, %v4133
        %v4159 = vadd.f32 %v1617, %v4136
        %v4160 = vadd.f32 %v1620, %v4139
        %v4161 = vadd.f32 %v1623, %v4142
        %v4162 = vadd.f32 %v1626, %v4145
        %v4163 = vxor.u32 %v4147, 2147483648
        %v4164 = vxor.u32 %v4148, 2147483648
        %v4165 = vxor.u32 %v4149, 2147483648
        %v4166 = vxor.u32 %v4150, 2147483648
        %v4167 = vxor.u32 %v4151, 2147483648
        %v4168 = vxor.u32 %v4152, 2147483648
        %v4169 = vxor.u32 %v4153, 2147483648
        %v4170 = vxor.u32 %v4154, 2147483648
        %v4171 = vxor.u32 %v4155, 2147483648
        %v4172 = vxor.u32 %v4156, 2147483648
        %v4173 = vxor.u32 %v4157, 2147483648
        %v4174 = vxor.u32 %v4158, 2147483648
        %v4175 = vxor.u32 %v4159, 2147483648
        %v4176 = vxor.u32 %v4160, 2147483648
        %v4177 = vxor.u32 %v4161, 2147483648
        %v4178 = vxor.u32 %v4162, 2147483648
        %v4179 = vmul.f32 %v4163, 1.442695
        %v4180 = vpow.pop %v4179
        %v4181 = vmul.f32 %v4164, 1.442695
        %v4182 = vpow.pop %v4181
        %v4183 = vmul.f32 %v4165, 1.442695
        %v4184 = vpow.pop %v4183
        %v4185 = vmul.f32 %v4166, 1.442695
        %v4186 = vpow.pop %v4185
        %v4187 = vmul.f32 %v4167, 1.442695
        %v4188 = vpow.pop %v4187
        %v4189 = vmul.f32 %v4168, 1.442695
        %v4190 = vpow.pop %v4189
        %v4191 = vmul.f32 %v4169, 1.442695
        %v4192 = vpow.pop %v4191
        %v4193 = vmul.f32 %v4170, 1.442695
        %v4194 = vpow.pop %v4193
        %v4195 = vmul.f32 %v4171, 1.442695
        %v4196 = vpow.pop %v4195
        %v4197 = vmul.f32 %v4172, 1.442695
        %v4198 = vpow.pop %v4197
        %v4199 = vmul.f32 %v4173, 1.442695
        %v4200 = vpow.pop %v4199
        %v4201 = vmul.f32 %v4174, 1.442695
        %v4202 = vpow.pop %v4201
        %v4203 = vmul.f32 %v4175, 1.442695
        %v4204 = vpow.pop %v4203
        %v4205 = vmul.f32 %v4176, 1.442695
        %v4206 = vpow.pop %v4205
        %v4207 = vmul.f32 %v4177, 1.442695
        %v4208 = vpow.pop %v4207
        %v4209 = vmul.f32 %v4178, 1.442695
        %v4210 = vpow.pop %v4209
        %v4211 = vadd.f32 %v4180, 1.0
        %v4212 = vadd.f32 %v4182, 1.0
        %v4213 = vadd.f32 %v4184, 1.0
        %v4214 = vadd.f32 %v4186, 1.0
        %v4215 = vadd.f32 %v4188, 1.0
        %v4216 = vadd.f32 %v4190, 1.0
        %v4217 = vadd.f32 %v4192, 1.0
        %v4218 = vadd.f32 %v4194, 1.0
        %v4219 = vadd.f32 %v4196, 1.0
        %v4220 = vadd.f32 %v4198, 1.0
        %v4221 = vadd.f32 %v4200, 1.0
        %v4222 = vadd.f32 %v4202, 1.0
        %v4223 = vadd.f32 %v4204, 1.0
        %v4224 = vadd.f32 %v4206, 1.0
        %v4225 = vadd.f32 %v4208, 1.0
        %v4226 = vadd.f32 %v4210, 1.0
        %v4227 = vrcp.pop %v4211
        %v4228 = vmul.f32 %v4211, %v4227
        %v4229 = vsub.f32 1.0, %v4228
        %v4230 = vmul.f32 %v4227, %v4229
        %v4231 = vadd.f32 %v4227, %v4230
        %vm4232 = vweird.f32 %v4211
        %vm4233 = vweird.f32 %v4227
        %vm4234 = vmor %vm4232, %vm4233
        %v4235 = vsel %vm4234, %v4227, %v4231
        %v4236 = vand.u32 2147483647, %v4211
        %vm4237 = vcmp.eq.f32.partialorder %v4236, 8.507059e+37
        %v4238 = vand.u32 %v4211, 2147483648
        %v4239 = vor.u32 1.1754944e-38, %v4238
        %v4240 = vsel %vm4237, %v4239, %v4235
        %v4241 = vmul.f32 1.0, %v4240
        %v4242 = vrcp.pop %v4212
        %v4243 = vmul.f32 %v4212, %v4242
        %v4244 = vsub.f32 1.0, %v4243
        %v4245 = vmul.f32 %v4242, %v4244
        %v4246 = vadd.f32 %v4242, %v4245
        %vm4247 = vweird.f32 %v4212
        %vm4248 = vweird.f32 %v4242
        %vm4249 = vmor %vm4247, %vm4248
        %v4250 = vsel %vm4249, %v4242, %v4246
        %v4251 = vand.u32 2147483647, %v4212
        %vm4252 = vcmp.eq.f32.partialorder %v4251, 8.507059e+37
        %v4253 = vand.u32 %v4212, 2147483648
        %v4254 = vor.u32 1.1754944e-38, %v4253
        %v4255 = vsel %vm4252, %v4254, %v4250
        %v4256 = vmul.f32 1.0, %v4255
        %v4257 = vrcp.pop %v4213
        %v4258 = vmul.f32 %v4213, %v4257
        %v4259 = vsub.f32 1.0, %v4258
        %v4260 = vmul.f32 %v4257, %v4259
        %v4261 = vadd.f32 %v4257, %v4260
        %vm4262 = vweird.f32 %v4213
        %vm4263 = vweird.f32 %v4257
        %vm4264 = vmor %vm4262, %vm4263
        %v4265 = vsel %vm4264, %v4257, %v4261
        %v4266 = vand.u32 2147483647, %v4213
        %vm4267 = vcmp.eq.f32.partialorder %v4266, 8.507059e+37
        %v4268 = vand.u32 %v4213, 2147483648
        %v4269 = vor.u32 1.1754944e-38, %v4268
        %v4270 = vsel %vm4267, %v4269, %v4265
        %v4271 = vmul.f32 1.0, %v4270
        %v4272 = vrcp.pop %v4214
        %v4273 = vmul.f32 %v4214, %v4272
        %v4274 = vsub.f32 1.0, %v4273
        %v4275 = vmul.f32 %v4272, %v4274
        %v4276 = vadd.f32 %v4272, %v4275
        %vm4277 = vweird.f32 %v4214
        %vm4278 = vweird.f32 %v4272
        %vm4279 = vmor %vm4277, %vm4278
        %v4280 = vsel %vm4279, %v4272, %v4276
        %v4281 = vand.u32 2147483647, %v4214
        %vm4282 = vcmp.eq.f32.partialorder %v4281, 8.507059e+37
        %v4283 = vand.u32 %v4214, 2147483648
        %v4284 = vor.u32 1.1754944e-38, %v4283
        %v4285 = vsel %vm4282, %v4284, %v4280
        %v4286 = vmul.f32 1.0, %v4285
        %v4287 = vrcp.pop %v4215
        %v4288 = vmul.f32 %v4215, %v4287
        %v4289 = vsub.f32 1.0, %v4288
        %v4290 = vmul.f32 %v4287, %v4289
        %v4291 = vadd.f32 %v4287, %v4290
        %vm4292 = vweird.f32 %v4215
        %vm4293 = vweird.f32 %v4287
        %vm4294 = vmor %vm4292, %vm4293
        %v4295 = vsel %vm4294, %v4287, %v4291
        %v4296 = vand.u32 2147483647, %v4215
        %vm4297 = vcmp.eq.f32.partialorder %v4296, 8.507059e+37
        %v4298 = vand.u32 %v4215, 2147483648
        %v4299 = vor.u32 1.1754944e-38, %v4298
        %v4300 = vsel %vm4297, %v4299, %v4295
        %v4301 = vmul.f32 1.0, %v4300
        %v4302 = vrcp.pop %v4216
        %v4303 = vmul.f32 %v4216, %v4302
        %v4304 = vsub.f32 1.0, %v4303
        %v4305 = vmul.f32 %v4302, %v4304
        %v4306 = vadd.f32 %v4302, %v4305
        %vm4307 = vweird.f32 %v4216
        %vm4308 = vweird.f32 %v4302
        %vm4309 = vmor %vm4307, %vm4308
        %v4310 = vsel %vm4309, %v4302, %v4306
        %v4311 = vand.u32 2147483647, %v4216
        %vm4312 = vcmp.eq.f32.partialorder %v4311, 8.507059e+37
        %v4313 = vand.u32 %v4216, 2147483648
        %v4314 = vor.u32 1.1754944e-38, %v4313
        %v4315 = vsel %vm4312, %v4314, %v4310
        %v4316 = vmul.f32 1.0, %v4315
        %v4317 = vrcp.pop %v4217
        %v4318 = vmul.f32 %v4217, %v4317
        %v4319 = vsub.f32 1.0, %v4318
        %v4320 = vmul.f32 %v4317, %v4319
        %v4321 = vadd.f32 %v4317, %v4320
        %vm4322 = vweird.f32 %v4217
        %vm4323 = vweird.f32 %v4317
        %vm4324 = vmor %vm4322, %vm4323
        %v4325 = vsel %vm4324, %v4317, %v4321
        %v4326 = vand.u32 2147483647, %v4217
        %vm4327 = vcmp.eq.f32.partialorder %v4326, 8.507059e+37
        %v4328 = vand.u32 %v4217, 2147483648
        %v4329 = vor.u32 1.1754944e-38, %v4328
        %v4330 = vsel %vm4327, %v4329, %v4325
        %v4331 = vmul.f32 1.0, %v4330
        %v4332 = vrcp.pop %v4218
        %v4333 = vmul.f32 %v4218, %v4332
        %v4334 = vsub.f32 1.0, %v4333
        %v4335 = vmul.f32 %v4332, %v4334
        %v4336 = vadd.f32 %v4332, %v4335
        %vm4337 = vweird.f32 %v4218
        %vm4338 = vweird.f32 %v4332
        %vm4339 = vmor %vm4337, %vm4338
        %v4340 = vsel %vm4339, %v4332, %v4336
        %v4341 = vand.u32 2147483647, %v4218
        %vm4342 = vcmp.eq.f32.partialorder %v4341, 8.507059e+37
        %v4343 = vand.u32 %v4218, 2147483648
        %v4344 = vor.u32 1.1754944e-38, %v4343
        %v4345 = vsel %vm4342, %v4344, %v4340
        %v4346 = vmul.f32 1.0, %v4345
        %v4347 = vrcp.pop %v4219
        %v4348 = vmul.f32 %v4219, %v4347
        %v4349 = vsub.f32 1.0, %v4348
        %v4350 = vmul.f32 %v4347, %v4349
        %v4351 = vadd.f32 %v4347, %v4350
        %vm4352 = vweird.f32 %v4219
        %vm4353 = vweird.f32 %v4347
        %vm4354 = vmor %vm4352, %vm4353
        %v4355 = vsel %vm4354, %v4347, %v4351
        %v4356 = vand.u32 2147483647, %v4219
        %vm4357 = vcmp.eq.f32.partialorder %v4356, 8.507059e+37
        %v4358 = vand.u32 %v4219, 2147483648
        %v4359 = vor.u32 1.1754944e-38, %v4358
        %v4360 = vsel %vm4357, %v4359, %v4355
        %v4361 = vmul.f32 1.0, %v4360
        %v4362 = vrcp.pop %v4220
        %v4363 = vmul.f32 %v4220, %v4362
        %v4364 = vsub.f32 1.0, %v4363
        %v4365 = vmul.f32 %v4362, %v4364
        %v4366 = vadd.f32 %v4362, %v4365
        %vm4367 = vweird.f32 %v4220
        %vm4368 = vweird.f32 %v4362
        %vm4369 = vmor %vm4367, %vm4368
        %v4370 = vsel %vm4369, %v4362, %v4366
        %v4371 = vand.u32 2147483647, %v4220
        %vm4372 = vcmp.eq.f32.partialorder %v4371, 8.507059e+37
        %v4373 = vand.u32 %v4220, 2147483648
        %v4374 = vor.u32 1.1754944e-38, %v4373
        %v4375 = vsel %vm4372, %v4374, %v4370
        %v4376 = vmul.f32 1.0, %v4375
        %v4377 = vrcp.pop %v4221
        %v4378 = vmul.f32 %v4221, %v4377
        %v4379 = vsub.f32 1.0, %v4378
        %v4380 = vmul.f32 %v4377, %v4379
        %v4381 = vadd.f32 %v4377, %v4380
        %vm4382 = vweird.f32 %v4221
        %vm4383 = vweird.f32 %v4377
        %vm4384 = vmor %vm4382, %vm4383
        %v4385 = vsel %vm4384, %v4377, %v4381
        %v4386 = vand.u32 2147483647, %v4221
        %vm4387 = vcmp.eq.f32.partialorder %v4386, 8.507059e+37
        %v4388 = vand.u32 %v4221, 2147483648
        %v4389 = vor.u32 1.1754944e-38, %v4388
        %v4390 = vsel %vm4387, %v4389, %v4385
        %v4391 = vmul.f32 1.0, %v4390
        %v4392 = vrcp.pop %v4222
        %v4393 = vmul.f32 %v4222, %v4392
        %v4394 = vsub.f32 1.0, %v4393
        %v4395 = vmul.f32 %v4392, %v4394
        %v4396 = vadd.f32 %v4392, %v4395
        %vm4397 = vweird.f32 %v4222
        %vm4398 = vweird.f32 %v4392
        %vm4399 = vmor %vm4397, %vm4398
        %v4400 = vsel %vm4399, %v4392, %v4396
        %v4401 = vand.u32 2147483647, %v4222
        %vm4402 = vcmp.eq.f32.partialorder %v4401, 8.507059e+37
        %v4403 = vand.u32 %v4222, 2147483648
        %v4404 = vor.u32 1.1754944e-38, %v4403
        %v4405 = vsel %vm4402, %v4404, %v4400
        %v4406 = vmul.f32 1.0, %v4405
        %v4407 = vrcp.pop %v4223
        %v4408 = vmul.f32 %v4223, %v4407
        %v4409 = vsub.f32 1.0, %v4408
        %v4410 = vmul.f32 %v4407, %v4409
        %v4411 = vadd.f32 %v4407, %v4410
        %vm4412 = vweird.f32 %v4223
        %vm4413 = vweird.f32 %v4407
        %vm4414 = vmor %vm4412, %vm4413
        %v4415 = vsel %vm4414, %v4407, %v4411
        %v4416 = vand.u32 2147483647, %v4223
        %vm4417 = vcmp.eq.f32.partialorder %v4416, 8.507059e+37
        %v4418 = vand.u32 %v4223, 2147483648
        %v4419 = vor.u32 1.1754944e-38, %v4418
        %v4420 = vsel %vm4417, %v4419, %v4415
        %v4421 = vmul.f32 1.0, %v4420
        %v4422 = vrcp.pop %v4224
        %v4423 = vmul.f32 %v4224, %v4422
        %v4424 = vsub.f32 1.0, %v4423
        %v4425 = vmul.f32 %v4422, %v4424
        %v4426 = vadd.f32 %v4422, %v4425
        %vm4427 = vweird.f32 %v4224
        %vm4428 = vweird.f32 %v4422
        %vm4429 = vmor %vm4427, %vm4428
        %v4430 = vsel %vm4429, %v4422, %v4426
        %v4431 = vand.u32 2147483647, %v4224
        %vm4432 = vcmp.eq.f32.partialorder %v4431, 8.507059e+37
        %v4433 = vand.u32 %v4224, 2147483648
        %v4434 = vor.u32 1.1754944e-38, %v4433
        %v4435 = vsel %vm4432, %v4434, %v4430
        %v4436 = vmul.f32 1.0, %v4435
        %v4437 = vrcp.pop %v4225
        %v4438 = vmul.f32 %v4225, %v4437
        %v4439 = vsub.f32 1.0, %v4438
        %v4440 = vmul.f32 %v4437, %v4439
        %v4441 = vadd.f32 %v4437, %v4440
        %vm4442 = vweird.f32 %v4225
        %vm4443 = vweird.f32 %v4437
        %vm4444 = vmor %vm4442, %vm4443
        %v4445 = vsel %vm4444, %v4437, %v4441
        %v4446 = vand.u32 2147483647, %v4225
        %vm4447 = vcmp.eq.f32.partialorder %v4446, 8.507059e+37
        %v4448 = vand.u32 %v4225, 2147483648
        %v4449 = vor.u32 1.1754944e-38, %v4448
        %v4450 = vsel %vm4447, %v4449, %v4445
        %v4451 = vmul.f32 1.0, %v4450
        %v4452 = vrcp.pop %v4226
        %v4453 = vmul.f32 %v4226, %v4452
        %v4454 = vsub.f32 1.0, %v4453
        %v4455 = vmul.f32 %v4452, %v4454
        %v4456 = vadd.f32 %v4452, %v4455
        %vm4457 = vweird.f32 %v4226
        %vm4458 = vweird.f32 %v4452
        %vm4459 = vmor %vm4457, %vm4458
        %v4460 = vsel %vm4459, %v4452, %v4456
        %v4461 = vand.u32 2147483647, %v4226
        %vm4462 = vcmp.eq.f32.partialorder %v4461, 8.507059e+37
        %v4463 = vand.u32 %v4226, 2147483648
        %v4464 = vor.u32 1.1754944e-38, %v4463
        %v4465 = vsel %vm4462, %v4464, %v4460
        %v4466 = vmul.f32 1.0, %v4465
        %v4467 = vtanh.pop %v4147
        %v4468 = vtanh.pop %v4148
        %v4469 = vtanh.pop %v4149
        %v4470 = vtanh.pop %v4150
        %v4471 = vtanh.pop %v4151
        %v4472 = vtanh.pop %v4152
        %v4473 = vtanh.pop %v4153
        %v4474 = vtanh.pop %v4154
        %v4475 = vtanh.pop %v4155
        %v4476 = vtanh.pop %v4156
        %v4477 = vtanh.pop %v4157
        %v4478 = vtanh.pop %v4158
        %v4479 = vtanh.pop %v4159
        %v4480 = vtanh.pop %v4160
        %v4481 = vtanh.pop %v4161
        %v4482 = vtanh.pop %v4162
        %v4483 = vmul.f32 %v4241, %v3890
        %v4484 = vmul.f32 %v4256, %v3891
        %v4485 = vmul.f32 %v4271, %v3892
        %v4486 = vmul.f32 %v4286, %v3893
        %v4487 = vmul.f32 %v4301, %v3894
        %v4488 = vmul.f32 %v4316, %v3895
        %v4489 = vmul.f32 %v4331, %v3896
        %v4490 = vmul.f32 %v4346, %v3897
        %v4491 = vmul.f32 %v4361, %v3898
        %v4492 = vmul.f32 %v4376, %v3899
        %v4493 = vmul.f32 %v4391, %v3900
        %v4494 = vmul.f32 %v4406, %v3901
        %v4495 = vmul.f32 %v4421, %v3902
        %v4496 = vmul.f32 %v4436, %v3903
        %v4497 = vmul.f32 %v4451, %v3904
        %v4498 = vmul.f32 %v4466, %v3905
        %4515 = vrot.lane.b32.xlu0 %v4467, 32
        %v4516 = vpop.permute.xlu0 %4515
        %4517 = vrot.lane.b32.xlu0 %v4468, 32
        %v4518 = vpop.permute.xlu0 %4517
        %4519 = vrot.lane.b32.xlu0 %v4469, 32
        %v4520 = vpop.permute.xlu0 %4519
        %4521 = vrot.lane.b32.xlu0 %v4470, 32
        %v4522 = vpop.permute.xlu0 %4521
        %4523 = vrot.lane.b32.xlu0 %v4471, 32
        %v4524 = vpop.permute.xlu0 %4523
        %4525 = vrot.lane.b32.xlu0 %v4472, 32
        %v4526 = vpop.permute.xlu0 %4525
        %4527 = vrot.lane.b32.xlu0 %v4473, 32
        %v4528 = vpop.permute.xlu0 %4527
        %4529 = vrot.lane.b32.xlu0 %v4474, 32
        %v4530 = vpop.permute.xlu0 %4529
        %4531 = vrot.lane.b32.xlu0 %v4475, 32
        %v4532 = vpop.permute.xlu0 %4531
        %4533 = vrot.lane.b32.xlu0 %v4476, 32
        %v4534 = vpop.permute.xlu0 %4533
        %4535 = vrot.lane.b32.xlu0 %v4477, 32
        %v4536 = vpop.permute.xlu0 %4535
        %4537 = vrot.lane.b32.xlu0 %v4478, 32
        %v4538 = vpop.permute.xlu0 %4537
        %4539 = vrot.lane.b32.xlu0 %v4479, 32
        %v4540 = vpop.permute.xlu0 %4539
        %4541 = vrot.lane.b32.xlu0 %v4480, 32
        %v4542 = vpop.permute.xlu0 %4541
        %4543 = vrot.lane.b32.xlu0 %v4481, 32
        %v4544 = vpop.permute.xlu0 %4543
        %4545 = vrot.lane.b32.xlu0 %v4482, 32
        %v4546 = vpop.permute.xlu0 %4545
        %v4563 = vmul.f32 %v4241, %v4516
        %v4564 = vmul.f32 %v4256, %v4518
        %v4565 = vmul.f32 %v4271, %v4520
        %v4566 = vmul.f32 %v4286, %v4522
        %v4567 = vmul.f32 %v4301, %v4524
        %v4568 = vmul.f32 %v4316, %v4526
        %v4569 = vmul.f32 %v4331, %v4528
        %v4570 = vmul.f32 %v4346, %v4530
        %v4571 = vmul.f32 %v4361, %v4532
        %v4572 = vmul.f32 %v4376, %v4534
        %v4573 = vmul.f32 %v4391, %v4536
        %v4574 = vmul.f32 %v4406, %v4538
        %v4575 = vmul.f32 %v4421, %v4540
        %v4576 = vmul.f32 %v4436, %v4542
        %v4577 = vmul.f32 %v4451, %v4544
        %v4578 = vmul.f32 %v4466, %v4546
        %4595 = vrot.lane.b32.xlu0 %v4563, 32
        %v4596 = vpop.permute.xlu0 %4595
        %4597 = vrot.lane.b32.xlu0 %v4564, 32
        %v4598 = vpop.permute.xlu0 %4597
        %4599 = vrot.lane.b32.xlu0 %v4565, 32
        %v4600 = vpop.permute.xlu0 %4599
        %4601 = vrot.lane.b32.xlu0 %v4566, 32
        %v4602 = vpop.permute.xlu0 %4601
        %4603 = vrot.lane.b32.xlu0 %v4567, 32
        %v4604 = vpop.permute.xlu0 %4603
        %4605 = vrot.lane.b32.xlu0 %v4568, 32
        %v4606 = vpop.permute.xlu0 %4605
        %4607 = vrot.lane.b32.xlu0 %v4569, 32
        %v4608 = vpop.permute.xlu0 %4607
        %4609 = vrot.lane.b32.xlu0 %v4570, 32
        %v4610 = vpop.permute.xlu0 %4609
        %4611 = vrot.lane.b32.xlu0 %v4571, 32
        %v4612 = vpop.permute.xlu0 %4611
        %4613 = vrot.lane.b32.xlu0 %v4572, 32
        %v4614 = vpop.permute.xlu0 %4613
        %4615 = vrot.lane.b32.xlu0 %v4573, 32
        %v4616 = vpop.permute.xlu0 %4615
        %4617 = vrot.lane.b32.xlu0 %v4574, 32
        %v4618 = vpop.permute.xlu0 %4617
        %4619 = vrot.lane.b32.xlu0 %v4575, 32
        %v4620 = vpop.permute.xlu0 %4619
        %4621 = vrot.lane.b32.xlu0 %v4576, 32
        %v4622 = vpop.permute.xlu0 %4621
        %4623 = vrot.lane.b32.xlu0 %v4577, 32
        %v4624 = vpop.permute.xlu0 %4623
        %4625 = vrot.lane.b32.xlu0 %v4578, 32
        %v4626 = vpop.permute.xlu0 %4625
        %v4643 = vadd.f32 %v4483, %v4596
        %v4644 = vadd.f32 %v4484, %v4598
        %v4645 = vadd.f32 %v4485, %v4600
        %v4646 = vadd.f32 %v4486, %v4602
        %v4647 = vadd.f32 %v4487, %v4604
        %v4648 = vadd.f32 %v4488, %v4606
        %v4649 = vadd.f32 %v4489, %v4608
        %v4650 = vadd.f32 %v4490, %v4610
        %v4651 = vadd.f32 %v4491, %v4612
        %v4652 = vadd.f32 %v4492, %v4614
        %v4653 = vadd.f32 %v4493, %v4616
        %v4654 = vadd.f32 %v4494, %v4618
        %v4655 = vadd.f32 %v4495, %v4620
        %v4656 = vadd.f32 %v4496, %v4622
        %v4657 = vadd.f32 %v4497, %v4624
        %v4658 = vadd.f32 %v4498, %v4626
        %v4659 = vtanh.pop %v4643
        %v4660 = vtanh.pop %v4644
        %v4661 = vtanh.pop %v4645
        %v4662 = vtanh.pop %v4646
        %v4663 = vtanh.pop %v4647
        %v4664 = vtanh.pop %v4648
        %v4665 = vtanh.pop %v4649
        %v4666 = vtanh.pop %v4650
        %v4667 = vtanh.pop %v4651
        %v4668 = vtanh.pop %v4652
        %v4669 = vtanh.pop %v4653
        %v4670 = vtanh.pop %v4654
        %v4671 = vtanh.pop %v4655
        %v4672 = vtanh.pop %v4656
        %v4673 = vtanh.pop %v4657
        %v4674 = vtanh.pop %v4658
        %4691 = vrot.lane.b32.xlu0 %v4659, 32
        %v4692 = vpop.permute.xlu0 %4691
        %4693 = vrot.lane.b32.xlu0 %v4660, 32
        %v4694 = vpop.permute.xlu0 %4693
        %4695 = vrot.lane.b32.xlu0 %v4661, 32
        %v4696 = vpop.permute.xlu0 %4695
        %4697 = vrot.lane.b32.xlu0 %v4662, 32
        %v4698 = vpop.permute.xlu0 %4697
        %4699 = vrot.lane.b32.xlu0 %v4663, 32
        %v4700 = vpop.permute.xlu0 %4699
        %4701 = vrot.lane.b32.xlu0 %v4664, 32
        %v4702 = vpop.permute.xlu0 %4701
        %4703 = vrot.lane.b32.xlu0 %v4665, 32
        %v4704 = vpop.permute.xlu0 %4703
        %4705 = vrot.lane.b32.xlu0 %v4666, 32
        %v4706 = vpop.permute.xlu0 %4705
        %4707 = vrot.lane.b32.xlu0 %v4667, 32
        %v4708 = vpop.permute.xlu0 %4707
        %4709 = vrot.lane.b32.xlu0 %v4668, 32
        %v4710 = vpop.permute.xlu0 %4709
        %4711 = vrot.lane.b32.xlu0 %v4669, 32
        %v4712 = vpop.permute.xlu0 %4711
        %4713 = vrot.lane.b32.xlu0 %v4670, 32
        %v4714 = vpop.permute.xlu0 %4713
        %4715 = vrot.lane.b32.xlu0 %v4671, 32
        %v4716 = vpop.permute.xlu0 %4715
        %4717 = vrot.lane.b32.xlu0 %v4672, 32
        %v4718 = vpop.permute.xlu0 %4717
        %4719 = vrot.lane.b32.xlu0 %v4673, 32
        %v4720 = vpop.permute.xlu0 %4719
        %4721 = vrot.lane.b32.xlu0 %v4674, 32
        %v4722 = vpop.permute.xlu0 %4721
        %v4739 = vmul.f32 %v4241, %v4692
        %v4740 = vmul.f32 %v4256, %v4694
        %v4741 = vmul.f32 %v4271, %v4696
        %v4742 = vmul.f32 %v4286, %v4698
        %v4743 = vmul.f32 %v4301, %v4700
        %v4744 = vmul.f32 %v4316, %v4702
        %v4745 = vmul.f32 %v4331, %v4704
        %v4746 = vmul.f32 %v4346, %v4706
        %v4747 = vmul.f32 %v4361, %v4708
        %v4748 = vmul.f32 %v4376, %v4710
        %v4749 = vmul.f32 %v4391, %v4712
        %v4750 = vmul.f32 %v4406, %v4714
        %v4751 = vmul.f32 %v4421, %v4716
        %v4752 = vmul.f32 %v4436, %v4718
        %v4753 = vmul.f32 %v4451, %v4720
        %v4754 = vmul.f32 %v4466, %v4722
        %4771 = vrot.lane.b32.xlu0 %v4739, 64
        %v4772 = vpop.permute.xlu0 %4771
        %4773 = vrot.lane.b32.xlu0 %v4740, 64
        %v4774 = vpop.permute.xlu0 %4773
        %4775 = vrot.lane.b32.xlu0 %v4741, 64
        %v4776 = vpop.permute.xlu0 %4775
        %4777 = vrot.lane.b32.xlu0 %v4742, 64
        %v4778 = vpop.permute.xlu0 %4777
        %4779 = vrot.lane.b32.xlu0 %v4743, 64
        %v4780 = vpop.permute.xlu0 %4779
        %4781 = vrot.lane.b32.xlu0 %v4744, 64
        %v4782 = vpop.permute.xlu0 %4781
        %4783 = vrot.lane.b32.xlu0 %v4745, 64
        %v4784 = vpop.permute.xlu0 %4783
        %4785 = vrot.lane.b32.xlu0 %v4746, 64
        %v4786 = vpop.permute.xlu0 %4785
        %4787 = vrot.lane.b32.xlu0 %v4747, 64
        %v4788 = vpop.permute.xlu0 %4787
        %4789 = vrot.lane.b32.xlu0 %v4748, 64
        %v4790 = vpop.permute.xlu0 %4789
        %4791 = vrot.lane.b32.xlu0 %v4749, 64
        %v4792 = vpop.permute.xlu0 %4791
        %4793 = vrot.lane.b32.xlu0 %v4750, 64
        %v4794 = vpop.permute.xlu0 %4793
        %4795 = vrot.lane.b32.xlu0 %v4751, 64
        %v4796 = vpop.permute.xlu0 %4795
        %4797 = vrot.lane.b32.xlu0 %v4752, 64
        %v4798 = vpop.permute.xlu0 %4797
        %4799 = vrot.lane.b32.xlu0 %v4753, 64
        %v4800 = vpop.permute.xlu0 %4799
        %4801 = vrot.lane.b32.xlu0 %v4754, 64
        %v4802 = vpop.permute.xlu0 %4801
        %v4803 = vsel %vm1034, %v4772, 0
        %v4805 = vsel %vm1034, %v4774, 0
        %v4807 = vsel %vm1034, %v4776, 0
        %v4809 = vsel %vm1034, %v4778, 0
        %v4811 = vsel %vm1034, %v4780, 0
        %v4813 = vsel %vm1034, %v4782, 0
        %v4815 = vsel %vm1034, %v4784, 0
        %v4817 = vsel %vm1034, %v4786, 0
        %v4819 = vsel %vm1034, %v4788, 0
        %v4821 = vsel %vm1034, %v4790, 0
        %v4823 = vsel %vm1034, %v4792, 0
        %v4825 = vsel %vm1034, %v4794, 0
        %v4827 = vsel %vm1034, %v4796, 0
        %v4829 = vsel %vm1034, %v4798, 0
        %v4831 = vsel %vm1034, %v4800, 0
        %v4833 = vsel %vm1034, %v4802, 0
        %4835 = vmatpush.msra.mxu0 0.0
        %4836 = vmatpush.msra.mxu0 0.0
        %4837 = vmatpush.msra.mxu0 0.0
        %4838 = vmatpush.msra.mxu0 0.0
        %4839 = vmatpush.msra.mxu0 0.0
        %4840 = vmatpush.msra.mxu0 0.0
        %4841 = vmatpush.msra.mxu0 0.0
        %4842 = vmatpush.msra.mxu0 0.0
        %4843 = vmatpush.msra.mxu0 0.0
        %4844 = vmatpush.msra.mxu0 0.0
        %4845 = vmatpush.msra.mxu0 0.0
        %4846 = vmatpush.msra.mxu0 0.0
        %4847 = vmatpush.msra.mxu0 %v897
        %4848 = vmatpush.msra.mxu0 %v896
        %4849 = vmatpush.msra.mxu0 %v895
        %4850 = vmatpush.msra.mxu0 %v894
        %4851 = vmatmul.f32.gmra.mxu0 %v4803
        %v4852 = vpop.f32.mrf.mxu0
        %v4853 = vadd.f32 0.0, %v4852
        %4854 = vmatmul.f32.gmra.mxu0 %v4805
        %v4855 = vpop.f32.mrf.mxu0
        %v4856 = vadd.f32 0.0, %v4855
        %4857 = vmatmul.f32.gmra.mxu0 %v4807
        %v4858 = vpop.f32.mrf.mxu0
        %v4859 = vadd.f32 0.0, %v4858
        %4860 = vmatmul.f32.gmra.mxu0 %v4809
        %v4861 = vpop.f32.mrf.mxu0
        %v4862 = vadd.f32 0.0, %v4861
        %4863 = vmatmul.f32.gmra.mxu0 %v4811
        %v4864 = vpop.f32.mrf.mxu0
        %v4865 = vadd.f32 0.0, %v4864
        %4866 = vmatmul.f32.gmra.mxu0 %v4813
        %v4867 = vpop.f32.mrf.mxu0
        %v4868 = vadd.f32 0.0, %v4867
        %4869 = vmatmul.f32.gmra.mxu0 %v4815
        %v4870 = vpop.f32.mrf.mxu0
        %v4871 = vadd.f32 0.0, %v4870
        %4872 = vmatmul.f32.gmra.mxu0 %v4817
        %v4873 = vpop.f32.mrf.mxu0
        %v4874 = vadd.f32 0.0, %v4873
        %4875 = vmatmul.f32.gmra.mxu0 %v4819
        %v4876 = vpop.f32.mrf.mxu0
        %v4877 = vadd.f32 0.0, %v4876
        %4878 = vmatmul.f32.gmra.mxu0 %v4821
        %v4879 = vpop.f32.mrf.mxu0
        %v4880 = vadd.f32 0.0, %v4879
        %4881 = vmatmul.f32.gmra.mxu0 %v4823
        %v4882 = vpop.f32.mrf.mxu0
        %v4883 = vadd.f32 0.0, %v4882
        %4884 = vmatmul.f32.gmra.mxu0 %v4825
        %v4885 = vpop.f32.mrf.mxu0
        %v4886 = vadd.f32 0.0, %v4885
        %4887 = vmatmul.f32.gmra.mxu0 %v4827
        %v4888 = vpop.f32.mrf.mxu0
        %v4889 = vadd.f32 0.0, %v4888
        %4890 = vmatmul.f32.gmra.mxu0 %v4829
        %v4891 = vpop.f32.mrf.mxu0
        %v4892 = vadd.f32 0.0, %v4891
        %4893 = vmatmul.f32.gmra.mxu0 %v4831
        %v4894 = vpop.f32.mrf.mxu0
        %v4895 = vadd.f32 0.0, %v4894
        %4896 = vmatmul.f32.gmra.mxu0 %v4833
        %v4897 = vpop.f32.mrf.mxu0
        %v4898 = vadd.f32 0.0, %v4897
        %4899 = vdwg.mxu0
        %v4900 = vadd.f32 %v1629, %v4853
        %v4901 = vadd.f32 %v1632, %v4856
        %v4902 = vadd.f32 %v1635, %v4859
        %v4903 = vadd.f32 %v1638, %v4862
        %v4904 = vadd.f32 %v1641, %v4865
        %v4905 = vadd.f32 %v1644, %v4868
        %v4906 = vadd.f32 %v1647, %v4871
        %v4907 = vadd.f32 %v1650, %v4874
        %v4908 = vadd.f32 %v1653, %v4877
        %v4909 = vadd.f32 %v1656, %v4880
        %v4910 = vadd.f32 %v1659, %v4883
        %v4911 = vadd.f32 %v1662, %v4886
        %v4912 = vadd.f32 %v1665, %v4889
        %v4913 = vadd.f32 %v1668, %v4892
        %v4914 = vadd.f32 %v1671, %v4895
        %v4915 = vadd.f32 %v1674, %v4898
        %v4916 = vxor.u32 %v4900, 2147483648
        %v4917 = vxor.u32 %v4901, 2147483648
        %v4918 = vxor.u32 %v4902, 2147483648
        %v4919 = vxor.u32 %v4903, 2147483648
        %v4920 = vxor.u32 %v4904, 2147483648
        %v4921 = vxor.u32 %v4905, 2147483648
        %v4922 = vxor.u32 %v4906, 2147483648
        %v4923 = vxor.u32 %v4907, 2147483648
        %v4924 = vxor.u32 %v4908, 2147483648
        %v4925 = vxor.u32 %v4909, 2147483648
        %v4926 = vxor.u32 %v4910, 2147483648
        %v4927 = vxor.u32 %v4911, 2147483648
        %v4928 = vxor.u32 %v4912, 2147483648
        %v4929 = vxor.u32 %v4913, 2147483648
        %v4930 = vxor.u32 %v4914, 2147483648
        %v4931 = vxor.u32 %v4915, 2147483648
        %v4932 = vmul.f32 %v4916, 1.442695
        %v4933 = vpow.pop %v4932
        %v4934 = vmul.f32 %v4917, 1.442695
        %v4935 = vpow.pop %v4934
        %v4936 = vmul.f32 %v4918, 1.442695
        %v4937 = vpow.pop %v4936
        %v4938 = vmul.f32 %v4919, 1.442695
        %v4939 = vpow.pop %v4938
        %v4940 = vmul.f32 %v4920, 1.442695
        %v4941 = vpow.pop %v4940
        %v4942 = vmul.f32 %v4921, 1.442695
        %v4943 = vpow.pop %v4942
        %v4944 = vmul.f32 %v4922, 1.442695
        %v4945 = vpow.pop %v4944
        %v4946 = vmul.f32 %v4923, 1.442695
        %v4947 = vpow.pop %v4946
        %v4948 = vmul.f32 %v4924, 1.442695
        %v4949 = vpow.pop %v4948
        %v4950 = vmul.f32 %v4925, 1.442695
        %v4951 = vpow.pop %v4950
        %v4952 = vmul.f32 %v4926, 1.442695
        %v4953 = vpow.pop %v4952
        %v4954 = vmul.f32 %v4927, 1.442695
        %v4955 = vpow.pop %v4954
        %v4956 = vmul.f32 %v4928, 1.442695
        %v4957 = vpow.pop %v4956
        %v4958 = vmul.f32 %v4929, 1.442695
        %v4959 = vpow.pop %v4958
        %v4960 = vmul.f32 %v4930, 1.442695
        %v4961 = vpow.pop %v4960
        %v4962 = vmul.f32 %v4931, 1.442695
        %v4963 = vpow.pop %v4962
        %v4964 = vadd.f32 %v4933, 1.0
        %v4965 = vadd.f32 %v4935, 1.0
        %v4966 = vadd.f32 %v4937, 1.0
        %v4967 = vadd.f32 %v4939, 1.0
        %v4968 = vadd.f32 %v4941, 1.0
        %v4969 = vadd.f32 %v4943, 1.0
        %v4970 = vadd.f32 %v4945, 1.0
        %v4971 = vadd.f32 %v4947, 1.0
        %v4972 = vadd.f32 %v4949, 1.0
        %v4973 = vadd.f32 %v4951, 1.0
        %v4974 = vadd.f32 %v4953, 1.0
        %v4975 = vadd.f32 %v4955, 1.0
        %v4976 = vadd.f32 %v4957, 1.0
        %v4977 = vadd.f32 %v4959, 1.0
        %v4978 = vadd.f32 %v4961, 1.0
        %v4979 = vadd.f32 %v4963, 1.0
        %v4980 = vrcp.pop %v4964
        %v4981 = vmul.f32 %v4964, %v4980
        %v4982 = vsub.f32 1.0, %v4981
        %v4983 = vmul.f32 %v4980, %v4982
        %v4984 = vadd.f32 %v4980, %v4983
        %vm4985 = vweird.f32 %v4964
        %vm4986 = vweird.f32 %v4980
        %vm4987 = vmor %vm4985, %vm4986
        %v4988 = vsel %vm4987, %v4980, %v4984
        %v4989 = vand.u32 2147483647, %v4964
        %vm4990 = vcmp.eq.f32.partialorder %v4989, 8.507059e+37
        %v4991 = vand.u32 %v4964, 2147483648
        %v4992 = vor.u32 1.1754944e-38, %v4991
        %v4993 = vsel %vm4990, %v4992, %v4988
        %v4994 = vmul.f32 1.0, %v4993
        %v4995 = vrcp.pop %v4965
        %v4996 = vmul.f32 %v4965, %v4995
        %v4997 = vsub.f32 1.0, %v4996
        %v4998 = vmul.f32 %v4995, %v4997
        %v4999 = vadd.f32 %v4995, %v4998
        %vm5000 = vweird.f32 %v4965
        %vm5001 = vweird.f32 %v4995
        %vm5002 = vmor %vm5000, %vm5001
        %v5003 = vsel %vm5002, %v4995, %v4999
        %v5004 = vand.u32 2147483647, %v4965
        %vm5005 = vcmp.eq.f32.partialorder %v5004, 8.507059e+37
        %v5006 = vand.u32 %v4965, 2147483648
        %v5007 = vor.u32 1.1754944e-38, %v5006
        %v5008 = vsel %vm5005, %v5007, %v5003
        %v5009 = vmul.f32 1.0, %v5008
        %v5010 = vrcp.pop %v4966
        %v5011 = vmul.f32 %v4966, %v5010
        %v5012 = vsub.f32 1.0, %v5011
        %v5013 = vmul.f32 %v5010, %v5012
        %v5014 = vadd.f32 %v5010, %v5013
        %vm5015 = vweird.f32 %v4966
        %vm5016 = vweird.f32 %v5010
        %vm5017 = vmor %vm5015, %vm5016
        %v5018 = vsel %vm5017, %v5010, %v5014
        %v5019 = vand.u32 2147483647, %v4966
        %vm5020 = vcmp.eq.f32.partialorder %v5019, 8.507059e+37
        %v5021 = vand.u32 %v4966, 2147483648
        %v5022 = vor.u32 1.1754944e-38, %v5021
        %v5023 = vsel %vm5020, %v5022, %v5018
        %v5024 = vmul.f32 1.0, %v5023
        %v5025 = vrcp.pop %v4967
        %v5026 = vmul.f32 %v4967, %v5025
        %v5027 = vsub.f32 1.0, %v5026
        %v5028 = vmul.f32 %v5025, %v5027
        %v5029 = vadd.f32 %v5025, %v5028
        %vm5030 = vweird.f32 %v4967
        %vm5031 = vweird.f32 %v5025
        %vm5032 = vmor %vm5030, %vm5031
        %v5033 = vsel %vm5032, %v5025, %v5029
        %v5034 = vand.u32 2147483647, %v4967
        %vm5035 = vcmp.eq.f32.partialorder %v5034, 8.507059e+37
        %v5036 = vand.u32 %v4967, 2147483648
        %v5037 = vor.u32 1.1754944e-38, %v5036
        %v5038 = vsel %vm5035, %v5037, %v5033
        %v5039 = vmul.f32 1.0, %v5038
        %v5040 = vrcp.pop %v4968
        %v5041 = vmul.f32 %v4968, %v5040
        %v5042 = vsub.f32 1.0, %v5041
        %v5043 = vmul.f32 %v5040, %v5042
        %v5044 = vadd.f32 %v5040, %v5043
        %vm5045 = vweird.f32 %v4968
        %vm5046 = vweird.f32 %v5040
        %vm5047 = vmor %vm5045, %vm5046
        %v5048 = vsel %vm5047, %v5040, %v5044
        %v5049 = vand.u32 2147483647, %v4968
        %vm5050 = vcmp.eq.f32.partialorder %v5049, 8.507059e+37
        %v5051 = vand.u32 %v4968, 2147483648
        %v5052 = vor.u32 1.1754944e-38, %v5051
        %v5053 = vsel %vm5050, %v5052, %v5048
        %v5054 = vmul.f32 1.0, %v5053
        %v5055 = vrcp.pop %v4969
        %v5056 = vmul.f32 %v4969, %v5055
        %v5057 = vsub.f32 1.0, %v5056
        %v5058 = vmul.f32 %v5055, %v5057
        %v5059 = vadd.f32 %v5055, %v5058
        %vm5060 = vweird.f32 %v4969
        %vm5061 = vweird.f32 %v5055
        %vm5062 = vmor %vm5060, %vm5061
        %v5063 = vsel %vm5062, %v5055, %v5059
        %v5064 = vand.u32 2147483647, %v4969
        %vm5065 = vcmp.eq.f32.partialorder %v5064, 8.507059e+37
        %v5066 = vand.u32 %v4969, 2147483648
        %v5067 = vor.u32 1.1754944e-38, %v5066
        %v5068 = vsel %vm5065, %v5067, %v5063
        %v5069 = vmul.f32 1.0, %v5068
        %v5070 = vrcp.pop %v4970
        %v5071 = vmul.f32 %v4970, %v5070
        %v5072 = vsub.f32 1.0, %v5071
        %v5073 = vmul.f32 %v5070, %v5072
        %v5074 = vadd.f32 %v5070, %v5073
        %vm5075 = vweird.f32 %v4970
        %vm5076 = vweird.f32 %v5070
        %vm5077 = vmor %vm5075, %vm5076
        %v5078 = vsel %vm5077, %v5070, %v5074
        %v5079 = vand.u32 2147483647, %v4970
        %vm5080 = vcmp.eq.f32.partialorder %v5079, 8.507059e+37
        %v5081 = vand.u32 %v4970, 2147483648
        %v5082 = vor.u32 1.1754944e-38, %v5081
        %v5083 = vsel %vm5080, %v5082, %v5078
        %v5084 = vmul.f32 1.0, %v5083
        %v5085 = vrcp.pop %v4971
        %v5086 = vmul.f32 %v4971, %v5085
        %v5087 = vsub.f32 1.0, %v5086
        %v5088 = vmul.f32 %v5085, %v5087
        %v5089 = vadd.f32 %v5085, %v5088
        %vm5090 = vweird.f32 %v4971
        %vm5091 = vweird.f32 %v5085
        %vm5092 = vmor %vm5090, %vm5091
        %v5093 = vsel %vm5092, %v5085, %v5089
        %v5094 = vand.u32 2147483647, %v4971
        %vm5095 = vcmp.eq.f32.partialorder %v5094, 8.507059e+37
        %v5096 = vand.u32 %v4971, 2147483648
        %v5097 = vor.u32 1.1754944e-38, %v5096
        %v5098 = vsel %vm5095, %v5097, %v5093
        %v5099 = vmul.f32 1.0, %v5098
        %v5100 = vrcp.pop %v4972
        %v5101 = vmul.f32 %v4972, %v5100
        %v5102 = vsub.f32 1.0, %v5101
        %v5103 = vmul.f32 %v5100, %v5102
        %v5104 = vadd.f32 %v5100, %v5103
        %vm5105 = vweird.f32 %v4972
        %vm5106 = vweird.f32 %v5100
        %vm5107 = vmor %vm5105, %vm5106
        %v5108 = vsel %vm5107, %v5100, %v5104
        %v5109 = vand.u32 2147483647, %v4972
        %vm5110 = vcmp.eq.f32.partialorder %v5109, 8.507059e+37
        %v5111 = vand.u32 %v4972, 2147483648
        %v5112 = vor.u32 1.1754944e-38, %v5111
        %v5113 = vsel %vm5110, %v5112, %v5108
        %v5114 = vmul.f32 1.0, %v5113
        %v5115 = vrcp.pop %v4973
        %v5116 = vmul.f32 %v4973, %v5115
        %v5117 = vsub.f32 1.0, %v5116
        %v5118 = vmul.f32 %v5115, %v5117
        %v5119 = vadd.f32 %v5115, %v5118
        %vm5120 = vweird.f32 %v4973
        %vm5121 = vweird.f32 %v5115
        %vm5122 = vmor %vm5120, %vm5121
        %v5123 = vsel %vm5122, %v5115, %v5119
        %v5124 = vand.u32 2147483647, %v4973
        %vm5125 = vcmp.eq.f32.partialorder %v5124, 8.507059e+37
        %v5126 = vand.u32 %v4973, 2147483648
        %v5127 = vor.u32 1.1754944e-38, %v5126
        %v5128 = vsel %vm5125, %v5127, %v5123
        %v5129 = vmul.f32 1.0, %v5128
        %v5130 = vrcp.pop %v4974
        %v5131 = vmul.f32 %v4974, %v5130
        %v5132 = vsub.f32 1.0, %v5131
        %v5133 = vmul.f32 %v5130, %v5132
        %v5134 = vadd.f32 %v5130, %v5133
        %vm5135 = vweird.f32 %v4974
        %vm5136 = vweird.f32 %v5130
        %vm5137 = vmor %vm5135, %vm5136
        %v5138 = vsel %vm5137, %v5130, %v5134
        %v5139 = vand.u32 2147483647, %v4974
        %vm5140 = vcmp.eq.f32.partialorder %v5139, 8.507059e+37
        %v5141 = vand.u32 %v4974, 2147483648
        %v5142 = vor.u32 1.1754944e-38, %v5141
        %v5143 = vsel %vm5140, %v5142, %v5138
        %v5144 = vmul.f32 1.0, %v5143
        %v5145 = vrcp.pop %v4975
        %v5146 = vmul.f32 %v4975, %v5145
        %v5147 = vsub.f32 1.0, %v5146
        %v5148 = vmul.f32 %v5145, %v5147
        %v5149 = vadd.f32 %v5145, %v5148
        %vm5150 = vweird.f32 %v4975
        %vm5151 = vweird.f32 %v5145
        %vm5152 = vmor %vm5150, %vm5151
        %v5153 = vsel %vm5152, %v5145, %v5149
        %v5154 = vand.u32 2147483647, %v4975
        %vm5155 = vcmp.eq.f32.partialorder %v5154, 8.507059e+37
        %v5156 = vand.u32 %v4975, 2147483648
        %v5157 = vor.u32 1.1754944e-38, %v5156
        %v5158 = vsel %vm5155, %v5157, %v5153
        %v5159 = vmul.f32 1.0, %v5158
        %v5160 = vrcp.pop %v4976
        %v5161 = vmul.f32 %v4976, %v5160
        %v5162 = vsub.f32 1.0, %v5161
        %v5163 = vmul.f32 %v5160, %v5162
        %v5164 = vadd.f32 %v5160, %v5163
        %vm5165 = vweird.f32 %v4976
        %vm5166 = vweird.f32 %v5160
        %vm5167 = vmor %vm5165, %vm5166
        %v5168 = vsel %vm5167, %v5160, %v5164
        %v5169 = vand.u32 2147483647, %v4976
        %vm5170 = vcmp.eq.f32.partialorder %v5169, 8.507059e+37
        %v5171 = vand.u32 %v4976, 2147483648
        %v5172 = vor.u32 1.1754944e-38, %v5171
        %v5173 = vsel %vm5170, %v5172, %v5168
        %v5174 = vmul.f32 1.0, %v5173
        %v5175 = vrcp.pop %v4977
        %v5176 = vmul.f32 %v4977, %v5175
        %v5177 = vsub.f32 1.0, %v5176
        %v5178 = vmul.f32 %v5175, %v5177
        %v5179 = vadd.f32 %v5175, %v5178
        %vm5180 = vweird.f32 %v4977
        %vm5181 = vweird.f32 %v5175
        %vm5182 = vmor %vm5180, %vm5181
        %v5183 = vsel %vm5182, %v5175, %v5179
        %v5184 = vand.u32 2147483647, %v4977
        %vm5185 = vcmp.eq.f32.partialorder %v5184, 8.507059e+37
        %v5186 = vand.u32 %v4977, 2147483648
        %v5187 = vor.u32 1.1754944e-38, %v5186
        %v5188 = vsel %vm5185, %v5187, %v5183
        %v5189 = vmul.f32 1.0, %v5188
        %v5190 = vrcp.pop %v4978
        %v5191 = vmul.f32 %v4978, %v5190
        %v5192 = vsub.f32 1.0, %v5191
        %v5193 = vmul.f32 %v5190, %v5192
        %v5194 = vadd.f32 %v5190, %v5193
        %vm5195 = vweird.f32 %v4978
        %vm5196 = vweird.f32 %v5190
        %vm5197 = vmor %vm5195, %vm5196
        %v5198 = vsel %vm5197, %v5190, %v5194
        %v5199 = vand.u32 2147483647, %v4978
        %vm5200 = vcmp.eq.f32.partialorder %v5199, 8.507059e+37
        %v5201 = vand.u32 %v4978, 2147483648
        %v5202 = vor.u32 1.1754944e-38, %v5201
        %v5203 = vsel %vm5200, %v5202, %v5198
        %v5204 = vmul.f32 1.0, %v5203
        %v5205 = vrcp.pop %v4979
        %v5206 = vmul.f32 %v4979, %v5205
        %v5207 = vsub.f32 1.0, %v5206
        %v5208 = vmul.f32 %v5205, %v5207
        %v5209 = vadd.f32 %v5205, %v5208
        %vm5210 = vweird.f32 %v4979
        %vm5211 = vweird.f32 %v5205
        %vm5212 = vmor %vm5210, %vm5211
        %v5213 = vsel %vm5212, %v5205, %v5209
        %v5214 = vand.u32 2147483647, %v4979
        %vm5215 = vcmp.eq.f32.partialorder %v5214, 8.507059e+37
        %v5216 = vand.u32 %v4979, 2147483648
        %v5217 = vor.u32 1.1754944e-38, %v5216
        %v5218 = vsel %vm5215, %v5217, %v5213
        %v5219 = vmul.f32 1.0, %v5218
        %v5220 = vtanh.pop %v4900
        %v5221 = vtanh.pop %v4901
        %v5222 = vtanh.pop %v4902
        %v5223 = vtanh.pop %v4903
        %v5224 = vtanh.pop %v4904
        %v5225 = vtanh.pop %v4905
        %v5226 = vtanh.pop %v4906
        %v5227 = vtanh.pop %v4907
        %v5228 = vtanh.pop %v4908
        %v5229 = vtanh.pop %v4909
        %v5230 = vtanh.pop %v4910
        %v5231 = vtanh.pop %v4911
        %v5232 = vtanh.pop %v4912
        %v5233 = vtanh.pop %v4913
        %v5234 = vtanh.pop %v4914
        %v5235 = vtanh.pop %v4915
        %v5236 = vmul.f32 %v4994, %v4643
        %v5237 = vmul.f32 %v5009, %v4644
        %v5238 = vmul.f32 %v5024, %v4645
        %v5239 = vmul.f32 %v5039, %v4646
        %v5240 = vmul.f32 %v5054, %v4647
        %v5241 = vmul.f32 %v5069, %v4648
        %v5242 = vmul.f32 %v5084, %v4649
        %v5243 = vmul.f32 %v5099, %v4650
        %v5244 = vmul.f32 %v5114, %v4651
        %v5245 = vmul.f32 %v5129, %v4652
        %v5246 = vmul.f32 %v5144, %v4653
        %v5247 = vmul.f32 %v5159, %v4654
        %v5248 = vmul.f32 %v5174, %v4655
        %v5249 = vmul.f32 %v5189, %v4656
        %v5250 = vmul.f32 %v5204, %v4657
        %v5251 = vmul.f32 %v5219, %v4658
        %5268 = vrot.lane.b32.xlu0 %v5220, 32
        %v5269 = vpop.permute.xlu0 %5268
        %5270 = vrot.lane.b32.xlu0 %v5221, 32
        %v5271 = vpop.permute.xlu0 %5270
        %5272 = vrot.lane.b32.xlu0 %v5222, 32
        %v5273 = vpop.permute.xlu0 %5272
        %5274 = vrot.lane.b32.xlu0 %v5223, 32
        %v5275 = vpop.permute.xlu0 %5274
        %5276 = vrot.lane.b32.xlu0 %v5224, 32
        %v5277 = vpop.permute.xlu0 %5276
        %5278 = vrot.lane.b32.xlu0 %v5225, 32
        %v5279 = vpop.permute.xlu0 %5278
        %5280 = vrot.lane.b32.xlu0 %v5226, 32
        %v5281 = vpop.permute.xlu0 %5280
        %5282 = vrot.lane.b32.xlu0 %v5227, 32
        %v5283 = vpop.permute.xlu0 %5282
        %5284 = vrot.lane.b32.xlu0 %v5228, 32
        %v5285 = vpop.permute.xlu0 %5284
        %5286 = vrot.lane.b32.xlu0 %v5229, 32
        %v5287 = vpop.permute.xlu0 %5286
        %5288 = vrot.lane.b32.xlu0 %v5230, 32
        %v5289 = vpop.permute.xlu0 %5288
        %5290 = vrot.lane.b32.xlu0 %v5231, 32
        %v5291 = vpop.permute.xlu0 %5290
        %5292 = vrot.lane.b32.xlu0 %v5232, 32
        %v5293 = vpop.permute.xlu0 %5292
        %5294 = vrot.lane.b32.xlu0 %v5233, 32
        %v5295 = vpop.permute.xlu0 %5294
        %5296 = vrot.lane.b32.xlu0 %v5234, 32
        %v5297 = vpop.permute.xlu0 %5296
        %5298 = vrot.lane.b32.xlu0 %v5235, 32
        %v5299 = vpop.permute.xlu0 %5298
        %v5316 = vmul.f32 %v4994, %v5269
        %v5317 = vmul.f32 %v5009, %v5271
        %v5318 = vmul.f32 %v5024, %v5273
        %v5319 = vmul.f32 %v5039, %v5275
        %v5320 = vmul.f32 %v5054, %v5277
        %v5321 = vmul.f32 %v5069, %v5279
        %v5322 = vmul.f32 %v5084, %v5281
        %v5323 = vmul.f32 %v5099, %v5283
        %v5324 = vmul.f32 %v5114, %v5285
        %v5325 = vmul.f32 %v5129, %v5287
        %v5326 = vmul.f32 %v5144, %v5289
        %v5327 = vmul.f32 %v5159, %v5291
        %v5328 = vmul.f32 %v5174, %v5293
        %v5329 = vmul.f32 %v5189, %v5295
        %v5330 = vmul.f32 %v5204, %v5297
        %v5331 = vmul.f32 %v5219, %v5299
        %5348 = vrot.lane.b32.xlu0 %v5316, 32
        %v5349 = vpop.permute.xlu0 %5348
        %5350 = vrot.lane.b32.xlu0 %v5317, 32
        %v5351 = vpop.permute.xlu0 %5350
        %5352 = vrot.lane.b32.xlu0 %v5318, 32
        %v5353 = vpop.permute.xlu0 %5352
        %5354 = vrot.lane.b32.xlu0 %v5319, 32
        %v5355 = vpop.permute.xlu0 %5354
        %5356 = vrot.lane.b32.xlu0 %v5320, 32
        %v5357 = vpop.permute.xlu0 %5356
        %5358 = vrot.lane.b32.xlu0 %v5321, 32
        %v5359 = vpop.permute.xlu0 %5358
        %5360 = vrot.lane.b32.xlu0 %v5322, 32
        %v5361 = vpop.permute.xlu0 %5360
        %5362 = vrot.lane.b32.xlu0 %v5323, 32
        %v5363 = vpop.permute.xlu0 %5362
        %5364 = vrot.lane.b32.xlu0 %v5324, 32
        %v5365 = vpop.permute.xlu0 %5364
        %5366 = vrot.lane.b32.xlu0 %v5325, 32
        %v5367 = vpop.permute.xlu0 %5366
        %5368 = vrot.lane.b32.xlu0 %v5326, 32
        %v5369 = vpop.permute.xlu0 %5368
        %5370 = vrot.lane.b32.xlu0 %v5327, 32
        %v5371 = vpop.permute.xlu0 %5370
        %5372 = vrot.lane.b32.xlu0 %v5328, 32
        %v5373 = vpop.permute.xlu0 %5372
        %5374 = vrot.lane.b32.xlu0 %v5329, 32
        %v5375 = vpop.permute.xlu0 %5374
        %5376 = vrot.lane.b32.xlu0 %v5330, 32
        %v5377 = vpop.permute.xlu0 %5376
        %5378 = vrot.lane.b32.xlu0 %v5331, 32
        %v5379 = vpop.permute.xlu0 %5378
        %v5396 = vadd.f32 %v5236, %v5349
        %v5397 = vadd.f32 %v5237, %v5351
        %v5398 = vadd.f32 %v5238, %v5353
        %v5399 = vadd.f32 %v5239, %v5355
        %v5400 = vadd.f32 %v5240, %v5357
        %v5401 = vadd.f32 %v5241, %v5359
        %v5402 = vadd.f32 %v5242, %v5361
        %v5403 = vadd.f32 %v5243, %v5363
        %v5404 = vadd.f32 %v5244, %v5365
        %v5405 = vadd.f32 %v5245, %v5367
        %v5406 = vadd.f32 %v5246, %v5369
        %v5407 = vadd.f32 %v5247, %v5371
        %v5408 = vadd.f32 %v5248, %v5373
        %v5409 = vadd.f32 %v5249, %v5375
        %v5410 = vadd.f32 %v5250, %v5377
        %v5411 = vadd.f32 %v5251, %v5379
        %v5412 = vtanh.pop %v5396
        %v5413 = vtanh.pop %v5397
        %v5414 = vtanh.pop %v5398
        %v5415 = vtanh.pop %v5399
        %v5416 = vtanh.pop %v5400
        %v5417 = vtanh.pop %v5401
        %v5418 = vtanh.pop %v5402
        %v5419 = vtanh.pop %v5403
        %v5420 = vtanh.pop %v5404
        %v5421 = vtanh.pop %v5405
        %v5422 = vtanh.pop %v5406
        %v5423 = vtanh.pop %v5407
        %v5424 = vtanh.pop %v5408
        %v5425 = vtanh.pop %v5409
        %v5426 = vtanh.pop %v5410
        %v5427 = vtanh.pop %v5411
        %5444 = vrot.lane.b32.xlu0 %v5412, 32
        %v5445 = vpop.permute.xlu0 %5444
        %5446 = vrot.lane.b32.xlu0 %v5413, 32
        %v5447 = vpop.permute.xlu0 %5446
        %5448 = vrot.lane.b32.xlu0 %v5414, 32
        %v5449 = vpop.permute.xlu0 %5448
        %5450 = vrot.lane.b32.xlu0 %v5415, 32
        %v5451 = vpop.permute.xlu0 %5450
        %5452 = vrot.lane.b32.xlu0 %v5416, 32
        %v5453 = vpop.permute.xlu0 %5452
        %5454 = vrot.lane.b32.xlu0 %v5417, 32
        %v5455 = vpop.permute.xlu0 %5454
        %5456 = vrot.lane.b32.xlu0 %v5418, 32
        %v5457 = vpop.permute.xlu0 %5456
        %5458 = vrot.lane.b32.xlu0 %v5419, 32
        %v5459 = vpop.permute.xlu0 %5458
        %5460 = vrot.lane.b32.xlu0 %v5420, 32
        %v5461 = vpop.permute.xlu0 %5460
        %5462 = vrot.lane.b32.xlu0 %v5421, 32
        %v5463 = vpop.permute.xlu0 %5462
        %5464 = vrot.lane.b32.xlu0 %v5422, 32
        %v5465 = vpop.permute.xlu0 %5464
        %5466 = vrot.lane.b32.xlu0 %v5423, 32
        %v5467 = vpop.permute.xlu0 %5466
        %5468 = vrot.lane.b32.xlu0 %v5424, 32
        %v5469 = vpop.permute.xlu0 %5468
        %5470 = vrot.lane.b32.xlu0 %v5425, 32
        %v5471 = vpop.permute.xlu0 %5470
        %5472 = vrot.lane.b32.xlu0 %v5426, 32
        %v5473 = vpop.permute.xlu0 %5472
        %5474 = vrot.lane.b32.xlu0 %v5427, 32
        %v5475 = vpop.permute.xlu0 %5474
        %v5492 = vmul.f32 %v4994, %v5445
        %v5493 = vmul.f32 %v5009, %v5447
        %v5494 = vmul.f32 %v5024, %v5449
        %v5495 = vmul.f32 %v5039, %v5451
        %v5496 = vmul.f32 %v5054, %v5453
        %v5497 = vmul.f32 %v5069, %v5455
        %v5498 = vmul.f32 %v5084, %v5457
        %v5499 = vmul.f32 %v5099, %v5459
        %v5500 = vmul.f32 %v5114, %v5461
        %v5501 = vmul.f32 %v5129, %v5463
        %v5502 = vmul.f32 %v5144, %v5465
        %v5503 = vmul.f32 %v5159, %v5467
        %v5504 = vmul.f32 %v5174, %v5469
        %v5505 = vmul.f32 %v5189, %v5471
        %v5506 = vmul.f32 %v5204, %v5473
        %v5507 = vmul.f32 %v5219, %v5475
        %5524 = vrot.lane.b32.xlu0 %v5492, 64
        %v5525 = vpop.permute.xlu0 %5524
        %5526 = vrot.lane.b32.xlu0 %v5493, 64
        %v5527 = vpop.permute.xlu0 %5526
        %5528 = vrot.lane.b32.xlu0 %v5494, 64
        %v5529 = vpop.permute.xlu0 %5528
        %5530 = vrot.lane.b32.xlu0 %v5495, 64
        %v5531 = vpop.permute.xlu0 %5530
        %5532 = vrot.lane.b32.xlu0 %v5496, 64
        %v5533 = vpop.permute.xlu0 %5532
        %5534 = vrot.lane.b32.xlu0 %v5497, 64
        %v5535 = vpop.permute.xlu0 %5534
        %5536 = vrot.lane.b32.xlu0 %v5498, 64
        %v5537 = vpop.permute.xlu0 %5536
        %5538 = vrot.lane.b32.xlu0 %v5499, 64
        %v5539 = vpop.permute.xlu0 %5538
        %5540 = vrot.lane.b32.xlu0 %v5500, 64
        %v5541 = vpop.permute.xlu0 %5540
        %5542 = vrot.lane.b32.xlu0 %v5501, 64
        %v5543 = vpop.permute.xlu0 %5542
        %5544 = vrot.lane.b32.xlu0 %v5502, 64
        %v5545 = vpop.permute.xlu0 %5544
        %5546 = vrot.lane.b32.xlu0 %v5503, 64
        %v5547 = vpop.permute.xlu0 %5546
        %5548 = vrot.lane.b32.xlu0 %v5504, 64
        %v5549 = vpop.permute.xlu0 %5548
        %5550 = vrot.lane.b32.xlu0 %v5505, 64
        %v5551 = vpop.permute.xlu0 %5550
        %5552 = vrot.lane.b32.xlu0 %v5506, 64
        %v5553 = vpop.permute.xlu0 %5552
        %5554 = vrot.lane.b32.xlu0 %v5507, 64
        %v5555 = vpop.permute.xlu0 %5554
        %v5556 = vsel %vm1034, %v5525, 0
        %v5558 = vsel %vm1034, %v5527, 0
        %v5560 = vsel %vm1034, %v5529, 0
        %v5562 = vsel %vm1034, %v5531, 0
        %v5564 = vsel %vm1034, %v5533, 0
        %v5566 = vsel %vm1034, %v5535, 0
        %v5568 = vsel %vm1034, %v5537, 0
        %v5570 = vsel %vm1034, %v5539, 0
        %v5572 = vsel %vm1034, %v5541, 0
        %v5574 = vsel %vm1034, %v5543, 0
        %v5576 = vsel %vm1034, %v5545, 0
        %v5578 = vsel %vm1034, %v5547, 0
        %v5580 = vsel %vm1034, %v5549, 0
        %v5582 = vsel %vm1034, %v5551, 0
        %v5584 = vsel %vm1034, %v5553, 0
        %v5586 = vsel %vm1034, %v5555, 0
        %5588 = vmatpush.msra.mxu0 0.0
        %5589 = vmatpush.msra.mxu0 0.0
        %5590 = vmatpush.msra.mxu0 0.0
        %5591 = vmatpush.msra.mxu0 0.0
        %5592 = vmatpush.msra.mxu0 0.0
        %5593 = vmatpush.msra.mxu0 0.0
        %5594 = vmatpush.msra.mxu0 0.0
        %5595 = vmatpush.msra.mxu0 0.0
        %5596 = vmatpush.msra.mxu0 0.0
        %5597 = vmatpush.msra.mxu0 0.0
        %5598 = vmatpush.msra.mxu0 0.0
        %5599 = vmatpush.msra.mxu0 0.0
        %5600 = vmatpush.msra.mxu0 %v897
        %5601 = vmatpush.msra.mxu0 %v896
        %5602 = vmatpush.msra.mxu0 %v895
        %5603 = vmatpush.msra.mxu0 %v894
        %5604 = vmatmul.f32.gmra.mxu0 %v5556
        %v5605 = vpop.f32.mrf.mxu0
        %v5606 = vadd.f32 0.0, %v5605
        %5607 = vmatmul.f32.gmra.mxu0 %v5558
        %v5608 = vpop.f32.mrf.mxu0
        %v5609 = vadd.f32 0.0, %v5608
        %5610 = vmatmul.f32.gmra.mxu0 %v5560
        %v5611 = vpop.f32.mrf.mxu0
        %v5612 = vadd.f32 0.0, %v5611
        %5613 = vmatmul.f32.gmra.mxu0 %v5562
        %v5614 = vpop.f32.mrf.mxu0
        %v5615 = vadd.f32 0.0, %v5614
        %5616 = vmatmul.f32.gmra.mxu0 %v5564
        %v5617 = vpop.f32.mrf.mxu0
        %v5618 = vadd.f32 0.0, %v5617
        %5619 = vmatmul.f32.gmra.mxu0 %v5566
        %v5620 = vpop.f32.mrf.mxu0
        %v5621 = vadd.f32 0.0, %v5620
        %5622 = vmatmul.f32.gmra.mxu0 %v5568
        %v5623 = vpop.f32.mrf.mxu0
        %v5624 = vadd.f32 0.0, %v5623
        %5625 = vmatmul.f32.gmra.mxu0 %v5570
        %v5626 = vpop.f32.mrf.mxu0
        %v5627 = vadd.f32 0.0, %v5626
        %5628 = vmatmul.f32.gmra.mxu0 %v5572
        %v5629 = vpop.f32.mrf.mxu0
        %v5630 = vadd.f32 0.0, %v5629
        %5631 = vmatmul.f32.gmra.mxu0 %v5574
        %v5632 = vpop.f32.mrf.mxu0
        %v5633 = vadd.f32 0.0, %v5632
        %5634 = vmatmul.f32.gmra.mxu0 %v5576
        %v5635 = vpop.f32.mrf.mxu0
        %v5636 = vadd.f32 0.0, %v5635
        %5637 = vmatmul.f32.gmra.mxu0 %v5578
        %v5638 = vpop.f32.mrf.mxu0
        %v5639 = vadd.f32 0.0, %v5638
        %5640 = vmatmul.f32.gmra.mxu0 %v5580
        %v5641 = vpop.f32.mrf.mxu0
        %v5642 = vadd.f32 0.0, %v5641
        %5643 = vmatmul.f32.gmra.mxu0 %v5582
        %v5644 = vpop.f32.mrf.mxu0
        %v5645 = vadd.f32 0.0, %v5644
        %5646 = vmatmul.f32.gmra.mxu0 %v5584
        %v5647 = vpop.f32.mrf.mxu0
        %v5648 = vadd.f32 0.0, %v5647
        %5649 = vmatmul.f32.gmra.mxu0 %v5586
        %v5650 = vpop.f32.mrf.mxu0
        %v5651 = vadd.f32 0.0, %v5650
        %5652 = vdwg.mxu0
        %v5653 = vadd.f32 %v1677, %v5606
        %v5654 = vadd.f32 %v1680, %v5609
        %v5655 = vadd.f32 %v1683, %v5612
        %v5656 = vadd.f32 %v1686, %v5615
        %v5657 = vadd.f32 %v1689, %v5618
        %v5658 = vadd.f32 %v1692, %v5621
        %v5659 = vadd.f32 %v1695, %v5624
        %v5660 = vadd.f32 %v1698, %v5627
        %v5661 = vadd.f32 %v1701, %v5630
        %v5662 = vadd.f32 %v1704, %v5633
        %v5663 = vadd.f32 %v1707, %v5636
        %v5664 = vadd.f32 %v1710, %v5639
        %v5665 = vadd.f32 %v1713, %v5642
        %v5666 = vadd.f32 %v1716, %v5645
        %v5667 = vadd.f32 %v1719, %v5648
        %v5668 = vadd.f32 %v1722, %v5651
        %v5669 = vxor.u32 %v5653, 2147483648
        %v5670 = vxor.u32 %v5654, 2147483648
        %v5671 = vxor.u32 %v5655, 2147483648
        %v5672 = vxor.u32 %v5656, 2147483648
        %v5673 = vxor.u32 %v5657, 2147483648
        %v5674 = vxor.u32 %v5658, 2147483648
        %v5675 = vxor.u32 %v5659, 2147483648
        %v5676 = vxor.u32 %v5660, 2147483648
        %v5677 = vxor.u32 %v5661, 2147483648
        %v5678 = vxor.u32 %v5662, 2147483648
        %v5679 = vxor.u32 %v5663, 2147483648
        %v5680 = vxor.u32 %v5664, 2147483648
        %v5681 = vxor.u32 %v5665, 2147483648
        %v5682 = vxor.u32 %v5666, 2147483648
        %v5683 = vxor.u32 %v5667, 2147483648
        %v5684 = vxor.u32 %v5668, 2147483648
        %v5685 = vmul.f32 %v5669, 1.442695
        %v5686 = vpow.pop %v5685
        %v5687 = vmul.f32 %v5670, 1.442695
        %v5688 = vpow.pop %v5687
        %v5689 = vmul.f32 %v5671, 1.442695
        %v5690 = vpow.pop %v5689
        %v5691 = vmul.f32 %v5672, 1.442695
        %v5692 = vpow.pop %v5691
        %v5693 = vmul.f32 %v5673, 1.442695
        %v5694 = vpow.pop %v5693
        %v5695 = vmul.f32 %v5674, 1.442695
        %v5696 = vpow.pop %v5695
        %v5697 = vmul.f32 %v5675, 1.442695
        %v5698 = vpow.pop %v5697
        %v5699 = vmul.f32 %v5676, 1.442695
        %v5700 = vpow.pop %v5699
        %v5701 = vmul.f32 %v5677, 1.442695
        %v5702 = vpow.pop %v5701
        %v5703 = vmul.f32 %v5678, 1.442695
        %v5704 = vpow.pop %v5703
        %v5705 = vmul.f32 %v5679, 1.442695
        %v5706 = vpow.pop %v5705
        %v5707 = vmul.f32 %v5680, 1.442695
        %v5708 = vpow.pop %v5707
        %v5709 = vmul.f32 %v5681, 1.442695
        %v5710 = vpow.pop %v5709
        %v5711 = vmul.f32 %v5682, 1.442695
        %v5712 = vpow.pop %v5711
        %v5713 = vmul.f32 %v5683, 1.442695
        %v5714 = vpow.pop %v5713
        %v5715 = vmul.f32 %v5684, 1.442695
        %v5716 = vpow.pop %v5715
        %v5717 = vadd.f32 %v5686, 1.0
        %v5718 = vadd.f32 %v5688, 1.0
        %v5719 = vadd.f32 %v5690, 1.0
        %v5720 = vadd.f32 %v5692, 1.0
        %v5721 = vadd.f32 %v5694, 1.0
        %v5722 = vadd.f32 %v5696, 1.0
        %v5723 = vadd.f32 %v5698, 1.0
        %v5724 = vadd.f32 %v5700, 1.0
        %v5725 = vadd.f32 %v5702, 1.0
        %v5726 = vadd.f32 %v5704, 1.0
        %v5727 = vadd.f32 %v5706, 1.0
        %v5728 = vadd.f32 %v5708, 1.0
        %v5729 = vadd.f32 %v5710, 1.0
        %v5730 = vadd.f32 %v5712, 1.0
        %v5731 = vadd.f32 %v5714, 1.0
        %v5732 = vadd.f32 %v5716, 1.0
        %v5733 = vrcp.pop %v5717
        %v5734 = vmul.f32 %v5717, %v5733
        %v5735 = vsub.f32 1.0, %v5734
        %v5736 = vmul.f32 %v5733, %v5735
        %v5737 = vadd.f32 %v5733, %v5736
        %vm5738 = vweird.f32 %v5717
        %vm5739 = vweird.f32 %v5733
        %vm5740 = vmor %vm5738, %vm5739
        %v5741 = vsel %vm5740, %v5733, %v5737
        %v5742 = vand.u32 2147483647, %v5717
        %vm5743 = vcmp.eq.f32.partialorder %v5742, 8.507059e+37
        %v5744 = vand.u32 %v5717, 2147483648
        %v5745 = vor.u32 1.1754944e-38, %v5744
        %v5746 = vsel %vm5743, %v5745, %v5741
        %v5747 = vmul.f32 1.0, %v5746
        %v5748 = vrcp.pop %v5718
        %v5749 = vmul.f32 %v5718, %v5748
        %v5750 = vsub.f32 1.0, %v5749
        %v5751 = vmul.f32 %v5748, %v5750
        %v5752 = vadd.f32 %v5748, %v5751
        %vm5753 = vweird.f32 %v5718
        %vm5754 = vweird.f32 %v5748
        %vm5755 = vmor %vm5753, %vm5754
        %v5756 = vsel %vm5755, %v5748, %v5752
        %v5757 = vand.u32 2147483647, %v5718
        %vm5758 = vcmp.eq.f32.partialorder %v5757, 8.507059e+37
        %v5759 = vand.u32 %v5718, 2147483648
        %v5760 = vor.u32 1.1754944e-38, %v5759
        %v5761 = vsel %vm5758, %v5760, %v5756
        %v5762 = vmul.f32 1.0, %v5761
        %v5763 = vrcp.pop %v5719
        %v5764 = vmul.f32 %v5719, %v5763
        %v5765 = vsub.f32 1.0, %v5764
        %v5766 = vmul.f32 %v5763, %v5765
        %v5767 = vadd.f32 %v5763, %v5766
        %vm5768 = vweird.f32 %v5719
        %vm5769 = vweird.f32 %v5763
        %vm5770 = vmor %vm5768, %vm5769
        %v5771 = vsel %vm5770, %v5763, %v5767
        %v5772 = vand.u32 2147483647, %v5719
        %vm5773 = vcmp.eq.f32.partialorder %v5772, 8.507059e+37
        %v5774 = vand.u32 %v5719, 2147483648
        %v5775 = vor.u32 1.1754944e-38, %v5774
        %v5776 = vsel %vm5773, %v5775, %v5771
        %v5777 = vmul.f32 1.0, %v5776
        %v5778 = vrcp.pop %v5720
        %v5779 = vmul.f32 %v5720, %v5778
        %v5780 = vsub.f32 1.0, %v5779
        %v5781 = vmul.f32 %v5778, %v5780
        %v5782 = vadd.f32 %v5778, %v5781
        %vm5783 = vweird.f32 %v5720
        %vm5784 = vweird.f32 %v5778
        %vm5785 = vmor %vm5783, %vm5784
        %v5786 = vsel %vm5785, %v5778, %v5782
        %v5787 = vand.u32 2147483647, %v5720
        %vm5788 = vcmp.eq.f32.partialorder %v5787, 8.507059e+37
        %v5789 = vand.u32 %v5720, 2147483648
        %v5790 = vor.u32 1.1754944e-38, %v5789
        %v5791 = vsel %vm5788, %v5790, %v5786
        %v5792 = vmul.f32 1.0, %v5791
        %v5793 = vrcp.pop %v5721
        %v5794 = vmul.f32 %v5721, %v5793
        %v5795 = vsub.f32 1.0, %v5794
        %v5796 = vmul.f32 %v5793, %v5795
        %v5797 = vadd.f32 %v5793, %v5796
        %vm5798 = vweird.f32 %v5721
        %vm5799 = vweird.f32 %v5793
        %vm5800 = vmor %vm5798, %vm5799
        %v5801 = vsel %vm5800, %v5793, %v5797
        %v5802 = vand.u32 2147483647, %v5721
        %vm5803 = vcmp.eq.f32.partialorder %v5802, 8.507059e+37
        %v5804 = vand.u32 %v5721, 2147483648
        %v5805 = vor.u32 1.1754944e-38, %v5804
        %v5806 = vsel %vm5803, %v5805, %v5801
        %v5807 = vmul.f32 1.0, %v5806
        %v5808 = vrcp.pop %v5722
        %v5809 = vmul.f32 %v5722, %v5808
        %v5810 = vsub.f32 1.0, %v5809
        %v5811 = vmul.f32 %v5808, %v5810
        %v5812 = vadd.f32 %v5808, %v5811
        %vm5813 = vweird.f32 %v5722
        %vm5814 = vweird.f32 %v5808
        %vm5815 = vmor %vm5813, %vm5814
        %v5816 = vsel %vm5815, %v5808, %v5812
        %v5817 = vand.u32 2147483647, %v5722
        %vm5818 = vcmp.eq.f32.partialorder %v5817, 8.507059e+37
        %v5819 = vand.u32 %v5722, 2147483648
        %v5820 = vor.u32 1.1754944e-38, %v5819
        %v5821 = vsel %vm5818, %v5820, %v5816
        %v5822 = vmul.f32 1.0, %v5821
        %v5823 = vrcp.pop %v5723
        %v5824 = vmul.f32 %v5723, %v5823
        %v5825 = vsub.f32 1.0, %v5824
        %v5826 = vmul.f32 %v5823, %v5825
        %v5827 = vadd.f32 %v5823, %v5826
        %vm5828 = vweird.f32 %v5723
        %vm5829 = vweird.f32 %v5823
        %vm5830 = vmor %vm5828, %vm5829
        %v5831 = vsel %vm5830, %v5823, %v5827
        %v5832 = vand.u32 2147483647, %v5723
        %vm5833 = vcmp.eq.f32.partialorder %v5832, 8.507059e+37
        %v5834 = vand.u32 %v5723, 2147483648
        %v5835 = vor.u32 1.1754944e-38, %v5834
        %v5836 = vsel %vm5833, %v5835, %v5831
        %v5837 = vmul.f32 1.0, %v5836
        %v5838 = vrcp.pop %v5724
        %v5839 = vmul.f32 %v5724, %v5838
        %v5840 = vsub.f32 1.0, %v5839
        %v5841 = vmul.f32 %v5838, %v5840
        %v5842 = vadd.f32 %v5838, %v5841
        %vm5843 = vweird.f32 %v5724
        %vm5844 = vweird.f32 %v5838
        %vm5845 = vmor %vm5843, %vm5844
        %v5846 = vsel %vm5845, %v5838, %v5842
        %v5847 = vand.u32 2147483647, %v5724
        %vm5848 = vcmp.eq.f32.partialorder %v5847, 8.507059e+37
        %v5849 = vand.u32 %v5724, 2147483648
        %v5850 = vor.u32 1.1754944e-38, %v5849
        %v5851 = vsel %vm5848, %v5850, %v5846
        %v5852 = vmul.f32 1.0, %v5851
        %v5853 = vrcp.pop %v5725
        %v5854 = vmul.f32 %v5725, %v5853
        %v5855 = vsub.f32 1.0, %v5854
        %v5856 = vmul.f32 %v5853, %v5855
        %v5857 = vadd.f32 %v5853, %v5856
        %vm5858 = vweird.f32 %v5725
        %vm5859 = vweird.f32 %v5853
        %vm5860 = vmor %vm5858, %vm5859
        %v5861 = vsel %vm5860, %v5853, %v5857
        %v5862 = vand.u32 2147483647, %v5725
        %vm5863 = vcmp.eq.f32.partialorder %v5862, 8.507059e+37
        %v5864 = vand.u32 %v5725, 2147483648
        %v5865 = vor.u32 1.1754944e-38, %v5864
        %v5866 = vsel %vm5863, %v5865, %v5861
        %v5867 = vmul.f32 1.0, %v5866
        %v5868 = vrcp.pop %v5726
        %v5869 = vmul.f32 %v5726, %v5868
        %v5870 = vsub.f32 1.0, %v5869
        %v5871 = vmul.f32 %v5868, %v5870
        %v5872 = vadd.f32 %v5868, %v5871
        %vm5873 = vweird.f32 %v5726
        %vm5874 = vweird.f32 %v5868
        %vm5875 = vmor %vm5873, %vm5874
        %v5876 = vsel %vm5875, %v5868, %v5872
        %v5877 = vand.u32 2147483647, %v5726
        %vm5878 = vcmp.eq.f32.partialorder %v5877, 8.507059e+37
        %v5879 = vand.u32 %v5726, 2147483648
        %v5880 = vor.u32 1.1754944e-38, %v5879
        %v5881 = vsel %vm5878, %v5880, %v5876
        %v5882 = vmul.f32 1.0, %v5881
        %v5883 = vrcp.pop %v5727
        %v5884 = vmul.f32 %v5727, %v5883
        %v5885 = vsub.f32 1.0, %v5884
        %v5886 = vmul.f32 %v5883, %v5885
        %v5887 = vadd.f32 %v5883, %v5886
        %vm5888 = vweird.f32 %v5727
        %vm5889 = vweird.f32 %v5883
        %vm5890 = vmor %vm5888, %vm5889
        %v5891 = vsel %vm5890, %v5883, %v5887
        %v5892 = vand.u32 2147483647, %v5727
        %vm5893 = vcmp.eq.f32.partialorder %v5892, 8.507059e+37
        %v5894 = vand.u32 %v5727, 2147483648
        %v5895 = vor.u32 1.1754944e-38, %v5894
        %v5896 = vsel %vm5893, %v5895, %v5891
        %v5897 = vmul.f32 1.0, %v5896
        %v5898 = vrcp.pop %v5728
        %v5899 = vmul.f32 %v5728, %v5898
        %v5900 = vsub.f32 1.0, %v5899
        %v5901 = vmul.f32 %v5898, %v5900
        %v5902 = vadd.f32 %v5898, %v5901
        %vm5903 = vweird.f32 %v5728
        %vm5904 = vweird.f32 %v5898
        %vm5905 = vmor %vm5903, %vm5904
        %v5906 = vsel %vm5905, %v5898, %v5902
        %v5907 = vand.u32 2147483647, %v5728
        %vm5908 = vcmp.eq.f32.partialorder %v5907, 8.507059e+37
        %v5909 = vand.u32 %v5728, 2147483648
        %v5910 = vor.u32 1.1754944e-38, %v5909
        %v5911 = vsel %vm5908, %v5910, %v5906
        %v5912 = vmul.f32 1.0, %v5911
        %v5913 = vrcp.pop %v5729
        %v5914 = vmul.f32 %v5729, %v5913
        %v5915 = vsub.f32 1.0, %v5914
        %v5916 = vmul.f32 %v5913, %v5915
        %v5917 = vadd.f32 %v5913, %v5916
        %vm5918 = vweird.f32 %v5729
        %vm5919 = vweird.f32 %v5913
        %vm5920 = vmor %vm5918, %vm5919
        %v5921 = vsel %vm5920, %v5913, %v5917
        %v5922 = vand.u32 2147483647, %v5729
        %vm5923 = vcmp.eq.f32.partialorder %v5922, 8.507059e+37
        %v5924 = vand.u32 %v5729, 2147483648
        %v5925 = vor.u32 1.1754944e-38, %v5924
        %v5926 = vsel %vm5923, %v5925, %v5921
        %v5927 = vmul.f32 1.0, %v5926
        %v5928 = vrcp.pop %v5730
        %v5929 = vmul.f32 %v5730, %v5928
        %v5930 = vsub.f32 1.0, %v5929
        %v5931 = vmul.f32 %v5928, %v5930
        %v5932 = vadd.f32 %v5928, %v5931
        %vm5933 = vweird.f32 %v5730
        %vm5934 = vweird.f32 %v5928
        %vm5935 = vmor %vm5933, %vm5934
        %v5936 = vsel %vm5935, %v5928, %v5932
        %v5937 = vand.u32 2147483647, %v5730
        %vm5938 = vcmp.eq.f32.partialorder %v5937, 8.507059e+37
        %v5939 = vand.u32 %v5730, 2147483648
        %v5940 = vor.u32 1.1754944e-38, %v5939
        %v5941 = vsel %vm5938, %v5940, %v5936
        %v5942 = vmul.f32 1.0, %v5941
        %v5943 = vrcp.pop %v5731
        %v5944 = vmul.f32 %v5731, %v5943
        %v5945 = vsub.f32 1.0, %v5944
        %v5946 = vmul.f32 %v5943, %v5945
        %v5947 = vadd.f32 %v5943, %v5946
        %vm5948 = vweird.f32 %v5731
        %vm5949 = vweird.f32 %v5943
        %vm5950 = vmor %vm5948, %vm5949
        %v5951 = vsel %vm5950, %v5943, %v5947
        %v5952 = vand.u32 2147483647, %v5731
        %vm5953 = vcmp.eq.f32.partialorder %v5952, 8.507059e+37
        %v5954 = vand.u32 %v5731, 2147483648
        %v5955 = vor.u32 1.1754944e-38, %v5954
        %v5956 = vsel %vm5953, %v5955, %v5951
        %v5957 = vmul.f32 1.0, %v5956
        %v5958 = vrcp.pop %v5732
        %v5959 = vmul.f32 %v5732, %v5958
        %v5960 = vsub.f32 1.0, %v5959
        %v5961 = vmul.f32 %v5958, %v5960
        %v5962 = vadd.f32 %v5958, %v5961
        %vm5963 = vweird.f32 %v5732
        %vm5964 = vweird.f32 %v5958
        %vm5965 = vmor %vm5963, %vm5964
        %v5966 = vsel %vm5965, %v5958, %v5962
        %v5967 = vand.u32 2147483647, %v5732
        %vm5968 = vcmp.eq.f32.partialorder %v5967, 8.507059e+37
        %v5969 = vand.u32 %v5732, 2147483648
        %v5970 = vor.u32 1.1754944e-38, %v5969
        %v5971 = vsel %vm5968, %v5970, %v5966
        %v5972 = vmul.f32 1.0, %v5971
        %v5973 = vtanh.pop %v5653
        %v5974 = vtanh.pop %v5654
        %v5975 = vtanh.pop %v5655
        %v5976 = vtanh.pop %v5656
        %v5977 = vtanh.pop %v5657
        %v5978 = vtanh.pop %v5658
        %v5979 = vtanh.pop %v5659
        %v5980 = vtanh.pop %v5660
        %v5981 = vtanh.pop %v5661
        %v5982 = vtanh.pop %v5662
        %v5983 = vtanh.pop %v5663
        %v5984 = vtanh.pop %v5664
        %v5985 = vtanh.pop %v5665
        %v5986 = vtanh.pop %v5666
        %v5987 = vtanh.pop %v5667
        %v5988 = vtanh.pop %v5668
        %v5989 = vmul.f32 %v5747, %v5396
        %v5990 = vmul.f32 %v5762, %v5397
        %v5991 = vmul.f32 %v5777, %v5398
        %v5992 = vmul.f32 %v5792, %v5399
        %v5993 = vmul.f32 %v5807, %v5400
        %v5994 = vmul.f32 %v5822, %v5401
        %v5995 = vmul.f32 %v5837, %v5402
        %v5996 = vmul.f32 %v5852, %v5403
        %v5997 = vmul.f32 %v5867, %v5404
        %v5998 = vmul.f32 %v5882, %v5405
        %v5999 = vmul.f32 %v5897, %v5406
        %v6000 = vmul.f32 %v5912, %v5407
        %v6001 = vmul.f32 %v5927, %v5408
        %v6002 = vmul.f32 %v5942, %v5409
        %v6003 = vmul.f32 %v5957, %v5410
        %v6004 = vmul.f32 %v5972, %v5411
        %6021 = vrot.lane.b32.xlu0 %v5973, 32
        %v6022 = vpop.permute.xlu0 %6021
        %6023 = vrot.lane.b32.xlu0 %v5974, 32
        %v6024 = vpop.permute.xlu0 %6023
        %6025 = vrot.lane.b32.xlu0 %v5975, 32
        %v6026 = vpop.permute.xlu0 %6025
        %6027 = vrot.lane.b32.xlu0 %v5976, 32
        %v6028 = vpop.permute.xlu0 %6027
        %6029 = vrot.lane.b32.xlu0 %v5977, 32
        %v6030 = vpop.permute.xlu0 %6029
        %6031 = vrot.lane.b32.xlu0 %v5978, 32
        %v6032 = vpop.permute.xlu0 %6031
        %6033 = vrot.lane.b32.xlu0 %v5979, 32
        %v6034 = vpop.permute.xlu0 %6033
        %6035 = vrot.lane.b32.xlu0 %v5980, 32
        %v6036 = vpop.permute.xlu0 %6035
        %6037 = vrot.lane.b32.xlu0 %v5981, 32
        %v6038 = vpop.permute.xlu0 %6037
        %6039 = vrot.lane.b32.xlu0 %v5982, 32
        %v6040 = vpop.permute.xlu0 %6039
        %6041 = vrot.lane.b32.xlu0 %v5983, 32
        %v6042 = vpop.permute.xlu0 %6041
        %6043 = vrot.lane.b32.xlu0 %v5984, 32
        %v6044 = vpop.permute.xlu0 %6043
        %6045 = vrot.lane.b32.xlu0 %v5985, 32
        %v6046 = vpop.permute.xlu0 %6045
        %6047 = vrot.lane.b32.xlu0 %v5986, 32
        %v6048 = vpop.permute.xlu0 %6047
        %6049 = vrot.lane.b32.xlu0 %v5987, 32
        %v6050 = vpop.permute.xlu0 %6049
        %6051 = vrot.lane.b32.xlu0 %v5988, 32
        %v6052 = vpop.permute.xlu0 %6051
        %v6069 = vmul.f32 %v5747, %v6022
        %v6070 = vmul.f32 %v5762, %v6024
        %v6071 = vmul.f32 %v5777, %v6026
        %v6072 = vmul.f32 %v5792, %v6028
        %v6073 = vmul.f32 %v5807, %v6030
        %v6074 = vmul.f32 %v5822, %v6032
        %v6075 = vmul.f32 %v5837, %v6034
        %v6076 = vmul.f32 %v5852, %v6036
        %v6077 = vmul.f32 %v5867, %v6038
        %v6078 = vmul.f32 %v5882, %v6040
        %v6079 = vmul.f32 %v5897, %v6042
        %v6080 = vmul.f32 %v5912, %v6044
        %v6081 = vmul.f32 %v5927, %v6046
        %v6082 = vmul.f32 %v5942, %v6048
        %v6083 = vmul.f32 %v5957, %v6050
        %v6084 = vmul.f32 %v5972, %v6052
        %6101 = vrot.lane.b32.xlu0 %v6069, 32
        %v6102 = vpop.permute.xlu0 %6101
        %6103 = vrot.lane.b32.xlu0 %v6070, 32
        %v6104 = vpop.permute.xlu0 %6103
        %6105 = vrot.lane.b32.xlu0 %v6071, 32
        %v6106 = vpop.permute.xlu0 %6105
        %6107 = vrot.lane.b32.xlu0 %v6072, 32
        %v6108 = vpop.permute.xlu0 %6107
        %6109 = vrot.lane.b32.xlu0 %v6073, 32
        %v6110 = vpop.permute.xlu0 %6109
        %6111 = vrot.lane.b32.xlu0 %v6074, 32
        %v6112 = vpop.permute.xlu0 %6111
        %6113 = vrot.lane.b32.xlu0 %v6075, 32
        %v6114 = vpop.permute.xlu0 %6113
        %6115 = vrot.lane.b32.xlu0 %v6076, 32
        %v6116 = vpop.permute.xlu0 %6115
        %6117 = vrot.lane.b32.xlu0 %v6077, 32
        %v6118 = vpop.permute.xlu0 %6117
        %6119 = vrot.lane.b32.xlu0 %v6078, 32
        %v6120 = vpop.permute.xlu0 %6119
        %6121 = vrot.lane.b32.xlu0 %v6079, 32
        %v6122 = vpop.permute.xlu0 %6121
        %6123 = vrot.lane.b32.xlu0 %v6080, 32
        %v6124 = vpop.permute.xlu0 %6123
        %6125 = vrot.lane.b32.xlu0 %v6081, 32
        %v6126 = vpop.permute.xlu0 %6125
        %6127 = vrot.lane.b32.xlu0 %v6082, 32
        %v6128 = vpop.permute.xlu0 %6127
        %6129 = vrot.lane.b32.xlu0 %v6083, 32
        %v6130 = vpop.permute.xlu0 %6129
        %6131 = vrot.lane.b32.xlu0 %v6084, 32
        %v6132 = vpop.permute.xlu0 %6131
        %v6149 = vadd.f32 %v5989, %v6102
        %v6150 = vadd.f32 %v5990, %v6104
        %v6151 = vadd.f32 %v5991, %v6106
        %v6152 = vadd.f32 %v5992, %v6108
        %v6153 = vadd.f32 %v5993, %v6110
        %v6154 = vadd.f32 %v5994, %v6112
        %v6155 = vadd.f32 %v5995, %v6114
        %v6156 = vadd.f32 %v5996, %v6116
        %v6157 = vadd.f32 %v5997, %v6118
        %v6158 = vadd.f32 %v5998, %v6120
        %v6159 = vadd.f32 %v5999, %v6122
        %v6160 = vadd.f32 %v6000, %v6124
        %v6161 = vadd.f32 %v6001, %v6126
        %v6162 = vadd.f32 %v6002, %v6128
        %v6163 = vadd.f32 %v6003, %v6130
        %v6164 = vadd.f32 %v6004, %v6132
        %v6165 = vtanh.pop %v6149
        %v6166 = vtanh.pop %v6150
        %v6167 = vtanh.pop %v6151
        %v6168 = vtanh.pop %v6152
        %v6169 = vtanh.pop %v6153
        %v6170 = vtanh.pop %v6154
        %v6171 = vtanh.pop %v6155
        %v6172 = vtanh.pop %v6156
        %v6173 = vtanh.pop %v6157
        %v6174 = vtanh.pop %v6158
        %v6175 = vtanh.pop %v6159
        %v6176 = vtanh.pop %v6160
        %v6177 = vtanh.pop %v6161
        %v6178 = vtanh.pop %v6162
        %v6179 = vtanh.pop %v6163
        %v6180 = vtanh.pop %v6164
        %6197 = vrot.lane.b32.xlu0 %v6165, 32
        %v6198 = vpop.permute.xlu0 %6197
        %6199 = vrot.lane.b32.xlu0 %v6166, 32
        %v6200 = vpop.permute.xlu0 %6199
        %6201 = vrot.lane.b32.xlu0 %v6167, 32
        %v6202 = vpop.permute.xlu0 %6201
        %6203 = vrot.lane.b32.xlu0 %v6168, 32
        %v6204 = vpop.permute.xlu0 %6203
        %6205 = vrot.lane.b32.xlu0 %v6169, 32
        %v6206 = vpop.permute.xlu0 %6205
        %6207 = vrot.lane.b32.xlu0 %v6170, 32
        %v6208 = vpop.permute.xlu0 %6207
        %6209 = vrot.lane.b32.xlu0 %v6171, 32
        %v6210 = vpop.permute.xlu0 %6209
        %6211 = vrot.lane.b32.xlu0 %v6172, 32
        %v6212 = vpop.permute.xlu0 %6211
        %6213 = vrot.lane.b32.xlu0 %v6173, 32
        %v6214 = vpop.permute.xlu0 %6213
        %6215 = vrot.lane.b32.xlu0 %v6174, 32
        %v6216 = vpop.permute.xlu0 %6215
        %6217 = vrot.lane.b32.xlu0 %v6175, 32
        %v6218 = vpop.permute.xlu0 %6217
        %6219 = vrot.lane.b32.xlu0 %v6176, 32
        %v6220 = vpop.permute.xlu0 %6219
        %6221 = vrot.lane.b32.xlu0 %v6177, 32
        %v6222 = vpop.permute.xlu0 %6221
        %6223 = vrot.lane.b32.xlu0 %v6178, 32
        %v6224 = vpop.permute.xlu0 %6223
        %6225 = vrot.lane.b32.xlu0 %v6179, 32
        %v6226 = vpop.permute.xlu0 %6225
        %6227 = vrot.lane.b32.xlu0 %v6180, 32
        %v6228 = vpop.permute.xlu0 %6227
        %v6245 = vmul.f32 %v5747, %v6198
        %v6246 = vmul.f32 %v5762, %v6200
        %v6247 = vmul.f32 %v5777, %v6202
        %v6248 = vmul.f32 %v5792, %v6204
        %v6249 = vmul.f32 %v5807, %v6206
        %v6250 = vmul.f32 %v5822, %v6208
        %v6251 = vmul.f32 %v5837, %v6210
        %v6252 = vmul.f32 %v5852, %v6212
        %v6253 = vmul.f32 %v5867, %v6214
        %v6254 = vmul.f32 %v5882, %v6216
        %v6255 = vmul.f32 %v5897, %v6218
        %v6256 = vmul.f32 %v5912, %v6220
        %v6257 = vmul.f32 %v5927, %v6222
        %v6258 = vmul.f32 %v5942, %v6224
        %v6259 = vmul.f32 %v5957, %v6226
        %v6260 = vmul.f32 %v5972, %v6228
        %6277 = vrot.lane.b32.xlu0 %v6245, 64
        %v6278 = vpop.permute.xlu0 %6277
        %6279 = vrot.lane.b32.xlu0 %v6246, 64
        %v6280 = vpop.permute.xlu0 %6279
        %6281 = vrot.lane.b32.xlu0 %v6247, 64
        %v6282 = vpop.permute.xlu0 %6281
        %6283 = vrot.lane.b32.xlu0 %v6248, 64
        %v6284 = vpop.permute.xlu0 %6283
        %6285 = vrot.lane.b32.xlu0 %v6249, 64
        %v6286 = vpop.permute.xlu0 %6285
        %6287 = vrot.lane.b32.xlu0 %v6250, 64
        %v6288 = vpop.permute.xlu0 %6287
        %6289 = vrot.lane.b32.xlu0 %v6251, 64
        %v6290 = vpop.permute.xlu0 %6289
        %6291 = vrot.lane.b32.xlu0 %v6252, 64
        %v6292 = vpop.permute.xlu0 %6291
        %6293 = vrot.lane.b32.xlu0 %v6253, 64
        %v6294 = vpop.permute.xlu0 %6293
        %6295 = vrot.lane.b32.xlu0 %v6254, 64
        %v6296 = vpop.permute.xlu0 %6295
        %6297 = vrot.lane.b32.xlu0 %v6255, 64
        %v6298 = vpop.permute.xlu0 %6297
        %6299 = vrot.lane.b32.xlu0 %v6256, 64
        %v6300 = vpop.permute.xlu0 %6299
        %6301 = vrot.lane.b32.xlu0 %v6257, 64
        %v6302 = vpop.permute.xlu0 %6301
        %6303 = vrot.lane.b32.xlu0 %v6258, 64
        %v6304 = vpop.permute.xlu0 %6303
        %6305 = vrot.lane.b32.xlu0 %v6259, 64
        %v6306 = vpop.permute.xlu0 %6305
        %6307 = vrot.lane.b32.xlu0 %v6260, 64
        %v6308 = vpop.permute.xlu0 %6307
        %v6309 = vsel %vm1034, %v6278, 0
        %v6311 = vsel %vm1034, %v6280, 0
        %v6313 = vsel %vm1034, %v6282, 0
        %v6315 = vsel %vm1034, %v6284, 0
        %v6317 = vsel %vm1034, %v6286, 0
        %v6319 = vsel %vm1034, %v6288, 0
        %v6321 = vsel %vm1034, %v6290, 0
        %v6323 = vsel %vm1034, %v6292, 0
        %v6325 = vsel %vm1034, %v6294, 0
        %v6327 = vsel %vm1034, %v6296, 0
        %v6329 = vsel %vm1034, %v6298, 0
        %v6331 = vsel %vm1034, %v6300, 0
        %v6333 = vsel %vm1034, %v6302, 0
        %v6335 = vsel %vm1034, %v6304, 0
        %v6337 = vsel %vm1034, %v6306, 0
        %v6339 = vsel %vm1034, %v6308, 0
        %6341 = vmatpush.msra.mxu0 0.0
        %6342 = vmatpush.msra.mxu0 0.0
        %6343 = vmatpush.msra.mxu0 0.0
        %6344 = vmatpush.msra.mxu0 0.0
        %6345 = vmatpush.msra.mxu0 0.0
        %6346 = vmatpush.msra.mxu0 0.0
        %6347 = vmatpush.msra.mxu0 0.0
        %6348 = vmatpush.msra.mxu0 0.0
        %6349 = vmatpush.msra.mxu0 0.0
        %6350 = vmatpush.msra.mxu0 0.0
        %6351 = vmatpush.msra.mxu0 0.0
        %6352 = vmatpush.msra.mxu0 0.0
        %6353 = vmatpush.msra.mxu0 %v897
        %6354 = vmatpush.msra.mxu0 %v896
        %6355 = vmatpush.msra.mxu0 %v895
        %6356 = vmatpush.msra.mxu0 %v894
        %6357 = vmatmul.f32.gmra.mxu0 %v6309
        %v6358 = vpop.f32.mrf.mxu0
        %v6359 = vadd.f32 0.0, %v6358
        %6360 = vmatmul.f32.gmra.mxu0 %v6311
        %v6361 = vpop.f32.mrf.mxu0
        %v6362 = vadd.f32 0.0, %v6361
        %6363 = vmatmul.f32.gmra.mxu0 %v6313
        %v6364 = vpop.f32.mrf.mxu0
        %v6365 = vadd.f32 0.0, %v6364
        %6366 = vmatmul.f32.gmra.mxu0 %v6315
        %v6367 = vpop.f32.mrf.mxu0
        %v6368 = vadd.f32 0.0, %v6367
        %6369 = vmatmul.f32.gmra.mxu0 %v6317
        %v6370 = vpop.f32.mrf.mxu0
        %v6371 = vadd.f32 0.0, %v6370
        %6372 = vmatmul.f32.gmra.mxu0 %v6319
        %v6373 = vpop.f32.mrf.mxu0
        %v6374 = vadd.f32 0.0, %v6373
        %6375 = vmatmul.f32.gmra.mxu0 %v6321
        %v6376 = vpop.f32.mrf.mxu0
        %v6377 = vadd.f32 0.0, %v6376
        %6378 = vmatmul.f32.gmra.mxu0 %v6323
        %v6379 = vpop.f32.mrf.mxu0
        %v6380 = vadd.f32 0.0, %v6379
        %6381 = vmatmul.f32.gmra.mxu0 %v6325
        %v6382 = vpop.f32.mrf.mxu0
        %v6383 = vadd.f32 0.0, %v6382
        %6384 = vmatmul.f32.gmra.mxu0 %v6327
        %v6385 = vpop.f32.mrf.mxu0
        %v6386 = vadd.f32 0.0, %v6385
        %6387 = vmatmul.f32.gmra.mxu0 %v6329
        %v6388 = vpop.f32.mrf.mxu0
        %v6389 = vadd.f32 0.0, %v6388
        %6390 = vmatmul.f32.gmra.mxu0 %v6331
        %v6391 = vpop.f32.mrf.mxu0
        %v6392 = vadd.f32 0.0, %v6391
        %6393 = vmatmul.f32.gmra.mxu0 %v6333
        %v6394 = vpop.f32.mrf.mxu0
        %v6395 = vadd.f32 0.0, %v6394
        %6396 = vmatmul.f32.gmra.mxu0 %v6335
        %v6397 = vpop.f32.mrf.mxu0
        %v6398 = vadd.f32 0.0, %v6397
        %6399 = vmatmul.f32.gmra.mxu0 %v6337
        %v6400 = vpop.f32.mrf.mxu0
        %v6401 = vadd.f32 0.0, %v6400
        %6402 = vmatmul.f32.gmra.mxu0 %v6339
        %v6403 = vpop.f32.mrf.mxu0
        %v6404 = vadd.f32 0.0, %v6403
        %6405 = vdwg.mxu0
        %v6406 = vadd.f32 %v1725, %v6359
        %v6407 = vadd.f32 %v1728, %v6362
        %v6408 = vadd.f32 %v1731, %v6365
        %v6409 = vadd.f32 %v1734, %v6368
        %v6410 = vadd.f32 %v1737, %v6371
        %v6411 = vadd.f32 %v1740, %v6374
        %v6412 = vadd.f32 %v1743, %v6377
        %v6413 = vadd.f32 %v1746, %v6380
        %v6414 = vadd.f32 %v1749, %v6383
        %v6415 = vadd.f32 %v1752, %v6386
        %v6416 = vadd.f32 %v1755, %v6389
        %v6417 = vadd.f32 %v1758, %v6392
        %v6418 = vadd.f32 %v1761, %v6395
        %v6419 = vadd.f32 %v1764, %v6398
        %v6420 = vadd.f32 %v1767, %v6401
        %v6421 = vadd.f32 %v1770, %v6404
        %v6422 = vxor.u32 %v6406, 2147483648
        %v6423 = vxor.u32 %v6407, 2147483648
        %v6424 = vxor.u32 %v6408, 2147483648
        %v6425 = vxor.u32 %v6409, 2147483648
        %v6426 = vxor.u32 %v6410, 2147483648
        %v6427 = vxor.u32 %v6411, 2147483648
        %v6428 = vxor.u32 %v6412, 2147483648
        %v6429 = vxor.u32 %v6413, 2147483648
        %v6430 = vxor.u32 %v6414, 2147483648
        %v6431 = vxor.u32 %v6415, 2147483648
        %v6432 = vxor.u32 %v6416, 2147483648
        %v6433 = vxor.u32 %v6417, 2147483648
        %v6434 = vxor.u32 %v6418, 2147483648
        %v6435 = vxor.u32 %v6419, 2147483648
        %v6436 = vxor.u32 %v6420, 2147483648
        %v6437 = vxor.u32 %v6421, 2147483648
        %v6438 = vmul.f32 %v6422, 1.442695
        %v6439 = vpow.pop %v6438
        %v6440 = vmul.f32 %v6423, 1.442695
        %v6441 = vpow.pop %v6440
        %v6442 = vmul.f32 %v6424, 1.442695
        %v6443 = vpow.pop %v6442
        %v6444 = vmul.f32 %v6425, 1.442695
        %v6445 = vpow.pop %v6444
        %v6446 = vmul.f32 %v6426, 1.442695
        %v6447 = vpow.pop %v6446
        %v6448 = vmul.f32 %v6427, 1.442695
        %v6449 = vpow.pop %v6448
        %v6450 = vmul.f32 %v6428, 1.442695
        %v6451 = vpow.pop %v6450
        %v6452 = vmul.f32 %v6429, 1.442695
        %v6453 = vpow.pop %v6452
        %v6454 = vmul.f32 %v6430, 1.442695
        %v6455 = vpow.pop %v6454
        %v6456 = vmul.f32 %v6431, 1.442695
        %v6457 = vpow.pop %v6456
        %v6458 = vmul.f32 %v6432, 1.442695
        %v6459 = vpow.pop %v6458
        %v6460 = vmul.f32 %v6433, 1.442695
        %v6461 = vpow.pop %v6460
        %v6462 = vmul.f32 %v6434, 1.442695
        %v6463 = vpow.pop %v6462
        %v6464 = vmul.f32 %v6435, 1.442695
        %v6465 = vpow.pop %v6464
        %v6466 = vmul.f32 %v6436, 1.442695
        %v6467 = vpow.pop %v6466
        %v6468 = vmul.f32 %v6437, 1.442695
        %v6469 = vpow.pop %v6468
        %v6470 = vadd.f32 %v6439, 1.0
        %v6471 = vadd.f32 %v6441, 1.0
        %v6472 = vadd.f32 %v6443, 1.0
        %v6473 = vadd.f32 %v6445, 1.0
        %v6474 = vadd.f32 %v6447, 1.0
        %v6475 = vadd.f32 %v6449, 1.0
        %v6476 = vadd.f32 %v6451, 1.0
        %v6477 = vadd.f32 %v6453, 1.0
        %v6478 = vadd.f32 %v6455, 1.0
        %v6479 = vadd.f32 %v6457, 1.0
        %v6480 = vadd.f32 %v6459, 1.0
        %v6481 = vadd.f32 %v6461, 1.0
        %v6482 = vadd.f32 %v6463, 1.0
        %v6483 = vadd.f32 %v6465, 1.0
        %v6484 = vadd.f32 %v6467, 1.0
        %v6485 = vadd.f32 %v6469, 1.0
        %v6486 = vrcp.pop %v6470
        %v6487 = vmul.f32 %v6470, %v6486
        %v6488 = vsub.f32 1.0, %v6487
        %v6489 = vmul.f32 %v6486, %v6488
        %v6490 = vadd.f32 %v6486, %v6489
        %vm6491 = vweird.f32 %v6470
        %vm6492 = vweird.f32 %v6486
        %vm6493 = vmor %vm6491, %vm6492
        %v6494 = vsel %vm6493, %v6486, %v6490
        %v6495 = vand.u32 2147483647, %v6470
        %vm6496 = vcmp.eq.f32.partialorder %v6495, 8.507059e+37
        %v6497 = vand.u32 %v6470, 2147483648
        %v6498 = vor.u32 1.1754944e-38, %v6497
        %v6499 = vsel %vm6496, %v6498, %v6494
        %v6500 = vmul.f32 1.0, %v6499
        %v6501 = vrcp.pop %v6471
        %v6502 = vmul.f32 %v6471, %v6501
        %v6503 = vsub.f32 1.0, %v6502
        %v6504 = vmul.f32 %v6501, %v6503
        %v6505 = vadd.f32 %v6501, %v6504
        %vm6506 = vweird.f32 %v6471
        %vm6507 = vweird.f32 %v6501
        %vm6508 = vmor %vm6506, %vm6507
        %v6509 = vsel %vm6508, %v6501, %v6505
        %v6510 = vand.u32 2147483647, %v6471
        %vm6511 = vcmp.eq.f32.partialorder %v6510, 8.507059e+37
        %v6512 = vand.u32 %v6471, 2147483648
        %v6513 = vor.u32 1.1754944e-38, %v6512
        %v6514 = vsel %vm6511, %v6513, %v6509
        %v6515 = vmul.f32 1.0, %v6514
        %v6516 = vrcp.pop %v6472
        %v6517 = vmul.f32 %v6472, %v6516
        %v6518 = vsub.f32 1.0, %v6517
        %v6519 = vmul.f32 %v6516, %v6518
        %v6520 = vadd.f32 %v6516, %v6519
        %vm6521 = vweird.f32 %v6472
        %vm6522 = vweird.f32 %v6516
        %vm6523 = vmor %vm6521, %vm6522
        %v6524 = vsel %vm6523, %v6516, %v6520
        %v6525 = vand.u32 2147483647, %v6472
        %vm6526 = vcmp.eq.f32.partialorder %v6525, 8.507059e+37
        %v6527 = vand.u32 %v6472, 2147483648
        %v6528 = vor.u32 1.1754944e-38, %v6527
        %v6529 = vsel %vm6526, %v6528, %v6524
        %v6530 = vmul.f32 1.0, %v6529
        %v6531 = vrcp.pop %v6473
        %v6532 = vmul.f32 %v6473, %v6531
        %v6533 = vsub.f32 1.0, %v6532
        %v6534 = vmul.f32 %v6531, %v6533
        %v6535 = vadd.f32 %v6531, %v6534
        %vm6536 = vweird.f32 %v6473
        %vm6537 = vweird.f32 %v6531
        %vm6538 = vmor %vm6536, %vm6537
        %v6539 = vsel %vm6538, %v6531, %v6535
        %v6540 = vand.u32 2147483647, %v6473
        %vm6541 = vcmp.eq.f32.partialorder %v6540, 8.507059e+37
        %v6542 = vand.u32 %v6473, 2147483648
        %v6543 = vor.u32 1.1754944e-38, %v6542
        %v6544 = vsel %vm6541, %v6543, %v6539
        %v6545 = vmul.f32 1.0, %v6544
        %v6546 = vrcp.pop %v6474
        %v6547 = vmul.f32 %v6474, %v6546
        %v6548 = vsub.f32 1.0, %v6547
        %v6549 = vmul.f32 %v6546, %v6548
        %v6550 = vadd.f32 %v6546, %v6549
        %vm6551 = vweird.f32 %v6474
        %vm6552 = vweird.f32 %v6546
        %vm6553 = vmor %vm6551, %vm6552
        %v6554 = vsel %vm6553, %v6546, %v6550
        %v6555 = vand.u32 2147483647, %v6474
        %vm6556 = vcmp.eq.f32.partialorder %v6555, 8.507059e+37
        %v6557 = vand.u32 %v6474, 2147483648
        %v6558 = vor.u32 1.1754944e-38, %v6557
        %v6559 = vsel %vm6556, %v6558, %v6554
        %v6560 = vmul.f32 1.0, %v6559
        %v6561 = vrcp.pop %v6475
        %v6562 = vmul.f32 %v6475, %v6561
        %v6563 = vsub.f32 1.0, %v6562
        %v6564 = vmul.f32 %v6561, %v6563
        %v6565 = vadd.f32 %v6561, %v6564
        %vm6566 = vweird.f32 %v6475
        %vm6567 = vweird.f32 %v6561
        %vm6568 = vmor %vm6566, %vm6567
        %v6569 = vsel %vm6568, %v6561, %v6565
        %v6570 = vand.u32 2147483647, %v6475
        %vm6571 = vcmp.eq.f32.partialorder %v6570, 8.507059e+37
        %v6572 = vand.u32 %v6475, 2147483648
        %v6573 = vor.u32 1.1754944e-38, %v6572
        %v6574 = vsel %vm6571, %v6573, %v6569
        %v6575 = vmul.f32 1.0, %v6574
        %v6576 = vrcp.pop %v6476
        %v6577 = vmul.f32 %v6476, %v6576
        %v6578 = vsub.f32 1.0, %v6577
        %v6579 = vmul.f32 %v6576, %v6578
        %v6580 = vadd.f32 %v6576, %v6579
        %vm6581 = vweird.f32 %v6476
        %vm6582 = vweird.f32 %v6576
        %vm6583 = vmor %vm6581, %vm6582
        %v6584 = vsel %vm6583, %v6576, %v6580
        %v6585 = vand.u32 2147483647, %v6476
        %vm6586 = vcmp.eq.f32.partialorder %v6585, 8.507059e+37
        %v6587 = vand.u32 %v6476, 2147483648
        %v6588 = vor.u32 1.1754944e-38, %v6587
        %v6589 = vsel %vm6586, %v6588, %v6584
        %v6590 = vmul.f32 1.0, %v6589
        %v6591 = vrcp.pop %v6477
        %v6592 = vmul.f32 %v6477, %v6591
        %v6593 = vsub.f32 1.0, %v6592
        %v6594 = vmul.f32 %v6591, %v6593
        %v6595 = vadd.f32 %v6591, %v6594
        %vm6596 = vweird.f32 %v6477
        %vm6597 = vweird.f32 %v6591
        %vm6598 = vmor %vm6596, %vm6597
        %v6599 = vsel %vm6598, %v6591, %v6595
        %v6600 = vand.u32 2147483647, %v6477
        %vm6601 = vcmp.eq.f32.partialorder %v6600, 8.507059e+37
        %v6602 = vand.u32 %v6477, 2147483648
        %v6603 = vor.u32 1.1754944e-38, %v6602
        %v6604 = vsel %vm6601, %v6603, %v6599
        %v6605 = vmul.f32 1.0, %v6604
        %v6606 = vrcp.pop %v6478
        %v6607 = vmul.f32 %v6478, %v6606
        %v6608 = vsub.f32 1.0, %v6607
        %v6609 = vmul.f32 %v6606, %v6608
        %v6610 = vadd.f32 %v6606, %v6609
        %vm6611 = vweird.f32 %v6478
        %vm6612 = vweird.f32 %v6606
        %vm6613 = vmor %vm6611, %vm6612
        %v6614 = vsel %vm6613, %v6606, %v6610
        %v6615 = vand.u32 2147483647, %v6478
        %vm6616 = vcmp.eq.f32.partialorder %v6615, 8.507059e+37
        %v6617 = vand.u32 %v6478, 2147483648
        %v6618 = vor.u32 1.1754944e-38, %v6617
        %v6619 = vsel %vm6616, %v6618, %v6614
        %v6620 = vmul.f32 1.0, %v6619
        %v6621 = vrcp.pop %v6479
        %v6622 = vmul.f32 %v6479, %v6621
        %v6623 = vsub.f32 1.0, %v6622
        %v6624 = vmul.f32 %v6621, %v6623
        %v6625 = vadd.f32 %v6621, %v6624
        %vm6626 = vweird.f32 %v6479
        %vm6627 = vweird.f32 %v6621
        %vm6628 = vmor %vm6626, %vm6627
        %v6629 = vsel %vm6628, %v6621, %v6625
        %v6630 = vand.u32 2147483647, %v6479
        %vm6631 = vcmp.eq.f32.partialorder %v6630, 8.507059e+37
        %v6632 = vand.u32 %v6479, 2147483648
        %v6633 = vor.u32 1.1754944e-38, %v6632
        %v6634 = vsel %vm6631, %v6633, %v6629
        %v6635 = vmul.f32 1.0, %v6634
        %v6636 = vrcp.pop %v6480
        %v6637 = vmul.f32 %v6480, %v6636
        %v6638 = vsub.f32 1.0, %v6637
        %v6639 = vmul.f32 %v6636, %v6638
        %v6640 = vadd.f32 %v6636, %v6639
        %vm6641 = vweird.f32 %v6480
        %vm6642 = vweird.f32 %v6636
        %vm6643 = vmor %vm6641, %vm6642
        %v6644 = vsel %vm6643, %v6636, %v6640
        %v6645 = vand.u32 2147483647, %v6480
        %vm6646 = vcmp.eq.f32.partialorder %v6645, 8.507059e+37
        %v6647 = vand.u32 %v6480, 2147483648
        %v6648 = vor.u32 1.1754944e-38, %v6647
        %v6649 = vsel %vm6646, %v6648, %v6644
        %v6650 = vmul.f32 1.0, %v6649
        %v6651 = vrcp.pop %v6481
        %v6652 = vmul.f32 %v6481, %v6651
        %v6653 = vsub.f32 1.0, %v6652
        %v6654 = vmul.f32 %v6651, %v6653
        %v6655 = vadd.f32 %v6651, %v6654
        %vm6656 = vweird.f32 %v6481
        %vm6657 = vweird.f32 %v6651
        %vm6658 = vmor %vm6656, %vm6657
        %v6659 = vsel %vm6658, %v6651, %v6655
        %v6660 = vand.u32 2147483647, %v6481
        %vm6661 = vcmp.eq.f32.partialorder %v6660, 8.507059e+37
        %v6662 = vand.u32 %v6481, 2147483648
        %v6663 = vor.u32 1.1754944e-38, %v6662
        %v6664 = vsel %vm6661, %v6663, %v6659
        %v6665 = vmul.f32 1.0, %v6664
        %v6666 = vrcp.pop %v6482
        %v6667 = vmul.f32 %v6482, %v6666
        %v6668 = vsub.f32 1.0, %v6667
        %v6669 = vmul.f32 %v6666, %v6668
        %v6670 = vadd.f32 %v6666, %v6669
        %vm6671 = vweird.f32 %v6482
        %vm6672 = vweird.f32 %v6666
        %vm6673 = vmor %vm6671, %vm6672
        %v6674 = vsel %vm6673, %v6666, %v6670
        %v6675 = vand.u32 2147483647, %v6482
        %vm6676 = vcmp.eq.f32.partialorder %v6675, 8.507059e+37
        %v6677 = vand.u32 %v6482, 2147483648
        %v6678 = vor.u32 1.1754944e-38, %v6677
        %v6679 = vsel %vm6676, %v6678, %v6674
        %v6680 = vmul.f32 1.0, %v6679
        %v6681 = vrcp.pop %v6483
        %v6682 = vmul.f32 %v6483, %v6681
        %v6683 = vsub.f32 1.0, %v6682
        %v6684 = vmul.f32 %v6681, %v6683
        %v6685 = vadd.f32 %v6681, %v6684
        %vm6686 = vweird.f32 %v6483
        %vm6687 = vweird.f32 %v6681
        %vm6688 = vmor %vm6686, %vm6687
        %v6689 = vsel %vm6688, %v6681, %v6685
        %v6690 = vand.u32 2147483647, %v6483
        %vm6691 = vcmp.eq.f32.partialorder %v6690, 8.507059e+37
        %v6692 = vand.u32 %v6483, 2147483648
        %v6693 = vor.u32 1.1754944e-38, %v6692
        %v6694 = vsel %vm6691, %v6693, %v6689
        %v6695 = vmul.f32 1.0, %v6694
        %v6696 = vrcp.pop %v6484
        %v6697 = vmul.f32 %v6484, %v6696
        %v6698 = vsub.f32 1.0, %v6697
        %v6699 = vmul.f32 %v6696, %v6698
        %v6700 = vadd.f32 %v6696, %v6699
        %vm6701 = vweird.f32 %v6484
        %vm6702 = vweird.f32 %v6696
        %vm6703 = vmor %vm6701, %vm6702
        %v6704 = vsel %vm6703, %v6696, %v6700
        %v6705 = vand.u32 2147483647, %v6484
        %vm6706 = vcmp.eq.f32.partialorder %v6705, 8.507059e+37
        %v6707 = vand.u32 %v6484, 2147483648
        %v6708 = vor.u32 1.1754944e-38, %v6707
        %v6709 = vsel %vm6706, %v6708, %v6704
        %v6710 = vmul.f32 1.0, %v6709
        %v6711 = vrcp.pop %v6485
        %v6712 = vmul.f32 %v6485, %v6711
        %v6713 = vsub.f32 1.0, %v6712
        %v6714 = vmul.f32 %v6711, %v6713
        %v6715 = vadd.f32 %v6711, %v6714
        %vm6716 = vweird.f32 %v6485
        %vm6717 = vweird.f32 %v6711
        %vm6718 = vmor %vm6716, %vm6717
        %v6719 = vsel %vm6718, %v6711, %v6715
        %v6720 = vand.u32 2147483647, %v6485
        %vm6721 = vcmp.eq.f32.partialorder %v6720, 8.507059e+37
        %v6722 = vand.u32 %v6485, 2147483648
        %v6723 = vor.u32 1.1754944e-38, %v6722
        %v6724 = vsel %vm6721, %v6723, %v6719
        %v6725 = vmul.f32 1.0, %v6724
        %v6726 = vtanh.pop %v6406
        %v6727 = vtanh.pop %v6407
        %v6728 = vtanh.pop %v6408
        %v6729 = vtanh.pop %v6409
        %v6730 = vtanh.pop %v6410
        %v6731 = vtanh.pop %v6411
        %v6732 = vtanh.pop %v6412
        %v6733 = vtanh.pop %v6413
        %v6734 = vtanh.pop %v6414
        %v6735 = vtanh.pop %v6415
        %v6736 = vtanh.pop %v6416
        %v6737 = vtanh.pop %v6417
        %v6738 = vtanh.pop %v6418
        %v6739 = vtanh.pop %v6419
        %v6740 = vtanh.pop %v6420
        %v6741 = vtanh.pop %v6421
        %v6742 = vmul.f32 %v6500, %v6149
        %v6743 = vmul.f32 %v6515, %v6150
        %v6744 = vmul.f32 %v6530, %v6151
        %v6745 = vmul.f32 %v6545, %v6152
        %v6746 = vmul.f32 %v6560, %v6153
        %v6747 = vmul.f32 %v6575, %v6154
        %v6748 = vmul.f32 %v6590, %v6155
        %v6749 = vmul.f32 %v6605, %v6156
        %v6750 = vmul.f32 %v6620, %v6157
        %v6751 = vmul.f32 %v6635, %v6158
        %v6752 = vmul.f32 %v6650, %v6159
        %v6753 = vmul.f32 %v6665, %v6160
        %v6754 = vmul.f32 %v6680, %v6161
        %v6755 = vmul.f32 %v6695, %v6162
        %v6756 = vmul.f32 %v6710, %v6163
        %v6757 = vmul.f32 %v6725, %v6164
        %6774 = vrot.lane.b32.xlu0 %v6726, 32
        %v6775 = vpop.permute.xlu0 %6774
        %6776 = vrot.lane.b32.xlu0 %v6727, 32
        %v6777 = vpop.permute.xlu0 %6776
        %6778 = vrot.lane.b32.xlu0 %v6728, 32
        %v6779 = vpop.permute.xlu0 %6778
        %6780 = vrot.lane.b32.xlu0 %v6729, 32
        %v6781 = vpop.permute.xlu0 %6780
        %6782 = vrot.lane.b32.xlu0 %v6730, 32
        %v6783 = vpop.permute.xlu0 %6782
        %6784 = vrot.lane.b32.xlu0 %v6731, 32
        %v6785 = vpop.permute.xlu0 %6784
        %6786 = vrot.lane.b32.xlu0 %v6732, 32
        %v6787 = vpop.permute.xlu0 %6786
        %6788 = vrot.lane.b32.xlu0 %v6733, 32
        %v6789 = vpop.permute.xlu0 %6788
        %6790 = vrot.lane.b32.xlu0 %v6734, 32
        %v6791 = vpop.permute.xlu0 %6790
        %6792 = vrot.lane.b32.xlu0 %v6735, 32
        %v6793 = vpop.permute.xlu0 %6792
        %6794 = vrot.lane.b32.xlu0 %v6736, 32
        %v6795 = vpop.permute.xlu0 %6794
        %6796 = vrot.lane.b32.xlu0 %v6737, 32
        %v6797 = vpop.permute.xlu0 %6796
        %6798 = vrot.lane.b32.xlu0 %v6738, 32
        %v6799 = vpop.permute.xlu0 %6798
        %6800 = vrot.lane.b32.xlu0 %v6739, 32
        %v6801 = vpop.permute.xlu0 %6800
        %6802 = vrot.lane.b32.xlu0 %v6740, 32
        %v6803 = vpop.permute.xlu0 %6802
        %6804 = vrot.lane.b32.xlu0 %v6741, 32
        %v6805 = vpop.permute.xlu0 %6804
        %v6822 = vmul.f32 %v6500, %v6775
        %v6823 = vmul.f32 %v6515, %v6777
        %v6824 = vmul.f32 %v6530, %v6779
        %v6825 = vmul.f32 %v6545, %v6781
        %v6826 = vmul.f32 %v6560, %v6783
        %v6827 = vmul.f32 %v6575, %v6785
        %v6828 = vmul.f32 %v6590, %v6787
        %v6829 = vmul.f32 %v6605, %v6789
        %v6830 = vmul.f32 %v6620, %v6791
        %v6831 = vmul.f32 %v6635, %v6793
        %v6832 = vmul.f32 %v6650, %v6795
        %v6833 = vmul.f32 %v6665, %v6797
        %v6834 = vmul.f32 %v6680, %v6799
        %v6835 = vmul.f32 %v6695, %v6801
        %v6836 = vmul.f32 %v6710, %v6803
        %v6837 = vmul.f32 %v6725, %v6805
        %6854 = vrot.lane.b32.xlu0 %v6822, 32
        %v6855 = vpop.permute.xlu0 %6854
        %6856 = vrot.lane.b32.xlu0 %v6823, 32
        %v6857 = vpop.permute.xlu0 %6856
        %6858 = vrot.lane.b32.xlu0 %v6824, 32
        %v6859 = vpop.permute.xlu0 %6858
        %6860 = vrot.lane.b32.xlu0 %v6825, 32
        %v6861 = vpop.permute.xlu0 %6860
        %6862 = vrot.lane.b32.xlu0 %v6826, 32
        %v6863 = vpop.permute.xlu0 %6862
        %6864 = vrot.lane.b32.xlu0 %v6827, 32
        %v6865 = vpop.permute.xlu0 %6864
        %6866 = vrot.lane.b32.xlu0 %v6828, 32
        %v6867 = vpop.permute.xlu0 %6866
        %6868 = vrot.lane.b32.xlu0 %v6829, 32
        %v6869 = vpop.permute.xlu0 %6868
        %6870 = vrot.lane.b32.xlu0 %v6830, 32
        %v6871 = vpop.permute.xlu0 %6870
        %6872 = vrot.lane.b32.xlu0 %v6831, 32
        %v6873 = vpop.permute.xlu0 %6872
        %6874 = vrot.lane.b32.xlu0 %v6832, 32
        %v6875 = vpop.permute.xlu0 %6874
        %6876 = vrot.lane.b32.xlu0 %v6833, 32
        %v6877 = vpop.permute.xlu0 %6876
        %6878 = vrot.lane.b32.xlu0 %v6834, 32
        %v6879 = vpop.permute.xlu0 %6878
        %6880 = vrot.lane.b32.xlu0 %v6835, 32
        %v6881 = vpop.permute.xlu0 %6880
        %6882 = vrot.lane.b32.xlu0 %v6836, 32
        %v6883 = vpop.permute.xlu0 %6882
        %6884 = vrot.lane.b32.xlu0 %v6837, 32
        %v6885 = vpop.permute.xlu0 %6884
        %v6902 = vadd.f32 %v6742, %v6855
        %v6903 = vadd.f32 %v6743, %v6857
        %v6904 = vadd.f32 %v6744, %v6859
        %v6905 = vadd.f32 %v6745, %v6861
        %v6906 = vadd.f32 %v6746, %v6863
        %v6907 = vadd.f32 %v6747, %v6865
        %v6908 = vadd.f32 %v6748, %v6867
        %v6909 = vadd.f32 %v6749, %v6869
        %v6910 = vadd.f32 %v6750, %v6871
        %v6911 = vadd.f32 %v6751, %v6873
        %v6912 = vadd.f32 %v6752, %v6875
        %v6913 = vadd.f32 %v6753, %v6877
        %v6914 = vadd.f32 %v6754, %v6879
        %v6915 = vadd.f32 %v6755, %v6881
        %v6916 = vadd.f32 %v6756, %v6883
        %v6917 = vadd.f32 %v6757, %v6885
        %v6918 = vtanh.pop %v6902
        %v6919 = vtanh.pop %v6903
        %v6920 = vtanh.pop %v6904
        %v6921 = vtanh.pop %v6905
        %v6922 = vtanh.pop %v6906
        %v6923 = vtanh.pop %v6907
        %v6924 = vtanh.pop %v6908
        %v6925 = vtanh.pop %v6909
        %v6926 = vtanh.pop %v6910
        %v6927 = vtanh.pop %v6911
        %v6928 = vtanh.pop %v6912
        %v6929 = vtanh.pop %v6913
        %v6930 = vtanh.pop %v6914
        %v6931 = vtanh.pop %v6915
        %v6932 = vtanh.pop %v6916
        %v6933 = vtanh.pop %v6917
        %6950 = vrot.lane.b32.xlu0 %v6918, 32
        %v6951 = vpop.permute.xlu0 %6950
        %6952 = vrot.lane.b32.xlu0 %v6919, 32
        %v6953 = vpop.permute.xlu0 %6952
        %6954 = vrot.lane.b32.xlu0 %v6920, 32
        %v6955 = vpop.permute.xlu0 %6954
        %6956 = vrot.lane.b32.xlu0 %v6921, 32
        %v6957 = vpop.permute.xlu0 %6956
        %6958 = vrot.lane.b32.xlu0 %v6922, 32
        %v6959 = vpop.permute.xlu0 %6958
        %6960 = vrot.lane.b32.xlu0 %v6923, 32
        %v6961 = vpop.permute.xlu0 %6960
        %6962 = vrot.lane.b32.xlu0 %v6924, 32
        %v6963 = vpop.permute.xlu0 %6962
        %6964 = vrot.lane.b32.xlu0 %v6925, 32
        %v6965 = vpop.permute.xlu0 %6964
        %6966 = vrot.lane.b32.xlu0 %v6926, 32
        %v6967 = vpop.permute.xlu0 %6966
        %6968 = vrot.lane.b32.xlu0 %v6927, 32
        %v6969 = vpop.permute.xlu0 %6968
        %6970 = vrot.lane.b32.xlu0 %v6928, 32
        %v6971 = vpop.permute.xlu0 %6970
        %6972 = vrot.lane.b32.xlu0 %v6929, 32
        %v6973 = vpop.permute.xlu0 %6972
        %6974 = vrot.lane.b32.xlu0 %v6930, 32
        %v6975 = vpop.permute.xlu0 %6974
        %6976 = vrot.lane.b32.xlu0 %v6931, 32
        %v6977 = vpop.permute.xlu0 %6976
        %6978 = vrot.lane.b32.xlu0 %v6932, 32
        %v6979 = vpop.permute.xlu0 %6978
        %6980 = vrot.lane.b32.xlu0 %v6933, 32
        %v6981 = vpop.permute.xlu0 %6980
        %v6998 = vmul.f32 %v6500, %v6951
        %v6999 = vmul.f32 %v6515, %v6953
        %v7000 = vmul.f32 %v6530, %v6955
        %v7001 = vmul.f32 %v6545, %v6957
        %v7002 = vmul.f32 %v6560, %v6959
        %v7003 = vmul.f32 %v6575, %v6961
        %v7004 = vmul.f32 %v6590, %v6963
        %v7005 = vmul.f32 %v6605, %v6965
        %v7006 = vmul.f32 %v6620, %v6967
        %v7007 = vmul.f32 %v6635, %v6969
        %v7008 = vmul.f32 %v6650, %v6971
        %v7009 = vmul.f32 %v6665, %v6973
        %v7010 = vmul.f32 %v6680, %v6975
        %v7011 = vmul.f32 %v6695, %v6977
        %v7012 = vmul.f32 %v6710, %v6979
        %v7013 = vmul.f32 %v6725, %v6981
        %7030 = vrot.lane.b32.xlu0 %v6998, 64
        %v7031 = vpop.permute.xlu0 %7030
        %7032 = vrot.lane.b32.xlu0 %v6999, 64
        %v7033 = vpop.permute.xlu0 %7032
        %7034 = vrot.lane.b32.xlu0 %v7000, 64
        %v7035 = vpop.permute.xlu0 %7034
        %7036 = vrot.lane.b32.xlu0 %v7001, 64
        %v7037 = vpop.permute.xlu0 %7036
        %7038 = vrot.lane.b32.xlu0 %v7002, 64
        %v7039 = vpop.permute.xlu0 %7038
        %7040 = vrot.lane.b32.xlu0 %v7003, 64
        %v7041 = vpop.permute.xlu0 %7040
        %7042 = vrot.lane.b32.xlu0 %v7004, 64
        %v7043 = vpop.permute.xlu0 %7042
        %7044 = vrot.lane.b32.xlu0 %v7005, 64
        %v7045 = vpop.permute.xlu0 %7044
        %7046 = vrot.lane.b32.xlu0 %v7006, 64
        %v7047 = vpop.permute.xlu0 %7046
        %7048 = vrot.lane.b32.xlu0 %v7007, 64
        %v7049 = vpop.permute.xlu0 %7048
        %7050 = vrot.lane.b32.xlu0 %v7008, 64
        %v7051 = vpop.permute.xlu0 %7050
        %7052 = vrot.lane.b32.xlu0 %v7009, 64
        %v7053 = vpop.permute.xlu0 %7052
        %7054 = vrot.lane.b32.xlu0 %v7010, 64
        %v7055 = vpop.permute.xlu0 %7054
        %7056 = vrot.lane.b32.xlu0 %v7011, 64
        %v7057 = vpop.permute.xlu0 %7056
        %7058 = vrot.lane.b32.xlu0 %v7012, 64
        %v7059 = vpop.permute.xlu0 %7058
        %7060 = vrot.lane.b32.xlu0 %v7013, 64
        %v7061 = vpop.permute.xlu0 %7060
        %v7062 = vsel %vm1034, %v7031, 0
        %v7064 = vsel %vm1034, %v7033, 0
        %v7066 = vsel %vm1034, %v7035, 0
        %v7068 = vsel %vm1034, %v7037, 0
        %v7070 = vsel %vm1034, %v7039, 0
        %v7072 = vsel %vm1034, %v7041, 0
        %v7074 = vsel %vm1034, %v7043, 0
        %v7076 = vsel %vm1034, %v7045, 0
        %v7078 = vsel %vm1034, %v7047, 0
        %v7080 = vsel %vm1034, %v7049, 0
        %v7082 = vsel %vm1034, %v7051, 0
        %v7084 = vsel %vm1034, %v7053, 0
        %v7086 = vsel %vm1034, %v7055, 0
        %v7088 = vsel %vm1034, %v7057, 0
        %v7090 = vsel %vm1034, %v7059, 0
        %v7092 = vsel %vm1034, %v7061, 0
        %7094 = vmatpush.msra.mxu0 0.0
        %7095 = vmatpush.msra.mxu0 0.0
        %7096 = vmatpush.msra.mxu0 0.0
        %7097 = vmatpush.msra.mxu0 0.0
        %7098 = vmatpush.msra.mxu0 0.0
        %7099 = vmatpush.msra.mxu0 0.0
        %7100 = vmatpush.msra.mxu0 0.0
        %7101 = vmatpush.msra.mxu0 0.0
        %7102 = vmatpush.msra.mxu0 0.0
        %7103 = vmatpush.msra.mxu0 0.0
        %7104 = vmatpush.msra.mxu0 0.0
        %7105 = vmatpush.msra.mxu0 0.0
        %7106 = vmatpush.msra.mxu0 %v897
        %7107 = vmatpush.msra.mxu0 %v896
        %7108 = vmatpush.msra.mxu0 %v895
        %7109 = vmatpush.msra.mxu0 %v894
        %7110 = vmatmul.f32.gmra.mxu0 %v7062
        %v7111 = vpop.f32.mrf.mxu0
        %v7112 = vadd.f32 0.0, %v7111
        %7113 = vmatmul.f32.gmra.mxu0 %v7064
        %v7114 = vpop.f32.mrf.mxu0
        %v7115 = vadd.f32 0.0, %v7114
        %7116 = vmatmul.f32.gmra.mxu0 %v7066
        %v7117 = vpop.f32.mrf.mxu0
        %v7118 = vadd.f32 0.0, %v7117
        %7119 = vmatmul.f32.gmra.mxu0 %v7068
        %v7120 = vpop.f32.mrf.mxu0
        %v7121 = vadd.f32 0.0, %v7120
        %7122 = vmatmul.f32.gmra.mxu0 %v7070
        %v7123 = vpop.f32.mrf.mxu0
        %v7124 = vadd.f32 0.0, %v7123
        %7125 = vmatmul.f32.gmra.mxu0 %v7072
        %v7126 = vpop.f32.mrf.mxu0
        %v7127 = vadd.f32 0.0, %v7126
        %7128 = vmatmul.f32.gmra.mxu0 %v7074
        %v7129 = vpop.f32.mrf.mxu0
        %v7130 = vadd.f32 0.0, %v7129
        %7131 = vmatmul.f32.gmra.mxu0 %v7076
        %v7132 = vpop.f32.mrf.mxu0
        %v7133 = vadd.f32 0.0, %v7132
        %7134 = vmatmul.f32.gmra.mxu0 %v7078
        %v7135 = vpop.f32.mrf.mxu0
        %v7136 = vadd.f32 0.0, %v7135
        %7137 = vmatmul.f32.gmra.mxu0 %v7080
        %v7138 = vpop.f32.mrf.mxu0
        %v7139 = vadd.f32 0.0, %v7138
        %7140 = vmatmul.f32.gmra.mxu0 %v7082
        %v7141 = vpop.f32.mrf.mxu0
        %v7142 = vadd.f32 0.0, %v7141
        %7143 = vmatmul.f32.gmra.mxu0 %v7084
        %v7144 = vpop.f32.mrf.mxu0
        %v7145 = vadd.f32 0.0, %v7144
        %7146 = vmatmul.f32.gmra.mxu0 %v7086
        %v7147 = vpop.f32.mrf.mxu0
        %v7148 = vadd.f32 0.0, %v7147
        %7149 = vmatmul.f32.gmra.mxu0 %v7088
        %v7150 = vpop.f32.mrf.mxu0
        %v7151 = vadd.f32 0.0, %v7150
        %7152 = vmatmul.f32.gmra.mxu0 %v7090
        %v7153 = vpop.f32.mrf.mxu0
        %v7154 = vadd.f32 0.0, %v7153
        %7155 = vmatmul.f32.gmra.mxu0 %v7092
        %v7156 = vpop.f32.mrf.mxu0
        %v7157 = vadd.f32 0.0, %v7156
        %7158 = vdwg.mxu0
        %v7159 = vadd.f32 %v1773, %v7112
        %v7160 = vadd.f32 %v1776, %v7115
        %v7161 = vadd.f32 %v1779, %v7118
        %v7162 = vadd.f32 %v1782, %v7121
        %v7163 = vadd.f32 %v1785, %v7124
        %v7164 = vadd.f32 %v1788, %v7127
        %v7165 = vadd.f32 %v1791, %v7130
        %v7166 = vadd.f32 %v1794, %v7133
        %v7167 = vadd.f32 %v1797, %v7136
        %v7168 = vadd.f32 %v1800, %v7139
        %v7169 = vadd.f32 %v1803, %v7142
        %v7170 = vadd.f32 %v1806, %v7145
        %v7171 = vadd.f32 %v1809, %v7148
        %v7172 = vadd.f32 %v1812, %v7151
        %v7173 = vadd.f32 %v1815, %v7154
        %v7174 = vadd.f32 %v1818, %v7157
        %v7175 = vxor.u32 %v7159, 2147483648
        %v7176 = vxor.u32 %v7160, 2147483648
        %v7177 = vxor.u32 %v7161, 2147483648
        %v7178 = vxor.u32 %v7162, 2147483648
        %v7179 = vxor.u32 %v7163, 2147483648
        %v7180 = vxor.u32 %v7164, 2147483648
        %v7181 = vxor.u32 %v7165, 2147483648
        %v7182 = vxor.u32 %v7166, 2147483648
        %v7183 = vxor.u32 %v7167, 2147483648
        %v7184 = vxor.u32 %v7168, 2147483648
        %v7185 = vxor.u32 %v7169, 2147483648
        %v7186 = vxor.u32 %v7170, 2147483648
        %v7187 = vxor.u32 %v7171, 2147483648
        %v7188 = vxor.u32 %v7172, 2147483648
        %v7189 = vxor.u32 %v7173, 2147483648
        %v7190 = vxor.u32 %v7174, 2147483648
        %v7191 = vmul.f32 %v7175, 1.442695
        %v7192 = vpow.pop %v7191
        %v7193 = vmul.f32 %v7176, 1.442695
        %v7194 = vpow.pop %v7193
        %v7195 = vmul.f32 %v7177, 1.442695
        %v7196 = vpow.pop %v7195
        %v7197 = vmul.f32 %v7178, 1.442695
        %v7198 = vpow.pop %v7197
        %v7199 = vmul.f32 %v7179, 1.442695
        %v7200 = vpow.pop %v7199
        %v7201 = vmul.f32 %v7180, 1.442695
        %v7202 = vpow.pop %v7201
        %v7203 = vmul.f32 %v7181, 1.442695
        %v7204 = vpow.pop %v7203
        %v7205 = vmul.f32 %v7182, 1.442695
        %v7206 = vpow.pop %v7205
        %v7207 = vmul.f32 %v7183, 1.442695
        %v7208 = vpow.pop %v7207
        %v7209 = vmul.f32 %v7184, 1.442695
        %v7210 = vpow.pop %v7209
        %v7211 = vmul.f32 %v7185, 1.442695
        %v7212 = vpow.pop %v7211
        %v7213 = vmul.f32 %v7186, 1.442695
        %v7214 = vpow.pop %v7213
        %v7215 = vmul.f32 %v7187, 1.442695
        %v7216 = vpow.pop %v7215
        %v7217 = vmul.f32 %v7188, 1.442695
        %v7218 = vpow.pop %v7217
        %v7219 = vmul.f32 %v7189, 1.442695
        %v7220 = vpow.pop %v7219
        %v7221 = vmul.f32 %v7190, 1.442695
        %v7222 = vpow.pop %v7221
        %v7223 = vadd.f32 %v7192, 1.0
        %v7224 = vadd.f32 %v7194, 1.0
        %v7225 = vadd.f32 %v7196, 1.0
        %v7226 = vadd.f32 %v7198, 1.0
        %v7227 = vadd.f32 %v7200, 1.0
        %v7228 = vadd.f32 %v7202, 1.0
        %v7229 = vadd.f32 %v7204, 1.0
        %v7230 = vadd.f32 %v7206, 1.0
        %v7231 = vadd.f32 %v7208, 1.0
        %v7232 = vadd.f32 %v7210, 1.0
        %v7233 = vadd.f32 %v7212, 1.0
        %v7234 = vadd.f32 %v7214, 1.0
        %v7235 = vadd.f32 %v7216, 1.0
        %v7236 = vadd.f32 %v7218, 1.0
        %v7237 = vadd.f32 %v7220, 1.0
        %v7238 = vadd.f32 %v7222, 1.0
        %v7239 = vrcp.pop %v7223
        %v7240 = vmul.f32 %v7223, %v7239
        %v7241 = vsub.f32 1.0, %v7240
        %v7242 = vmul.f32 %v7239, %v7241
        %v7243 = vadd.f32 %v7239, %v7242
        %vm7244 = vweird.f32 %v7223
        %vm7245 = vweird.f32 %v7239
        %vm7246 = vmor %vm7244, %vm7245
        %v7247 = vsel %vm7246, %v7239, %v7243
        %v7248 = vand.u32 2147483647, %v7223
        %vm7249 = vcmp.eq.f32.partialorder %v7248, 8.507059e+37
        %v7250 = vand.u32 %v7223, 2147483648
        %v7251 = vor.u32 1.1754944e-38, %v7250
        %v7252 = vsel %vm7249, %v7251, %v7247
        %v7253 = vmul.f32 1.0, %v7252
        %v7254 = vrcp.pop %v7224
        %v7255 = vmul.f32 %v7224, %v7254
        %v7256 = vsub.f32 1.0, %v7255
        %v7257 = vmul.f32 %v7254, %v7256
        %v7258 = vadd.f32 %v7254, %v7257
        %vm7259 = vweird.f32 %v7224
        %vm7260 = vweird.f32 %v7254
        %vm7261 = vmor %vm7259, %vm7260
        %v7262 = vsel %vm7261, %v7254, %v7258
        %v7263 = vand.u32 2147483647, %v7224
        %vm7264 = vcmp.eq.f32.partialorder %v7263, 8.507059e+37
        %v7265 = vand.u32 %v7224, 2147483648
        %v7266 = vor.u32 1.1754944e-38, %v7265
        %v7267 = vsel %vm7264, %v7266, %v7262
        %v7268 = vmul.f32 1.0, %v7267
        %v7269 = vrcp.pop %v7225
        %v7270 = vmul.f32 %v7225, %v7269
        %v7271 = vsub.f32 1.0, %v7270
        %v7272 = vmul.f32 %v7269, %v7271
        %v7273 = vadd.f32 %v7269, %v7272
        %vm7274 = vweird.f32 %v7225
        %vm7275 = vweird.f32 %v7269
        %vm7276 = vmor %vm7274, %vm7275
        %v7277 = vsel %vm7276, %v7269, %v7273
        %v7278 = vand.u32 2147483647, %v7225
        %vm7279 = vcmp.eq.f32.partialorder %v7278, 8.507059e+37
        %v7280 = vand.u32 %v7225, 2147483648
        %v7281 = vor.u32 1.1754944e-38, %v7280
        %v7282 = vsel %vm7279, %v7281, %v7277
        %v7283 = vmul.f32 1.0, %v7282
        %v7284 = vrcp.pop %v7226
        %v7285 = vmul.f32 %v7226, %v7284
        %v7286 = vsub.f32 1.0, %v7285
        %v7287 = vmul.f32 %v7284, %v7286
        %v7288 = vadd.f32 %v7284, %v7287
        %vm7289 = vweird.f32 %v7226
        %vm7290 = vweird.f32 %v7284
        %vm7291 = vmor %vm7289, %vm7290
        %v7292 = vsel %vm7291, %v7284, %v7288
        %v7293 = vand.u32 2147483647, %v7226
        %vm7294 = vcmp.eq.f32.partialorder %v7293, 8.507059e+37
        %v7295 = vand.u32 %v7226, 2147483648
        %v7296 = vor.u32 1.1754944e-38, %v7295
        %v7297 = vsel %vm7294, %v7296, %v7292
        %v7298 = vmul.f32 1.0, %v7297
        %v7299 = vrcp.pop %v7227
        %v7300 = vmul.f32 %v7227, %v7299
        %v7301 = vsub.f32 1.0, %v7300
        %v7302 = vmul.f32 %v7299, %v7301
        %v7303 = vadd.f32 %v7299, %v7302
        %vm7304 = vweird.f32 %v7227
        %vm7305 = vweird.f32 %v7299
        %vm7306 = vmor %vm7304, %vm7305
        %v7307 = vsel %vm7306, %v7299, %v7303
        %v7308 = vand.u32 2147483647, %v7227
        %vm7309 = vcmp.eq.f32.partialorder %v7308, 8.507059e+37
        %v7310 = vand.u32 %v7227, 2147483648
        %v7311 = vor.u32 1.1754944e-38, %v7310
        %v7312 = vsel %vm7309, %v7311, %v7307
        %v7313 = vmul.f32 1.0, %v7312
        %v7314 = vrcp.pop %v7228
        %v7315 = vmul.f32 %v7228, %v7314
        %v7316 = vsub.f32 1.0, %v7315
        %v7317 = vmul.f32 %v7314, %v7316
        %v7318 = vadd.f32 %v7314, %v7317
        %vm7319 = vweird.f32 %v7228
        %vm7320 = vweird.f32 %v7314
        %vm7321 = vmor %vm7319, %vm7320
        %v7322 = vsel %vm7321, %v7314, %v7318
        %v7323 = vand.u32 2147483647, %v7228
        %vm7324 = vcmp.eq.f32.partialorder %v7323, 8.507059e+37
        %v7325 = vand.u32 %v7228, 2147483648
        %v7326 = vor.u32 1.1754944e-38, %v7325
        %v7327 = vsel %vm7324, %v7326, %v7322
        %v7328 = vmul.f32 1.0, %v7327
        %v7329 = vrcp.pop %v7229
        %v7330 = vmul.f32 %v7229, %v7329
        %v7331 = vsub.f32 1.0, %v7330
        %v7332 = vmul.f32 %v7329, %v7331
        %v7333 = vadd.f32 %v7329, %v7332
        %vm7334 = vweird.f32 %v7229
        %vm7335 = vweird.f32 %v7329
        %vm7336 = vmor %vm7334, %vm7335
        %v7337 = vsel %vm7336, %v7329, %v7333
        %v7338 = vand.u32 2147483647, %v7229
        %vm7339 = vcmp.eq.f32.partialorder %v7338, 8.507059e+37
        %v7340 = vand.u32 %v7229, 2147483648
        %v7341 = vor.u32 1.1754944e-38, %v7340
        %v7342 = vsel %vm7339, %v7341, %v7337
        %v7343 = vmul.f32 1.0, %v7342
        %v7344 = vrcp.pop %v7230
        %v7345 = vmul.f32 %v7230, %v7344
        %v7346 = vsub.f32 1.0, %v7345
        %v7347 = vmul.f32 %v7344, %v7346
        %v7348 = vadd.f32 %v7344, %v7347
        %vm7349 = vweird.f32 %v7230
        %vm7350 = vweird.f32 %v7344
        %vm7351 = vmor %vm7349, %vm7350
        %v7352 = vsel %vm7351, %v7344, %v7348
        %v7353 = vand.u32 2147483647, %v7230
        %vm7354 = vcmp.eq.f32.partialorder %v7353, 8.507059e+37
        %v7355 = vand.u32 %v7230, 2147483648
        %v7356 = vor.u32 1.1754944e-38, %v7355
        %v7357 = vsel %vm7354, %v7356, %v7352
        %v7358 = vmul.f32 1.0, %v7357
        %v7359 = vrcp.pop %v7231
        %v7360 = vmul.f32 %v7231, %v7359
        %v7361 = vsub.f32 1.0, %v7360
        %v7362 = vmul.f32 %v7359, %v7361
        %v7363 = vadd.f32 %v7359, %v7362
        %vm7364 = vweird.f32 %v7231
        %vm7365 = vweird.f32 %v7359
        %vm7366 = vmor %vm7364, %vm7365
        %v7367 = vsel %vm7366, %v7359, %v7363
        %v7368 = vand.u32 2147483647, %v7231
        %vm7369 = vcmp.eq.f32.partialorder %v7368, 8.507059e+37
        %v7370 = vand.u32 %v7231, 2147483648
        %v7371 = vor.u32 1.1754944e-38, %v7370
        %v7372 = vsel %vm7369, %v7371, %v7367
        %v7373 = vmul.f32 1.0, %v7372
        %v7374 = vrcp.pop %v7232
        %v7375 = vmul.f32 %v7232, %v7374
        %v7376 = vsub.f32 1.0, %v7375
        %v7377 = vmul.f32 %v7374, %v7376
        %v7378 = vadd.f32 %v7374, %v7377
        %vm7379 = vweird.f32 %v7232
        %vm7380 = vweird.f32 %v7374
        %vm7381 = vmor %vm7379, %vm7380
        %v7382 = vsel %vm7381, %v7374, %v7378
        %v7383 = vand.u32 2147483647, %v7232
        %vm7384 = vcmp.eq.f32.partialorder %v7383, 8.507059e+37
        %v7385 = vand.u32 %v7232, 2147483648
        %v7386 = vor.u32 1.1754944e-38, %v7385
        %v7387 = vsel %vm7384, %v7386, %v7382
        %v7388 = vmul.f32 1.0, %v7387
        %v7389 = vrcp.pop %v7233
        %v7390 = vmul.f32 %v7233, %v7389
        %v7391 = vsub.f32 1.0, %v7390
        %v7392 = vmul.f32 %v7389, %v7391
        %v7393 = vadd.f32 %v7389, %v7392
        %vm7394 = vweird.f32 %v7233
        %vm7395 = vweird.f32 %v7389
        %vm7396 = vmor %vm7394, %vm7395
        %v7397 = vsel %vm7396, %v7389, %v7393
        %v7398 = vand.u32 2147483647, %v7233
        %vm7399 = vcmp.eq.f32.partialorder %v7398, 8.507059e+37
        %v7400 = vand.u32 %v7233, 2147483648
        %v7401 = vor.u32 1.1754944e-38, %v7400
        %v7402 = vsel %vm7399, %v7401, %v7397
        %v7403 = vmul.f32 1.0, %v7402
        %v7404 = vrcp.pop %v7234
        %v7405 = vmul.f32 %v7234, %v7404
        %v7406 = vsub.f32 1.0, %v7405
        %v7407 = vmul.f32 %v7404, %v7406
        %v7408 = vadd.f32 %v7404, %v7407
        %vm7409 = vweird.f32 %v7234
        %vm7410 = vweird.f32 %v7404
        %vm7411 = vmor %vm7409, %vm7410
        %v7412 = vsel %vm7411, %v7404, %v7408
        %v7413 = vand.u32 2147483647, %v7234
        %vm7414 = vcmp.eq.f32.partialorder %v7413, 8.507059e+37
        %v7415 = vand.u32 %v7234, 2147483648
        %v7416 = vor.u32 1.1754944e-38, %v7415
        %v7417 = vsel %vm7414, %v7416, %v7412
        %v7418 = vmul.f32 1.0, %v7417
        %v7419 = vrcp.pop %v7235
        %v7420 = vmul.f32 %v7235, %v7419
        %v7421 = vsub.f32 1.0, %v7420
        %v7422 = vmul.f32 %v7419, %v7421
        %v7423 = vadd.f32 %v7419, %v7422
        %vm7424 = vweird.f32 %v7235
        %vm7425 = vweird.f32 %v7419
        %vm7426 = vmor %vm7424, %vm7425
        %v7427 = vsel %vm7426, %v7419, %v7423
        %v7428 = vand.u32 2147483647, %v7235
        %vm7429 = vcmp.eq.f32.partialorder %v7428, 8.507059e+37
        %v7430 = vand.u32 %v7235, 2147483648
        %v7431 = vor.u32 1.1754944e-38, %v7430
        %v7432 = vsel %vm7429, %v7431, %v7427
        %v7433 = vmul.f32 1.0, %v7432
        %v7434 = vrcp.pop %v7236
        %v7435 = vmul.f32 %v7236, %v7434
        %v7436 = vsub.f32 1.0, %v7435
        %v7437 = vmul.f32 %v7434, %v7436
        %v7438 = vadd.f32 %v7434, %v7437
        %vm7439 = vweird.f32 %v7236
        %vm7440 = vweird.f32 %v7434
        %vm7441 = vmor %vm7439, %vm7440
        %v7442 = vsel %vm7441, %v7434, %v7438
        %v7443 = vand.u32 2147483647, %v7236
        %vm7444 = vcmp.eq.f32.partialorder %v7443, 8.507059e+37
        %v7445 = vand.u32 %v7236, 2147483648
        %v7446 = vor.u32 1.1754944e-38, %v7445
        %v7447 = vsel %vm7444, %v7446, %v7442
        %v7448 = vmul.f32 1.0, %v7447
        %v7449 = vrcp.pop %v7237
        %v7450 = vmul.f32 %v7237, %v7449
        %v7451 = vsub.f32 1.0, %v7450
        %v7452 = vmul.f32 %v7449, %v7451
        %v7453 = vadd.f32 %v7449, %v7452
        %vm7454 = vweird.f32 %v7237
        %vm7455 = vweird.f32 %v7449
        %vm7456 = vmor %vm7454, %vm7455
        %v7457 = vsel %vm7456, %v7449, %v7453
        %v7458 = vand.u32 2147483647, %v7237
        %vm7459 = vcmp.eq.f32.partialorder %v7458, 8.507059e+37
        %v7460 = vand.u32 %v7237, 2147483648
        %v7461 = vor.u32 1.1754944e-38, %v7460
        %v7462 = vsel %vm7459, %v7461, %v7457
        %v7463 = vmul.f32 1.0, %v7462
        %v7464 = vrcp.pop %v7238
        %v7465 = vmul.f32 %v7238, %v7464
        %v7466 = vsub.f32 1.0, %v7465
        %v7467 = vmul.f32 %v7464, %v7466
        %v7468 = vadd.f32 %v7464, %v7467
        %vm7469 = vweird.f32 %v7238
        %vm7470 = vweird.f32 %v7464
        %vm7471 = vmor %vm7469, %vm7470
        %v7472 = vsel %vm7471, %v7464, %v7468
        %v7473 = vand.u32 2147483647, %v7238
        %vm7474 = vcmp.eq.f32.partialorder %v7473, 8.507059e+37
        %v7475 = vand.u32 %v7238, 2147483648
        %v7476 = vor.u32 1.1754944e-38, %v7475
        %v7477 = vsel %vm7474, %v7476, %v7472
        %v7478 = vmul.f32 1.0, %v7477
        %v7479 = vtanh.pop %v7159
        %v7480 = vtanh.pop %v7160
        %v7481 = vtanh.pop %v7161
        %v7482 = vtanh.pop %v7162
        %v7483 = vtanh.pop %v7163
        %v7484 = vtanh.pop %v7164
        %v7485 = vtanh.pop %v7165
        %v7486 = vtanh.pop %v7166
        %v7487 = vtanh.pop %v7167
        %v7488 = vtanh.pop %v7168
        %v7489 = vtanh.pop %v7169
        %v7490 = vtanh.pop %v7170
        %v7491 = vtanh.pop %v7171
        %v7492 = vtanh.pop %v7172
        %v7493 = vtanh.pop %v7173
        %v7494 = vtanh.pop %v7174
        %v7495 = vmul.f32 %v7253, %v6902
        %v7496 = vmul.f32 %v7268, %v6903
        %v7497 = vmul.f32 %v7283, %v6904
        %v7498 = vmul.f32 %v7298, %v6905
        %v7499 = vmul.f32 %v7313, %v6906
        %v7500 = vmul.f32 %v7328, %v6907
        %v7501 = vmul.f32 %v7343, %v6908
        %v7502 = vmul.f32 %v7358, %v6909
        %v7503 = vmul.f32 %v7373, %v6910
        %v7504 = vmul.f32 %v7388, %v6911
        %v7505 = vmul.f32 %v7403, %v6912
        %v7506 = vmul.f32 %v7418, %v6913
        %v7507 = vmul.f32 %v7433, %v6914
        %v7508 = vmul.f32 %v7448, %v6915
        %v7509 = vmul.f32 %v7463, %v6916
        %v7510 = vmul.f32 %v7478, %v6917
        %7527 = vrot.lane.b32.xlu0 %v7479, 32
        %v7528 = vpop.permute.xlu0 %7527
        %7529 = vrot.lane.b32.xlu0 %v7480, 32
        %v7530 = vpop.permute.xlu0 %7529
        %7531 = vrot.lane.b32.xlu0 %v7481, 32
        %v7532 = vpop.permute.xlu0 %7531
        %7533 = vrot.lane.b32.xlu0 %v7482, 32
        %v7534 = vpop.permute.xlu0 %7533
        %7535 = vrot.lane.b32.xlu0 %v7483, 32
        %v7536 = vpop.permute.xlu0 %7535
        %7537 = vrot.lane.b32.xlu0 %v7484, 32
        %v7538 = vpop.permute.xlu0 %7537
        %7539 = vrot.lane.b32.xlu0 %v7485, 32
        %v7540 = vpop.permute.xlu0 %7539
        %7541 = vrot.lane.b32.xlu0 %v7486, 32
        %v7542 = vpop.permute.xlu0 %7541
        %7543 = vrot.lane.b32.xlu0 %v7487, 32
        %v7544 = vpop.permute.xlu0 %7543
        %7545 = vrot.lane.b32.xlu0 %v7488, 32
        %v7546 = vpop.permute.xlu0 %7545
        %7547 = vrot.lane.b32.xlu0 %v7489, 32
        %v7548 = vpop.permute.xlu0 %7547
        %7549 = vrot.lane.b32.xlu0 %v7490, 32
        %v7550 = vpop.permute.xlu0 %7549
        %7551 = vrot.lane.b32.xlu0 %v7491, 32
        %v7552 = vpop.permute.xlu0 %7551
        %7553 = vrot.lane.b32.xlu0 %v7492, 32
        %v7554 = vpop.permute.xlu0 %7553
        %7555 = vrot.lane.b32.xlu0 %v7493, 32
        %v7556 = vpop.permute.xlu0 %7555
        %7557 = vrot.lane.b32.xlu0 %v7494, 32
        %v7558 = vpop.permute.xlu0 %7557
        %v7575 = vmul.f32 %v7253, %v7528
        %v7576 = vmul.f32 %v7268, %v7530
        %v7577 = vmul.f32 %v7283, %v7532
        %v7578 = vmul.f32 %v7298, %v7534
        %v7579 = vmul.f32 %v7313, %v7536
        %v7580 = vmul.f32 %v7328, %v7538
        %v7581 = vmul.f32 %v7343, %v7540
        %v7582 = vmul.f32 %v7358, %v7542
        %v7583 = vmul.f32 %v7373, %v7544
        %v7584 = vmul.f32 %v7388, %v7546
        %v7585 = vmul.f32 %v7403, %v7548
        %v7586 = vmul.f32 %v7418, %v7550
        %v7587 = vmul.f32 %v7433, %v7552
        %v7588 = vmul.f32 %v7448, %v7554
        %v7589 = vmul.f32 %v7463, %v7556
        %v7590 = vmul.f32 %v7478, %v7558
        %7607 = vrot.lane.b32.xlu0 %v7575, 32
        %v7608 = vpop.permute.xlu0 %7607
        %7609 = vrot.lane.b32.xlu0 %v7576, 32
        %v7610 = vpop.permute.xlu0 %7609
        %7611 = vrot.lane.b32.xlu0 %v7577, 32
        %v7612 = vpop.permute.xlu0 %7611
        %7613 = vrot.lane.b32.xlu0 %v7578, 32
        %v7614 = vpop.permute.xlu0 %7613
        %7615 = vrot.lane.b32.xlu0 %v7579, 32
        %v7616 = vpop.permute.xlu0 %7615
        %7617 = vrot.lane.b32.xlu0 %v7580, 32
        %v7618 = vpop.permute.xlu0 %7617
        %7619 = vrot.lane.b32.xlu0 %v7581, 32
        %v7620 = vpop.permute.xlu0 %7619
        %7621 = vrot.lane.b32.xlu0 %v7582, 32
        %v7622 = vpop.permute.xlu0 %7621
        %7623 = vrot.lane.b32.xlu0 %v7583, 32
        %v7624 = vpop.permute.xlu0 %7623
        %7625 = vrot.lane.b32.xlu0 %v7584, 32
        %v7626 = vpop.permute.xlu0 %7625
        %7627 = vrot.lane.b32.xlu0 %v7585, 32
        %v7628 = vpop.permute.xlu0 %7627
        %7629 = vrot.lane.b32.xlu0 %v7586, 32
        %v7630 = vpop.permute.xlu0 %7629
        %7631 = vrot.lane.b32.xlu0 %v7587, 32
        %v7632 = vpop.permute.xlu0 %7631
        %7633 = vrot.lane.b32.xlu0 %v7588, 32
        %v7634 = vpop.permute.xlu0 %7633
        %7635 = vrot.lane.b32.xlu0 %v7589, 32
        %v7636 = vpop.permute.xlu0 %7635
        %7637 = vrot.lane.b32.xlu0 %v7590, 32
        %v7638 = vpop.permute.xlu0 %7637
        %v7655 = vadd.f32 %v7495, %v7608
        %v7656 = vadd.f32 %v7496, %v7610
        %v7657 = vadd.f32 %v7497, %v7612
        %v7658 = vadd.f32 %v7498, %v7614
        %v7659 = vadd.f32 %v7499, %v7616
        %v7660 = vadd.f32 %v7500, %v7618
        %v7661 = vadd.f32 %v7501, %v7620
        %v7662 = vadd.f32 %v7502, %v7622
        %v7663 = vadd.f32 %v7503, %v7624
        %v7664 = vadd.f32 %v7504, %v7626
        %v7665 = vadd.f32 %v7505, %v7628
        %v7666 = vadd.f32 %v7506, %v7630
        %v7667 = vadd.f32 %v7507, %v7632
        %v7668 = vadd.f32 %v7508, %v7634
        %v7669 = vadd.f32 %v7509, %v7636
        %v7670 = vadd.f32 %v7510, %v7638
        %v7671 = vtanh.pop %v7655
        %v7672 = vtanh.pop %v7656
        %v7673 = vtanh.pop %v7657
        %v7674 = vtanh.pop %v7658
        %v7675 = vtanh.pop %v7659
        %v7676 = vtanh.pop %v7660
        %v7677 = vtanh.pop %v7661
        %v7678 = vtanh.pop %v7662
        %v7679 = vtanh.pop %v7663
        %v7680 = vtanh.pop %v7664
        %v7681 = vtanh.pop %v7665
        %v7682 = vtanh.pop %v7666
        %v7683 = vtanh.pop %v7667
        %v7684 = vtanh.pop %v7668
        %v7685 = vtanh.pop %v7669
        %v7686 = vtanh.pop %v7670
        %7703 = vrot.lane.b32.xlu0 %v7671, 32
        %v7704 = vpop.permute.xlu0 %7703
        %7705 = vrot.lane.b32.xlu0 %v7672, 32
        %v7706 = vpop.permute.xlu0 %7705
        %7707 = vrot.lane.b32.xlu0 %v7673, 32
        %v7708 = vpop.permute.xlu0 %7707
        %7709 = vrot.lane.b32.xlu0 %v7674, 32
        %v7710 = vpop.permute.xlu0 %7709
        %7711 = vrot.lane.b32.xlu0 %v7675, 32
        %v7712 = vpop.permute.xlu0 %7711
        %7713 = vrot.lane.b32.xlu0 %v7676, 32
        %v7714 = vpop.permute.xlu0 %7713
        %7715 = vrot.lane.b32.xlu0 %v7677, 32
        %v7716 = vpop.permute.xlu0 %7715
        %7717 = vrot.lane.b32.xlu0 %v7678, 32
        %v7718 = vpop.permute.xlu0 %7717
        %7719 = vrot.lane.b32.xlu0 %v7679, 32
        %v7720 = vpop.permute.xlu0 %7719
        %7721 = vrot.lane.b32.xlu0 %v7680, 32
        %v7722 = vpop.permute.xlu0 %7721
        %7723 = vrot.lane.b32.xlu0 %v7681, 32
        %v7724 = vpop.permute.xlu0 %7723
        %7725 = vrot.lane.b32.xlu0 %v7682, 32
        %v7726 = vpop.permute.xlu0 %7725
        %7727 = vrot.lane.b32.xlu0 %v7683, 32
        %v7728 = vpop.permute.xlu0 %7727
        %7729 = vrot.lane.b32.xlu0 %v7684, 32
        %v7730 = vpop.permute.xlu0 %7729
        %7731 = vrot.lane.b32.xlu0 %v7685, 32
        %v7732 = vpop.permute.xlu0 %7731
        %7733 = vrot.lane.b32.xlu0 %v7686, 32
        %v7734 = vpop.permute.xlu0 %7733
        %v7751 = vmul.f32 %v7253, %v7704
        %v7752 = vmul.f32 %v7268, %v7706
        %v7753 = vmul.f32 %v7283, %v7708
        %v7754 = vmul.f32 %v7298, %v7710
        %v7755 = vmul.f32 %v7313, %v7712
        %v7756 = vmul.f32 %v7328, %v7714
        %v7757 = vmul.f32 %v7343, %v7716
        %v7758 = vmul.f32 %v7358, %v7718
        %v7759 = vmul.f32 %v7373, %v7720
        %v7760 = vmul.f32 %v7388, %v7722
        %v7761 = vmul.f32 %v7403, %v7724
        %v7762 = vmul.f32 %v7418, %v7726
        %v7763 = vmul.f32 %v7433, %v7728
        %v7764 = vmul.f32 %v7448, %v7730
        %v7765 = vmul.f32 %v7463, %v7732
        %v7766 = vmul.f32 %v7478, %v7734
        %v7767 = vld [vmem:[%s891] sm:$0xff]
        %v7768 = vld [vmem:[%s891 + $0x8] sm:$0xff]
        %v7769 = vld [vmem:[%s891 + $0x10] sm:$0xff]
        %v7770 = vld [vmem:[%s891 + $0x18] sm:$0xff]
        %v7771 = vld [vmem:[%s891 + $0x20] sm:$0xff]
        %v7772 = vld [vmem:[%s891 + $0x28] sm:$0xff]
        %v7773 = vld [vmem:[%s891 + $0x30] sm:$0xff]
        %v7774 = vld [vmem:[%s891 + $0x38] sm:$0xff]
        %v7775 = vld [vmem:[%s891 + $0x40] sm:$0xff]
        %v7776 = vld [vmem:[%s891 + $0x48] sm:$0xff]
        %v7777 = vld [vmem:[%s891 + $0x50] sm:$0xff]
        %v7778 = vld [vmem:[%s891 + $0x58] sm:$0xff]
        %v7779 = vld [vmem:[%s891 + $0x60] sm:$0xff]
        %v7780 = vld [vmem:[%s891 + $0x68] sm:$0xff]
        %v7781 = vld [vmem:[%s891 + $0x70] sm:$0xff]
        %v7782 = vld [vmem:[%s891 + $0x78] sm:$0xff]
        %7784 = vset.pattern.permute.xlu0 0
        %7785 = vperm.xlu0 %7784, %v7767
        %v7786 = vpop.permute.xlu0 %7785
        %7789 = vset.pattern.permute.xlu0 0
        %7790 = vperm.xlu0 %7789, %v7768
        %v7791 = vpop.permute.xlu0 %7790
        %7794 = vset.pattern.permute.xlu0 0
        %7795 = vperm.xlu0 %7794, %v7769
        %v7796 = vpop.permute.xlu0 %7795
        %7799 = vset.pattern.permute.xlu0 0
        %7800 = vperm.xlu0 %7799, %v7770
        %v7801 = vpop.permute.xlu0 %7800
        %7804 = vset.pattern.permute.xlu0 0
        %7805 = vperm.xlu0 %7804, %v7771
        %v7806 = vpop.permute.xlu0 %7805
        %7809 = vset.pattern.permute.xlu0 0
        %7810 = vperm.xlu0 %7809, %v7772
        %v7811 = vpop.permute.xlu0 %7810
        %7814 = vset.pattern.permute.xlu0 0
        %7815 = vperm.xlu0 %7814, %v7773
        %v7816 = vpop.permute.xlu0 %7815
        %7819 = vset.pattern.permute.xlu0 0
        %7820 = vperm.xlu0 %7819, %v7774
        %v7821 = vpop.permute.xlu0 %7820
        %7824 = vset.pattern.permute.xlu0 0
        %7825 = vperm.xlu0 %7824, %v7775
        %v7826 = vpop.permute.xlu0 %7825
        %7829 = vset.pattern.permute.xlu0 0
        %7830 = vperm.xlu0 %7829, %v7776
        %v7831 = vpop.permute.xlu0 %7830
        %7834 = vset.pattern.permute.xlu0 0
        %7835 = vperm.xlu0 %7834, %v7777
        %v7836 = vpop.permute.xlu0 %7835
        %7839 = vset.pattern.permute.xlu0 0
        %7840 = vperm.xlu0 %7839, %v7778
        %v7841 = vpop.permute.xlu0 %7840
        %7844 = vset.pattern.permute.xlu0 0
        %7845 = vperm.xlu0 %7844, %v7779
        %v7846 = vpop.permute.xlu0 %7845
        %7849 = vset.pattern.permute.xlu0 0
        %7850 = vperm.xlu0 %7849, %v7780
        %v7851 = vpop.permute.xlu0 %7850
        %7854 = vset.pattern.permute.xlu0 0
        %7855 = vperm.xlu0 %7854, %v7781
        %v7856 = vpop.permute.xlu0 %7855
        %7859 = vset.pattern.permute.xlu0 0
        %7860 = vperm.xlu0 %7859, %v7782
        %v7861 = vpop.permute.xlu0 %7860
        %v7863 = vmul.f32 %v7751, %v7786
        %v7864 = vmul.f32 %v7752, %v7791
        %v7865 = vmul.f32 %v7753, %v7796
        %v7866 = vmul.f32 %v7754, %v7801
        %v7867 = vmul.f32 %v7755, %v7806
        %v7868 = vmul.f32 %v7756, %v7811
        %v7869 = vmul.f32 %v7757, %v7816
        %v7870 = vmul.f32 %v7758, %v7821
        %v7871 = vmul.f32 %v7759, %v7826
        %v7872 = vmul.f32 %v7760, %v7831
        %v7873 = vmul.f32 %v7761, %v7836
        %v7874 = vmul.f32 %v7762, %v7841
        %v7875 = vmul.f32 %v7763, %v7846
        %v7876 = vmul.f32 %v7764, %v7851
        %v7877 = vmul.f32 %v7765, %v7856
        %v7878 = vmul.f32 %v7766, %v7861
        %v7879 = vld [vmem:[%s885] sm:$0xff]
        %v7880 = vld [vmem:[%s885 + $0x8] sm:$0xff]
        %v7881 = vld [vmem:[%s885 + $0x10] sm:$0xff]
        %v7882 = vld [vmem:[%s885 + $0x18] sm:$0xff]
        %v7883 = vld [vmem:[%s885 + $0x20] sm:$0xff]
        %v7884 = vld [vmem:[%s885 + $0x28] sm:$0xff]
        %v7885 = vld [vmem:[%s885 + $0x30] sm:$0xff]
        %v7886 = vld [vmem:[%s885 + $0x38] sm:$0xff]
        %v7887 = vld [vmem:[%s885 + $0x40] sm:$0xff]
        %v7888 = vld [vmem:[%s885 + $0x48] sm:$0xff]
        %v7889 = vld [vmem:[%s885 + $0x50] sm:$0xff]
        %v7890 = vld [vmem:[%s885 + $0x58] sm:$0xff]
        %v7891 = vld [vmem:[%s885 + $0x60] sm:$0xff]
        %v7892 = vld [vmem:[%s885 + $0x68] sm:$0xff]
        %v7893 = vld [vmem:[%s885 + $0x70] sm:$0xff]
        %v7894 = vld [vmem:[%s885 + $0x78] sm:$0xff]
        %7911 = vrot.lane.b32.xlu0 %v7863, 96
        %v7912 = vpop.permute.xlu0 %7911
        %7913 = vrot.lane.b32.xlu0 %v7864, 96
        %v7914 = vpop.permute.xlu0 %7913
        %7915 = vrot.lane.b32.xlu0 %v7865, 96
        %v7916 = vpop.permute.xlu0 %7915
        %7917 = vrot.lane.b32.xlu0 %v7866, 96
        %v7918 = vpop.permute.xlu0 %7917
        %7919 = vrot.lane.b32.xlu0 %v7867, 96
        %v7920 = vpop.permute.xlu0 %7919
        %7921 = vrot.lane.b32.xlu0 %v7868, 96
        %v7922 = vpop.permute.xlu0 %7921
        %7923 = vrot.lane.b32.xlu0 %v7869, 96
        %v7924 = vpop.permute.xlu0 %7923
        %7925 = vrot.lane.b32.xlu0 %v7870, 96
        %v7926 = vpop.permute.xlu0 %7925
        %7927 = vrot.lane.b32.xlu0 %v7871, 96
        %v7928 = vpop.permute.xlu0 %7927
        %7929 = vrot.lane.b32.xlu0 %v7872, 96
        %v7930 = vpop.permute.xlu0 %7929
        %7931 = vrot.lane.b32.xlu0 %v7873, 96
        %v7932 = vpop.permute.xlu0 %7931
        %7933 = vrot.lane.b32.xlu0 %v7874, 96
        %v7934 = vpop.permute.xlu0 %7933
        %7935 = vrot.lane.b32.xlu0 %v7875, 96
        %v7936 = vpop.permute.xlu0 %7935
        %7937 = vrot.lane.b32.xlu0 %v7876, 96
        %v7938 = vpop.permute.xlu0 %7937
        %7939 = vrot.lane.b32.xlu0 %v7877, 96
        %v7940 = vpop.permute.xlu0 %7939
        %7941 = vrot.lane.b32.xlu0 %v7878, 96
        %v7942 = vpop.permute.xlu0 %7941
        %v7959 = vsel %vm1034, %v7879, %v7912
        %v7960 = vsel %vm1034, %v7880, %v7914
        %v7961 = vsel %vm1034, %v7881, %v7916
        %v7962 = vsel %vm1034, %v7882, %v7918
        %v7963 = vsel %vm1034, %v7883, %v7920
        %v7964 = vsel %vm1034, %v7884, %v7922
        %v7965 = vsel %vm1034, %v7885, %v7924
        %v7966 = vsel %vm1034, %v7886, %v7926
        %v7967 = vsel %vm1034, %v7887, %v7928
        %v7968 = vsel %vm1034, %v7888, %v7930
        %v7969 = vsel %vm1034, %v7889, %v7932
        %v7970 = vsel %vm1034, %v7890, %v7934
        %v7971 = vsel %vm1034, %v7891, %v7936
        %v7972 = vsel %vm1034, %v7892, %v7938
        %v7973 = vsel %vm1034, %v7893, %v7940
        %v7974 = vsel %vm1034, %v7894, %v7942
        %v7975 = vld [vmem:[%s6] sm:$0xff]
        %v7976 = vld [vmem:[%s6 + $0x8] sm:$0xff]
        %v7977 = vld [vmem:[%s6 + $0x10] sm:$0xff]
        %v7978 = vld [vmem:[%s6 + $0x18] sm:$0xff]
        %v7979 = vld [vmem:[%s6 + $0x20] sm:$0xff]
        %v7980 = vld [vmem:[%s6 + $0x28] sm:$0xff]
        %v7981 = vld [vmem:[%s6 + $0x30] sm:$0xff]
        %v7982 = vld [vmem:[%s6 + $0x38] sm:$0xff]
        %v7983 = vld [vmem:[%s7] sm:$0x1]
        %v7985 = vperm.slane %v7983, 0
        %vm7987 = vcmask 523264
        %v7989 = vsel %vm7987, %v7959, 0
        %v7992 = vsel %vm7987, %v7960, 0
        %v7995 = vsel %vm7987, %v7961, 0
        %v7998 = vsel %vm7987, %v7962, 0
        %v8001 = vsel %vm7987, %v7963, 0
        %v8004 = vsel %vm7987, %v7964, 0
        %v8007 = vsel %vm7987, %v7965, 0
        %v8010 = vsel %vm7987, %v7966, 0
        %v8013 = vsel %vm7987, %v7967, 0
        %v8016 = vsel %vm7987, %v7968, 0
        %v8019 = vsel %vm7987, %v7969, 0
        %v8022 = vsel %vm7987, %v7970, 0
        %v8025 = vsel %vm7987, %v7971, 0
        %v8028 = vsel %vm7987, %v7972, 0
        %v8031 = vsel %vm7987, %v7973, 0
        %v8034 = vsel %vm7987, %v7974, 0
        %8036 = vmatpush.msra.mxu0 0.0
        %8037 = vmatpush.msra.mxu0 0.0
        %8038 = vmatpush.msra.mxu0 0.0
        %8039 = vmatpush.msra.mxu0 0.0
        %8040 = vmatpush.msra.mxu0 0.0
        %8041 = vmatpush.msra.mxu0 0.0
        %8042 = vmatpush.msra.mxu0 0.0
        %8043 = vmatpush.msra.mxu0 0.0
        %8044 = vmatpush.msra.mxu0 %v7982
        %8045 = vmatpush.msra.mxu0 %v7981
        %8046 = vmatpush.msra.mxu0 %v7980
        %8047 = vmatpush.msra.mxu0 %v7979
        %8048 = vmatpush.msra.mxu0 %v7978
        %8049 = vmatpush.msra.mxu0 %v7977
        %8050 = vmatpush.msra.mxu0 %v7976
        %8051 = vmatpush.msra.mxu0 %v7975
        %8052 = vmatmul.f32.gmra.mxu0 %v7989
        %v8053 = vpop.f32.mrf.mxu0
        %v8054 = vadd.f32 %v7985, %v8053
        %8055 = vmatmul.f32.gmra.mxu0 %v7992
        %v8056 = vpop.f32.mrf.mxu0
        %v8057 = vadd.f32 %v7985, %v8056
        %8058 = vmatmul.f32.gmra.mxu0 %v7995
        %v8059 = vpop.f32.mrf.mxu0
        %v8060 = vadd.f32 %v7985, %v8059
        %8061 = vmatmul.f32.gmra.mxu0 %v7998
        %v8062 = vpop.f32.mrf.mxu0
        %v8063 = vadd.f32 %v7985, %v8062
        %8064 = vmatmul.f32.gmra.mxu0 %v8001
        %v8065 = vpop.f32.mrf.mxu0
        %v8066 = vadd.f32 %v7985, %v8065
        %8067 = vmatmul.f32.gmra.mxu0 %v8004
        %v8068 = vpop.f32.mrf.mxu0
        %v8069 = vadd.f32 %v7985, %v8068
        %8070 = vmatmul.f32.gmra.mxu0 %v8007
        %v8071 = vpop.f32.mrf.mxu0
        %v8072 = vadd.f32 %v7985, %v8071
        %8073 = vmatmul.f32.gmra.mxu0 %v8010
        %v8074 = vpop.f32.mrf.mxu0
        %v8075 = vadd.f32 %v7985, %v8074
        %8076 = vmatmul.f32.gmra.mxu0 %v8013
        %v8077 = vpop.f32.mrf.mxu0
        %v8078 = vadd.f32 %v7985, %v8077
        %8079 = vmatmul.f32.gmra.mxu0 %v8016
        %v8080 = vpop.f32.mrf.mxu0
        %v8081 = vadd.f32 %v7985, %v8080
        %8082 = vmatmul.f32.gmra.mxu0 %v8019
        %v8083 = vpop.f32.mrf.mxu0
        %v8084 = vadd.f32 %v7985, %v8083
        %8085 = vmatmul.f32.gmra.mxu0 %v8022
        %v8086 = vpop.f32.mrf.mxu0
        %v8087 = vadd.f32 %v7985, %v8086
        %8088 = vmatmul.f32.gmra.mxu0 %v8025
        %v8089 = vpop.f32.mrf.mxu0
        %v8090 = vadd.f32 %v7985, %v8089
        %8091 = vmatmul.f32.gmra.mxu0 %v8028
        %v8092 = vpop.f32.mrf.mxu0
        %v8093 = vadd.f32 %v7985, %v8092
        %8094 = vmatmul.f32.gmra.mxu0 %v8031
        %v8095 = vpop.f32.mrf.mxu0
        %v8096 = vadd.f32 %v7985, %v8095
        %8097 = vmatmul.f32.gmra.mxu0 %v8034
        %v8098 = vpop.f32.mrf.mxu0
        %v8099 = vadd.f32 %v7985, %v8098
        %8100 = vdwg.mxu0
        %8101 = vst [vmem:[%s879] sm:$0xff] %v8054
        %8102 = vst [vmem:[%s879 + $0x8] sm:$0xff] %v8057
        %8103 = vst [vmem:[%s879 + $0x10] sm:$0xff] %v8060
        %8104 = vst [vmem:[%s879 + $0x18] sm:$0xff] %v8063
        %8105 = vst [vmem:[%s879 + $0x20] sm:$0xff] %v8066
        %8106 = vst [vmem:[%s879 + $0x28] sm:$0xff] %v8069
        %8107 = vst [vmem:[%s879 + $0x30] sm:$0xff] %v8072
        %8108 = vst [vmem:[%s879 + $0x38] sm:$0xff] %v8075
        %8109 = vst [vmem:[%s879 + $0x40] sm:$0xff] %v8078
        %8110 = vst [vmem:[%s879 + $0x48] sm:$0xff] %v8081
        %8111 = vst [vmem:[%s879 + $0x50] sm:$0xff] %v8084
        %8112 = vst [vmem:[%s879 + $0x58] sm:$0xff] %v8087
        %8113 = vst [vmem:[%s879 + $0x60] sm:$0xff] %v8090
        %8114 = vst [vmem:[%s879 + $0x68] sm:$0xff] %v8093
        %8115 = vst [vmem:[%s879 + $0x70] sm:$0xff] %v8096
        %8116 = vst [vmem:[%s879 + $0x78] sm:$0xff] %v8099
        %s8117 = sand.u32 %s213, 1
        %s8118 = scalar_lea.sflag [#allocation4], %s8117
        %s8119 = sand.u32 %s213, 1
        %s8120 = smul.addr %s8119, 128
        %s8121 = scalar_lea.vmem [#allocation3], %s8120
        // Predicated region
        $region91: #{tpu_custom_call.1} parent=85 // pred_check
          %p8122 = pneg %p223
        $region92: #{tpu_custom_call.1} parent=85 // pred_check_branch
          %8124 = sbr.rel (%p8122) target = $region94
        $region93: #{tpu_custom_call.1} parent=85 // pred_region
          %s8125 = smul.u32 16, %s22
          %8127 = vsyncadd %s8118, 0
          %s8128 = smul.addr %s8125, 8
          %s8129 = scalar_lea.hbm %s8, %s8128
          %s8130 = sshll.u32 %s8121, 4
          %s8131 = int_to_ptr.vmem [resolvable:$true] %s8130
          %s8132 = sshll.u32 %s8129, 4
          %s8133 = int_to_ptr.hbm [resolvable:$true] %s8132
          %8138 = dma.vmem_to_hbm [thread:$0]  %s8131, 2048, %s8133, %s8118, 128, 128, 8
        $region94: #{tpu_custom_call.1} parent=85 // pred_fallthru
          _
      $region86: #{tpu_custom_call.1} parent=5 // pred_fallthru
        _
      %p8139 = scmp.le.s32.totalorder 2, %s17
      // Predicated region
      $region95: #{tpu_custom_call.1} parent=5 // pred_check
        %p8140 = pneg %p8139
      $region96: #{tpu_custom_call.1} parent=5 // pred_check_branch
        %8142 = sbr.rel (%p8140) target = $region98
      $region97: #{tpu_custom_call.1} parent=5 // pred_region
        %s8143 = ssub.s32 %s17, 2
        // Predicated region
        $region99: #{tpu_custom_call.1} parent=97 // pred_check
          %p8144 = pneg %p229
        $region100: #{tpu_custom_call.1} parent=97 // pred_check_branch
          %8146 = sbr.rel (%p8144) target = $region102
        $region101: #{tpu_custom_call.1} parent=97 // pred_region
          %s8147 = sand.u32 %s214, 1
          %s8148 = scalar_lea.sflag [#allocation4], %s8147
          %s8149 = sand.u32 %s214, 1
          %s8150 = smul.addr %s8149, 128
          %s8151 = scalar_lea.vmem [#allocation3], %s8150
          %8153 = dma.done %s8148, 2048
        $region102: #{tpu_custom_call.1} parent=97 // pred_fallthru
          _
      $region98: #{tpu_custom_call.1} parent=5 // pred_fallthru
        _
    $region6: #{tpu_custom_call.1} parent=1 // loop_footer
      %s21 = sadd.s32 1, %s17
    $region7: #{tpu_custom_call.1} parent=1 // loop_footer_branch
      %16 = sbr.rel target = $region3
    $region8: #{tpu_custom_call.1} parent=1 // loop_exit
      _
    %8154 = vsyncpa [#allocation4], 1
    %s8155 = scalar_lea.sflag [#allocation4], 1
    %8156 = vsyncpa %s8155, 1

</llo_original>
